<compile_context>
chip_gen: v7x
topology: tpu7x:2x2x1
jax: 0.10.0
libtpu: 0.0.40
codegen_flags: <defaults>
</compile_context>

<pallas_src>
import functools
import math

import numpy as np
import jax
import jax.numpy as jnp
from jax.experimental import pallas as pl
from jax.experimental.pallas import tpu as pltpu


# ----------------------------------------------------------------------------- kernel


def _apply_gates(g, c, Dd):
    """PyTorch nn.LSTMCell gate math, gates order (i, f, g, o); g = pre-activations."""
    i = jax.nn.sigmoid(g[:, 0 * Dd:1 * Dd])
    f = jax.nn.sigmoid(g[:, 1 * Dd:2 * Dd])
    gg = jnp.tanh(g[:, 2 * Dd:3 * Dd])
    o = jax.nn.sigmoid(g[:, 3 * Dd:4 * Dd])
    c_new = f * c + i * gg
    h_new = o * jnp.tanh(c_new)
    return h_new, c_new


def decoder_kernel(dec_len_ref, enc_ref, emb_t0_ref, emb_tok0_ref,
                   w_ea_ref, b_ea_ref, w_da_ref, b_da_ref, w_fa_ref, b_fa_ref,
                   w_fb_ref, b_fb_ref, w_ih_ref, b_ih_ref, w_ic_ref, b_ic_ref,
                   wx_ref, b_lstm_ref, wh_ref, w_fc_ref, b_fc_ref,
                   pred_ref, alpha_ref,
                   h_s, m_s, hB_s, mB_s, att1_s,
                   *, num_pixels):
    tb = pl.program_id(1)                       # time-block index (sequential axis)
    Bb, P_pad, E = enc_ref.shape
    Dd = h_s.shape[1]
    A = att1_s.shape[2]
    ED = emb_t0_ref.shape[1]
    K = pred_ref.shape[0]                       # time steps per grid invocation

    # ---- once per batch block: hoisted encoder projection + init_hidden_state ------
    @pl.when(tb == 0)
    def _init():
        enc = enc_ref[...]                                              # (Bb, P_pad, E)
        att1 = (jnp.dot(enc.reshape(Bb * P_pad, E), w_ea_ref[...],
                        preferred_element_type=jnp.float32) + b_ea_ref[...])
        att1_s[...] = att1.reshape(Bb, P_pad, A)
        # mean over the *real* pixels (padded pixels are zero)
        mean_enc = jnp.sum(enc, axis=1) * (1.0 / num_pixels)            # (Bb, E)
        h0 = jnp.dot(mean_enc, w_ih_ref[...],
                     preferred_element_type=jnp.float32) + b_ih_ref[...]
        c0 = jnp.dot(mean_enc, w_ic_ref[...],
                     preferred_element_type=jnp.float32) + b_ic_ref[...]
        h_s[...] = h0
        m_s[...] = c0
        for j in range(3):
            hB_s[j] = h0
            mB_s[j] = c0

    # hoisted loop-invariants
    dec_len = dec_len_ref[...]                                          # (Bb, 1) int32
    emb_tok0_b = jnp.broadcast_to(emb_tok0_ref[...], (Bb, ED))          # (Bb, ED)
    pix_valid = jax.lax.broadcasted_iota(jnp.int32, (1, P_pad), 1) < num_pixels

    @pl.loop(0, K)
    def _step(i):
        t = tb * K + i
        # row b active at step t iff decode_length[b] > t (sorted descending => prefix)
        mask = dec_len > t                                              # (Bb, 1) bool

        h = h_s[...]                                                    # (Bb, Dd)
        enc = enc_ref[...]                                              # (Bb, P_pad, E)

        # ---- Attention (att1 reused from scratch) ----------------------------------
        att2 = jnp.dot(h, w_da_ref[...],
                       preferred_element_type=jnp.float32) + b_da_ref[...]   # (Bb, A)
        r = jnp.maximum(att1_s[...] + att2[:, None, :], 0.0)            # relu
        att = jnp.sum(r * w_fa_ref[...][None, :, :], axis=-1) + b_fa_ref[...]  # (Bb,P_pad)
        att = jnp.where(pix_valid, att, -1e30)                          # mask padded px
        att = att - jnp.max(att, axis=1, keepdims=True)
        ex = jnp.exp(att)
        alpha = ex / jnp.sum(ex, axis=1, keepdims=True)                 # softmax dim=1
        # attention-weighted encoding via MXU (batched matvec)
        awe = jnp.einsum('bqp,bpe->bqe', alpha[:, None, :], enc,
                         preferred_element_type=jnp.float32)[:, 0, :]   # (Bb, E)

        gate = jax.nn.sigmoid(jnp.dot(h, w_fb_ref[...],
                                      preferred_element_type=jnp.float32)
                              + b_fb_ref[...])
        awe = gate * awe

        # teacher forcing: t>0 uses embedding of argmax(zeros) == token 0
        emb = jnp.where(t == 0, emb_t0_ref[...], emb_tok0_b)
        x = jnp.concatenate([emb, awe], axis=1)                         # (Bb, ED + E)

        # ---- StackGridLSTMCell2d: fused input projection for all 6 LSTM cells ------
        xg = jnp.dot(x, wx_ref[...],
                     preferred_element_type=jnp.float32) + b_lstm_ref[...]  # (Bb, 24*Dd)

        hA = h
        mA = m_s[...]
        new_hB = []
        new_mB = []
        for k in range(3):
            Hk = hA + hB_s[k]
            # fused recurrent matmul for the A- and B-cell of this grid cell
            hg = jnp.dot(Hk, wh_ref[k], preferred_element_type=jnp.float32)  # (Bb, 8*Dd)
            gA = xg[:, (2 * k) * 4 * Dd:(2 * k + 1) * 4 * Dd] + hg[:, :4 * Dd]
            gB = xg[:, (2 * k + 1) * 4 * Dd:(2 * k + 2) * 4 * Dd] + hg[:, 4 * Dd:]
            hA, mA = _apply_gates(gA, mA, Dd)
            hBn, mBn = _apply_gates(gB, mB_s[k], Dd)
            new_hB.append(hBn)
            new_mB.append(mBn)

        # masked state update (only active rows advance — matches [:batch_size_t])
        h_s[...] = jnp.where(mask, hA, h_s[...])
        m_s[...] = jnp.where(mask, mA, m_s[...])
        for k in range(3):
            hB_s[k] = jnp.where(mask, new_hB[k], hB_s[k])
            mB_s[k] = jnp.where(mask, new_mB[k], mB_s[k])

        # TODO(synk): dropout treated as identity (eval mode).
        preds = jnp.dot(hA, w_fc_ref[...],
                        preferred_element_type=jnp.float32) + b_fc_ref[...]
        pred_ref[i] = jnp.where(mask, preds, 0.0)
        alpha_ref[i] = jnp.where(mask, alpha, 0.0)


# ----------------------------------------------------------------------------- wrapper


def _round_up(x, m):
    return (x + m - 1) // m * m


def run_decoder(params, encoder_out, encoded_captions, caption_lengths,
                steps_per_block=8):
    B, Hi, Wi, E = encoder_out.shape
    P = Hi * Wi
    enc = encoder_out.reshape(B, P, E).astype(jnp.float32)

    lens = caption_lengths[:, 0].astype(jnp.int32)
    sort_ind = jnp.argsort(-lens)                 # descending (stable)
    lens_sorted = lens[sort_ind]
    enc = enc[sort_ind]
    caps_sorted = encoded_captions[sort_ind]

    emb_table = params["embedding"]
    emb_t0 = emb_table[caps_sorted[:, 0]]         # (B, ED) — only t=0 embedding is used
    emb_tok0 = emb_table[0:1, :]                  # token-0 embedding (teacher forcing)

    dec_len = lens_sorted - 1
    # host values are required anyway to build the python decode_lengths list
    dec_len_np = np.asarray(jax.device_get(dec_len))
    T_max = int(dec_len_np.max())

    Dd = params["w_da"].shape[0]
    ED = emb_t0.shape[1]
    V = params["w_fc"].shape[1]
    A = params["w_ea"].shape[1]

    # ---- padding to (8, 128)-friendly shapes --------------------------------------
    B_BLK = 8
    B_pad = _round_up(B, B_BLK)
    P_pad = _round_up(P, 128)
    V_pad = _round_up(V, 128)
    K = steps_per_block
    T_pad = _round_up(max(T_max, 1), K)
    nb = B_pad // B_BLK
    nt = T_pad // K

    enc_p = jnp.zeros((B_pad, P_pad, E), jnp.float32).at[:B, :P, :].set(enc)
    dec_len_p = jnp.zeros((B_pad, 1), jnp.int32).at[:B, 0].set(dec_len)
    emb_t0_p = jnp.zeros((B_pad, ED), jnp.float32).at[:B, :].set(emb_t0)
    w_fc_p = jnp.zeros((Dd, V_pad), jnp.float32).at[:, :V].set(params["w_fc"])
    b_fc_p = jnp.zeros((1, V_pad), jnp.float32).at[:, :V].set(params["b_fc"])

    inputs = [
        dec_len_p, enc_p, emb_t0_p, emb_tok0,
        params["w_ea"], params["b_ea"], params["w_da"], params["b_da"],
        params["w_fa"], params["b_fa"], params["w_fb"], params["b_fb"],
        params["w_init_h"], params["b_init_h"], params["w_init_c"], params["b_init_c"],
        params["wx_cat"], params["b_cat"], params["wh_cat"],
        w_fc_p, b_fc_p,
    ]

    # batch-blocked inputs
    batch_specs = [
        pl.BlockSpec((B_BLK, 1), lambda b, t: (b, 0)),
        pl.BlockSpec((B_BLK, P_pad, E), lambda b, t: (b, 0, 0)),
        pl.BlockSpec((B_BLK, ED), lambda b, t: (b, 0)),
    ]

    def full_spec(x):
        nd = x.ndim
        return pl.BlockSpec(x.shape, lambda b, t, _nd=nd: (0,) * _nd)

    in_specs = batch_specs + [full_spec(x) for x in inputs[3:]]

    out_shapes = (jax.ShapeDtypeStruct((T_pad, B_pad, V_pad), jnp.float32),
                  jax.ShapeDtypeStruct((T_pad, B_pad, P_pad), jnp.float32))
    out_specs = [
        pl.BlockSpec((K, B_BLK, V_pad), lambda b, t: (t, b, 0)),
        pl.BlockSpec((K, B_BLK, P_pad), lambda b, t: (t, b, 0)),
    ]

    grid_spec = pltpu.PrefetchScalarGridSpec(
        num_scalar_prefetch=0,
        grid=(nb, nt),                        # batch blocks (parallel), time (arbitrary)
        in_specs=in_specs,
        out_specs=out_specs,
        scratch_shapes=[
            pltpu.VMEM((B_BLK, Dd), jnp.float32),        # h   (A-direction hidden)
            pltpu.VMEM((B_BLK, Dd), jnp.float32),        # m   (A-direction cell)
            pltpu.VMEM((3, B_BLK, Dd), jnp.float32),     # hB1..3
            pltpu.VMEM((3, B_BLK, Dd), jnp.float32),     # mB1..3
            pltpu.VMEM((B_BLK, P_pad, A), jnp.float32),  # hoisted enc attention proj
        ],
    )

    kernel = functools.partial(decoder_kernel, num_pixels=P)

    preds_tbv, alphas_tbp = pl.pallas_call(
        kernel,
        out_shape=out_shapes,
        grid_spec=grid_spec,
        compiler_params=pltpu.CompilerParams(
            dimension_semantics=("parallel", "arbitrary")),
    )(*inputs)

    predictions = jnp.transpose(preds_tbv[:T_max, :B, :V], (1, 0, 2))   # (B, T_max, V)
    alphas = jnp.transpose(alphas_tbp[:T_max, :B, :P], (1, 0, 2))       # (B, T_max, P)
    decode_lengths = [int(l) for l in dec_len_np]
    return predictions, caps_sorted, decode_lengths, alphas, sort_ind


# ----------------------------------------------------------------------------- params


def init_params(key, attention_dim, embed_dim, decoder_dim, vocab_size, encoder_dim):
    ks = iter(jax.random.split(key, 64))

    def uni(shape, bound):
        return jax.random.uniform(next(ks), shape, minval=-bound, maxval=bound,
                                  dtype=jnp.float32)

    def linear(fin, fout):
        k = 1.0 / math.sqrt(fin)
        return uni((fin, fout), k), uni((1, fout), k)

    p = {}
    # Attention
    p["w_ea"], p["b_ea"] = linear(encoder_dim, attention_dim)
    p["w_da"], p["b_da"] = linear(decoder_dim, attention_dim)
    wf, bf = linear(attention_dim, 1)
    p["w_fa"], p["b_fa"] = wf.T, bf                       # (1, A), (1, 1)
    # gate + init state
    p["w_fb"], p["b_fb"] = linear(decoder_dim, encoder_dim)
    p["w_init_h"], p["b_init_h"] = linear(encoder_dim, decoder_dim)
    p["w_init_c"], p["b_init_c"] = linear(encoder_dim, decoder_dim)
    # 6 LSTM cells (StackGridLSTMCell2d = 3 GridLSTMCell2d x 2 nn.LSTMCell)
    IS = embed_dim + encoder_dim
    kb = 1.0 / math.sqrt(decoder_dim)
    wx, wh, bb = [], [], []
    for _ in range(6):
        wx.append(uni((IS, 4 * decoder_dim), kb))
        wh.append(uni((decoder_dim, 4 * decoder_dim), kb))
        bb.append(uni((1, 4 * decoder_dim), kb) + uni((1, 4 * decoder_dim), kb))
    # fused layouts: one x-projection matmul, one recurrent matmul per grid cell
    p["wx_cat"] = jnp.concatenate(wx, axis=1)                       # (IS, 24*Dd)
    p["b_cat"] = jnp.concatenate(bb, axis=1)                        # (1, 24*Dd)
    p["wh_cat"] = jnp.stack(
        [jnp.concatenate([wh[2 * k], wh[2 * k + 1]], axis=1) for k in range(3)])
    # embedding / fc (matching init_weights: uniform(-0.1, 0.1), fc bias = 0)
    p["embedding"] = uni((vocab_size, embed_dim), 0.1)
    p["w_fc"] = uni((decoder_dim, vocab_size), 0.1)
    p["b_fc"] = jnp.zeros((1, vocab_size), jnp.float32)
    return p


# ------------------------------------------------------------------------------- main


if __name__ == "__main__":
    attention_dim = 32
    embed_dim = 32
    decoder_dim = 32
    vocab_size = 128
    encoder_dim = 32
    B = 4
    enc_size = 8
    max_cap_len = 8

    key = jax.random.PRNGKey(0)
    kp, ke, kc = jax.random.split(key, 3)

    params = init_params(kp, attention_dim, embed_dim, decoder_dim, vocab_size,
                         encoder_dim)

    encoder_out = jax.random.normal(ke, (B, enc_size, enc_size, encoder_dim),
                                    jnp.float32)
    encoded_captions = jax.random.randint(kc, (B, max_cap_len), 0, vocab_size,
                                          dtype=jnp.int32)
    caption_lengths = jnp.array([[5], [8], [3], [6]], dtype=jnp.int32)

    preds, caps_sorted, dec_lens, alphas, sort_ind = run_decoder(
        params, encoder_out, encoded_captions, caption_lengths)
    jax.block_until_ready((preds, alphas))

    assert preds.shape == (B, max(dec_lens), vocab_size)
    assert alphas.shape == (B, max(dec_lens), enc_size * enc_size)
    assert bool(jnp.all(jnp.isfinite(preds)))
    assert bool(jnp.all(jnp.isfinite(alphas)))
    print("KERNEL_OK")
</pallas_src>

<mosaic_0001>
module attributes {stable_mosaic.version = 11 : i64} {
  func.func @decoder_kernel(%arg0: i32, %arg1: i32, %arg2: memref<8x1xi32, #tpu.memory_space<vmem>>, %arg3: memref<8x128x32xf32, #tpu.memory_space<vmem>>, %arg4: memref<8x32xf32, #tpu.memory_space<vmem>>, %arg5: memref<1x32xf32, #tpu.memory_space<vmem>>, %arg6: memref<32x32xf32, #tpu.memory_space<vmem>>, %arg7: memref<1x32xf32, #tpu.memory_space<vmem>>, %arg8: memref<32x32xf32, #tpu.memory_space<vmem>>, %arg9: memref<1x32xf32, #tpu.memory_space<vmem>>, %arg10: memref<1x32xf32, #tpu.memory_space<vmem>>, %arg11: memref<1x1xf32, #tpu.memory_space<vmem>>, %arg12: memref<32x32xf32, #tpu.memory_space<vmem>>, %arg13: memref<1x32xf32, #tpu.memory_space<vmem>>, %arg14: memref<32x32xf32, #tpu.memory_space<vmem>>, %arg15: memref<1x32xf32, #tpu.memory_space<vmem>>, %arg16: memref<32x32xf32, #tpu.memory_space<vmem>>, %arg17: memref<1x32xf32, #tpu.memory_space<vmem>>, %arg18: memref<64x768xf32, #tpu.memory_space<vmem>>, %arg19: memref<1x768xf32, #tpu.memory_space<vmem>>, %arg20: memref<3x32x256xf32, #tpu.memory_space<vmem>>, %arg21: memref<32x128xf32, #tpu.memory_space<vmem>>, %arg22: memref<1x128xf32, #tpu.memory_space<vmem>>, %arg23: memref<8x8x128xf32, #tpu.memory_space<vmem>>, %arg24: memref<8x8x128xf32, #tpu.memory_space<vmem>>, %arg25: memref<8x32xf32, #tpu.memory_space<vmem>>, %arg26: memref<8x32xf32, #tpu.memory_space<vmem>>, %arg27: memref<3x8x32xf32, #tpu.memory_space<vmem>>, %arg28: memref<3x8x32xf32, #tpu.memory_space<vmem>>, %arg29: memref<8x128x32xf32, #tpu.memory_space<vmem>>) attributes {dimension_semantics = [#tpu.dimension_semantics<parallel>, #tpu.dimension_semantics<arbitrary>], iteration_bounds = array<i64: 1, 1>, scalar_prefetch = 0 : i64, scratch_operands = 5 : i64, tpu.core_type = #tpu.core_type<tc>, window_params = [{transform_indices = @transform_0, window_bounds = array<i64: 8, 1>}, {transform_indices = @transform_1, window_bounds = array<i64: 8, 128, 32>}, {transform_indices = @transform_2, window_bounds = array<i64: 8, 32>}, {pipeline_mode = #tpu.pipeline_mode<synchronous>, transform_indices = @transform_3, window_bounds = array<i64: 1, 32>}, {pipeline_mode = #tpu.pipeline_mode<synchronous>, transform_indices = @transform_4, window_bounds = array<i64: 32, 32>}, {pipeline_mode = #tpu.pipeline_mode<synchronous>, transform_indices = @transform_5, window_bounds = array<i64: 1, 32>}, {pipeline_mode = #tpu.pipeline_mode<synchronous>, transform_indices = @transform_6, window_bounds = array<i64: 32, 32>}, {pipeline_mode = #tpu.pipeline_mode<synchronous>, transform_indices = @transform_7, window_bounds = array<i64: 1, 32>}, {pipeline_mode = #tpu.pipeline_mode<synchronous>, transform_indices = @transform_8, window_bounds = array<i64: 1, 32>}, {pipeline_mode = #tpu.pipeline_mode<synchronous>, transform_indices = @transform_9, window_bounds = array<i64: 1, 1>}, {pipeline_mode = #tpu.pipeline_mode<synchronous>, transform_indices = @transform_10, window_bounds = array<i64: 32, 32>}, {pipeline_mode = #tpu.pipeline_mode<synchronous>, transform_indices = @transform_11, window_bounds = array<i64: 1, 32>}, {pipeline_mode = #tpu.pipeline_mode<synchronous>, transform_indices = @transform_12, window_bounds = array<i64: 32, 32>}, {pipeline_mode = #tpu.pipeline_mode<synchronous>, transform_indices = @transform_13, window_bounds = array<i64: 1, 32>}, {pipeline_mode = #tpu.pipeline_mode<synchronous>, transform_indices = @transform_14, window_bounds = array<i64: 32, 32>}, {pipeline_mode = #tpu.pipeline_mode<synchronous>, transform_indices = @transform_15, window_bounds = array<i64: 1, 32>}, {pipeline_mode = #tpu.pipeline_mode<synchronous>, transform_indices = @transform_16, window_bounds = array<i64: 64, 768>}, {pipeline_mode = #tpu.pipeline_mode<synchronous>, transform_indices = @transform_17, window_bounds = array<i64: 1, 768>}, {pipeline_mode = #tpu.pipeline_mode<synchronous>, transform_indices = @transform_18, window_bounds = array<i64: 3, 32, 256>}, {pipeline_mode = #tpu.pipeline_mode<synchronous>, transform_indices = @transform_19, window_bounds = array<i64: 32, 128>}, {pipeline_mode = #tpu.pipeline_mode<synchronous>, transform_indices = @transform_20, window_bounds = array<i64: 1, 128>}, {transform_indices = @transform_21, window_bounds = array<i64: 8, 8, 128>}, {transform_indices = @transform_22, window_bounds = array<i64: 8, 8, 128>}]} {
    %c0_i32 = arith.constant 0 : i32
    %0 = arith.cmpi eq, %arg1, %c0_i32 : i32
    %1 = arith.extui %0 : i1 to i32
    %c0_i32_0 = arith.constant 0 : i32
    %2 = arith.cmpi ne, %1, %c0_i32_0 : i32
    scf.if %2 {
      %c0_6 = arith.constant 0 : index
      %c0_7 = arith.constant 0 : index
      %c0_8 = arith.constant 0 : index
      %11 = vector.load %arg3[%c0_6, %c0_7, %c0_8] : memref<8x128x32xf32, #tpu.memory_space<vmem>>, vector<8x128x32xf32>
      %12 = vector.shape_cast %11 : vector<8x128x32xf32> to vector<1024x32xf32>
      %c0_9 = arith.constant 0 : index
      %c0_10 = arith.constant 0 : index
      %13 = vector.load %arg6[%c0_9, %c0_10] : memref<32x32xf32, #tpu.memory_space<vmem>>, vector<32x32xf32>
      %cst = arith.constant dense<0.000000e+00> : vector<1024x32xf32>
      %14 = tpu.matmul %12, %13, %cst {dimension_numbers = #tpu.dot_dimension_numbers<[1], [0], [0], [1], [0, 0, 1, 1], [], []>} : vector<1024x32xf32>, vector<32x32xf32>, vector<1024x32xf32> -> vector<1024x32xf32>
      %c0_11 = arith.constant 0 : index
      %c0_12 = arith.constant 0 : index
      %15 = vector.load %arg7[%c0_11, %c0_12] : memref<1x32xf32, #tpu.memory_space<vmem>>, vector<1x32xf32>
      %16 = vector.broadcast %15 : vector<1x32xf32> to vector<1024x32xf32>
      %17 = arith.addf %14, %16 : vector<1024x32xf32>
      %18 = vector.shape_cast %17 : vector<1024x32xf32> to vector<8x128x32xf32>
      %c0_13 = arith.constant 0 : index
      %c0_14 = arith.constant 0 : index
      %c0_15 = arith.constant 0 : index
      %19 = vector.load %arg29[%c0_13, %c0_14, %c0_15] : memref<8x128x32xf32, #tpu.memory_space<vmem>>, vector<8x128x32xf32>
      tpu.vector_store %arg29[%c0_13, %c0_14, %c0_15], %18 {strides = array<i32>} : memref<8x128x32xf32, #tpu.memory_space<vmem>>, vector<8x128x32xf32>,
      %cst_16 = arith.constant dense<0.000000e+00> : vector<8x32xf32>
      %20 = vector.multi_reduction <add>, %11, %cst_16 [1] : vector<8x128x32xf32> to vector<8x32xf32>
      %cst_17 = arith.constant 1.562500e-02 : f32
      %21 = vector.broadcast %cst_17 : f32 to vector<8x32xf32>
      %22 = arith.mulf %20, %21 : vector<8x32xf32>
      %c0_18 = arith.constant 0 : index
      %c0_19 = arith.constant 0 : index
      %23 = vector.load %arg14[%c0_18, %c0_19] : memref<32x32xf32, #tpu.memory_space<vmem>>, vector<32x32xf32>
      %cst_20 = arith.constant dense<0.000000e+00> : vector<8x32xf32>
      %24 = tpu.matmul %22, %23, %cst_20 {dimension_numbers = #tpu.dot_dimension_numbers<[1], [0], [0], [1], [0, 0, 1, 1], [], []>} : vector<8x32xf32>, vector<32x32xf32>, vector<8x32xf32> -> vector<8x32xf32>
      %c0_21 = arith.constant 0 : index
      %c0_22 = arith.constant 0 : index
      %25 = vector.load %arg15[%c0_21, %c0_22] : memref<1x32xf32, #tpu.memory_space<vmem>>, vector<1x32xf32>
      %26 = vector.broadcast %25 : vector<1x32xf32> to vector<8x32xf32>
      %27 = arith.addf %24, %26 : vector<8x32xf32>
      %c0_23 = arith.constant 0 : index
      %c0_24 = arith.constant 0 : index
      %28 = vector.load %arg16[%c0_23, %c0_24] : memref<32x32xf32, #tpu.memory_space<vmem>>, vector<32x32xf32>
      %cst_25 = arith.constant dense<0.000000e+00> : vector<8x32xf32>
      %29 = tpu.matmul %22, %28, %cst_25 {dimension_numbers = #tpu.dot_dimension_numbers<[1], [0], [0], [1], [0, 0, 1, 1], [], []>} : vector<8x32xf32>, vector<32x32xf32>, vector<8x32xf32> -> vector<8x32xf32>
      %c0_26 = arith.constant 0 : index
      %c0_27 = arith.constant 0 : index
      %30 = vector.load %arg17[%c0_26, %c0_27] : memref<1x32xf32, #tpu.memory_space<vmem>>, vector<1x32xf32>
      %31 = vector.broadcast %30 : vector<1x32xf32> to vector<8x32xf32>
      %32 = arith.addf %29, %31 : vector<8x32xf32>
      %c0_28 = arith.constant 0 : index
      %c0_29 = arith.constant 0 : index
      %33 = vector.load %arg25[%c0_28, %c0_29] : memref<8x32xf32, #tpu.memory_space<vmem>>, vector<8x32xf32>
      tpu.vector_store %arg25[%c0_28, %c0_29], %27 {strides = array<i32>} : memref<8x32xf32, #tpu.memory_space<vmem>>, vector<8x32xf32>,
      %c0_30 = arith.constant 0 : index
      %c0_31 = arith.constant 0 : index
      %34 = vector.load %arg26[%c0_30, %c0_31] : memref<8x32xf32, #tpu.memory_space<vmem>>, vector<8x32xf32>
      tpu.vector_store %arg26[%c0_30, %c0_31], %32 {strides = array<i32>} : memref<8x32xf32, #tpu.memory_space<vmem>>, vector<8x32xf32>,
      %c0_32 = arith.constant 0 : index
      %c0_33 = arith.constant 0 : index
      %c0_34 = arith.constant 0 : index
      %35 = vector.load %arg27[%c0_32, %c0_33, %c0_34] : memref<3x8x32xf32, #tpu.memory_space<vmem>>, vector<1x8x32xf32>
      %36 = vector.shape_cast %35 : vector<1x8x32xf32> to vector<8x32xf32>
      %37 = vector.shape_cast %27 : vector<8x32xf32> to vector<1x8x32xf32>
      tpu.vector_store %arg27[%c0_32, %c0_33, %c0_34], %37 {strides = array<i32>} : memref<3x8x32xf32, #tpu.memory_space<vmem>>, vector<1x8x32xf32>,
      %c0_35 = arith.constant 0 : index
      %c0_36 = arith.constant 0 : index
      %c0_37 = arith.constant 0 : index
      %38 = vector.load %arg28[%c0_35, %c0_36, %c0_37] : memref<3x8x32xf32, #tpu.memory_space<vmem>>, vector<1x8x32xf32>
      %39 = vector.shape_cast %38 : vector<1x8x32xf32> to vector<8x32xf32>
      %40 = vector.shape_cast %32 : vector<8x32xf32> to vector<1x8x32xf32>
      tpu.vector_store %arg28[%c0_35, %c0_36, %c0_37], %40 {strides = array<i32>} : memref<3x8x32xf32, #tpu.memory_space<vmem>>, vector<1x8x32xf32>,
      %c1 = arith.constant 1 : index
      %c0_38 = arith.constant 0 : index
      %c0_39 = arith.constant 0 : index
      %41 = vector.load %arg27[%c1, %c0_38, %c0_39] : memref<3x8x32xf32, #tpu.memory_space<vmem>>, vector<1x8x32xf32>
      %42 = vector.shape_cast %41 : vector<1x8x32xf32> to vector<8x32xf32>
      %43 = vector.shape_cast %27 : vector<8x32xf32> to vector<1x8x32xf32>
      tpu.vector_store %arg27[%c1, %c0_38, %c0_39], %43 {strides = array<i32>} : memref<3x8x32xf32, #tpu.memory_space<vmem>>, vector<1x8x32xf32>,
      %c1_40 = arith.constant 1 : index
      %c0_41 = arith.constant 0 : index
      %c0_42 = arith.constant 0 : index
      %44 = vector.load %arg28[%c1_40, %c0_41, %c0_42] : memref<3x8x32xf32, #tpu.memory_space<vmem>>, vector<1x8x32xf32>
      %45 = vector.shape_cast %44 : vector<1x8x32xf32> to vector<8x32xf32>
      %46 = vector.shape_cast %32 : vector<8x32xf32> to vector<1x8x32xf32>
      tpu.vector_store %arg28[%c1_40, %c0_41, %c0_42], %46 {strides = array<i32>} : memref<3x8x32xf32, #tpu.memory_space<vmem>>, vector<1x8x32xf32>,
      %c2 = arith.constant 2 : index
      %c0_43 = arith.constant 0 : index
      %c0_44 = arith.constant 0 : index
      %47 = vector.load %arg27[%c2, %c0_43, %c0_44] : memref<3x8x32xf32, #tpu.memory_space<vmem>>, vector<1x8x32xf32>
      %48 = vector.shape_cast %47 : vector<1x8x32xf32> to vector<8x32xf32>
      %49 = vector.shape_cast %27 : vector<8x32xf32> to vector<1x8x32xf32>
      tpu.vector_store %arg27[%c2, %c0_43, %c0_44], %49 {strides = array<i32>} : memref<3x8x32xf32, #tpu.memory_space<vmem>>, vector<1x8x32xf32>,
      %c2_45 = arith.constant 2 : index
      %c0_46 = arith.constant 0 : index
      %c0_47 = arith.constant 0 : index
      %50 = vector.load %arg28[%c2_45, %c0_46, %c0_47] : memref<3x8x32xf32, #tpu.memory_space<vmem>>, vector<1x8x32xf32>
      %51 = vector.shape_cast %50 : vector<1x8x32xf32> to vector<8x32xf32>
      %52 = vector.shape_cast %32 : vector<8x32xf32> to vector<1x8x32xf32>
      tpu.vector_store %arg28[%c2_45, %c0_46, %c0_47], %52 {strides = array<i32>} : memref<3x8x32xf32, #tpu.memory_space<vmem>>, vector<1x8x32xf32>,
    } else {
    }
    %c0 = arith.constant 0 : index
    %c0_1 = arith.constant 0 : index
    %3 = vector.load %arg2[%c0, %c0_1] : memref<8x1xi32, #tpu.memory_space<vmem>>, vector<8x1xi32>
    %c0_2 = arith.constant 0 : index
    %c0_3 = arith.constant 0 : index
    %4 = vector.load %arg5[%c0_2, %c0_3] : memref<1x32xf32, #tpu.memory_space<vmem>>, vector<1x32xf32>
    %5 = vector.shape_cast %4 : vector<1x32xf32> to vector<1x32xf32>
    %6 = vector.broadcast %5 : vector<1x32xf32> to vector<8x32xf32>
    %7 = tpu.iota {dimensions = array<i32: 1>} : vector<1x128xi32>
    %c64_i32 = arith.constant 64 : i32
    %8 = vector.broadcast %c64_i32 : i32 to vector<1x128xi32>
    %9 = arith.cmpi slt, %7, %8 : vector<1x128xi32>
    %c0_i32_4 = arith.constant 0 : i32
    %c8_i32 = arith.constant 8 : i32
    %10 = arith.addi %c0_i32_4, %c8_i32 : i32
    %c1_i32 = arith.constant 1 : i32
    scf.for %arg30 = %c0_i32_4 to %10 step %c1_i32  : i32 {
      %c1_i32_6 = arith.constant 1 : i32
      %11 = arith.muli %arg30, %c1_i32_6 : i32
      %c0_i32_7 = arith.constant 0 : i32
      %12 = arith.addi %c0_i32_7, %11 : i32
      %c8_i32_8 = arith.constant 8 : i32
      %13 = arith.muli %arg1, %c8_i32_8 : i32
      %14 = arith.addi %13, %12 : i32
      %15 = vector.broadcast %14 : i32 to vector<8x1xi32>
      %16 = arith.cmpi sgt, %3, %15 : vector<8x1xi32>
      %c0_9 = arith.constant 0 : index
      %c0_10 = arith.constant 0 : index
      %17 = vector.load %arg25[%c0_9, %c0_10] : memref<8x32xf32, #tpu.memory_space<vmem>>, vector<8x32xf32>
      %c0_11 = arith.constant 0 : index
      %c0_12 = arith.constant 0 : index
      %c0_13 = arith.constant 0 : index
      %18 = vector.load %arg3[%c0_11, %c0_12, %c0_13] : memref<8x128x32xf32, #tpu.memory_space<vmem>>, vector<8x128x32xf32>
      %c0_14 = arith.constant 0 : index
      %c0_15 = arith.constant 0 : index
      %19 = vector.load %arg8[%c0_14, %c0_15] : memref<32x32xf32, #tpu.memory_space<vmem>>, vector<32x32xf32>
      %cst = arith.constant dense<0.000000e+00> : vector<8x32xf32>
      %20 = tpu.matmul %17, %19, %cst {dimension_numbers = #tpu.dot_dimension_numbers<[1], [0], [0], [1], [0, 0, 1, 1], [], []>} : vector<8x32xf32>, vector<32x32xf32>, vector<8x32xf32> -> vector<8x32xf32>
      %c0_16 = arith.constant 0 : index
      %c0_17 = arith.constant 0 : index
      %21 = vector.load %arg9[%c0_16, %c0_17] : memref<1x32xf32, #tpu.memory_space<vmem>>, vector<1x32xf32>
      %22 = vector.broadcast %21 : vector<1x32xf32> to vector<8x32xf32>
      %23 = arith.addf %20, %22 : vector<8x32xf32>
      %c0_18 = arith.constant 0 : index
      %c0_19 = arith.constant 0 : index
      %c0_20 = arith.constant 0 : index
      %24 = vector.load %arg29[%c0_18, %c0_19, %c0_20] : memref<8x128x32xf32, #tpu.memory_space<vmem>>, vector<8x128x32xf32>
      %25 = vector.shape_cast %23 : vector<8x32xf32> to vector<8x1x32xf32>
      %26 = vector.broadcast %25 : vector<8x1x32xf32> to vector<8x128x32xf32>
      %27 = arith.addf %24, %26 : vector<8x128x32xf32>
      %cst_21 = arith.constant 0.000000e+00 : f32
      %28 = vector.broadcast %cst_21 : f32 to vector<8x128x32xf32>
      %29 = arith.maximumf %27, %28 : vector<8x128x32xf32>
      %c0_22 = arith.constant 0 : index
      %c0_23 = arith.constant 0 : index
      %30 = vector.load %arg10[%c0_22, %c0_23] : memref<1x32xf32, #tpu.memory_space<vmem>>, vector<1x32xf32>
      %31 = vector.shape_cast %30 : vector<1x32xf32> to vector<1x1x32xf32>
      %32 = vector.broadcast %31 : vector<1x1x32xf32> to vector<8x128x32xf32>
      %33 = arith.mulf %29, %32 : vector<8x128x32xf32>
      %cst_24 = arith.constant dense<0.000000e+00> : vector<8x128xf32>
      %34 = vector.multi_reduction <add>, %33, %cst_24 [2] : vector<8x128x32xf32> to vector<8x128xf32>
      %c0_25 = arith.constant 0 : index
      %c0_26 = arith.constant 0 : index
      %35 = vector.load %arg11[%c0_25, %c0_26] : memref<1x1xf32, #tpu.memory_space<vmem>>, vector<1x1xf32>
      %36 = vector.broadcast %35 : vector<1x1xf32> to vector<8x128xf32>
      %37 = arith.addf %34, %36 : vector<8x128xf32>
      %cst_27 = arith.constant -1.000000e+30 : f32
      %38 = vector.shape_cast %9 : vector<1x128xi1> to vector<1x128xi1>
      %39 = vector.broadcast %38 : vector<1x128xi1> to vector<8x128xi1>
      %40 = vector.broadcast %cst_27 : f32 to vector<8x128xf32>
      %41 = arith.select %39, %37, %40 : vector<8x128xi1>, vector<8x128xf32>
      %cst_28 = arith.constant dense<0xFF800000> : vector<8xf32>
      %42 = vector.multi_reduction <maximumf>, %41, %cst_28 [1] : vector<8x128xf32> to vector<8xf32>
      %43 = vector.shape_cast %42 : vector<8xf32> to vector<8x1xf32>
      %44 = vector.broadcast %43 : vector<8x1xf32> to vector<8x128xf32>
      %45 = arith.subf %41, %44 : vector<8x128xf32>
      %46 = math.exp %45 : vector<8x128xf32>
      %cst_29 = arith.constant dense<0.000000e+00> : vector<8xf32>
      %47 = vector.multi_reduction <add>, %46, %cst_29 [1] : vector<8x128xf32> to vector<8xf32>
      %48 = vector.shape_cast %47 : vector<8xf32> to vector<8x1xf32>
      %49 = vector.broadcast %48 : vector<8x1xf32> to vector<8x128xf32>
      %50 = arith.divf %46, %49 : vector<8x128xf32>
      %51 = vector.shape_cast %50 : vector<8x128xf32> to vector<8x1x128xf32>
      "tpu.trace_start"() <{level = 10 : i32, message = "bqp,bpe->bqe"}> : () -> ()
      %cst_30 = arith.constant dense<0.000000e+00> : vector<8x1x32xf32>
      %52 = tpu.matmul %51, %18, %cst_30 {dimension_numbers = #tpu.dot_dimension_numbers<[2], [1], [1], [2], [0, 0, 0, 1, 1, 2], [0], [0]>} : vector<8x1x128xf32>, vector<8x128x32xf32>, vector<8x1x32xf32> -> vector<8x1x32xf32>
      "tpu.trace_stop"() : () -> ()
      %53 = vector.shape_cast %52 : vector<8x1x32xf32> to vector<8x32xf32>
      %c0_31 = arith.constant 0 : index
      %c0_32 = arith.constant 0 : index
      %54 = vector.load %arg12[%c0_31, %c0_32] : memref<32x32xf32, #tpu.memory_space<vmem>>, vector<32x32xf32>
      %cst_33 = arith.constant dense<0.000000e+00> : vector<8x32xf32>
      %55 = tpu.matmul %17, %54, %cst_33 {dimension_numbers = #tpu.dot_dimension_numbers<[1], [0], [0], [1], [0, 0, 1, 1], [], []>} : vector<8x32xf32>, vector<32x32xf32>, vector<8x32xf32> -> vector<8x32xf32>
      %c0_34 = arith.constant 0 : index
      %c0_35 = arith.constant 0 : index
      %56 = vector.load %arg13[%c0_34, %c0_35] : memref<1x32xf32, #tpu.memory_space<vmem>>, vector<1x32xf32>
      %57 = vector.broadcast %56 : vector<1x32xf32> to vector<8x32xf32>
      %58 = arith.addf %55, %57 : vector<8x32xf32>
      %59 = arith.negf %58 : vector<8x32xf32>
      %60 = math.exp %59 : vector<8x32xf32>
      %cst_36 = arith.constant 1.000000e+00 : f32
      %61 = vector.broadcast %cst_36 : f32 to vector<8x32xf32>
      %62 = arith.addf %61, %60 : vector<8x32xf32>
      %63 = arith.divf %61, %62 : vector<8x32xf32>
      %64 = arith.mulf %63, %53 : vector<8x32xf32>
      %c0_i32_37 = arith.constant 0 : i32
      %65 = arith.cmpi eq, %14, %c0_i32_37 : i32
      %c0_38 = arith.constant 0 : index
      %c0_39 = arith.constant 0 : index
      %66 = vector.load %arg4[%c0_38, %c0_39] : memref<8x32xf32, #tpu.memory_space<vmem>>, vector<8x32xf32>
      %67 = arith.select %65, %66, %6 : vector<8x32xf32>
      %68 = tpu.concatenate %67, %64 in 1 : vector<8x32xf32>, vector<8x32xf32> -> vector<8x64xf32>
      %c0_40 = arith.constant 0 : index
      %c0_41 = arith.constant 0 : index
      %69 = vector.load %arg18[%c0_40, %c0_41] : memref<64x768xf32, #tpu.memory_space<vmem>>, vector<64x768xf32>
      %cst_42 = arith.constant dense<0.000000e+00> : vector<8x768xf32>
      %70 = tpu.matmul %68, %69, %cst_42 {dimension_numbers = #tpu.dot_dimension_numbers<[1], [0], [0], [1], [0, 0, 1, 1], [], []>} : vector<8x64xf32>, vector<64x768xf32>, vector<8x768xf32> -> vector<8x768xf32>
      %c0_43 = arith.constant 0 : index
      %c0_44 = arith.constant 0 : index
      %71 = vector.load %arg19[%c0_43, %c0_44] : memref<1x768xf32, #tpu.memory_space<vmem>>, vector<1x768xf32>
      %72 = vector.broadcast %71 : vector<1x768xf32> to vector<8x768xf32>
      %73 = arith.addf %70, %72 : vector<8x768xf32>
      %c0_45 = arith.constant 0 : index
      %c0_46 = arith.constant 0 : index
      %74 = vector.load %arg26[%c0_45, %c0_46] : memref<8x32xf32, #tpu.memory_space<vmem>>, vector<8x32xf32>
      %c0_47 = arith.constant 0 : index
      %c0_48 = arith.constant 0 : index
      %c0_49 = arith.constant 0 : index
      %75 = vector.load %arg27[%c0_47, %c0_48, %c0_49] : memref<3x8x32xf32, #tpu.memory_space<vmem>>, vector<1x8x32xf32>
      %76 = vector.shape_cast %75 : vector<1x8x32xf32> to vector<8x32xf32>
      %77 = arith.addf %17, %76 : vector<8x32xf32>
      %c0_50 = arith.constant 0 : index
      %c0_51 = arith.constant 0 : index
      %c0_52 = arith.constant 0 : index
      %78 = vector.load %arg20[%c0_50, %c0_51, %c0_52] : memref<3x32x256xf32, #tpu.memory_space<vmem>>, vector<1x32x256xf32>
      %79 = vector.shape_cast %78 : vector<1x32x256xf32> to vector<32x256xf32>
      %cst_53 = arith.constant dense<0.000000e+00> : vector<8x256xf32>
      %80 = tpu.matmul %77, %79, %cst_53 {dimension_numbers = #tpu.dot_dimension_numbers<[1], [0], [0], [1], [0, 0, 1, 1], [], []>} : vector<8x32xf32>, vector<32x256xf32>, vector<8x256xf32> -> vector<8x256xf32>
      %81 = vector.extract_strided_slice %73 {offsets = [0, 0], sizes = [8, 128], strides = [1, 1]} : vector<8x768xf32> to vector<8x128xf32>
      %82 = vector.extract_strided_slice %80 {offsets = [0, 0], sizes = [8, 128], strides = [1, 1]} : vector<8x256xf32> to vector<8x128xf32>
      %83 = arith.addf %81, %82 : vector<8x128xf32>
      %84 = vector.extract_strided_slice %73 {offsets = [0, 128], sizes = [8, 128], strides = [1, 1]} : vector<8x768xf32> to vector<8x128xf32>
      %85 = vector.extract_strided_slice %80 {offsets = [0, 128], sizes = [8, 128], strides = [1, 1]} : vector<8x256xf32> to vector<8x128xf32>
      %86 = arith.addf %84, %85 : vector<8x128xf32>
      %87 = vector.extract_strided_slice %83 {offsets = [0, 0], sizes = [8, 32], strides = [1, 1]} : vector<8x128xf32> to vector<8x32xf32>
      %88 = arith.negf %87 : vector<8x32xf32>
      %89 = math.exp %88 : vector<8x32xf32>
      %cst_54 = arith.constant 1.000000e+00 : f32
      %90 = vector.broadcast %cst_54 : f32 to vector<8x32xf32>
      %91 = arith.addf %90, %89 : vector<8x32xf32>
      %92 = arith.divf %90, %91 : vector<8x32xf32>
      %93 = vector.extract_strided_slice %83 {offsets = [0, 32], sizes = [8, 32], strides = [1, 1]} : vector<8x128xf32> to vector<8x32xf32>
      %94 = arith.negf %93 : vector<8x32xf32>
      %95 = math.exp %94 : vector<8x32xf32>
      %cst_55 = arith.constant 1.000000e+00 : f32
      %96 = vector.broadcast %cst_55 : f32 to vector<8x32xf32>
      %97 = arith.addf %96, %95 : vector<8x32xf32>
      %98 = arith.divf %96, %97 : vector<8x32xf32>
      %99 = vector.extract_strided_slice %83 {offsets = [0, 64], sizes = [8, 32], strides = [1, 1]} : vector<8x128xf32> to vector<8x32xf32>
      %100 = math.tanh %99 : vector<8x32xf32>
      %101 = vector.extract_strided_slice %83 {offsets = [0, 96], sizes = [8, 32], strides = [1, 1]} : vector<8x128xf32> to vector<8x32xf32>
      %102 = arith.negf %101 : vector<8x32xf32>
      %103 = math.exp %102 : vector<8x32xf32>
      %cst_56 = arith.constant 1.000000e+00 : f32
      %104 = vector.broadcast %cst_56 : f32 to vector<8x32xf32>
      %105 = arith.addf %104, %103 : vector<8x32xf32>
      %106 = arith.divf %104, %105 : vector<8x32xf32>
      %107 = arith.mulf %98, %74 : vector<8x32xf32>
      %108 = arith.mulf %92, %100 : vector<8x32xf32>
      %109 = arith.addf %107, %108 : vector<8x32xf32>
      %110 = math.tanh %109 : vector<8x32xf32>
      %111 = arith.mulf %106, %110 : vector<8x32xf32>
      %c0_57 = arith.constant 0 : index
      %c0_58 = arith.constant 0 : index
      %c0_59 = arith.constant 0 : index
      %112 = vector.load %arg28[%c0_57, %c0_58, %c0_59] : memref<3x8x32xf32, #tpu.memory_space<vmem>>, vector<1x8x32xf32>
      %113 = vector.shape_cast %112 : vector<1x8x32xf32> to vector<8x32xf32>
      %114 = vector.extract_strided_slice %86 {offsets = [0, 0], sizes = [8, 32], strides = [1, 1]} : vector<8x128xf32> to vector<8x32xf32>
      %115 = arith.negf %114 : vector<8x32xf32>
      %116 = math.exp %115 : vector<8x32xf32>
      %cst_60 = arith.constant 1.000000e+00 : f32
      %117 = vector.broadcast %cst_60 : f32 to vector<8x32xf32>
      %118 = arith.addf %117, %116 : vector<8x32xf32>
      %119 = arith.divf %117, %118 : vector<8x32xf32>
      %120 = vector.extract_strided_slice %86 {offsets = [0, 32], sizes = [8, 32], strides = [1, 1]} : vector<8x128xf32> to vector<8x32xf32>
      %121 = arith.negf %120 : vector<8x32xf32>
      %122 = math.exp %121 : vector<8x32xf32>
      %cst_61 = arith.constant 1.000000e+00 : f32
      %123 = vector.broadcast %cst_61 : f32 to vector<8x32xf32>
      %124 = arith.addf %123, %122 : vector<8x32xf32>
      %125 = arith.divf %123, %124 : vector<8x32xf32>
      %126 = vector.extract_strided_slice %86 {offsets = [0, 64], sizes = [8, 32], strides = [1, 1]} : vector<8x128xf32> to vector<8x32xf32>
      %127 = math.tanh %126 : vector<8x32xf32>
      %128 = vector.extract_strided_slice %86 {offsets = [0, 96], sizes = [8, 32], strides = [1, 1]} : vector<8x128xf32> to vector<8x32xf32>
      %129 = arith.negf %128 : vector<8x32xf32>
      %130 = math.exp %129 : vector<8x32xf32>
      %cst_62 = arith.constant 1.000000e+00 : f32
      %131 = vector.broadcast %cst_62 : f32 to vector<8x32xf32>
      %132 = arith.addf %131, %130 : vector<8x32xf32>
      %133 = arith.divf %131, %132 : vector<8x32xf32>
      %134 = arith.mulf %125, %113 : vector<8x32xf32>
      %135 = arith.mulf %119, %127 : vector<8x32xf32>
      %136 = arith.addf %134, %135 : vector<8x32xf32>
      %137 = math.tanh %136 : vector<8x32xf32>
      %138 = arith.mulf %133, %137 : vector<8x32xf32>
      %c1 = arith.constant 1 : index
      %c0_63 = arith.constant 0 : index
      %c0_64 = arith.constant 0 : index
      %139 = vector.load %arg27[%c1, %c0_63, %c0_64] : memref<3x8x32xf32, #tpu.memory_space<vmem>>, vector<1x8x32xf32>
      %140 = vector.shape_cast %139 : vector<1x8x32xf32> to vector<8x32xf32>
      %141 = arith.addf %111, %140 : vector<8x32xf32>
      %c1_65 = arith.constant 1 : index
      %c0_66 = arith.constant 0 : index
      %c0_67 = arith.constant 0 : index
      %142 = vector.load %arg20[%c1_65, %c0_66, %c0_67] : memref<3x32x256xf32, #tpu.memory_space<vmem>>, vector<1x32x256xf32>
      %143 = vector.shape_cast %142 : vector<1x32x256xf32> to vector<32x256xf32>
      %cst_68 = arith.constant dense<0.000000e+00> : vector<8x256xf32>
      %144 = tpu.matmul %141, %143, %cst_68 {dimension_numbers = #tpu.dot_dimension_numbers<[1], [0], [0], [1], [0, 0, 1, 1], [], []>} : vector<8x32xf32>, vector<32x256xf32>, vector<8x256xf32> -> vector<8x256xf32>
      %145 = vector.extract_strided_slice %73 {offsets = [0, 256], sizes = [8, 128], strides = [1, 1]} : vector<8x768xf32> to vector<8x128xf32>
      %146 = vector.extract_strided_slice %144 {offsets = [0, 0], sizes = [8, 128], strides = [1, 1]} : vector<8x256xf32> to vector<8x128xf32>
      %147 = arith.addf %145, %146 : vector<8x128xf32>
      %148 = vector.extract_strided_slice %73 {offsets = [0, 384], sizes = [8, 128], strides = [1, 1]} : vector<8x768xf32> to vector<8x128xf32>
      %149 = vector.extract_strided_slice %144 {offsets = [0, 128], sizes = [8, 128], strides = [1, 1]} : vector<8x256xf32> to vector<8x128xf32>
      %150 = arith.addf %148, %149 : vector<8x128xf32>
      %151 = vector.extract_strided_slice %147 {offsets = [0, 0], sizes = [8, 32], strides = [1, 1]} : vector<8x128xf32> to vector<8x32xf32>
      %152 = arith.negf %151 : vector<8x32xf32>
      %153 = math.exp %152 : vector<8x32xf32>
      %cst_69 = arith.constant 1.000000e+00 : f32
      %154 = vector.broadcast %cst_69 : f32 to vector<8x32xf32>
      %155 = arith.addf %154, %153 : vector<8x32xf32>
      %156 = arith.divf %154, %155 : vector<8x32xf32>
      %157 = vector.extract_strided_slice %147 {offsets = [0, 32], sizes = [8, 32], strides = [1, 1]} : vector<8x128xf32> to vector<8x32xf32>
      %158 = arith.negf %157 : vector<8x32xf32>
      %159 = math.exp %158 : vector<8x32xf32>
      %cst_70 = arith.constant 1.000000e+00 : f32
      %160 = vector.broadcast %cst_70 : f32 to vector<8x32xf32>
      %161 = arith.addf %160, %159 : vector<8x32xf32>
      %162 = arith.divf %160, %161 : vector<8x32xf32>
      %163 = vector.extract_strided_slice %147 {offsets = [0, 64], sizes = [8, 32], strides = [1, 1]} : vector<8x128xf32> to vector<8x32xf32>
      %164 = math.tanh %163 : vector<8x32xf32>
      %165 = vector.extract_strided_slice %147 {offsets = [0, 96], sizes = [8, 32], strides = [1, 1]} : vector<8x128xf32> to vector<8x32xf32>
      %166 = arith.negf %165 : vector<8x32xf32>
      %167 = math.exp %166 : vector<8x32xf32>
      %cst_71 = arith.constant 1.000000e+00 : f32
      %168 = vector.broadcast %cst_71 : f32 to vector<8x32xf32>
      %169 = arith.addf %168, %167 : vector<8x32xf32>
      %170 = arith.divf %168, %169 : vector<8x32xf32>
      %171 = arith.mulf %162, %109 : vector<8x32xf32>
      %172 = arith.mulf %156, %164 : vector<8x32xf32>
      %173 = arith.addf %171, %172 : vector<8x32xf32>
      %174 = math.tanh %173 : vector<8x32xf32>
      %175 = arith.mulf %170, %174 : vector<8x32xf32>
      %c1_72 = arith.constant 1 : index
      %c0_73 = arith.constant 0 : index
      %c0_74 = arith.constant 0 : index
      %176 = vector.load %arg28[%c1_72, %c0_73, %c0_74] : memref<3x8x32xf32, #tpu.memory_space<vmem>>, vector<1x8x32xf32>
      %177 = vector.shape_cast %176 : vector<1x8x32xf32> to vector<8x32xf32>
      %178 = vector.extract_strided_slice %150 {offsets = [0, 0], sizes = [8, 32], strides = [1, 1]} : vector<8x128xf32> to vector<8x32xf32>
      %179 = arith.negf %178 : vector<8x32xf32>
      %180 = math.exp %179 : vector<8x32xf32>
      %cst_75 = arith.constant 1.000000e+00 : f32
      %181 = vector.broadcast %cst_75 : f32 to vector<8x32xf32>
      %182 = arith.addf %181, %180 : vector<8x32xf32>
      %183 = arith.divf %181, %182 : vector<8x32xf32>
      %184 = vector.extract_strided_slice %150 {offsets = [0, 32], sizes = [8, 32], strides = [1, 1]} : vector<8x128xf32> to vector<8x32xf32>
      %185 = arith.negf %184 : vector<8x32xf32>
      %186 = math.exp %185 : vector<8x32xf32>
      %cst_76 = arith.constant 1.000000e+00 : f32
      %187 = vector.broadcast %cst_76 : f32 to vector<8x32xf32>
      %188 = arith.addf %187, %186 : vector<8x32xf32>
      %189 = arith.divf %187, %188 : vector<8x32xf32>
      %190 = vector.extract_strided_slice %150 {offsets = [0, 64], sizes = [8, 32], strides = [1, 1]} : vector<8x128xf32> to vector<8x32xf32>
      %191 = math.tanh %190 : vector<8x32xf32>
      %192 = vector.extract_strided_slice %150 {offsets = [0, 96], sizes = [8, 32], strides = [1, 1]} : vector<8x128xf32> to vector<8x32xf32>
      %193 = arith.negf %192 : vector<8x32xf32>
      %194 = math.exp %193 : vector<8x32xf32>
      %cst_77 = arith.constant 1.000000e+00 : f32
      %195 = vector.broadcast %cst_77 : f32 to vector<8x32xf32>
      %196 = arith.addf %195, %194 : vector<8x32xf32>
      %197 = arith.divf %195, %196 : vector<8x32xf32>
      %198 = arith.mulf %189, %177 : vector<8x32xf32>
      %199 = arith.mulf %183, %191 : vector<8x32xf32>
      %200 = arith.addf %198, %199 : vector<8x32xf32>
      %201 = math.tanh %200 : vector<8x32xf32>
      %202 = arith.mulf %197, %201 : vector<8x32xf32>
      %c2 = arith.constant 2 : index
      %c0_78 = arith.constant 0 : index
      %c0_79 = arith.constant 0 : index
      %203 = vector.load %arg27[%c2, %c0_78, %c0_79] : memref<3x8x32xf32, #tpu.memory_space<vmem>>, vector<1x8x32xf32>
      %204 = vector.shape_cast %203 : vector<1x8x32xf32> to vector<8x32xf32>
      %205 = arith.addf %175, %204 : vector<8x32xf32>
      %c2_80 = arith.constant 2 : index
      %c0_81 = arith.constant 0 : index
      %c0_82 = arith.constant 0 : index
      %206 = vector.load %arg20[%c2_80, %c0_81, %c0_82] : memref<3x32x256xf32, #tpu.memory_space<vmem>>, vector<1x32x256xf32>
      %207 = vector.shape_cast %206 : vector<1x32x256xf32> to vector<32x256xf32>
      %cst_83 = arith.constant dense<0.000000e+00> : vector<8x256xf32>
      %208 = tpu.matmul %205, %207, %cst_83 {dimension_numbers = #tpu.dot_dimension_numbers<[1], [0], [0], [1], [0, 0, 1, 1], [], []>} : vector<8x32xf32>, vector<32x256xf32>, vector<8x256xf32> -> vector<8x256xf32>
      %209 = vector.extract_strided_slice %73 {offsets = [0, 512], sizes = [8, 128], strides = [1, 1]} : vector<8x768xf32> to vector<8x128xf32>
      %210 = vector.extract_strided_slice %208 {offsets = [0, 0], sizes = [8, 128], strides = [1, 1]} : vector<8x256xf32> to vector<8x128xf32>
      %211 = arith.addf %209, %210 : vector<8x128xf32>
      %212 = vector.extract_strided_slice %73 {offsets = [0, 640], sizes = [8, 128], strides = [1, 1]} : vector<8x768xf32> to vector<8x128xf32>
      %213 = vector.extract_strided_slice %208 {offsets = [0, 128], sizes = [8, 128], strides = [1, 1]} : vector<8x256xf32> to vector<8x128xf32>
      %214 = arith.addf %212, %213 : vector<8x128xf32>
      %215 = vector.extract_strided_slice %211 {offsets = [0, 0], sizes = [8, 32], strides = [1, 1]} : vector<8x128xf32> to vector<8x32xf32>
      %216 = arith.negf %215 : vector<8x32xf32>
      %217 = math.exp %216 : vector<8x32xf32>
      %cst_84 = arith.constant 1.000000e+00 : f32
      %218 = vector.broadcast %cst_84 : f32 to vector<8x32xf32>
      %219 = arith.addf %218, %217 : vector<8x32xf32>
      %220 = arith.divf %218, %219 : vector<8x32xf32>
      %221 = vector.extract_strided_slice %211 {offsets = [0, 32], sizes = [8, 32], strides = [1, 1]} : vector<8x128xf32> to vector<8x32xf32>
      %222 = arith.negf %221 : vector<8x32xf32>
      %223 = math.exp %222 : vector<8x32xf32>
      %cst_85 = arith.constant 1.000000e+00 : f32
      %224 = vector.broadcast %cst_85 : f32 to vector<8x32xf32>
      %225 = arith.addf %224, %223 : vector<8x32xf32>
      %226 = arith.divf %224, %225 : vector<8x32xf32>
      %227 = vector.extract_strided_slice %211 {offsets = [0, 64], sizes = [8, 32], strides = [1, 1]} : vector<8x128xf32> to vector<8x32xf32>
      %228 = math.tanh %227 : vector<8x32xf32>
      %229 = vector.extract_strided_slice %211 {offsets = [0, 96], sizes = [8, 32], strides = [1, 1]} : vector<8x128xf32> to vector<8x32xf32>
      %230 = arith.negf %229 : vector<8x32xf32>
      %231 = math.exp %230 : vector<8x32xf32>
      %cst_86 = arith.constant 1.000000e+00 : f32
      %232 = vector.broadcast %cst_86 : f32 to vector<8x32xf32>
      %233 = arith.addf %232, %231 : vector<8x32xf32>
      %234 = arith.divf %232, %233 : vector<8x32xf32>
      %235 = arith.mulf %226, %173 : vector<8x32xf32>
      %236 = arith.mulf %220, %228 : vector<8x32xf32>
      %237 = arith.addf %235, %236 : vector<8x32xf32>
      %238 = math.tanh %237 : vector<8x32xf32>
      %239 = arith.mulf %234, %238 : vector<8x32xf32>
      %c2_87 = arith.constant 2 : index
      %c0_88 = arith.constant 0 : index
      %c0_89 = arith.constant 0 : index
      %240 = vector.load %arg28[%c2_87, %c0_88, %c0_89] : memref<3x8x32xf32, #tpu.memory_space<vmem>>, vector<1x8x32xf32>
      %241 = vector.shape_cast %240 : vector<1x8x32xf32> to vector<8x32xf32>
      %242 = vector.extract_strided_slice %214 {offsets = [0, 0], sizes = [8, 32], strides = [1, 1]} : vector<8x128xf32> to vector<8x32xf32>
      %243 = arith.negf %242 : vector<8x32xf32>
      %244 = math.exp %243 : vector<8x32xf32>
      %cst_90 = arith.constant 1.000000e+00 : f32
      %245 = vector.broadcast %cst_90 : f32 to vector<8x32xf32>
      %246 = arith.addf %245, %244 : vector<8x32xf32>
      %247 = arith.divf %245, %246 : vector<8x32xf32>
      %248 = vector.extract_strided_slice %214 {offsets = [0, 32], sizes = [8, 32], strides = [1, 1]} : vector<8x128xf32> to vector<8x32xf32>
      %249 = arith.negf %248 : vector<8x32xf32>
      %250 = math.exp %249 : vector<8x32xf32>
      %cst_91 = arith.constant 1.000000e+00 : f32
      %251 = vector.broadcast %cst_91 : f32 to vector<8x32xf32>
      %252 = arith.addf %251, %250 : vector<8x32xf32>
      %253 = arith.divf %251, %252 : vector<8x32xf32>
      %254 = vector.extract_strided_slice %214 {offsets = [0, 64], sizes = [8, 32], strides = [1, 1]} : vector<8x128xf32> to vector<8x32xf32>
      %255 = math.tanh %254 : vector<8x32xf32>
      %256 = vector.extract_strided_slice %214 {offsets = [0, 96], sizes = [8, 32], strides = [1, 1]} : vector<8x128xf32> to vector<8x32xf32>
      %257 = arith.negf %256 : vector<8x32xf32>
      %258 = math.exp %257 : vector<8x32xf32>
      %cst_92 = arith.constant 1.000000e+00 : f32
      %259 = vector.broadcast %cst_92 : f32 to vector<8x32xf32>
      %260 = arith.addf %259, %258 : vector<8x32xf32>
      %261 = arith.divf %259, %260 : vector<8x32xf32>
      %262 = arith.mulf %253, %241 : vector<8x32xf32>
      %263 = arith.mulf %247, %255 : vector<8x32xf32>
      %264 = arith.addf %262, %263 : vector<8x32xf32>
      %265 = math.tanh %264 : vector<8x32xf32>
      %266 = arith.mulf %261, %265 : vector<8x32xf32>
      %c0_93 = arith.constant 0 : index
      %c0_94 = arith.constant 0 : index
      %267 = vector.load %arg25[%c0_93, %c0_94] : memref<8x32xf32, #tpu.memory_space<vmem>>, vector<8x32xf32>
      %268 = vector.shape_cast %16 : vector<8x1xi1> to vector<8x1xi1>
      %269 = vector.broadcast %268 : vector<8x1xi1> to vector<8x32xi1>
      %270 = arith.select %269, %239, %267 : vector<8x32xi1>, vector<8x32xf32>
      %c0_95 = arith.constant 0 : index
      %c0_96 = arith.constant 0 : index
      %271 = vector.load %arg25[%c0_95, %c0_96] : memref<8x32xf32, #tpu.memory_space<vmem>>, vector<8x32xf32>
      tpu.vector_store %arg25[%c0_95, %c0_96], %270 {strides = array<i32>} : memref<8x32xf32, #tpu.memory_space<vmem>>, vector<8x32xf32>,
      %c0_97 = arith.constant 0 : index
      %c0_98 = arith.constant 0 : index
      %272 = vector.load %arg26[%c0_97, %c0_98] : memref<8x32xf32, #tpu.memory_space<vmem>>, vector<8x32xf32>
      %273 = vector.shape_cast %16 : vector<8x1xi1> to vector<8x1xi1>
      %274 = vector.broadcast %273 : vector<8x1xi1> to vector<8x32xi1>
      %275 = arith.select %274, %237, %272 : vector<8x32xi1>, vector<8x32xf32>
      %c0_99 = arith.constant 0 : index
      %c0_100 = arith.constant 0 : index
      %276 = vector.load %arg26[%c0_99, %c0_100] : memref<8x32xf32, #tpu.memory_space<vmem>>, vector<8x32xf32>
      tpu.vector_store %arg26[%c0_99, %c0_100], %275 {strides = array<i32>} : memref<8x32xf32, #tpu.memory_space<vmem>>, vector<8x32xf32>,
      %c0_101 = arith.constant 0 : index
      %c0_102 = arith.constant 0 : index
      %c0_103 = arith.constant 0 : index
      %277 = vector.load %arg27[%c0_101, %c0_102, %c0_103] : memref<3x8x32xf32, #tpu.memory_space<vmem>>, vector<1x8x32xf32>
      %278 = vector.shape_cast %277 : vector<1x8x32xf32> to vector<8x32xf32>
      %279 = vector.shape_cast %16 : vector<8x1xi1> to vector<8x1xi1>
      %280 = vector.broadcast %279 : vector<8x1xi1> to vector<8x32xi1>
      %281 = arith.select %280, %138, %278 : vector<8x32xi1>, vector<8x32xf32>
      %c0_104 = arith.constant 0 : index
      %c0_105 = arith.constant 0 : index
      %c0_106 = arith.constant 0 : index
      %282 = vector.load %arg27[%c0_104, %c0_105, %c0_106] : memref<3x8x32xf32, #tpu.memory_space<vmem>>, vector<1x8x32xf32>
      %283 = vector.shape_cast %282 : vector<1x8x32xf32> to vector<8x32xf32>
      %284 = vector.shape_cast %281 : vector<8x32xf32> to vector<1x8x32xf32>
      tpu.vector_store %arg27[%c0_104, %c0_105, %c0_106], %284 {strides = array<i32>} : memref<3x8x32xf32, #tpu.memory_space<vmem>>, vector<1x8x32xf32>,
      %c0_107 = arith.constant 0 : index
      %c0_108 = arith.constant 0 : index
      %c0_109 = arith.constant 0 : index
      %285 = vector.load %arg28[%c0_107, %c0_108, %c0_109] : memref<3x8x32xf32, #tpu.memory_space<vmem>>, vector<1x8x32xf32>
      %286 = vector.shape_cast %285 : vector<1x8x32xf32> to vector<8x32xf32>
      %287 = vector.shape_cast %16 : vector<8x1xi1> to vector<8x1xi1>
      %288 = vector.broadcast %287 : vector<8x1xi1> to vector<8x32xi1>
      %289 = arith.select %288, %136, %286 : vector<8x32xi1>, vector<8x32xf32>
      %c0_110 = arith.constant 0 : index
      %c0_111 = arith.constant 0 : index
      %c0_112 = arith.constant 0 : index
      %290 = vector.load %arg28[%c0_110, %c0_111, %c0_112] : memref<3x8x32xf32, #tpu.memory_space<vmem>>, vector<1x8x32xf32>
      %291 = vector.shape_cast %290 : vector<1x8x32xf32> to vector<8x32xf32>
      %292 = vector.shape_cast %289 : vector<8x32xf32> to vector<1x8x32xf32>
      tpu.vector_store %arg28[%c0_110, %c0_111, %c0_112], %292 {strides = array<i32>} : memref<3x8x32xf32, #tpu.memory_space<vmem>>, vector<1x8x32xf32>,
      %c1_113 = arith.constant 1 : index
      %c0_114 = arith.constant 0 : index
      %c0_115 = arith.constant 0 : index
      %293 = vector.load %arg27[%c1_113, %c0_114, %c0_115] : memref<3x8x32xf32, #tpu.memory_space<vmem>>, vector<1x8x32xf32>
      %294 = vector.shape_cast %293 : vector<1x8x32xf32> to vector<8x32xf32>
      %295 = vector.shape_cast %16 : vector<8x1xi1> to vector<8x1xi1>
      %296 = vector.broadcast %295 : vector<8x1xi1> to vector<8x32xi1>
      %297 = arith.select %296, %202, %294 : vector<8x32xi1>, vector<8x32xf32>
      %c1_116 = arith.constant 1 : index
      %c0_117 = arith.constant 0 : index
      %c0_118 = arith.constant 0 : index
      %298 = vector.load %arg27[%c1_116, %c0_117, %c0_118] : memref<3x8x32xf32, #tpu.memory_space<vmem>>, vector<1x8x32xf32>
      %299 = vector.shape_cast %298 : vector<1x8x32xf32> to vector<8x32xf32>
      %300 = vector.shape_cast %297 : vector<8x32xf32> to vector<1x8x32xf32>
      tpu.vector_store %arg27[%c1_116, %c0_117, %c0_118], %300 {strides = array<i32>} : memref<3x8x32xf32, #tpu.memory_space<vmem>>, vector<1x8x32xf32>,
      %c1_119 = arith.constant 1 : index
      %c0_120 = arith.constant 0 : index
      %c0_121 = arith.constant 0 : index
      %301 = vector.load %arg28[%c1_119, %c0_120, %c0_121] : memref<3x8x32xf32, #tpu.memory_space<vmem>>, vector<1x8x32xf32>
      %302 = vector.shape_cast %301 : vector<1x8x32xf32> to vector<8x32xf32>
      %303 = vector.shape_cast %16 : vector<8x1xi1> to vector<8x1xi1>
      %304 = vector.broadcast %303 : vector<8x1xi1> to vector<8x32xi1>
      %305 = arith.select %304, %200, %302 : vector<8x32xi1>, vector<8x32xf32>
      %c1_122 = arith.constant 1 : index
      %c0_123 = arith.constant 0 : index
      %c0_124 = arith.constant 0 : index
      %306 = vector.load %arg28[%c1_122, %c0_123, %c0_124] : memref<3x8x32xf32, #tpu.memory_space<vmem>>, vector<1x8x32xf32>
      %307 = vector.shape_cast %306 : vector<1x8x32xf32> to vector<8x32xf32>
      %308 = vector.shape_cast %305 : vector<8x32xf32> to vector<1x8x32xf32>
      tpu.vector_store %arg28[%c1_122, %c0_123, %c0_124], %308 {strides = array<i32>} : memref<3x8x32xf32, #tpu.memory_space<vmem>>, vector<1x8x32xf32>,
      %c2_125 = arith.constant 2 : index
      %c0_126 = arith.constant 0 : index
      %c0_127 = arith.constant 0 : index
      %309 = vector.load %arg27[%c2_125, %c0_126, %c0_127] : memref<3x8x32xf32, #tpu.memory_space<vmem>>, vector<1x8x32xf32>
      %310 = vector.shape_cast %309 : vector<1x8x32xf32> to vector<8x32xf32>
      %311 = vector.shape_cast %16 : vector<8x1xi1> to vector<8x1xi1>
      %312 = vector.broadcast %311 : vector<8x1xi1> to vector<8x32xi1>
      %313 = arith.select %312, %266, %310 : vector<8x32xi1>, vector<8x32xf32>
      %c2_128 = arith.constant 2 : index
      %c0_129 = arith.constant 0 : index
      %c0_130 = arith.constant 0 : index
      %314 = vector.load %arg27[%c2_128, %c0_129, %c0_130] : memref<3x8x32xf32, #tpu.memory_space<vmem>>, vector<1x8x32xf32>
      %315 = vector.shape_cast %314 : vector<1x8x32xf32> to vector<8x32xf32>
      %316 = vector.shape_cast %313 : vector<8x32xf32> to vector<1x8x32xf32>
      tpu.vector_store %arg27[%c2_128, %c0_129, %c0_130], %316 {strides = array<i32>} : memref<3x8x32xf32, #tpu.memory_space<vmem>>, vector<1x8x32xf32>,
      %c2_131 = arith.constant 2 : index
      %c0_132 = arith.constant 0 : index
      %c0_133 = arith.constant 0 : index
      %317 = vector.load %arg28[%c2_131, %c0_132, %c0_133] : memref<3x8x32xf32, #tpu.memory_space<vmem>>, vector<1x8x32xf32>
      %318 = vector.shape_cast %317 : vector<1x8x32xf32> to vector<8x32xf32>
      %319 = vector.shape_cast %16 : vector<8x1xi1> to vector<8x1xi1>
      %320 = vector.broadcast %319 : vector<8x1xi1> to vector<8x32xi1>
      %321 = arith.select %320, %264, %318 : vector<8x32xi1>, vector<8x32xf32>
      %c2_134 = arith.constant 2 : index
      %c0_135 = arith.constant 0 : index
      %c0_136 = arith.constant 0 : index
      %322 = vector.load %arg28[%c2_134, %c0_135, %c0_136] : memref<3x8x32xf32, #tpu.memory_space<vmem>>, vector<1x8x32xf32>
      %323 = vector.shape_cast %322 : vector<1x8x32xf32> to vector<8x32xf32>
      %324 = vector.shape_cast %321 : vector<8x32xf32> to vector<1x8x32xf32>
      tpu.vector_store %arg28[%c2_134, %c0_135, %c0_136], %324 {strides = array<i32>} : memref<3x8x32xf32, #tpu.memory_space<vmem>>, vector<1x8x32xf32>,
      %c0_137 = arith.constant 0 : index
      %c0_138 = arith.constant 0 : index
      %325 = vector.load %arg21[%c0_137, %c0_138] : memref<32x128xf32, #tpu.memory_space<vmem>>, vector<32x128xf32>
      %cst_139 = arith.constant dense<0.000000e+00> : vector<8x128xf32>
      %326 = tpu.matmul %239, %325, %cst_139 {dimension_numbers = #tpu.dot_dimension_numbers<[1], [0], [0], [1], [0, 0, 1, 1], [], []>} : vector<8x32xf32>, vector<32x128xf32>, vector<8x128xf32> -> vector<8x128xf32>
      %c0_140 = arith.constant 0 : index
      %c0_141 = arith.constant 0 : index
      %327 = vector.load %arg22[%c0_140, %c0_141] : memref<1x128xf32, #tpu.memory_space<vmem>>, vector<1x128xf32>
      %328 = vector.broadcast %327 : vector<1x128xf32> to vector<8x128xf32>
      %329 = arith.addf %326, %328 : vector<8x128xf32>
      %cst_142 = arith.constant 0.000000e+00 : f32
      %330 = vector.shape_cast %16 : vector<8x1xi1> to vector<8x1xi1>
      %331 = vector.broadcast %330 : vector<8x1xi1> to vector<8x128xi1>
      %332 = vector.broadcast %cst_142 : f32 to vector<8x128xf32>
      %333 = arith.select %331, %329, %332 : vector<8x128xi1>, vector<8x128xf32>
      %334 = arith.index_cast %12 : i32 to index
      %c0_143 = arith.constant 0 : index
      %c0_144 = arith.constant 0 : index
      %335 = vector.load %arg23[%334, %c0_143, %c0_144] : memref<8x8x128xf32, #tpu.memory_space<vmem>>, vector<1x8x128xf32>
      %336 = vector.shape_cast %335 : vector<1x8x128xf32> to vector<8x128xf32>
      %337 = vector.shape_cast %333 : vector<8x128xf32> to vector<1x8x128xf32>
      tpu.vector_store %arg23[%334, %c0_143, %c0_144], %337 {strides = array<i32>} : memref<8x8x128xf32, #tpu.memory_space<vmem>>, vector<1x8x128xf32>,
      %cst_145 = arith.constant 0.000000e+00 : f32
      %338 = vector.shape_cast %16 : vector<8x1xi1> to vector<8x1xi1>
      %339 = vector.broadcast %338 : vector<8x1xi1> to vector<8x128xi1>
      %340 = vector.broadcast %cst_145 : f32 to vector<8x128xf32>
      %341 = arith.select %339, %50, %340 : vector<8x128xi1>, vector<8x128xf32>
      %342 = arith.index_cast %12 : i32 to index
      %c0_146 = arith.constant 0 : index
      %c0_147 = arith.constant 0 : index
      %343 = vector.load %arg24[%342, %c0_146, %c0_147] : memref<8x8x128xf32, #tpu.memory_space<vmem>>, vector<1x8x128xf32>
      %344 = vector.shape_cast %343 : vector<1x8x128xf32> to vector<8x128xf32>
      %345 = vector.shape_cast %341 : vector<8x128xf32> to vector<1x8x128xf32>
      tpu.vector_store %arg24[%342, %c0_146, %c0_147], %345 {strides = array<i32>} : memref<8x8x128xf32, #tpu.memory_space<vmem>>, vector<1x8x128xf32>,
    }
    %c8_i32_5 = arith.constant 8 : i32
    return
  }
  func.func @transform_0(%arg0: i32, %arg1: i32) -> (i32, i32) {
    %c0_i32 = arith.constant 0 : i32
    %c0_i32_0 = arith.constant 0 : i32
    return %arg0, %c0_i32 : i32, i32
  }
  func.func @transform_1(%arg0: i32, %arg1: i32) -> (i32, i32, i32) {
    %c0_i32 = arith.constant 0 : i32
    %c0_i32_0 = arith.constant 0 : i32
    %c0_i32_1 = arith.constant 0 : i32
    return %arg0, %c0_i32, %c0_i32_0 : i32, i32, i32
  }
  func.func @transform_2(%arg0: i32, %arg1: i32) -> (i32, i32) {
    %c0_i32 = arith.constant 0 : i32
    %c0_i32_0 = arith.constant 0 : i32
    return %arg0, %c0_i32 : i32, i32
  }
  func.func @transform_3(%arg0: i32, %arg1: i32) -> (i32, i32) {
    %c0_i32 = arith.constant 0 : i32
    %c0_i32_0 = arith.constant 0 : i32
    %c0_i32_1 = arith.constant 0 : i32
    return %c0_i32, %c0_i32_0 : i32, i32
  }
  func.func @transform_4(%arg0: i32, %arg1: i32) -> (i32, i32) {
    %c0_i32 = arith.constant 0 : i32
    %c0_i32_0 = arith.constant 0 : i32
    %c0_i32_1 = arith.constant 0 : i32
    return %c0_i32, %c0_i32_0 : i32, i32
  }
  func.func @transform_5(%arg0: i32, %arg1: i32) -> (i32, i32) {
    %c0_i32 = arith.constant 0 : i32
    %c0_i32_0 = arith.constant 0 : i32
    %c0_i32_1 = arith.constant 0 : i32
    return %c0_i32, %c0_i32_0 : i32, i32
  }
  func.func @transform_6(%arg0: i32, %arg1: i32) -> (i32, i32) {
    %c0_i32 = arith.constant 0 : i32
    %c0_i32_0 = arith.constant 0 : i32
    %c0_i32_1 = arith.constant 0 : i32
    return %c0_i32, %c0_i32_0 : i32, i32
  }
  func.func @transform_7(%arg0: i32, %arg1: i32) -> (i32, i32) {
    %c0_i32 = arith.constant 0 : i32
    %c0_i32_0 = arith.constant 0 : i32
    %c0_i32_1 = arith.constant 0 : i32
    return %c0_i32, %c0_i32_0 : i32, i32
  }
  func.func @transform_8(%arg0: i32, %arg1: i32) -> (i32, i32) {
    %c0_i32 = arith.constant 0 : i32
    %c0_i32_0 = arith.constant 0 : i32
    %c0_i32_1 = arith.constant 0 : i32
    return %c0_i32, %c0_i32_0 : i32, i32
  }
  func.func @transform_9(%arg0: i32, %arg1: i32) -> (i32, i32) {
    %c0_i32 = arith.constant 0 : i32
    %c0_i32_0 = arith.constant 0 : i32
    %c0_i32_1 = arith.constant 0 : i32
    return %c0_i32, %c0_i32_0 : i32, i32
  }
  func.func @transform_10(%arg0: i32, %arg1: i32) -> (i32, i32) {
    %c0_i32 = arith.constant 0 : i32
    %c0_i32_0 = arith.constant 0 : i32
    %c0_i32_1 = arith.constant 0 : i32
    return %c0_i32, %c0_i32_0 : i32, i32
  }
  func.func @transform_11(%arg0: i32, %arg1: i32) -> (i32, i32) {
    %c0_i32 = arith.constant 0 : i32
    %c0_i32_0 = arith.constant 0 : i32
    %c0_i32_1 = arith.constant 0 : i32
    return %c0_i32, %c0_i32_0 : i32, i32
  }
  func.func @transform_12(%arg0: i32, %arg1: i32) -> (i32, i32) {
    %c0_i32 = arith.constant 0 : i32
    %c0_i32_0 = arith.constant 0 : i32
    %c0_i32_1 = arith.constant 0 : i32
    return %c0_i32, %c0_i32_0 : i32, i32
  }
  func.func @transform_13(%arg0: i32, %arg1: i32) -> (i32, i32) {
    %c0_i32 = arith.constant 0 : i32
    %c0_i32_0 = arith.constant 0 : i32
    %c0_i32_1 = arith.constant 0 : i32
    return %c0_i32, %c0_i32_0 : i32, i32
  }
  func.func @transform_14(%arg0: i32, %arg1: i32) -> (i32, i32) {
    %c0_i32 = arith.constant 0 : i32
    %c0_i32_0 = arith.constant 0 : i32
    %c0_i32_1 = arith.constant 0 : i32
    return %c0_i32, %c0_i32_0 : i32, i32
  }
  func.func @transform_15(%arg0: i32, %arg1: i32) -> (i32, i32) {
    %c0_i32 = arith.constant 0 : i32
    %c0_i32_0 = arith.constant 0 : i32
    %c0_i32_1 = arith.constant 0 : i32
    return %c0_i32, %c0_i32_0 : i32, i32
  }
  func.func @transform_16(%arg0: i32, %arg1: i32) -> (i32, i32) {
    %c0_i32 = arith.constant 0 : i32
    %c0_i32_0 = arith.constant 0 : i32
    %c0_i32_1 = arith.constant 0 : i32
    return %c0_i32, %c0_i32_0 : i32, i32
  }
  func.func @transform_17(%arg0: i32, %arg1: i32) -> (i32, i32) {
    %c0_i32 = arith.constant 0 : i32
    %c0_i32_0 = arith.constant 0 : i32
    %c0_i32_1 = arith.constant 0 : i32
    return %c0_i32, %c0_i32_0 : i32, i32
  }
  func.func @transform_18(%arg0: i32, %arg1: i32) -> (i32, i32, i32) {
    %c0_i32 = arith.constant 0 : i32
    %c0_i32_0 = arith.constant 0 : i32
    %c0_i32_1 = arith.constant 0 : i32
    %c0_i32_2 = arith.constant 0 : i32
    return %c0_i32, %c0_i32_0, %c0_i32_1 : i32, i32, i32
  }
  func.func @transform_19(%arg0: i32, %arg1: i32) -> (i32, i32) {
    %c0_i32 = arith.constant 0 : i32
    %c0_i32_0 = arith.constant 0 : i32
    %c0_i32_1 = arith.constant 0 : i32
    return %c0_i32, %c0_i32_0 : i32, i32
  }
  func.func @transform_20(%arg0: i32, %arg1: i32) -> (i32, i32) {
    %c0_i32 = arith.constant 0 : i32
    %c0_i32_0 = arith.constant 0 : i32
    %c0_i32_1 = arith.constant 0 : i32
    return %c0_i32, %c0_i32_0 : i32, i32
  }
  func.func @transform_21(%arg0: i32, %arg1: i32) -> (i32, i32, i32) {
    %c0_i32 = arith.constant 0 : i32
    %c0_i32_0 = arith.constant 0 : i32
    return %arg1, %arg0, %c0_i32 : i32, i32, i32
  }
  func.func @transform_22(%arg0: i32, %arg1: i32) -> (i32, i32, i32) {
    %c0_i32 = arith.constant 0 : i32
    %c0_i32_0 = arith.constant 0 : i32
    return %arg1, %arg0, %c0_i32 : i32, i32, i32
  }
}

</mosaic_0001>

<llo_original>
// kernel: tpu_custom_call.1
$region0: #{tpu_custom_call.1}
  #allocation0 [shape = 'u32[]', space=smem, size = 0x4, offset = 0x4, fixed_abs, tag = 'smem constant byte address 0x4 - core index']
  #allocation1 [shape = 'u32[144,128]{1,0:T(1,128)}', space=vmem, size = 0x12000, scoped, tag = 'internal scratch']
  #allocation2 [shape = 'f32[8,32]{1,0:T(8,128)}', space=vmem, size = 0x1000, scoped, tag = 'scratch operand']
  #allocation3 [shape = 'f32[8,32]{1,0:T(8,128)}', space=vmem, size = 0x1000, scoped, tag = 'scratch operand']
  #allocation4 [shape = 'f32[3,8,32]{2,1,0:T(8,128)}', space=vmem, size = 0x3000, scoped, tag = 'scratch operand']
  #allocation5 [shape = 'f32[3,8,32]{2,1,0:T(8,128)}', space=vmem, size = 0x3000, scoped, tag = 'scratch operand']
  #allocation6 [shape = 'f32[8,128,32]{2,1,0:T(8,128)}', space=vmem, size = 0x80000, scoped, tag = 'scratch operand']
  #allocation7 [shape = 'f32[1,1]{1,0:T(1,128)S(1)}', space=vmem, size = 0x200, scoped, tag = 'scoped memory for tpu_custom_call.1']
  %s0 = inlined_call_operand.vmem [shape: s32[8,1], index: 0, kind: input, shape index: {}]
  %s1 = inlined_call_operand.vmem [shape: f32[8,128,32], index: 1, kind: input, shape index: {}]
  %s2 = inlined_call_operand.vmem [shape: f32[8,32], index: 2, kind: input, shape index: {}]
  %s3 = inlined_call_operand.vmem [shape: f32[1,32], index: 3, kind: input, shape index: {}]
  %s4 = inlined_call_operand.vmem [shape: f32[32,32], index: 4, kind: input, shape index: {}]
  %s5 = inlined_call_operand.vmem [shape: f32[1,32], index: 5, kind: input, shape index: {}]
  %s6 = inlined_call_operand.vmem [shape: f32[32,32], index: 6, kind: input, shape index: {}]
  %s7 = inlined_call_operand.vmem [shape: f32[1,32], index: 7, kind: input, shape index: {}]
  %s8 = inlined_call_operand.vmem [shape: f32[1,32], index: 8, kind: input, shape index: {}]
  %s9 = inlined_call_operand.<no memory space> [shape: f32[1,1], index: 9, kind: input, shape index: {}]
  %s10 = inlined_call_operand.vmem [shape: f32[32,32], index: 10, kind: input, shape index: {}]
  %s11 = inlined_call_operand.vmem [shape: f32[1,32], index: 11, kind: input, shape index: {}]
  %s12 = inlined_call_operand.vmem [shape: f32[32,32], index: 12, kind: input, shape index: {}]
  %s13 = inlined_call_operand.vmem [shape: f32[1,32], index: 13, kind: input, shape index: {}]
  %s14 = inlined_call_operand.vmem [shape: f32[32,32], index: 14, kind: input, shape index: {}]
  %s15 = inlined_call_operand.vmem [shape: f32[1,32], index: 15, kind: input, shape index: {}]
  %s16 = inlined_call_operand.vmem [shape: f32[64,768], index: 16, kind: input, shape index: {}]
  %s17 = inlined_call_operand.vmem [shape: f32[1,768], index: 17, kind: input, shape index: {}]
  %s18 = inlined_call_operand.vmem [shape: f32[3,32,256], index: 18, kind: input, shape index: {}]
  %s19 = inlined_call_operand.vmem [shape: f32[32,128], index: 19, kind: input, shape index: {}]
  %s20 = inlined_call_operand.vmem [shape: f32[1,128], index: 20, kind: input, shape index: {}]
  %s21 = inlined_call_operand.hbm [shape: f32[8,8,128], index: 21, kind: output, shape index: {0}]
  %s22 = inlined_call_operand.hbm [shape: f32[8,8,128], index: 22, kind: output, shape index: {1}]
  %23 = xla_tuple %s21, %s22
  %s24 = sld [smem:[#allocation0]]
  $region113: #{tpu_custom_call.1} parent=0
    _
  %s26 = ssub.s32 1, %s24
  %s27 = scalar_select 0, %s26, %s24
  %v28 = vstv %s9
  %29 = vst [vmem:[#allocation7] sm:$0x1] %v28
  $region1: #{tpu_custom_call.1} parent=0
    #allocation8 [shape = 'u8[32768]{0}', space=vmem, size = 0x8000, scoped, tag = 'output window, operand 0, single buffered']
    #allocation9 [shape = 's32[1]{0}', space=sflag, size = 0x4, scoped, tag = 'scoped memory for tpu_custom_call.1']
    #allocation10 [shape = 'u8[32768]{0}', space=vmem, size = 0x8000, scoped, tag = 'output window, operand 1, single buffered']
    #allocation11 [shape = 's32[1]{0}', space=sflag, size = 0x4, scoped, tag = 'scoped memory for tpu_custom_call.1']
    %30 = vsyncpa [#allocation9], 0
    %31 = vsyncpa [#allocation11], 0
    // Predicated region
    $region2: #{tpu_custom_call.1} parent=1 // pred_check
      _
    $region3: #{tpu_custom_call.1} parent=1 // pred_check_branch
      %33 = sbr.rel (0) target = $region5
    $region4: #{tpu_custom_call.1} parent=1 // pred_region
      _
    $region5: #{tpu_custom_call.1} parent=1 // pred_fallthru
      _
    // Predicated region
    $region6: #{tpu_custom_call.1} parent=1 // pred_check
      _
    $region7: #{tpu_custom_call.1} parent=1 // pred_check_branch
      %35 = sbr.rel (0) target = $region9
    $region8: #{tpu_custom_call.1} parent=1 // pred_region
      _
    $region9: #{tpu_custom_call.1} parent=1 // pred_fallthru
      _
    // Predicated region
    $region10: #{tpu_custom_call.1} parent=1 // pred_check
      _
    $region11: #{tpu_custom_call.1} parent=1 // pred_check_branch
      %37 = sbr.rel (0) target = $region13
    $region12: #{tpu_custom_call.1} parent=1 // pred_region
      _
    $region13: #{tpu_custom_call.1} parent=1 // pred_fallthru
      _
    // Predicated region
    $region14: #{tpu_custom_call.1} parent=1 // pred_check
      _
    $region15: #{tpu_custom_call.1} parent=1 // pred_check_branch
      %39 = sbr.rel (0) target = $region17
    $region16: #{tpu_custom_call.1} parent=1 // pred_region
      _
    $region17: #{tpu_custom_call.1} parent=1 // pred_fallthru
      _
    // Predicated region
    $region18: #{tpu_custom_call.1} parent=1 // pred_check
      _
    $region19: #{tpu_custom_call.1} parent=1 // pred_check_branch
      %41 = sbr.rel (0) target = $region21
    $region20: #{tpu_custom_call.1} parent=1 // pred_region
      _
    $region21: #{tpu_custom_call.1} parent=1 // pred_fallthru
      _
    // Predicated region
    $region22: #{tpu_custom_call.1} parent=1 // pred_check
      _
    $region23: #{tpu_custom_call.1} parent=1 // pred_check_branch
      %43 = sbr.rel (0) target = $region25
    $region24: #{tpu_custom_call.1} parent=1 // pred_region
      _
    $region25: #{tpu_custom_call.1} parent=1 // pred_fallthru
      _
    // Predicated region
    $region26: #{tpu_custom_call.1} parent=1 // pred_check
      _
    $region27: #{tpu_custom_call.1} parent=1 // pred_check_branch
      %45 = sbr.rel (0) target = $region29
    $region28: #{tpu_custom_call.1} parent=1 // pred_region
      _
    $region29: #{tpu_custom_call.1} parent=1 // pred_fallthru
      _
    // Predicated region
    $region30: #{tpu_custom_call.1} parent=1 // pred_check
      _
    $region31: #{tpu_custom_call.1} parent=1 // pred_check_branch
      %47 = sbr.rel (0) target = $region33
    $region32: #{tpu_custom_call.1} parent=1 // pred_region
      _
    $region33: #{tpu_custom_call.1} parent=1 // pred_fallthru
      _
    // Predicated region
    $region34: #{tpu_custom_call.1} parent=1 // pred_check
      _
    $region35: #{tpu_custom_call.1} parent=1 // pred_check_branch
      %49 = sbr.rel (0) target = $region37
    $region36: #{tpu_custom_call.1} parent=1 // pred_region
      _
    $region37: #{tpu_custom_call.1} parent=1 // pred_fallthru
      _
    // Predicated region
    $region38: #{tpu_custom_call.1} parent=1 // pred_check
      _
    $region39: #{tpu_custom_call.1} parent=1 // pred_check_branch
      %51 = sbr.rel (0) target = $region41
    $region40: #{tpu_custom_call.1} parent=1 // pred_region
      _
    $region41: #{tpu_custom_call.1} parent=1 // pred_fallthru
      _
    // Predicated region
    $region42: #{tpu_custom_call.1} parent=1 // pred_check
      _
    $region43: #{tpu_custom_call.1} parent=1 // pred_check_branch
      %53 = sbr.rel (0) target = $region45
    $region44: #{tpu_custom_call.1} parent=1 // pred_region
      _
    $region45: #{tpu_custom_call.1} parent=1 // pred_fallthru
      _
    // Predicated region
    $region46: #{tpu_custom_call.1} parent=1 // pred_check
      _
    $region47: #{tpu_custom_call.1} parent=1 // pred_check_branch
      %55 = sbr.rel (0) target = $region49
    $region48: #{tpu_custom_call.1} parent=1 // pred_region
      _
    $region49: #{tpu_custom_call.1} parent=1 // pred_fallthru
      _
    // Predicated region
    $region50: #{tpu_custom_call.1} parent=1 // pred_check
      _
    $region51: #{tpu_custom_call.1} parent=1 // pred_check_branch
      %57 = sbr.rel (0) target = $region53
    $region52: #{tpu_custom_call.1} parent=1 // pred_region
      _
    $region53: #{tpu_custom_call.1} parent=1 // pred_fallthru
      _
    // Predicated region
    $region54: #{tpu_custom_call.1} parent=1 // pred_check
      _
    $region55: #{tpu_custom_call.1} parent=1 // pred_check_branch
      %59 = sbr.rel (0) target = $region57
    $region56: #{tpu_custom_call.1} parent=1 // pred_region
      _
    $region57: #{tpu_custom_call.1} parent=1 // pred_fallthru
      _
    // Predicated region
    $region58: #{tpu_custom_call.1} parent=1 // pred_check
      _
    $region59: #{tpu_custom_call.1} parent=1 // pred_check_branch
      %61 = sbr.rel (0) target = $region61
    $region60: #{tpu_custom_call.1} parent=1 // pred_region
      _
    $region61: #{tpu_custom_call.1} parent=1 // pred_fallthru
      _
    // Predicated region
    $region62: #{tpu_custom_call.1} parent=1 // pred_check
      _
    $region63: #{tpu_custom_call.1} parent=1 // pred_check_branch
      %63 = sbr.rel (0) target = $region65
    $region64: #{tpu_custom_call.1} parent=1 // pred_region
      _
    $region65: #{tpu_custom_call.1} parent=1 // pred_fallthru
      _
    // Predicated region
    $region66: #{tpu_custom_call.1} parent=1 // pred_check
      _
    $region67: #{tpu_custom_call.1} parent=1 // pred_check_branch
      %65 = sbr.rel (0) target = $region69
    $region68: #{tpu_custom_call.1} parent=1 // pred_region
      _
    $region69: #{tpu_custom_call.1} parent=1 // pred_fallthru
      _
    // Predicated region
    $region70: #{tpu_custom_call.1} parent=1 // pred_check
      _
    $region71: #{tpu_custom_call.1} parent=1 // pred_check_branch
      %67 = sbr.rel (0) target = $region73
    $region72: #{tpu_custom_call.1} parent=1 // pred_region
      _
    $region73: #{tpu_custom_call.1} parent=1 // pred_fallthru
      _
    // Predicated region
    $region74: #{tpu_custom_call.1} parent=1 // pred_check
      _
    $region75: #{tpu_custom_call.1} parent=1 // pred_check_branch
      %69 = sbr.rel (0) target = $region77
    $region76: #{tpu_custom_call.1} parent=1 // pred_region
      _
    $region77: #{tpu_custom_call.1} parent=1 // pred_fallthru
      _
    // Predicated region
    $region78: #{tpu_custom_call.1} parent=1 // pred_check
      _
    $region79: #{tpu_custom_call.1} parent=1 // pred_check_branch
      %71 = sbr.rel (0) target = $region81
    $region80: #{tpu_custom_call.1} parent=1 // pred_region
      _
    $region81: #{tpu_custom_call.1} parent=1 // pred_fallthru
      _
    // Predicated region
    $region82: #{tpu_custom_call.1} parent=1 // pred_check
      _
    $region83: #{tpu_custom_call.1} parent=1 // pred_check_branch
      %73 = sbr.rel (0) target = $region85
    $region84: #{tpu_custom_call.1} parent=1 // pred_region
      _
    $region85: #{tpu_custom_call.1} parent=1 // pred_fallthru
      _
    %p74 = scmp.eq.s32.totalorder 0, 0
    // Predicated region
    $region86: #{tpu_custom_call.1} parent=1 // pred_check
      %p75 = pneg %p74
    $region87: #{tpu_custom_call.1} parent=1 // pred_check_branch
      %77 = sbr.rel (%p75) target = $region89
    $region88: #{tpu_custom_call.1} parent=1 // pred_region
      %v78 = vld [vmem:[%s1] sm:$0xff]
      %v79 = vld [vmem:[%s1 + $0x8] sm:$0xff]
      %v80 = vld [vmem:[%s1 + $0x10] sm:$0xff]
      %v81 = vld [vmem:[%s1 + $0x18] sm:$0xff]
      %v82 = vld [vmem:[%s1 + $0x20] sm:$0xff]
      %v83 = vld [vmem:[%s1 + $0x28] sm:$0xff]
      %v84 = vld [vmem:[%s1 + $0x30] sm:$0xff]
      %v85 = vld [vmem:[%s1 + $0x38] sm:$0xff]
      %v86 = vld [vmem:[%s1 + $0x40] sm:$0xff]
      %v87 = vld [vmem:[%s1 + $0x48] sm:$0xff]
      %v88 = vld [vmem:[%s1 + $0x50] sm:$0xff]
      %v89 = vld [vmem:[%s1 + $0x58] sm:$0xff]
      %v90 = vld [vmem:[%s1 + $0x60] sm:$0xff]
      %v91 = vld [vmem:[%s1 + $0x68] sm:$0xff]
      %v92 = vld [vmem:[%s1 + $0x70] sm:$0xff]
      %v93 = vld [vmem:[%s1 + $0x78] sm:$0xff]
      %v94 = vld [vmem:[%s1 + $0x80] sm:$0xff]
      %v95 = vld [vmem:[%s1 + $0x88] sm:$0xff]
      %v96 = vld [vmem:[%s1 + $0x90] sm:$0xff]
      %v97 = vld [vmem:[%s1 + $0x98] sm:$0xff]
      %v98 = vld [vmem:[%s1 + $0xa0] sm:$0xff]
      %v99 = vld [vmem:[%s1 + $0xa8] sm:$0xff]
      %v100 = vld [vmem:[%s1 + $0xb0] sm:$0xff]
      %v101 = vld [vmem:[%s1 + $0xb8] sm:$0xff]
      %v102 = vld [vmem:[%s1 + $0xc0] sm:$0xff]
      %v103 = vld [vmem:[%s1 + $0xc8] sm:$0xff]
      %v104 = vld [vmem:[%s1 + $0xd0] sm:$0xff]
      %v105 = vld [vmem:[%s1 + $0xd8] sm:$0xff]
      %v106 = vld [vmem:[%s1 + $0xe0] sm:$0xff]
      %v107 = vld [vmem:[%s1 + $0xe8] sm:$0xff]
      %v108 = vld [vmem:[%s1 + $0xf0] sm:$0xff]
      %v109 = vld [vmem:[%s1 + $0xf8] sm:$0xff]
      %v110 = vld [vmem:[%s1 + $0x100] sm:$0xff]
      %v111 = vld [vmem:[%s1 + $0x108] sm:$0xff]
      %v112 = vld [vmem:[%s1 + $0x110] sm:$0xff]
      %v113 = vld [vmem:[%s1 + $0x118] sm:$0xff]
      %v114 = vld [vmem:[%s1 + $0x120] sm:$0xff]
      %v115 = vld [vmem:[%s1 + $0x128] sm:$0xff]
      %v116 = vld [vmem:[%s1 + $0x130] sm:$0xff]
      %v117 = vld [vmem:[%s1 + $0x138] sm:$0xff]
      %v118 = vld [vmem:[%s1 + $0x140] sm:$0xff]
      %v119 = vld [vmem:[%s1 + $0x148] sm:$0xff]
      %v120 = vld [vmem:[%s1 + $0x150] sm:$0xff]
      %v121 = vld [vmem:[%s1 + $0x158] sm:$0xff]
      %v122 = vld [vmem:[%s1 + $0x160] sm:$0xff]
      %v123 = vld [vmem:[%s1 + $0x168] sm:$0xff]
      %v124 = vld [vmem:[%s1 + $0x170] sm:$0xff]
      %v125 = vld [vmem:[%s1 + $0x178] sm:$0xff]
      %v126 = vld [vmem:[%s1 + $0x180] sm:$0xff]
      %v127 = vld [vmem:[%s1 + $0x188] sm:$0xff]
      %v128 = vld [vmem:[%s1 + $0x190] sm:$0xff]
      %v129 = vld [vmem:[%s1 + $0x198] sm:$0xff]
      %v130 = vld [vmem:[%s1 + $0x1a0] sm:$0xff]
      %v131 = vld [vmem:[%s1 + $0x1a8] sm:$0xff]
      %v132 = vld [vmem:[%s1 + $0x1b0] sm:$0xff]
      %v133 = vld [vmem:[%s1 + $0x1b8] sm:$0xff]
      %v134 = vld [vmem:[%s1 + $0x1c0] sm:$0xff]
      %v135 = vld [vmem:[%s1 + $0x1c8] sm:$0xff]
      %v136 = vld [vmem:[%s1 + $0x1d0] sm:$0xff]
      %v137 = vld [vmem:[%s1 + $0x1d8] sm:$0xff]
      %v138 = vld [vmem:[%s1 + $0x1e0] sm:$0xff]
      %v139 = vld [vmem:[%s1 + $0x1e8] sm:$0xff]
      %v140 = vld [vmem:[%s1 + $0x1f0] sm:$0xff]
      %v141 = vld [vmem:[%s1 + $0x1f8] sm:$0xff]
      %v142 = vld [vmem:[%s1 + $0x200] sm:$0xff]
      %v143 = vld [vmem:[%s1 + $0x208] sm:$0xff]
      %v144 = vld [vmem:[%s1 + $0x210] sm:$0xff]
      %v145 = vld [vmem:[%s1 + $0x218] sm:$0xff]
      %v146 = vld [vmem:[%s1 + $0x220] sm:$0xff]
      %v147 = vld [vmem:[%s1 + $0x228] sm:$0xff]
      %v148 = vld [vmem:[%s1 + $0x230] sm:$0xff]
      %v149 = vld [vmem:[%s1 + $0x238] sm:$0xff]
      %v150 = vld [vmem:[%s1 + $0x240] sm:$0xff]
      %v151 = vld [vmem:[%s1 + $0x248] sm:$0xff]
      %v152 = vld [vmem:[%s1 + $0x250] sm:$0xff]
      %v153 = vld [vmem:[%s1 + $0x258] sm:$0xff]
      %v154 = vld [vmem:[%s1 + $0x260] sm:$0xff]
      %v155 = vld [vmem:[%s1 + $0x268] sm:$0xff]
      %v156 = vld [vmem:[%s1 + $0x270] sm:$0xff]
      %v157 = vld [vmem:[%s1 + $0x278] sm:$0xff]
      %v158 = vld [vmem:[%s1 + $0x280] sm:$0xff]
      %v159 = vld [vmem:[%s1 + $0x288] sm:$0xff]
      %v160 = vld [vmem:[%s1 + $0x290] sm:$0xff]
      %v161 = vld [vmem:[%s1 + $0x298] sm:$0xff]
      %v162 = vld [vmem:[%s1 + $0x2a0] sm:$0xff]
      %v163 = vld [vmem:[%s1 + $0x2a8] sm:$0xff]
      %v164 = vld [vmem:[%s1 + $0x2b0] sm:$0xff]
      %v165 = vld [vmem:[%s1 + $0x2b8] sm:$0xff]
      %v166 = vld [vmem:[%s1 + $0x2c0] sm:$0xff]
      %v167 = vld [vmem:[%s1 + $0x2c8] sm:$0xff]
      %v168 = vld [vmem:[%s1 + $0x2d0] sm:$0xff]
      %v169 = vld [vmem:[%s1 + $0x2d8] sm:$0xff]
      %v170 = vld [vmem:[%s1 + $0x2e0] sm:$0xff]
      %v171 = vld [vmem:[%s1 + $0x2e8] sm:$0xff]
      %v172 = vld [vmem:[%s1 + $0x2f0] sm:$0xff]
      %v173 = vld [vmem:[%s1 + $0x2f8] sm:$0xff]
      %v174 = vld [vmem:[%s1 + $0x300] sm:$0xff]
      %v175 = vld [vmem:[%s1 + $0x308] sm:$0xff]
      %v176 = vld [vmem:[%s1 + $0x310] sm:$0xff]
      %v177 = vld [vmem:[%s1 + $0x318] sm:$0xff]
      %v178 = vld [vmem:[%s1 + $0x320] sm:$0xff]
      %v179 = vld [vmem:[%s1 + $0x328] sm:$0xff]
      %v180 = vld [vmem:[%s1 + $0x330] sm:$0xff]
      %v181 = vld [vmem:[%s1 + $0x338] sm:$0xff]
      %v182 = vld [vmem:[%s1 + $0x340] sm:$0xff]
      %v183 = vld [vmem:[%s1 + $0x348] sm:$0xff]
      %v184 = vld [vmem:[%s1 + $0x350] sm:$0xff]
      %v185 = vld [vmem:[%s1 + $0x358] sm:$0xff]
      %v186 = vld [vmem:[%s1 + $0x360] sm:$0xff]
      %v187 = vld [vmem:[%s1 + $0x368] sm:$0xff]
      %v188 = vld [vmem:[%s1 + $0x370] sm:$0xff]
      %v189 = vld [vmem:[%s1 + $0x378] sm:$0xff]
      %v190 = vld [vmem:[%s1 + $0x380] sm:$0xff]
      %v191 = vld [vmem:[%s1 + $0x388] sm:$0xff]
      %v192 = vld [vmem:[%s1 + $0x390] sm:$0xff]
      %v193 = vld [vmem:[%s1 + $0x398] sm:$0xff]
      %v194 = vld [vmem:[%s1 + $0x3a0] sm:$0xff]
      %v195 = vld [vmem:[%s1 + $0x3a8] sm:$0xff]
      %v196 = vld [vmem:[%s1 + $0x3b0] sm:$0xff]
      %v197 = vld [vmem:[%s1 + $0x3b8] sm:$0xff]
      %v198 = vld [vmem:[%s1 + $0x3c0] sm:$0xff]
      %v199 = vld [vmem:[%s1 + $0x3c8] sm:$0xff]
      %v200 = vld [vmem:[%s1 + $0x3d0] sm:$0xff]
      %v201 = vld [vmem:[%s1 + $0x3d8] sm:$0xff]
      %v202 = vld [vmem:[%s1 + $0x3e0] sm:$0xff]
      %v203 = vld [vmem:[%s1 + $0x3e8] sm:$0xff]
      %v204 = vld [vmem:[%s1 + $0x3f0] sm:$0xff]
      %v205 = vld [vmem:[%s1 + $0x3f8] sm:$0xff]
      %v206 = vld [vmem:[%s4] sm:$0xff]
      %v207 = vld [vmem:[%s4 + $0x8] sm:$0xff]
      %v208 = vld [vmem:[%s4 + $0x10] sm:$0xff]
      %v209 = vld [vmem:[%s4 + $0x18] sm:$0xff]
      %v210 = vld [vmem:[%s5] sm:$0x1]
      %v212 = vlaneseq
      %v213 = vshrl.u32 %v212, 7
      %v214 = vsub.s32 0, %v213
      %v215 = vrot.slane %v210, %v214
      %vm217 = vcmask 261120
      %v219 = vsel %vm217, %v78, 0
      %v222 = vsel %vm217, %v79, 0
      %v225 = vsel %vm217, %v80, 0
      %v228 = vsel %vm217, %v81, 0
      %v231 = vsel %vm217, %v82, 0
      %v234 = vsel %vm217, %v83, 0
      %v237 = vsel %vm217, %v84, 0
      %v240 = vsel %vm217, %v85, 0
      %v243 = vsel %vm217, %v86, 0
      %v246 = vsel %vm217, %v87, 0
      %v249 = vsel %vm217, %v88, 0
      %v252 = vsel %vm217, %v89, 0
      %v255 = vsel %vm217, %v90, 0
      %v258 = vsel %vm217, %v91, 0
      %v261 = vsel %vm217, %v92, 0
      %v264 = vsel %vm217, %v93, 0
      %v267 = vsel %vm217, %v94, 0
      %v270 = vsel %vm217, %v95, 0
      %v273 = vsel %vm217, %v96, 0
      %v276 = vsel %vm217, %v97, 0
      %v279 = vsel %vm217, %v98, 0
      %v282 = vsel %vm217, %v99, 0
      %v285 = vsel %vm217, %v100, 0
      %v288 = vsel %vm217, %v101, 0
      %v291 = vsel %vm217, %v102, 0
      %v294 = vsel %vm217, %v103, 0
      %v297 = vsel %vm217, %v104, 0
      %v300 = vsel %vm217, %v105, 0
      %v303 = vsel %vm217, %v106, 0
      %v306 = vsel %vm217, %v107, 0
      %v309 = vsel %vm217, %v108, 0
      %v312 = vsel %vm217, %v109, 0
      %v315 = vsel %vm217, %v110, 0
      %v318 = vsel %vm217, %v111, 0
      %v321 = vsel %vm217, %v112, 0
      %v324 = vsel %vm217, %v113, 0
      %v327 = vsel %vm217, %v114, 0
      %v330 = vsel %vm217, %v115, 0
      %v333 = vsel %vm217, %v116, 0
      %v336 = vsel %vm217, %v117, 0
      %v339 = vsel %vm217, %v118, 0
      %v342 = vsel %vm217, %v119, 0
      %v345 = vsel %vm217, %v120, 0
      %v348 = vsel %vm217, %v121, 0
      %v351 = vsel %vm217, %v122, 0
      %v354 = vsel %vm217, %v123, 0
      %v357 = vsel %vm217, %v124, 0
      %v360 = vsel %vm217, %v125, 0
      %v363 = vsel %vm217, %v126, 0
      %v366 = vsel %vm217, %v127, 0
      %v369 = vsel %vm217, %v128, 0
      %v372 = vsel %vm217, %v129, 0
      %v375 = vsel %vm217, %v130, 0
      %v378 = vsel %vm217, %v131, 0
      %v381 = vsel %vm217, %v132, 0
      %v384 = vsel %vm217, %v133, 0
      %v387 = vsel %vm217, %v134, 0
      %v390 = vsel %vm217, %v135, 0
      %v393 = vsel %vm217, %v136, 0
      %v396 = vsel %vm217, %v137, 0
      %v399 = vsel %vm217, %v138, 0
      %v402 = vsel %vm217, %v139, 0
      %v405 = vsel %vm217, %v140, 0
      %v408 = vsel %vm217, %v141, 0
      %v411 = vsel %vm217, %v142, 0
      %v414 = vsel %vm217, %v143, 0
      %v417 = vsel %vm217, %v144, 0
      %v420 = vsel %vm217, %v145, 0
      %v423 = vsel %vm217, %v146, 0
      %v426 = vsel %vm217, %v147, 0
      %v429 = vsel %vm217, %v148, 0
      %v432 = vsel %vm217, %v149, 0
      %v435 = vsel %vm217, %v150, 0
      %v438 = vsel %vm217, %v151, 0
      %v441 = vsel %vm217, %v152, 0
      %v444 = vsel %vm217, %v153, 0
      %v447 = vsel %vm217, %v154, 0
      %v450 = vsel %vm217, %v155, 0
      %v453 = vsel %vm217, %v156, 0
      %v456 = vsel %vm217, %v157, 0
      %v459 = vsel %vm217, %v158, 0
      %v462 = vsel %vm217, %v159, 0
      %v465 = vsel %vm217, %v160, 0
      %v468 = vsel %vm217, %v161, 0
      %v471 = vsel %vm217, %v162, 0
      %v474 = vsel %vm217, %v163, 0
      %v477 = vsel %vm217, %v164, 0
      %v480 = vsel %vm217, %v165, 0
      %v483 = vsel %vm217, %v166, 0
      %v486 = vsel %vm217, %v167, 0
      %v489 = vsel %vm217, %v168, 0
      %v492 = vsel %vm217, %v169, 0
      %v495 = vsel %vm217, %v170, 0
      %v498 = vsel %vm217, %v171, 0
      %v501 = vsel %vm217, %v172, 0
      %v504 = vsel %vm217, %v173, 0
      %v507 = vsel %vm217, %v174, 0
      %v510 = vsel %vm217, %v175, 0
      %v513 = vsel %vm217, %v176, 0
      %v516 = vsel %vm217, %v177, 0
      %v519 = vsel %vm217, %v178, 0
      %v522 = vsel %vm217, %v179, 0
      %v525 = vsel %vm217, %v180, 0
      %v528 = vsel %vm217, %v181, 0
      %v531 = vsel %vm217, %v182, 0
      %v534 = vsel %vm217, %v183, 0
      %v537 = vsel %vm217, %v184, 0
      %v540 = vsel %vm217, %v185, 0
      %v543 = vsel %vm217, %v186, 0
      %v546 = vsel %vm217, %v187, 0
      %v549 = vsel %vm217, %v188, 0
      %v552 = vsel %vm217, %v189, 0
      %v555 = vsel %vm217, %v190, 0
      %v558 = vsel %vm217, %v191, 0
      %v561 = vsel %vm217, %v192, 0
      %v564 = vsel %vm217, %v193, 0
      %v567 = vsel %vm217, %v194, 0
      %v570 = vsel %vm217, %v195, 0
      %v573 = vsel %vm217, %v196, 0
      %v576 = vsel %vm217, %v197, 0
      %v579 = vsel %vm217, %v198, 0
      %v582 = vsel %vm217, %v199, 0
      %v585 = vsel %vm217, %v200, 0
      %v588 = vsel %vm217, %v201, 0
      %v591 = vsel %vm217, %v202, 0
      %v594 = vsel %vm217, %v203, 0
      %v597 = vsel %vm217, %v204, 0
      %v600 = vsel %vm217, %v205, 0
      %602 = vmatprep.subr.mxu0 0.0
      %603 = vmatpush1.msra.mxu0 %v206
      %604 = vmatprep.subr.mxu0 0.0
      %605 = vmatpush1.msra.mxu0 %v207
      %606 = vmatprep.subr.mxu0 0.0
      %607 = vmatpush1.msra.mxu0 %v208
      %608 = vmatprep.subr.mxu0 0.0
      %609 = vmatpush1.msra.mxu0 %v209
      %610 = vmatprep.subr.mxu0 0.0
      %611 = vmatpush1.msra.mxu0 0.0
      %612 = vmatprep.subr.mxu0 0.0
      %613 = vmatpush1.msra.mxu0 0.0
      %614 = vmatprep.subr.mxu0 0.0
      %615 = vmatpush1.msra.mxu0 0.0
      %616 = vmatprep.subr.mxu0 0.0
      %617 = vmatpush1.msra.mxu0 0.0
      %618 = vmatprep.subr.mxu0 0.0
      %619 = vmatpush1.msra.mxu0 0.0
      %620 = vmatprep.subr.mxu0 0.0
      %621 = vmatpush1.msra.mxu0 0.0
      %622 = vmatprep.subr.mxu0 0.0
      %623 = vmatpush1.msra.mxu0 0.0
      %624 = vmatprep.subr.mxu0 0.0
      %625 = vmatpush1.msra.mxu0 0.0
      %626 = vmatprep.subr.mxu0 0.0
      %627 = vmatpush1.msra.mxu0 0.0
      %628 = vmatprep.subr.mxu0 0.0
      %629 = vmatpush1.msra.mxu0 0.0
      %630 = vmatprep.subr.mxu0 0.0
      %631 = vmatpush1.msra.mxu0 0.0
      %632 = vmatprep.subr.mxu0 0.0
      %633 = vmatpush1.msra.mxu0 0.0
      %634 = vmatprep.subr.mxu0 0.0
      %635 = vmatpush1.msra.mxu0 0.0
      %636 = vmatprep.subr.mxu0 0.0
      %637 = vmatpush1.msra.mxu0 0.0
      %638 = vmatprep.subr.mxu0 0.0
      %639 = vmatpush1.msra.mxu0 0.0
      %640 = vmatprep.subr.mxu0 0.0
      %641 = vmatpush1.msra.mxu0 0.0
      %642 = vmatprep.subr.mxu0 0.0
      %643 = vmatpush1.msra.mxu0 0.0
      %644 = vmatprep.subr.mxu0 0.0
      %645 = vmatpush1.msra.mxu0 0.0
      %646 = vmatprep.subr.mxu0 0.0
      %647 = vmatpush1.msra.mxu0 0.0
      %648 = vmatprep.subr.mxu0 0.0
      %649 = vmatpush1.msra.mxu0 0.0
      %650 = vmatprep.subr.mxu0 0.0
      %651 = vmatpush1.msra.mxu0 0.0
      %652 = vmatprep.subr.mxu0 0.0
      %653 = vmatpush1.msra.mxu0 0.0
      %654 = vmatprep.subr.mxu0 0.0
      %655 = vmatpush1.msra.mxu0 0.0
      %656 = vmatprep.subr.mxu0 0.0
      %657 = vmatpush1.msra.mxu0 0.0
      %658 = vmatprep.subr.mxu0 0.0
      %659 = vmatpush1.msra.mxu0 0.0
      %660 = vmatprep.subr.mxu0 0.0
      %661 = vmatpush1.msra.mxu0 0.0
      %662 = vmatprep.subr.mxu0 0.0
      %663 = vmatpush1.msra.mxu0 0.0
      %664 = vmatprep.subr.mxu0 0.0
      %665 = vmatpush1.msra.mxu0 0.0
      %666 = vmatprep.mubr.f32.mxu0 0.0
      %667 = vmatmul.mubr.f32.gmra.mrb[0].mxu0 %v219
      %v668 = vpop.f32.mrb[0].mxu0
      %v669 = vadd.f32 %v215, %v668
      %v670 = vpop.f32.mrb[0].mxu0
      %671 = vmatprep.mubr.f32.mxu0 0.0
      %672 = vmatmul.mubr.f32.gmra.mrb[0].mxu0 %v222
      %v673 = vpop.f32.mrb[0].mxu0
      %v674 = vadd.f32 %v215, %v673
      %v675 = vpop.f32.mrb[0].mxu0
      %676 = vmatprep.mubr.f32.mxu0 0.0
      %677 = vmatmul.mubr.f32.gmra.mrb[0].mxu0 %v225
      %v678 = vpop.f32.mrb[0].mxu0
      %v679 = vadd.f32 %v215, %v678
      %v680 = vpop.f32.mrb[0].mxu0
      %681 = vmatprep.mubr.f32.mxu0 0.0
      %682 = vmatmul.mubr.f32.gmra.mrb[0].mxu0 %v228
      %v683 = vpop.f32.mrb[0].mxu0
      %v684 = vadd.f32 %v215, %v683
      %v685 = vpop.f32.mrb[0].mxu0
      %686 = vmatprep.mubr.f32.mxu0 0.0
      %687 = vmatmul.mubr.f32.gmra.mrb[0].mxu0 %v231
      %v688 = vpop.f32.mrb[0].mxu0
      %v689 = vadd.f32 %v215, %v688
      %v690 = vpop.f32.mrb[0].mxu0
      %691 = vmatprep.mubr.f32.mxu0 0.0
      %692 = vmatmul.mubr.f32.gmra.mrb[0].mxu0 %v234
      %v693 = vpop.f32.mrb[0].mxu0
      %v694 = vadd.f32 %v215, %v693
      %v695 = vpop.f32.mrb[0].mxu0
      %696 = vmatprep.mubr.f32.mxu0 0.0
      %697 = vmatmul.mubr.f32.gmra.mrb[0].mxu0 %v237
      %v698 = vpop.f32.mrb[0].mxu0
      %v699 = vadd.f32 %v215, %v698
      %v700 = vpop.f32.mrb[0].mxu0
      %701 = vmatprep.mubr.f32.mxu0 0.0
      %702 = vmatmul.mubr.f32.gmra.mrb[0].mxu0 %v240
      %v703 = vpop.f32.mrb[0].mxu0
      %v704 = vadd.f32 %v215, %v703
      %v705 = vpop.f32.mrb[0].mxu0
      %706 = vmatprep.mubr.f32.mxu0 0.0
      %707 = vmatmul.mubr.f32.gmra.mrb[0].mxu0 %v243
      %v708 = vpop.f32.mrb[0].mxu0
      %v709 = vadd.f32 %v215, %v708
      %v710 = vpop.f32.mrb[0].mxu0
      %711 = vmatprep.mubr.f32.mxu0 0.0
      %712 = vmatmul.mubr.f32.gmra.mrb[0].mxu0 %v246
      %v713 = vpop.f32.mrb[0].mxu0
      %v714 = vadd.f32 %v215, %v713
      %v715 = vpop.f32.mrb[0].mxu0
      %716 = vmatprep.mubr.f32.mxu0 0.0
      %717 = vmatmul.mubr.f32.gmra.mrb[0].mxu0 %v249
      %v718 = vpop.f32.mrb[0].mxu0
      %v719 = vadd.f32 %v215, %v718
      %v720 = vpop.f32.mrb[0].mxu0
      %721 = vmatprep.mubr.f32.mxu0 0.0
      %722 = vmatmul.mubr.f32.gmra.mrb[0].mxu0 %v252
      %v723 = vpop.f32.mrb[0].mxu0
      %v724 = vadd.f32 %v215, %v723
      %v725 = vpop.f32.mrb[0].mxu0
      %726 = vmatprep.mubr.f32.mxu0 0.0
      %727 = vmatmul.mubr.f32.gmra.mrb[0].mxu0 %v255
      %v728 = vpop.f32.mrb[0].mxu0
      %v729 = vadd.f32 %v215, %v728
      %v730 = vpop.f32.mrb[0].mxu0
      %731 = vmatprep.mubr.f32.mxu0 0.0
      %732 = vmatmul.mubr.f32.gmra.mrb[0].mxu0 %v258
      %v733 = vpop.f32.mrb[0].mxu0
      %v734 = vadd.f32 %v215, %v733
      %v735 = vpop.f32.mrb[0].mxu0
      %736 = vmatprep.mubr.f32.mxu0 0.0
      %737 = vmatmul.mubr.f32.gmra.mrb[0].mxu0 %v261
      %v738 = vpop.f32.mrb[0].mxu0
      %v739 = vadd.f32 %v215, %v738
      %v740 = vpop.f32.mrb[0].mxu0
      %741 = vmatprep.mubr.f32.mxu0 0.0
      %742 = vmatmul.mubr.f32.gmra.mrb[0].mxu0 %v264
      %v743 = vpop.f32.mrb[0].mxu0
      %v744 = vadd.f32 %v215, %v743
      %v745 = vpop.f32.mrb[0].mxu0
      %746 = vmatprep.mubr.f32.mxu0 0.0
      %747 = vmatmul.mubr.f32.gmra.mrb[0].mxu0 %v267
      %v748 = vpop.f32.mrb[0].mxu0
      %v749 = vadd.f32 %v215, %v748
      %v750 = vpop.f32.mrb[0].mxu0
      %751 = vmatprep.mubr.f32.mxu0 0.0
      %752 = vmatmul.mubr.f32.gmra.mrb[0].mxu0 %v270
      %v753 = vpop.f32.mrb[0].mxu0
      %v754 = vadd.f32 %v215, %v753
      %v755 = vpop.f32.mrb[0].mxu0
      %756 = vmatprep.mubr.f32.mxu0 0.0
      %757 = vmatmul.mubr.f32.gmra.mrb[0].mxu0 %v273
      %v758 = vpop.f32.mrb[0].mxu0
      %v759 = vadd.f32 %v215, %v758
      %v760 = vpop.f32.mrb[0].mxu0
      %761 = vmatprep.mubr.f32.mxu0 0.0
      %762 = vmatmul.mubr.f32.gmra.mrb[0].mxu0 %v276
      %v763 = vpop.f32.mrb[0].mxu0
      %v764 = vadd.f32 %v215, %v763
      %v765 = vpop.f32.mrb[0].mxu0
      %766 = vmatprep.mubr.f32.mxu0 0.0
      %767 = vmatmul.mubr.f32.gmra.mrb[0].mxu0 %v279
      %v768 = vpop.f32.mrb[0].mxu0
      %v769 = vadd.f32 %v215, %v768
      %v770 = vpop.f32.mrb[0].mxu0
      %771 = vmatprep.mubr.f32.mxu0 0.0
      %772 = vmatmul.mubr.f32.gmra.mrb[0].mxu0 %v282
      %v773 = vpop.f32.mrb[0].mxu0
      %v774 = vadd.f32 %v215, %v773
      %v775 = vpop.f32.mrb[0].mxu0
      %776 = vmatprep.mubr.f32.mxu0 0.0
      %777 = vmatmul.mubr.f32.gmra.mrb[0].mxu0 %v285
      %v778 = vpop.f32.mrb[0].mxu0
      %v779 = vadd.f32 %v215, %v778
      %v780 = vpop.f32.mrb[0].mxu0
      %781 = vmatprep.mubr.f32.mxu0 0.0
      %782 = vmatmul.mubr.f32.gmra.mrb[0].mxu0 %v288
      %v783 = vpop.f32.mrb[0].mxu0
      %v784 = vadd.f32 %v215, %v783
      %v785 = vpop.f32.mrb[0].mxu0
      %786 = vmatprep.mubr.f32.mxu0 0.0
      %787 = vmatmul.mubr.f32.gmra.mrb[0].mxu0 %v291
      %v788 = vpop.f32.mrb[0].mxu0
      %v789 = vadd.f32 %v215, %v788
      %v790 = vpop.f32.mrb[0].mxu0
      %791 = vmatprep.mubr.f32.mxu0 0.0
      %792 = vmatmul.mubr.f32.gmra.mrb[0].mxu0 %v294
      %v793 = vpop.f32.mrb[0].mxu0
      %v794 = vadd.f32 %v215, %v793
      %v795 = vpop.f32.mrb[0].mxu0
      %796 = vmatprep.mubr.f32.mxu0 0.0
      %797 = vmatmul.mubr.f32.gmra.mrb[0].mxu0 %v297
      %v798 = vpop.f32.mrb[0].mxu0
      %v799 = vadd.f32 %v215, %v798
      %v800 = vpop.f32.mrb[0].mxu0
      %801 = vmatprep.mubr.f32.mxu0 0.0
      %802 = vmatmul.mubr.f32.gmra.mrb[0].mxu0 %v300
      %v803 = vpop.f32.mrb[0].mxu0
      %v804 = vadd.f32 %v215, %v803
      %v805 = vpop.f32.mrb[0].mxu0
      %806 = vmatprep.mubr.f32.mxu0 0.0
      %807 = vmatmul.mubr.f32.gmra.mrb[0].mxu0 %v303
      %v808 = vpop.f32.mrb[0].mxu0
      %v809 = vadd.f32 %v215, %v808
      %v810 = vpop.f32.mrb[0].mxu0
      %811 = vmatprep.mubr.f32.mxu0 0.0
      %812 = vmatmul.mubr.f32.gmra.mrb[0].mxu0 %v306
      %v813 = vpop.f32.mrb[0].mxu0
      %v814 = vadd.f32 %v215, %v813
      %v815 = vpop.f32.mrb[0].mxu0
      %816 = vmatprep.mubr.f32.mxu0 0.0
      %817 = vmatmul.mubr.f32.gmra.mrb[0].mxu0 %v309
      %v818 = vpop.f32.mrb[0].mxu0
      %v819 = vadd.f32 %v215, %v818
      %v820 = vpop.f32.mrb[0].mxu0
      %821 = vmatprep.mubr.f32.mxu0 0.0
      %822 = vmatmul.mubr.f32.gmra.mrb[0].mxu0 %v312
      %v823 = vpop.f32.mrb[0].mxu0
      %v824 = vadd.f32 %v215, %v823
      %v825 = vpop.f32.mrb[0].mxu0
      %826 = vmatprep.mubr.f32.mxu0 0.0
      %827 = vmatmul.mubr.f32.gmra.mrb[0].mxu0 %v315
      %v828 = vpop.f32.mrb[0].mxu0
      %v829 = vadd.f32 %v215, %v828
      %v830 = vpop.f32.mrb[0].mxu0
      %831 = vmatprep.mubr.f32.mxu0 0.0
      %832 = vmatmul.mubr.f32.gmra.mrb[0].mxu0 %v318
      %v833 = vpop.f32.mrb[0].mxu0
      %v834 = vadd.f32 %v215, %v833
      %v835 = vpop.f32.mrb[0].mxu0
      %836 = vmatprep.mubr.f32.mxu0 0.0
      %837 = vmatmul.mubr.f32.gmra.mrb[0].mxu0 %v321
      %v838 = vpop.f32.mrb[0].mxu0
      %v839 = vadd.f32 %v215, %v838
      %v840 = vpop.f32.mrb[0].mxu0
      %841 = vmatprep.mubr.f32.mxu0 0.0
      %842 = vmatmul.mubr.f32.gmra.mrb[0].mxu0 %v324
      %v843 = vpop.f32.mrb[0].mxu0
      %v844 = vadd.f32 %v215, %v843
      %v845 = vpop.f32.mrb[0].mxu0
      %846 = vmatprep.mubr.f32.mxu0 0.0
      %847 = vmatmul.mubr.f32.gmra.mrb[0].mxu0 %v327
      %v848 = vpop.f32.mrb[0].mxu0
      %v849 = vadd.f32 %v215, %v848
      %v850 = vpop.f32.mrb[0].mxu0
      %851 = vmatprep.mubr.f32.mxu0 0.0
      %852 = vmatmul.mubr.f32.gmra.mrb[0].mxu0 %v330
      %v853 = vpop.f32.mrb[0].mxu0
      %v854 = vadd.f32 %v215, %v853
      %v855 = vpop.f32.mrb[0].mxu0
      %856 = vmatprep.mubr.f32.mxu0 0.0
      %857 = vmatmul.mubr.f32.gmra.mrb[0].mxu0 %v333
      %v858 = vpop.f32.mrb[0].mxu0
      %v859 = vadd.f32 %v215, %v858
      %v860 = vpop.f32.mrb[0].mxu0
      %861 = vmatprep.mubr.f32.mxu0 0.0
      %862 = vmatmul.mubr.f32.gmra.mrb[0].mxu0 %v336
      %v863 = vpop.f32.mrb[0].mxu0
      %v864 = vadd.f32 %v215, %v863
      %v865 = vpop.f32.mrb[0].mxu0
      %866 = vmatprep.mubr.f32.mxu0 0.0
      %867 = vmatmul.mubr.f32.gmra.mrb[0].mxu0 %v339
      %v868 = vpop.f32.mrb[0].mxu0
      %v869 = vadd.f32 %v215, %v868
      %v870 = vpop.f32.mrb[0].mxu0
      %871 = vmatprep.mubr.f32.mxu0 0.0
      %872 = vmatmul.mubr.f32.gmra.mrb[0].mxu0 %v342
      %v873 = vpop.f32.mrb[0].mxu0
      %v874 = vadd.f32 %v215, %v873
      %v875 = vpop.f32.mrb[0].mxu0
      %876 = vmatprep.mubr.f32.mxu0 0.0
      %877 = vmatmul.mubr.f32.gmra.mrb[0].mxu0 %v345
      %v878 = vpop.f32.mrb[0].mxu0
      %v879 = vadd.f32 %v215, %v878
      %v880 = vpop.f32.mrb[0].mxu0
      %881 = vmatprep.mubr.f32.mxu0 0.0
      %882 = vmatmul.mubr.f32.gmra.mrb[0].mxu0 %v348
      %v883 = vpop.f32.mrb[0].mxu0
      %v884 = vadd.f32 %v215, %v883
      %v885 = vpop.f32.mrb[0].mxu0
      %886 = vmatprep.mubr.f32.mxu0 0.0
      %887 = vmatmul.mubr.f32.gmra.mrb[0].mxu0 %v351
      %v888 = vpop.f32.mrb[0].mxu0
      %v889 = vadd.f32 %v215, %v888
      %v890 = vpop.f32.mrb[0].mxu0
      %891 = vmatprep.mubr.f32.mxu0 0.0
      %892 = vmatmul.mubr.f32.gmra.mrb[0].mxu0 %v354
      %v893 = vpop.f32.mrb[0].mxu0
      %v894 = vadd.f32 %v215, %v893
      %v895 = vpop.f32.mrb[0].mxu0
      %896 = vmatprep.mubr.f32.mxu0 0.0
      %897 = vmatmul.mubr.f32.gmra.mrb[0].mxu0 %v357
      %v898 = vpop.f32.mrb[0].mxu0
      %v899 = vadd.f32 %v215, %v898
      %v900 = vpop.f32.mrb[0].mxu0
      %901 = vmatprep.mubr.f32.mxu0 0.0
      %902 = vmatmul.mubr.f32.gmra.mrb[0].mxu0 %v360
      %v903 = vpop.f32.mrb[0].mxu0
      %v904 = vadd.f32 %v215, %v903
      %v905 = vpop.f32.mrb[0].mxu0
      %906 = vmatprep.mubr.f32.mxu0 0.0
      %907 = vmatmul.mubr.f32.gmra.mrb[0].mxu0 %v363
      %v908 = vpop.f32.mrb[0].mxu0
      %v909 = vadd.f32 %v215, %v908
      %v910 = vpop.f32.mrb[0].mxu0
      %911 = vmatprep.mubr.f32.mxu0 0.0
      %912 = vmatmul.mubr.f32.gmra.mrb[0].mxu0 %v366
      %v913 = vpop.f32.mrb[0].mxu0
      %v914 = vadd.f32 %v215, %v913
      %v915 = vpop.f32.mrb[0].mxu0
      %916 = vmatprep.mubr.f32.mxu0 0.0
      %917 = vmatmul.mubr.f32.gmra.mrb[0].mxu0 %v369
      %v918 = vpop.f32.mrb[0].mxu0
      %v919 = vadd.f32 %v215, %v918
      %v920 = vpop.f32.mrb[0].mxu0
      %921 = vmatprep.mubr.f32.mxu0 0.0
      %922 = vmatmul.mubr.f32.gmra.mrb[0].mxu0 %v372
      %v923 = vpop.f32.mrb[0].mxu0
      %v924 = vadd.f32 %v215, %v923
      %v925 = vpop.f32.mrb[0].mxu0
      %926 = vmatprep.mubr.f32.mxu0 0.0
      %927 = vmatmul.mubr.f32.gmra.mrb[0].mxu0 %v375
      %v928 = vpop.f32.mrb[0].mxu0
      %v929 = vadd.f32 %v215, %v928
      %v930 = vpop.f32.mrb[0].mxu0
      %931 = vmatprep.mubr.f32.mxu0 0.0
      %932 = vmatmul.mubr.f32.gmra.mrb[0].mxu0 %v378
      %v933 = vpop.f32.mrb[0].mxu0
      %v934 = vadd.f32 %v215, %v933
      %v935 = vpop.f32.mrb[0].mxu0
      %936 = vmatprep.mubr.f32.mxu0 0.0
      %937 = vmatmul.mubr.f32.gmra.mrb[0].mxu0 %v381
      %v938 = vpop.f32.mrb[0].mxu0
      %v939 = vadd.f32 %v215, %v938
      %v940 = vpop.f32.mrb[0].mxu0
      %941 = vmatprep.mubr.f32.mxu0 0.0
      %942 = vmatmul.mubr.f32.gmra.mrb[0].mxu0 %v384
      %v943 = vpop.f32.mrb[0].mxu0
      %v944 = vadd.f32 %v215, %v943
      %v945 = vpop.f32.mrb[0].mxu0
      %946 = vmatprep.mubr.f32.mxu0 0.0
      %947 = vmatmul.mubr.f32.gmra.mrb[0].mxu0 %v387
      %v948 = vpop.f32.mrb[0].mxu0
      %v949 = vadd.f32 %v215, %v948
      %v950 = vpop.f32.mrb[0].mxu0
      %951 = vmatprep.mubr.f32.mxu0 0.0
      %952 = vmatmul.mubr.f32.gmra.mrb[0].mxu0 %v390
      %v953 = vpop.f32.mrb[0].mxu0
      %v954 = vadd.f32 %v215, %v953
      %v955 = vpop.f32.mrb[0].mxu0
      %956 = vmatprep.mubr.f32.mxu0 0.0
      %957 = vmatmul.mubr.f32.gmra.mrb[0].mxu0 %v393
      %v958 = vpop.f32.mrb[0].mxu0
      %v959 = vadd.f32 %v215, %v958
      %v960 = vpop.f32.mrb[0].mxu0
      %961 = vmatprep.mubr.f32.mxu0 0.0
      %962 = vmatmul.mubr.f32.gmra.mrb[0].mxu0 %v396
      %v963 = vpop.f32.mrb[0].mxu0
      %v964 = vadd.f32 %v215, %v963
      %v965 = vpop.f32.mrb[0].mxu0
      %966 = vmatprep.mubr.f32.mxu0 0.0
      %967 = vmatmul.mubr.f32.gmra.mrb[0].mxu0 %v399
      %v968 = vpop.f32.mrb[0].mxu0
      %v969 = vadd.f32 %v215, %v968
      %v970 = vpop.f32.mrb[0].mxu0
      %971 = vmatprep.mubr.f32.mxu0 0.0
      %972 = vmatmul.mubr.f32.gmra.mrb[0].mxu0 %v402
      %v973 = vpop.f32.mrb[0].mxu0
      %v974 = vadd.f32 %v215, %v973
      %v975 = vpop.f32.mrb[0].mxu0
      %976 = vmatprep.mubr.f32.mxu0 0.0
      %977 = vmatmul.mubr.f32.gmra.mrb[0].mxu0 %v405
      %v978 = vpop.f32.mrb[0].mxu0
      %v979 = vadd.f32 %v215, %v978
      %v980 = vpop.f32.mrb[0].mxu0
      %981 = vmatprep.mubr.f32.mxu0 0.0
      %982 = vmatmul.mubr.f32.gmra.mrb[0].mxu0 %v408
      %v983 = vpop.f32.mrb[0].mxu0
      %v984 = vadd.f32 %v215, %v983
      %v985 = vpop.f32.mrb[0].mxu0
      %986 = vmatprep.mubr.f32.mxu0 0.0
      %987 = vmatmul.mubr.f32.gmra.mrb[0].mxu0 %v411
      %v988 = vpop.f32.mrb[0].mxu0
      %v989 = vadd.f32 %v215, %v988
      %v990 = vpop.f32.mrb[0].mxu0
      %991 = vmatprep.mubr.f32.mxu0 0.0
      %992 = vmatmul.mubr.f32.gmra.mrb[0].mxu0 %v414
      %v993 = vpop.f32.mrb[0].mxu0
      %v994 = vadd.f32 %v215, %v993
      %v995 = vpop.f32.mrb[0].mxu0
      %996 = vmatprep.mubr.f32.mxu0 0.0
      %997 = vmatmul.mubr.f32.gmra.mrb[0].mxu0 %v417
      %v998 = vpop.f32.mrb[0].mxu0
      %v999 = vadd.f32 %v215, %v998
      %v1000 = vpop.f32.mrb[0].mxu0
      %1001 = vmatprep.mubr.f32.mxu0 0.0
      %1002 = vmatmul.mubr.f32.gmra.mrb[0].mxu0 %v420
      %v1003 = vpop.f32.mrb[0].mxu0
      %v1004 = vadd.f32 %v215, %v1003
      %v1005 = vpop.f32.mrb[0].mxu0
      %1006 = vmatprep.mubr.f32.mxu0 0.0
      %1007 = vmatmul.mubr.f32.gmra.mrb[0].mxu0 %v423
      %v1008 = vpop.f32.mrb[0].mxu0
      %v1009 = vadd.f32 %v215, %v1008
      %v1010 = vpop.f32.mrb[0].mxu0
      %1011 = vmatprep.mubr.f32.mxu0 0.0
      %1012 = vmatmul.mubr.f32.gmra.mrb[0].mxu0 %v426
      %v1013 = vpop.f32.mrb[0].mxu0
      %v1014 = vadd.f32 %v215, %v1013
      %v1015 = vpop.f32.mrb[0].mxu0
      %1016 = vmatprep.mubr.f32.mxu0 0.0
      %1017 = vmatmul.mubr.f32.gmra.mrb[0].mxu0 %v429
      %v1018 = vpop.f32.mrb[0].mxu0
      %v1019 = vadd.f32 %v215, %v1018
      %v1020 = vpop.f32.mrb[0].mxu0
      %1021 = vmatprep.mubr.f32.mxu0 0.0
      %1022 = vmatmul.mubr.f32.gmra.mrb[0].mxu0 %v432
      %v1023 = vpop.f32.mrb[0].mxu0
      %v1024 = vadd.f32 %v215, %v1023
      %v1025 = vpop.f32.mrb[0].mxu0
      %1026 = vmatprep.mubr.f32.mxu0 0.0
      %1027 = vmatmul.mubr.f32.gmra.mrb[0].mxu0 %v435
      %v1028 = vpop.f32.mrb[0].mxu0
      %v1029 = vadd.f32 %v215, %v1028
      %v1030 = vpop.f32.mrb[0].mxu0
      %1031 = vmatprep.mubr.f32.mxu0 0.0
      %1032 = vmatmul.mubr.f32.gmra.mrb[0].mxu0 %v438
      %v1033 = vpop.f32.mrb[0].mxu0
      %v1034 = vadd.f32 %v215, %v1033
      %v1035 = vpop.f32.mrb[0].mxu0
      %1036 = vmatprep.mubr.f32.mxu0 0.0
      %1037 = vmatmul.mubr.f32.gmra.mrb[0].mxu0 %v441
      %v1038 = vpop.f32.mrb[0].mxu0
      %v1039 = vadd.f32 %v215, %v1038
      %v1040 = vpop.f32.mrb[0].mxu0
      %1041 = vmatprep.mubr.f32.mxu0 0.0
      %1042 = vmatmul.mubr.f32.gmra.mrb[0].mxu0 %v444
      %v1043 = vpop.f32.mrb[0].mxu0
      %v1044 = vadd.f32 %v215, %v1043
      %v1045 = vpop.f32.mrb[0].mxu0
      %1046 = vmatprep.mubr.f32.mxu0 0.0
      %1047 = vmatmul.mubr.f32.gmra.mrb[0].mxu0 %v447
      %v1048 = vpop.f32.mrb[0].mxu0
      %v1049 = vadd.f32 %v215, %v1048
      %v1050 = vpop.f32.mrb[0].mxu0
      %1051 = vmatprep.mubr.f32.mxu0 0.0
      %1052 = vmatmul.mubr.f32.gmra.mrb[0].mxu0 %v450
      %v1053 = vpop.f32.mrb[0].mxu0
      %v1054 = vadd.f32 %v215, %v1053
      %v1055 = vpop.f32.mrb[0].mxu0
      %1056 = vmatprep.mubr.f32.mxu0 0.0
      %1057 = vmatmul.mubr.f32.gmra.mrb[0].mxu0 %v453
      %v1058 = vpop.f32.mrb[0].mxu0
      %v1059 = vadd.f32 %v215, %v1058
      %v1060 = vpop.f32.mrb[0].mxu0
      %1061 = vmatprep.mubr.f32.mxu0 0.0
      %1062 = vmatmul.mubr.f32.gmra.mrb[0].mxu0 %v456
      %v1063 = vpop.f32.mrb[0].mxu0
      %v1064 = vadd.f32 %v215, %v1063
      %v1065 = vpop.f32.mrb[0].mxu0
      %1066 = vmatprep.mubr.f32.mxu0 0.0
      %1067 = vmatmul.mubr.f32.gmra.mrb[0].mxu0 %v459
      %v1068 = vpop.f32.mrb[0].mxu0
      %v1069 = vadd.f32 %v215, %v1068
      %v1070 = vpop.f32.mrb[0].mxu0
      %1071 = vmatprep.mubr.f32.mxu0 0.0
      %1072 = vmatmul.mubr.f32.gmra.mrb[0].mxu0 %v462
      %v1073 = vpop.f32.mrb[0].mxu0
      %v1074 = vadd.f32 %v215, %v1073
      %v1075 = vpop.f32.mrb[0].mxu0
      %1076 = vmatprep.mubr.f32.mxu0 0.0
      %1077 = vmatmul.mubr.f32.gmra.mrb[0].mxu0 %v465
      %v1078 = vpop.f32.mrb[0].mxu0
      %v1079 = vadd.f32 %v215, %v1078
      %v1080 = vpop.f32.mrb[0].mxu0
      %1081 = vmatprep.mubr.f32.mxu0 0.0
      %1082 = vmatmul.mubr.f32.gmra.mrb[0].mxu0 %v468
      %v1083 = vpop.f32.mrb[0].mxu0
      %v1084 = vadd.f32 %v215, %v1083
      %v1085 = vpop.f32.mrb[0].mxu0
      %1086 = vmatprep.mubr.f32.mxu0 0.0
      %1087 = vmatmul.mubr.f32.gmra.mrb[0].mxu0 %v471
      %v1088 = vpop.f32.mrb[0].mxu0
      %v1089 = vadd.f32 %v215, %v1088
      %v1090 = vpop.f32.mrb[0].mxu0
      %1091 = vmatprep.mubr.f32.mxu0 0.0
      %1092 = vmatmul.mubr.f32.gmra.mrb[0].mxu0 %v474
      %v1093 = vpop.f32.mrb[0].mxu0
      %v1094 = vadd.f32 %v215, %v1093
      %v1095 = vpop.f32.mrb[0].mxu0
      %1096 = vmatprep.mubr.f32.mxu0 0.0
      %1097 = vmatmul.mubr.f32.gmra.mrb[0].mxu0 %v477
      %v1098 = vpop.f32.mrb[0].mxu0
      %v1099 = vadd.f32 %v215, %v1098
      %v1100 = vpop.f32.mrb[0].mxu0
      %1101 = vmatprep.mubr.f32.mxu0 0.0
      %1102 = vmatmul.mubr.f32.gmra.mrb[0].mxu0 %v480
      %v1103 = vpop.f32.mrb[0].mxu0
      %v1104 = vadd.f32 %v215, %v1103
      %v1105 = vpop.f32.mrb[0].mxu0
      %1106 = vmatprep.mubr.f32.mxu0 0.0
      %1107 = vmatmul.mubr.f32.gmra.mrb[0].mxu0 %v483
      %v1108 = vpop.f32.mrb[0].mxu0
      %v1109 = vadd.f32 %v215, %v1108
      %v1110 = vpop.f32.mrb[0].mxu0
      %1111 = vmatprep.mubr.f32.mxu0 0.0
      %1112 = vmatmul.mubr.f32.gmra.mrb[0].mxu0 %v486
      %v1113 = vpop.f32.mrb[0].mxu0
      %v1114 = vadd.f32 %v215, %v1113
      %v1115 = vpop.f32.mrb[0].mxu0
      %1116 = vmatprep.mubr.f32.mxu0 0.0
      %1117 = vmatmul.mubr.f32.gmra.mrb[0].mxu0 %v489
      %v1118 = vpop.f32.mrb[0].mxu0
      %v1119 = vadd.f32 %v215, %v1118
      %v1120 = vpop.f32.mrb[0].mxu0
      %1121 = vmatprep.mubr.f32.mxu0 0.0
      %1122 = vmatmul.mubr.f32.gmra.mrb[0].mxu0 %v492
      %v1123 = vpop.f32.mrb[0].mxu0
      %v1124 = vadd.f32 %v215, %v1123
      %v1125 = vpop.f32.mrb[0].mxu0
      %1126 = vmatprep.mubr.f32.mxu0 0.0
      %1127 = vmatmul.mubr.f32.gmra.mrb[0].mxu0 %v495
      %v1128 = vpop.f32.mrb[0].mxu0
      %v1129 = vadd.f32 %v215, %v1128
      %v1130 = vpop.f32.mrb[0].mxu0
      %1131 = vmatprep.mubr.f32.mxu0 0.0
      %1132 = vmatmul.mubr.f32.gmra.mrb[0].mxu0 %v498
      %v1133 = vpop.f32.mrb[0].mxu0
      %v1134 = vadd.f32 %v215, %v1133
      %v1135 = vpop.f32.mrb[0].mxu0
      %1136 = vmatprep.mubr.f32.mxu0 0.0
      %1137 = vmatmul.mubr.f32.gmra.mrb[0].mxu0 %v501
      %v1138 = vpop.f32.mrb[0].mxu0
      %v1139 = vadd.f32 %v215, %v1138
      %v1140 = vpop.f32.mrb[0].mxu0
      %1141 = vmatprep.mubr.f32.mxu0 0.0
      %1142 = vmatmul.mubr.f32.gmra.mrb[0].mxu0 %v504
      %v1143 = vpop.f32.mrb[0].mxu0
      %v1144 = vadd.f32 %v215, %v1143
      %v1145 = vpop.f32.mrb[0].mxu0
      %1146 = vmatprep.mubr.f32.mxu0 0.0
      %1147 = vmatmul.mubr.f32.gmra.mrb[0].mxu0 %v507
      %v1148 = vpop.f32.mrb[0].mxu0
      %v1149 = vadd.f32 %v215, %v1148
      %v1150 = vpop.f32.mrb[0].mxu0
      %1151 = vmatprep.mubr.f32.mxu0 0.0
      %1152 = vmatmul.mubr.f32.gmra.mrb[0].mxu0 %v510
      %v1153 = vpop.f32.mrb[0].mxu0
      %v1154 = vadd.f32 %v215, %v1153
      %v1155 = vpop.f32.mrb[0].mxu0
      %1156 = vmatprep.mubr.f32.mxu0 0.0
      %1157 = vmatmul.mubr.f32.gmra.mrb[0].mxu0 %v513
      %v1158 = vpop.f32.mrb[0].mxu0
      %v1159 = vadd.f32 %v215, %v1158
      %v1160 = vpop.f32.mrb[0].mxu0
      %1161 = vmatprep.mubr.f32.mxu0 0.0
      %1162 = vmatmul.mubr.f32.gmra.mrb[0].mxu0 %v516
      %v1163 = vpop.f32.mrb[0].mxu0
      %v1164 = vadd.f32 %v215, %v1163
      %v1165 = vpop.f32.mrb[0].mxu0
      %1166 = vmatprep.mubr.f32.mxu0 0.0
      %1167 = vmatmul.mubr.f32.gmra.mrb[0].mxu0 %v519
      %v1168 = vpop.f32.mrb[0].mxu0
      %v1169 = vadd.f32 %v215, %v1168
      %v1170 = vpop.f32.mrb[0].mxu0
      %1171 = vmatprep.mubr.f32.mxu0 0.0
      %1172 = vmatmul.mubr.f32.gmra.mrb[0].mxu0 %v522
      %v1173 = vpop.f32.mrb[0].mxu0
      %v1174 = vadd.f32 %v215, %v1173
      %v1175 = vpop.f32.mrb[0].mxu0
      %1176 = vmatprep.mubr.f32.mxu0 0.0
      %1177 = vmatmul.mubr.f32.gmra.mrb[0].mxu0 %v525
      %v1178 = vpop.f32.mrb[0].mxu0
      %v1179 = vadd.f32 %v215, %v1178
      %v1180 = vpop.f32.mrb[0].mxu0
      %1181 = vmatprep.mubr.f32.mxu0 0.0
      %1182 = vmatmul.mubr.f32.gmra.mrb[0].mxu0 %v528
      %v1183 = vpop.f32.mrb[0].mxu0
      %v1184 = vadd.f32 %v215, %v1183
      %v1185 = vpop.f32.mrb[0].mxu0
      %1186 = vmatprep.mubr.f32.mxu0 0.0
      %1187 = vmatmul.mubr.f32.gmra.mrb[0].mxu0 %v531
      %v1188 = vpop.f32.mrb[0].mxu0
      %v1189 = vadd.f32 %v215, %v1188
      %v1190 = vpop.f32.mrb[0].mxu0
      %1191 = vmatprep.mubr.f32.mxu0 0.0
      %1192 = vmatmul.mubr.f32.gmra.mrb[0].mxu0 %v534
      %v1193 = vpop.f32.mrb[0].mxu0
      %v1194 = vadd.f32 %v215, %v1193
      %v1195 = vpop.f32.mrb[0].mxu0
      %1196 = vmatprep.mubr.f32.mxu0 0.0
      %1197 = vmatmul.mubr.f32.gmra.mrb[0].mxu0 %v537
      %v1198 = vpop.f32.mrb[0].mxu0
      %v1199 = vadd.f32 %v215, %v1198
      %v1200 = vpop.f32.mrb[0].mxu0
      %1201 = vmatprep.mubr.f32.mxu0 0.0
      %1202 = vmatmul.mubr.f32.gmra.mrb[0].mxu0 %v540
      %v1203 = vpop.f32.mrb[0].mxu0
      %v1204 = vadd.f32 %v215, %v1203
      %v1205 = vpop.f32.mrb[0].mxu0
      %1206 = vmatprep.mubr.f32.mxu0 0.0
      %1207 = vmatmul.mubr.f32.gmra.mrb[0].mxu0 %v543
      %v1208 = vpop.f32.mrb[0].mxu0
      %v1209 = vadd.f32 %v215, %v1208
      %v1210 = vpop.f32.mrb[0].mxu0
      %1211 = vmatprep.mubr.f32.mxu0 0.0
      %1212 = vmatmul.mubr.f32.gmra.mrb[0].mxu0 %v546
      %v1213 = vpop.f32.mrb[0].mxu0
      %v1214 = vadd.f32 %v215, %v1213
      %v1215 = vpop.f32.mrb[0].mxu0
      %1216 = vmatprep.mubr.f32.mxu0 0.0
      %1217 = vmatmul.mubr.f32.gmra.mrb[0].mxu0 %v549
      %v1218 = vpop.f32.mrb[0].mxu0
      %v1219 = vadd.f32 %v215, %v1218
      %v1220 = vpop.f32.mrb[0].mxu0
      %1221 = vmatprep.mubr.f32.mxu0 0.0
      %1222 = vmatmul.mubr.f32.gmra.mrb[0].mxu0 %v552
      %v1223 = vpop.f32.mrb[0].mxu0
      %v1224 = vadd.f32 %v215, %v1223
      %v1225 = vpop.f32.mrb[0].mxu0
      %1226 = vmatprep.mubr.f32.mxu0 0.0
      %1227 = vmatmul.mubr.f32.gmra.mrb[0].mxu0 %v555
      %v1228 = vpop.f32.mrb[0].mxu0
      %v1229 = vadd.f32 %v215, %v1228
      %v1230 = vpop.f32.mrb[0].mxu0
      %1231 = vmatprep.mubr.f32.mxu0 0.0
      %1232 = vmatmul.mubr.f32.gmra.mrb[0].mxu0 %v558
      %v1233 = vpop.f32.mrb[0].mxu0
      %v1234 = vadd.f32 %v215, %v1233
      %v1235 = vpop.f32.mrb[0].mxu0
      %1236 = vmatprep.mubr.f32.mxu0 0.0
      %1237 = vmatmul.mubr.f32.gmra.mrb[0].mxu0 %v561
      %v1238 = vpop.f32.mrb[0].mxu0
      %v1239 = vadd.f32 %v215, %v1238
      %v1240 = vpop.f32.mrb[0].mxu0
      %1241 = vmatprep.mubr.f32.mxu0 0.0
      %1242 = vmatmul.mubr.f32.gmra.mrb[0].mxu0 %v564
      %v1243 = vpop.f32.mrb[0].mxu0
      %v1244 = vadd.f32 %v215, %v1243
      %v1245 = vpop.f32.mrb[0].mxu0
      %1246 = vmatprep.mubr.f32.mxu0 0.0
      %1247 = vmatmul.mubr.f32.gmra.mrb[0].mxu0 %v567
      %v1248 = vpop.f32.mrb[0].mxu0
      %v1249 = vadd.f32 %v215, %v1248
      %v1250 = vpop.f32.mrb[0].mxu0
      %1251 = vmatprep.mubr.f32.mxu0 0.0
      %1252 = vmatmul.mubr.f32.gmra.mrb[0].mxu0 %v570
      %v1253 = vpop.f32.mrb[0].mxu0
      %v1254 = vadd.f32 %v215, %v1253
      %v1255 = vpop.f32.mrb[0].mxu0
      %1256 = vmatprep.mubr.f32.mxu0 0.0
      %1257 = vmatmul.mubr.f32.gmra.mrb[0].mxu0 %v573
      %v1258 = vpop.f32.mrb[0].mxu0
      %v1259 = vadd.f32 %v215, %v1258
      %v1260 = vpop.f32.mrb[0].mxu0
      %1261 = vmatprep.mubr.f32.mxu0 0.0
      %1262 = vmatmul.mubr.f32.gmra.mrb[0].mxu0 %v576
      %v1263 = vpop.f32.mrb[0].mxu0
      %v1264 = vadd.f32 %v215, %v1263
      %v1265 = vpop.f32.mrb[0].mxu0
      %1266 = vmatprep.mubr.f32.mxu0 0.0
      %1267 = vmatmul.mubr.f32.gmra.mrb[0].mxu0 %v579
      %v1268 = vpop.f32.mrb[0].mxu0
      %v1269 = vadd.f32 %v215, %v1268
      %v1270 = vpop.f32.mrb[0].mxu0
      %1271 = vmatprep.mubr.f32.mxu0 0.0
      %1272 = vmatmul.mubr.f32.gmra.mrb[0].mxu0 %v582
      %v1273 = vpop.f32.mrb[0].mxu0
      %v1274 = vadd.f32 %v215, %v1273
      %v1275 = vpop.f32.mrb[0].mxu0
      %1276 = vmatprep.mubr.f32.mxu0 0.0
      %1277 = vmatmul.mubr.f32.gmra.mrb[0].mxu0 %v585
      %v1278 = vpop.f32.mrb[0].mxu0
      %v1279 = vadd.f32 %v215, %v1278
      %v1280 = vpop.f32.mrb[0].mxu0
      %1281 = vmatprep.mubr.f32.mxu0 0.0
      %1282 = vmatmul.mubr.f32.gmra.mrb[0].mxu0 %v588
      %v1283 = vpop.f32.mrb[0].mxu0
      %v1284 = vadd.f32 %v215, %v1283
      %v1285 = vpop.f32.mrb[0].mxu0
      %1286 = vmatprep.mubr.f32.mxu0 0.0
      %1287 = vmatmul.mubr.f32.gmra.mrb[0].mxu0 %v591
      %v1288 = vpop.f32.mrb[0].mxu0
      %v1289 = vadd.f32 %v215, %v1288
      %v1290 = vpop.f32.mrb[0].mxu0
      %1291 = vmatprep.mubr.f32.mxu0 0.0
      %1292 = vmatmul.mubr.f32.gmra.mrb[0].mxu0 %v594
      %v1293 = vpop.f32.mrb[0].mxu0
      %v1294 = vadd.f32 %v215, %v1293
      %v1295 = vpop.f32.mrb[0].mxu0
      %1296 = vmatprep.mubr.f32.mxu0 0.0
      %1297 = vmatmul.mubr.f32.gmra.mrb[0].mxu0 %v597
      %v1298 = vpop.f32.mrb[0].mxu0
      %v1299 = vadd.f32 %v215, %v1298
      %v1300 = vpop.f32.mrb[0].mxu0
      %1301 = vmatprep.mubr.f32.mxu0 0.0
      %1302 = vmatmul.mubr.f32.gmra.mrb[0].mxu0 %v600
      %v1303 = vpop.f32.mrb[0].mxu0
      %v1304 = vadd.f32 %v215, %v1303
      %v1305 = vpop.f32.mrb[0].mxu0
      %1306 = vdwg.mxu0
      %1307 = vst.msk [vmem:[#allocation6] sm:$0xff] %vm217, %v669
      %1308 = vst.msk [vmem:[#allocation6 + $0x8] sm:$0xff] %vm217, %v674
      %1309 = vst.msk [vmem:[#allocation6 + $0x10] sm:$0xff] %vm217, %v679
      %1310 = vst.msk [vmem:[#allocation6 + $0x18] sm:$0xff] %vm217, %v684
      %1311 = vst.msk [vmem:[#allocation6 + $0x20] sm:$0xff] %vm217, %v689
      %1312 = vst.msk [vmem:[#allocation6 + $0x28] sm:$0xff] %vm217, %v694
      %1313 = vst.msk [vmem:[#allocation6 + $0x30] sm:$0xff] %vm217, %v699
      %1314 = vst.msk [vmem:[#allocation6 + $0x38] sm:$0xff] %vm217, %v704
      %1315 = vst.msk [vmem:[#allocation6 + $0x40] sm:$0xff] %vm217, %v709
      %1316 = vst.msk [vmem:[#allocation6 + $0x48] sm:$0xff] %vm217, %v714
      %1317 = vst.msk [vmem:[#allocation6 + $0x50] sm:$0xff] %vm217, %v719
      %1318 = vst.msk [vmem:[#allocation6 + $0x58] sm:$0xff] %vm217, %v724
      %1319 = vst.msk [vmem:[#allocation6 + $0x60] sm:$0xff] %vm217, %v729
      %1320 = vst.msk [vmem:[#allocation6 + $0x68] sm:$0xff] %vm217, %v734
      %1321 = vst.msk [vmem:[#allocation6 + $0x70] sm:$0xff] %vm217, %v739
      %1322 = vst.msk [vmem:[#allocation6 + $0x78] sm:$0xff] %vm217, %v744
      %1323 = vst.msk [vmem:[#allocation6 + $0x80] sm:$0xff] %vm217, %v749
      %1324 = vst.msk [vmem:[#allocation6 + $0x88] sm:$0xff] %vm217, %v754
      %1325 = vst.msk [vmem:[#allocation6 + $0x90] sm:$0xff] %vm217, %v759
      %1326 = vst.msk [vmem:[#allocation6 + $0x98] sm:$0xff] %vm217, %v764
      %1327 = vst.msk [vmem:[#allocation6 + $0xa0] sm:$0xff] %vm217, %v769
      %1328 = vst.msk [vmem:[#allocation6 + $0xa8] sm:$0xff] %vm217, %v774
      %1329 = vst.msk [vmem:[#allocation6 + $0xb0] sm:$0xff] %vm217, %v779
      %1330 = vst.msk [vmem:[#allocation6 + $0xb8] sm:$0xff] %vm217, %v784
      %1331 = vst.msk [vmem:[#allocation6 + $0xc0] sm:$0xff] %vm217, %v789
      %1332 = vst.msk [vmem:[#allocation6 + $0xc8] sm:$0xff] %vm217, %v794
      %1333 = vst.msk [vmem:[#allocation6 + $0xd0] sm:$0xff] %vm217, %v799
      %1334 = vst.msk [vmem:[#allocation6 + $0xd8] sm:$0xff] %vm217, %v804
      %1335 = vst.msk [vmem:[#allocation6 + $0xe0] sm:$0xff] %vm217, %v809
      %1336 = vst.msk [vmem:[#allocation6 + $0xe8] sm:$0xff] %vm217, %v814
      %1337 = vst.msk [vmem:[#allocation6 + $0xf0] sm:$0xff] %vm217, %v819
      %1338 = vst.msk [vmem:[#allocation6 + $0xf8] sm:$0xff] %vm217, %v824
      %1339 = vst.msk [vmem:[#allocation6 + $0x100] sm:$0xff] %vm217, %v829
      %1340 = vst.msk [vmem:[#allocation6 + $0x108] sm:$0xff] %vm217, %v834
      %1341 = vst.msk [vmem:[#allocation6 + $0x110] sm:$0xff] %vm217, %v839
      %1342 = vst.msk [vmem:[#allocation6 + $0x118] sm:$0xff] %vm217, %v844
      %1343 = vst.msk [vmem:[#allocation6 + $0x120] sm:$0xff] %vm217, %v849
      %1344 = vst.msk [vmem:[#allocation6 + $0x128] sm:$0xff] %vm217, %v854
      %1345 = vst.msk [vmem:[#allocation6 + $0x130] sm:$0xff] %vm217, %v859
      %1346 = vst.msk [vmem:[#allocation6 + $0x138] sm:$0xff] %vm217, %v864
      %1347 = vst.msk [vmem:[#allocation6 + $0x140] sm:$0xff] %vm217, %v869
      %1348 = vst.msk [vmem:[#allocation6 + $0x148] sm:$0xff] %vm217, %v874
      %1349 = vst.msk [vmem:[#allocation6 + $0x150] sm:$0xff] %vm217, %v879
      %1350 = vst.msk [vmem:[#allocation6 + $0x158] sm:$0xff] %vm217, %v884
      %1351 = vst.msk [vmem:[#allocation6 + $0x160] sm:$0xff] %vm217, %v889
      %1352 = vst.msk [vmem:[#allocation6 + $0x168] sm:$0xff] %vm217, %v894
      %1353 = vst.msk [vmem:[#allocation6 + $0x170] sm:$0xff] %vm217, %v899
      %1354 = vst.msk [vmem:[#allocation6 + $0x178] sm:$0xff] %vm217, %v904
      %1355 = vst.msk [vmem:[#allocation6 + $0x180] sm:$0xff] %vm217, %v909
      %1356 = vst.msk [vmem:[#allocation6 + $0x188] sm:$0xff] %vm217, %v914
      %1357 = vst.msk [vmem:[#allocation6 + $0x190] sm:$0xff] %vm217, %v919
      %1358 = vst.msk [vmem:[#allocation6 + $0x198] sm:$0xff] %vm217, %v924
      %1359 = vst.msk [vmem:[#allocation6 + $0x1a0] sm:$0xff] %vm217, %v929
      %1360 = vst.msk [vmem:[#allocation6 + $0x1a8] sm:$0xff] %vm217, %v934
      %1361 = vst.msk [vmem:[#allocation6 + $0x1b0] sm:$0xff] %vm217, %v939
      %1362 = vst.msk [vmem:[#allocation6 + $0x1b8] sm:$0xff] %vm217, %v944
      %1363 = vst.msk [vmem:[#allocation6 + $0x1c0] sm:$0xff] %vm217, %v949
      %1364 = vst.msk [vmem:[#allocation6 + $0x1c8] sm:$0xff] %vm217, %v954
      %1365 = vst.msk [vmem:[#allocation6 + $0x1d0] sm:$0xff] %vm217, %v959
      %1366 = vst.msk [vmem:[#allocation6 + $0x1d8] sm:$0xff] %vm217, %v964
      %1367 = vst.msk [vmem:[#allocation6 + $0x1e0] sm:$0xff] %vm217, %v969
      %1368 = vst.msk [vmem:[#allocation6 + $0x1e8] sm:$0xff] %vm217, %v974
      %1369 = vst.msk [vmem:[#allocation6 + $0x1f0] sm:$0xff] %vm217, %v979
      %1370 = vst.msk [vmem:[#allocation6 + $0x1f8] sm:$0xff] %vm217, %v984
      %1371 = vst.msk [vmem:[#allocation6 + $0x200] sm:$0xff] %vm217, %v989
      %1372 = vst.msk [vmem:[#allocation6 + $0x208] sm:$0xff] %vm217, %v994
      %1373 = vst.msk [vmem:[#allocation6 + $0x210] sm:$0xff] %vm217, %v999
      %1374 = vst.msk [vmem:[#allocation6 + $0x218] sm:$0xff] %vm217, %v1004
      %1375 = vst.msk [vmem:[#allocation6 + $0x220] sm:$0xff] %vm217, %v1009
      %1376 = vst.msk [vmem:[#allocation6 + $0x228] sm:$0xff] %vm217, %v1014
      %1377 = vst.msk [vmem:[#allocation6 + $0x230] sm:$0xff] %vm217, %v1019
      %1378 = vst.msk [vmem:[#allocation6 + $0x238] sm:$0xff] %vm217, %v1024
      %1379 = vst.msk [vmem:[#allocation6 + $0x240] sm:$0xff] %vm217, %v1029
      %1380 = vst.msk [vmem:[#allocation6 + $0x248] sm:$0xff] %vm217, %v1034
      %1381 = vst.msk [vmem:[#allocation6 + $0x250] sm:$0xff] %vm217, %v1039
      %1382 = vst.msk [vmem:[#allocation6 + $0x258] sm:$0xff] %vm217, %v1044
      %1383 = vst.msk [vmem:[#allocation6 + $0x260] sm:$0xff] %vm217, %v1049
      %1384 = vst.msk [vmem:[#allocation6 + $0x268] sm:$0xff] %vm217, %v1054
      %1385 = vst.msk [vmem:[#allocation6 + $0x270] sm:$0xff] %vm217, %v1059
      %1386 = vst.msk [vmem:[#allocation6 + $0x278] sm:$0xff] %vm217, %v1064
      %1387 = vst.msk [vmem:[#allocation6 + $0x280] sm:$0xff] %vm217, %v1069
      %1388 = vst.msk [vmem:[#allocation6 + $0x288] sm:$0xff] %vm217, %v1074
      %1389 = vst.msk [vmem:[#allocation6 + $0x290] sm:$0xff] %vm217, %v1079
      %1390 = vst.msk [vmem:[#allocation6 + $0x298] sm:$0xff] %vm217, %v1084
      %1391 = vst.msk [vmem:[#allocation6 + $0x2a0] sm:$0xff] %vm217, %v1089
      %1392 = vst.msk [vmem:[#allocation6 + $0x2a8] sm:$0xff] %vm217, %v1094
      %1393 = vst.msk [vmem:[#allocation6 + $0x2b0] sm:$0xff] %vm217, %v1099
      %1394 = vst.msk [vmem:[#allocation6 + $0x2b8] sm:$0xff] %vm217, %v1104
      %1395 = vst.msk [vmem:[#allocation6 + $0x2c0] sm:$0xff] %vm217, %v1109
      %1396 = vst.msk [vmem:[#allocation6 + $0x2c8] sm:$0xff] %vm217, %v1114
      %1397 = vst.msk [vmem:[#allocation6 + $0x2d0] sm:$0xff] %vm217, %v1119
      %1398 = vst.msk [vmem:[#allocation6 + $0x2d8] sm:$0xff] %vm217, %v1124
      %1399 = vst.msk [vmem:[#allocation6 + $0x2e0] sm:$0xff] %vm217, %v1129
      %1400 = vst.msk [vmem:[#allocation6 + $0x2e8] sm:$0xff] %vm217, %v1134
      %1401 = vst.msk [vmem:[#allocation6 + $0x2f0] sm:$0xff] %vm217, %v1139
      %1402 = vst.msk [vmem:[#allocation6 + $0x2f8] sm:$0xff] %vm217, %v1144
      %1403 = vst.msk [vmem:[#allocation6 + $0x300] sm:$0xff] %vm217, %v1149
      %1404 = vst.msk [vmem:[#allocation6 + $0x308] sm:$0xff] %vm217, %v1154
      %1405 = vst.msk [vmem:[#allocation6 + $0x310] sm:$0xff] %vm217, %v1159
      %1406 = vst.msk [vmem:[#allocation6 + $0x318] sm:$0xff] %vm217, %v1164
      %1407 = vst.msk [vmem:[#allocation6 + $0x320] sm:$0xff] %vm217, %v1169
      %1408 = vst.msk [vmem:[#allocation6 + $0x328] sm:$0xff] %vm217, %v1174
      %1409 = vst.msk [vmem:[#allocation6 + $0x330] sm:$0xff] %vm217, %v1179
      %1410 = vst.msk [vmem:[#allocation6 + $0x338] sm:$0xff] %vm217, %v1184
      %1411 = vst.msk [vmem:[#allocation6 + $0x340] sm:$0xff] %vm217, %v1189
      %1412 = vst.msk [vmem:[#allocation6 + $0x348] sm:$0xff] %vm217, %v1194
      %1413 = vst.msk [vmem:[#allocation6 + $0x350] sm:$0xff] %vm217, %v1199
      %1414 = vst.msk [vmem:[#allocation6 + $0x358] sm:$0xff] %vm217, %v1204
      %1415 = vst.msk [vmem:[#allocation6 + $0x360] sm:$0xff] %vm217, %v1209
      %1416 = vst.msk [vmem:[#allocation6 + $0x368] sm:$0xff] %vm217, %v1214
      %1417 = vst.msk [vmem:[#allocation6 + $0x370] sm:$0xff] %vm217, %v1219
      %1418 = vst.msk [vmem:[#allocation6 + $0x378] sm:$0xff] %vm217, %v1224
      %1419 = vst.msk [vmem:[#allocation6 + $0x380] sm:$0xff] %vm217, %v1229
      %1420 = vst.msk [vmem:[#allocation6 + $0x388] sm:$0xff] %vm217, %v1234
      %1421 = vst.msk [vmem:[#allocation6 + $0x390] sm:$0xff] %vm217, %v1239
      %1422 = vst.msk [vmem:[#allocation6 + $0x398] sm:$0xff] %vm217, %v1244
      %1423 = vst.msk [vmem:[#allocation6 + $0x3a0] sm:$0xff] %vm217, %v1249
      %1424 = vst.msk [vmem:[#allocation6 + $0x3a8] sm:$0xff] %vm217, %v1254
      %1425 = vst.msk [vmem:[#allocation6 + $0x3b0] sm:$0xff] %vm217, %v1259
      %1426 = vst.msk [vmem:[#allocation6 + $0x3b8] sm:$0xff] %vm217, %v1264
      %1427 = vst.msk [vmem:[#allocation6 + $0x3c0] sm:$0xff] %vm217, %v1269
      %1428 = vst.msk [vmem:[#allocation6 + $0x3c8] sm:$0xff] %vm217, %v1274
      %1429 = vst.msk [vmem:[#allocation6 + $0x3d0] sm:$0xff] %vm217, %v1279
      %1430 = vst.msk [vmem:[#allocation6 + $0x3d8] sm:$0xff] %vm217, %v1284
      %1431 = vst.msk [vmem:[#allocation6 + $0x3e0] sm:$0xff] %vm217, %v1289
      %1432 = vst.msk [vmem:[#allocation6 + $0x3e8] sm:$0xff] %vm217, %v1294
      %1433 = vst.msk [vmem:[#allocation6 + $0x3f0] sm:$0xff] %vm217, %v1299
      %1434 = vst.msk [vmem:[#allocation6 + $0x3f8] sm:$0xff] %vm217, %v1304
      %v1435 = vsel %vm217, %v78, 0.0
      %v1436 = vsel %vm217, %v79, 0.0
      %v1437 = vadd.f32 %v1435, %v1436
      %v1438 = vsel %vm217, %v80, 0.0
      %v1439 = vadd.f32 %v1437, %v1438
      %v1440 = vsel %vm217, %v81, 0.0
      %v1441 = vadd.f32 %v1439, %v1440
      %v1442 = vsel %vm217, %v82, 0.0
      %v1443 = vadd.f32 %v1441, %v1442
      %v1444 = vsel %vm217, %v83, 0.0
      %v1445 = vadd.f32 %v1443, %v1444
      %v1446 = vsel %vm217, %v84, 0.0
      %v1447 = vadd.f32 %v1445, %v1446
      %v1448 = vsel %vm217, %v85, 0.0
      %v1449 = vadd.f32 %v1447, %v1448
      %v1450 = vsel %vm217, %v86, 0.0
      %v1451 = vadd.f32 %v1449, %v1450
      %v1452 = vsel %vm217, %v87, 0.0
      %v1453 = vadd.f32 %v1451, %v1452
      %v1454 = vsel %vm217, %v88, 0.0
      %v1455 = vadd.f32 %v1453, %v1454
      %v1456 = vsel %vm217, %v89, 0.0
      %v1457 = vadd.f32 %v1455, %v1456
      %v1458 = vsel %vm217, %v90, 0.0
      %v1459 = vadd.f32 %v1457, %v1458
      %v1460 = vsel %vm217, %v91, 0.0
      %v1461 = vadd.f32 %v1459, %v1460
      %v1462 = vsel %vm217, %v92, 0.0
      %v1463 = vadd.f32 %v1461, %v1462
      %v1464 = vsel %vm217, %v93, 0.0
      %v1465 = vadd.f32 %v1463, %v1464
      %v1466 = vrot.slane %v1465, 4
      %v1467 = vadd.f32 %v1465, %v1466
      %v1468 = vrot.slane %v1467, 2
      %v1469 = vadd.f32 %v1467, %v1468
      %v1470 = vrot.slane %v1469, 1
      %v1471 = vadd.f32 %v1469, %v1470
      %v1472 = vsel %vm217, %v94, 0.0
      %v1473 = vsel %vm217, %v95, 0.0
      %v1474 = vadd.f32 %v1472, %v1473
      %v1475 = vsel %vm217, %v96, 0.0
      %v1476 = vadd.f32 %v1474, %v1475
      %v1477 = vsel %vm217, %v97, 0.0
      %v1478 = vadd.f32 %v1476, %v1477
      %v1479 = vsel %vm217, %v98, 0.0
      %v1480 = vadd.f32 %v1478, %v1479
      %v1481 = vsel %vm217, %v99, 0.0
      %v1482 = vadd.f32 %v1480, %v1481
      %v1483 = vsel %vm217, %v100, 0.0
      %v1484 = vadd.f32 %v1482, %v1483
      %v1485 = vsel %vm217, %v101, 0.0
      %v1486 = vadd.f32 %v1484, %v1485
      %v1487 = vsel %vm217, %v102, 0.0
      %v1488 = vadd.f32 %v1486, %v1487
      %v1489 = vsel %vm217, %v103, 0.0
      %v1490 = vadd.f32 %v1488, %v1489
      %v1491 = vsel %vm217, %v104, 0.0
      %v1492 = vadd.f32 %v1490, %v1491
      %v1493 = vsel %vm217, %v105, 0.0
      %v1494 = vadd.f32 %v1492, %v1493
      %v1495 = vsel %vm217, %v106, 0.0
      %v1496 = vadd.f32 %v1494, %v1495
      %v1497 = vsel %vm217, %v107, 0.0
      %v1498 = vadd.f32 %v1496, %v1497
      %v1499 = vsel %vm217, %v108, 0.0
      %v1500 = vadd.f32 %v1498, %v1499
      %v1501 = vsel %vm217, %v109, 0.0
      %v1502 = vadd.f32 %v1500, %v1501
      %v1503 = vrot.slane %v1502, 4
      %v1504 = vadd.f32 %v1502, %v1503
      %v1505 = vrot.slane %v1504, 2
      %v1506 = vadd.f32 %v1504, %v1505
      %v1507 = vrot.slane %v1506, 1
      %v1508 = vadd.f32 %v1506, %v1507
      %v1509 = vsel %vm217, %v110, 0.0
      %v1510 = vsel %vm217, %v111, 0.0
      %v1511 = vadd.f32 %v1509, %v1510
      %v1512 = vsel %vm217, %v112, 0.0
      %v1513 = vadd.f32 %v1511, %v1512
      %v1514 = vsel %vm217, %v113, 0.0
      %v1515 = vadd.f32 %v1513, %v1514
      %v1516 = vsel %vm217, %v114, 0.0
      %v1517 = vadd.f32 %v1515, %v1516
      %v1518 = vsel %vm217, %v115, 0.0
      %v1519 = vadd.f32 %v1517, %v1518
      %v1520 = vsel %vm217, %v116, 0.0
      %v1521 = vadd.f32 %v1519, %v1520
      %v1522 = vsel %vm217, %v117, 0.0
      %v1523 = vadd.f32 %v1521, %v1522
      %v1524 = vsel %vm217, %v118, 0.0
      %v1525 = vadd.f32 %v1523, %v1524
      %v1526 = vsel %vm217, %v119, 0.0
      %v1527 = vadd.f32 %v1525, %v1526
      %v1528 = vsel %vm217, %v120, 0.0
      %v1529 = vadd.f32 %v1527, %v1528
      %v1530 = vsel %vm217, %v121, 0.0
      %v1531 = vadd.f32 %v1529, %v1530
      %v1532 = vsel %vm217, %v122, 0.0
      %v1533 = vadd.f32 %v1531, %v1532
      %v1534 = vsel %vm217, %v123, 0.0
      %v1535 = vadd.f32 %v1533, %v1534
      %v1536 = vsel %vm217, %v124, 0.0
      %v1537 = vadd.f32 %v1535, %v1536
      %v1538 = vsel %vm217, %v125, 0.0
      %v1539 = vadd.f32 %v1537, %v1538
      %v1540 = vrot.slane %v1539, 4
      %v1541 = vadd.f32 %v1539, %v1540
      %v1542 = vrot.slane %v1541, 2
      %v1543 = vadd.f32 %v1541, %v1542
      %v1544 = vrot.slane %v1543, 1
      %v1545 = vadd.f32 %v1543, %v1544
      %v1546 = vsel %vm217, %v126, 0.0
      %v1547 = vsel %vm217, %v127, 0.0
      %v1548 = vadd.f32 %v1546, %v1547
      %v1549 = vsel %vm217, %v128, 0.0
      %v1550 = vadd.f32 %v1548, %v1549
      %v1551 = vsel %vm217, %v129, 0.0
      %v1552 = vadd.f32 %v1550, %v1551
      %v1553 = vsel %vm217, %v130, 0.0
      %v1554 = vadd.f32 %v1552, %v1553
      %v1555 = vsel %vm217, %v131, 0.0
      %v1556 = vadd.f32 %v1554, %v1555
      %v1557 = vsel %vm217, %v132, 0.0
      %v1558 = vadd.f32 %v1556, %v1557
      %v1559 = vsel %vm217, %v133, 0.0
      %v1560 = vadd.f32 %v1558, %v1559
      %v1561 = vsel %vm217, %v134, 0.0
      %v1562 = vadd.f32 %v1560, %v1561
      %v1563 = vsel %vm217, %v135, 0.0
      %v1564 = vadd.f32 %v1562, %v1563
      %v1565 = vsel %vm217, %v136, 0.0
      %v1566 = vadd.f32 %v1564, %v1565
      %v1567 = vsel %vm217, %v137, 0.0
      %v1568 = vadd.f32 %v1566, %v1567
      %v1569 = vsel %vm217, %v138, 0.0
      %v1570 = vadd.f32 %v1568, %v1569
      %v1571 = vsel %vm217, %v139, 0.0
      %v1572 = vadd.f32 %v1570, %v1571
      %v1573 = vsel %vm217, %v140, 0.0
      %v1574 = vadd.f32 %v1572, %v1573
      %v1575 = vsel %vm217, %v141, 0.0
      %v1576 = vadd.f32 %v1574, %v1575
      %v1577 = vrot.slane %v1576, 4
      %v1578 = vadd.f32 %v1576, %v1577
      %v1579 = vrot.slane %v1578, 2
      %v1580 = vadd.f32 %v1578, %v1579
      %v1581 = vrot.slane %v1580, 1
      %v1582 = vadd.f32 %v1580, %v1581
      %v1583 = vsel %vm217, %v142, 0.0
      %v1584 = vsel %vm217, %v143, 0.0
      %v1585 = vadd.f32 %v1583, %v1584
      %v1586 = vsel %vm217, %v144, 0.0
      %v1587 = vadd.f32 %v1585, %v1586
      %v1588 = vsel %vm217, %v145, 0.0
      %v1589 = vadd.f32 %v1587, %v1588
      %v1590 = vsel %vm217, %v146, 0.0
      %v1591 = vadd.f32 %v1589, %v1590
      %v1592 = vsel %vm217, %v147, 0.0
      %v1593 = vadd.f32 %v1591, %v1592
      %v1594 = vsel %vm217, %v148, 0.0
      %v1595 = vadd.f32 %v1593, %v1594
      %v1596 = vsel %vm217, %v149, 0.0
      %v1597 = vadd.f32 %v1595, %v1596
      %v1598 = vsel %vm217, %v150, 0.0
      %v1599 = vadd.f32 %v1597, %v1598
      %v1600 = vsel %vm217, %v151, 0.0
      %v1601 = vadd.f32 %v1599, %v1600
      %v1602 = vsel %vm217, %v152, 0.0
      %v1603 = vadd.f32 %v1601, %v1602
      %v1604 = vsel %vm217, %v153, 0.0
      %v1605 = vadd.f32 %v1603, %v1604
      %v1606 = vsel %vm217, %v154, 0.0
      %v1607 = vadd.f32 %v1605, %v1606
      %v1608 = vsel %vm217, %v155, 0.0
      %v1609 = vadd.f32 %v1607, %v1608
      %v1610 = vsel %vm217, %v156, 0.0
      %v1611 = vadd.f32 %v1609, %v1610
      %v1612 = vsel %vm217, %v157, 0.0
      %v1613 = vadd.f32 %v1611, %v1612
      %v1614 = vrot.slane %v1613, 4
      %v1615 = vadd.f32 %v1613, %v1614
      %v1616 = vrot.slane %v1615, 2
      %v1617 = vadd.f32 %v1615, %v1616
      %v1618 = vrot.slane %v1617, 1
      %v1619 = vadd.f32 %v1617, %v1618
      %v1620 = vsel %vm217, %v158, 0.0
      %v1621 = vsel %vm217, %v159, 0.0
      %v1622 = vadd.f32 %v1620, %v1621
      %v1623 = vsel %vm217, %v160, 0.0
      %v1624 = vadd.f32 %v1622, %v1623
      %v1625 = vsel %vm217, %v161, 0.0
      %v1626 = vadd.f32 %v1624, %v1625
      %v1627 = vsel %vm217, %v162, 0.0
      %v1628 = vadd.f32 %v1626, %v1627
      %v1629 = vsel %vm217, %v163, 0.0
      %v1630 = vadd.f32 %v1628, %v1629
      %v1631 = vsel %vm217, %v164, 0.0
      %v1632 = vadd.f32 %v1630, %v1631
      %v1633 = vsel %vm217, %v165, 0.0
      %v1634 = vadd.f32 %v1632, %v1633
      %v1635 = vsel %vm217, %v166, 0.0
      %v1636 = vadd.f32 %v1634, %v1635
      %v1637 = vsel %vm217, %v167, 0.0
      %v1638 = vadd.f32 %v1636, %v1637
      %v1639 = vsel %vm217, %v168, 0.0
      %v1640 = vadd.f32 %v1638, %v1639
      %v1641 = vsel %vm217, %v169, 0.0
      %v1642 = vadd.f32 %v1640, %v1641
      %v1643 = vsel %vm217, %v170, 0.0
      %v1644 = vadd.f32 %v1642, %v1643
      %v1645 = vsel %vm217, %v171, 0.0
      %v1646 = vadd.f32 %v1644, %v1645
      %v1647 = vsel %vm217, %v172, 0.0
      %v1648 = vadd.f32 %v1646, %v1647
      %v1649 = vsel %vm217, %v173, 0.0
      %v1650 = vadd.f32 %v1648, %v1649
      %v1651 = vrot.slane %v1650, 4
      %v1652 = vadd.f32 %v1650, %v1651
      %v1653 = vrot.slane %v1652, 2
      %v1654 = vadd.f32 %v1652, %v1653
      %v1655 = vrot.slane %v1654, 1
      %v1656 = vadd.f32 %v1654, %v1655
      %v1657 = vsel %vm217, %v174, 0.0
      %v1658 = vsel %vm217, %v175, 0.0
      %v1659 = vadd.f32 %v1657, %v1658
      %v1660 = vsel %vm217, %v176, 0.0
      %v1661 = vadd.f32 %v1659, %v1660
      %v1662 = vsel %vm217, %v177, 0.0
      %v1663 = vadd.f32 %v1661, %v1662
      %v1664 = vsel %vm217, %v178, 0.0
      %v1665 = vadd.f32 %v1663, %v1664
      %v1666 = vsel %vm217, %v179, 0.0
      %v1667 = vadd.f32 %v1665, %v1666
      %v1668 = vsel %vm217, %v180, 0.0
      %v1669 = vadd.f32 %v1667, %v1668
      %v1670 = vsel %vm217, %v181, 0.0
      %v1671 = vadd.f32 %v1669, %v1670
      %v1672 = vsel %vm217, %v182, 0.0
      %v1673 = vadd.f32 %v1671, %v1672
      %v1674 = vsel %vm217, %v183, 0.0
      %v1675 = vadd.f32 %v1673, %v1674
      %v1676 = vsel %vm217, %v184, 0.0
      %v1677 = vadd.f32 %v1675, %v1676
      %v1678 = vsel %vm217, %v185, 0.0
      %v1679 = vadd.f32 %v1677, %v1678
      %v1680 = vsel %vm217, %v186, 0.0
      %v1681 = vadd.f32 %v1679, %v1680
      %v1682 = vsel %vm217, %v187, 0.0
      %v1683 = vadd.f32 %v1681, %v1682
      %v1684 = vsel %vm217, %v188, 0.0
      %v1685 = vadd.f32 %v1683, %v1684
      %v1686 = vsel %vm217, %v189, 0.0
      %v1687 = vadd.f32 %v1685, %v1686
      %v1688 = vrot.slane %v1687, 4
      %v1689 = vadd.f32 %v1687, %v1688
      %v1690 = vrot.slane %v1689, 2
      %v1691 = vadd.f32 %v1689, %v1690
      %v1692 = vrot.slane %v1691, 1
      %v1693 = vadd.f32 %v1691, %v1692
      %v1694 = vsel %vm217, %v190, 0.0
      %v1695 = vsel %vm217, %v191, 0.0
      %v1696 = vadd.f32 %v1694, %v1695
      %v1697 = vsel %vm217, %v192, 0.0
      %v1698 = vadd.f32 %v1696, %v1697
      %v1699 = vsel %vm217, %v193, 0.0
      %v1700 = vadd.f32 %v1698, %v1699
      %v1701 = vsel %vm217, %v194, 0.0
      %v1702 = vadd.f32 %v1700, %v1701
      %v1703 = vsel %vm217, %v195, 0.0
      %v1704 = vadd.f32 %v1702, %v1703
      %v1705 = vsel %vm217, %v196, 0.0
      %v1706 = vadd.f32 %v1704, %v1705
      %v1707 = vsel %vm217, %v197, 0.0
      %v1708 = vadd.f32 %v1706, %v1707
      %v1709 = vsel %vm217, %v198, 0.0
      %v1710 = vadd.f32 %v1708, %v1709
      %v1711 = vsel %vm217, %v199, 0.0
      %v1712 = vadd.f32 %v1710, %v1711
      %v1713 = vsel %vm217, %v200, 0.0
      %v1714 = vadd.f32 %v1712, %v1713
      %v1715 = vsel %vm217, %v201, 0.0
      %v1716 = vadd.f32 %v1714, %v1715
      %v1717 = vsel %vm217, %v202, 0.0
      %v1718 = vadd.f32 %v1716, %v1717
      %v1719 = vsel %vm217, %v203, 0.0
      %v1720 = vadd.f32 %v1718, %v1719
      %v1721 = vsel %vm217, %v204, 0.0
      %v1722 = vadd.f32 %v1720, %v1721
      %v1723 = vsel %vm217, %v205, 0.0
      %v1724 = vadd.f32 %v1722, %v1723
      %v1725 = vrot.slane %v1724, 4
      %v1726 = vadd.f32 %v1724, %v1725
      %v1727 = vrot.slane %v1726, 2
      %v1728 = vadd.f32 %v1726, %v1727
      %v1729 = vrot.slane %v1728, 1
      %v1730 = vadd.f32 %v1728, %v1729
      %v1731 = vmul.f32 %v1471, 0.015625
      %v1732 = vmul.f32 %v1508, 0.015625
      %v1733 = vmul.f32 %v1545, 0.015625
      %v1734 = vmul.f32 %v1582, 0.015625
      %v1735 = vmul.f32 %v1619, 0.015625
      %v1736 = vmul.f32 %v1656, 0.015625
      %v1737 = vmul.f32 %v1693, 0.015625
      %v1738 = vmul.f32 %v1730, 0.015625
      %v1739 = vld [vmem:[%s12] sm:$0xff]
      %v1740 = vld [vmem:[%s12 + $0x8] sm:$0xff]
      %v1741 = vld [vmem:[%s12 + $0x10] sm:$0xff]
      %v1742 = vld [vmem:[%s12 + $0x18] sm:$0xff]
      %v1743 = vld [vmem:[%s13] sm:$0x1]
      %v1745 = vlaneseq
      %v1746 = vshrl.u32 %v1745, 7
      %v1747 = vsub.s32 0, %v1746
      %v1748 = vrot.slane %v1743, %v1747
      %vm1758 = vcmask 1041409
      %v1759 = vsel %vm1758, %v1732, %v1731
      %vm1760 = vcmask 1042434
      %v1761 = vsel %vm1760, %v1733, %v1759
      %vm1762 = vcmask 1043459
      %v1763 = vsel %vm1762, %v1734, %v1761
      %vm1764 = vcmask 1044484
      %v1765 = vsel %vm1764, %v1735, %v1763
      %vm1766 = vcmask 1045509
      %v1767 = vsel %vm1766, %v1736, %v1765
      %vm1768 = vcmask 1046534
      %v1769 = vsel %vm1768, %v1737, %v1767
      %vm1770 = vcmask 1047559
      %v1771 = vsel %vm1770, %v1738, %v1769
      %v1772 = vsel %vm217, %v1771, 0
      %1774 = vmatprep.subr.mxu0 0.0
      %1775 = vmatpush1.msra.mxu0 %v1739
      %1776 = vmatprep.subr.mxu0 0.0
      %1777 = vmatpush1.msra.mxu0 %v1740
      %1778 = vmatprep.subr.mxu0 0.0
      %1779 = vmatpush1.msra.mxu0 %v1741
      %1780 = vmatprep.subr.mxu0 0.0
      %1781 = vmatpush1.msra.mxu0 %v1742
      %1782 = vmatprep.subr.mxu0 0.0
      %1783 = vmatpush1.msra.mxu0 0.0
      %1784 = vmatprep.subr.mxu0 0.0
      %1785 = vmatpush1.msra.mxu0 0.0
      %1786 = vmatprep.subr.mxu0 0.0
      %1787 = vmatpush1.msra.mxu0 0.0
      %1788 = vmatprep.subr.mxu0 0.0
      %1789 = vmatpush1.msra.mxu0 0.0
      %1790 = vmatprep.subr.mxu0 0.0
      %1791 = vmatpush1.msra.mxu0 0.0
      %1792 = vmatprep.subr.mxu0 0.0
      %1793 = vmatpush1.msra.mxu0 0.0
      %1794 = vmatprep.subr.mxu0 0.0
      %1795 = vmatpush1.msra.mxu0 0.0
      %1796 = vmatprep.subr.mxu0 0.0
      %1797 = vmatpush1.msra.mxu0 0.0
      %1798 = vmatprep.subr.mxu0 0.0
      %1799 = vmatpush1.msra.mxu0 0.0
      %1800 = vmatprep.subr.mxu0 0.0
      %1801 = vmatpush1.msra.mxu0 0.0
      %1802 = vmatprep.subr.mxu0 0.0
      %1803 = vmatpush1.msra.mxu0 0.0
      %1804 = vmatprep.subr.mxu0 0.0
      %1805 = vmatpush1.msra.mxu0 0.0
      %1806 = vmatprep.subr.mxu0 0.0
      %1807 = vmatpush1.msra.mxu0 0.0
      %1808 = vmatprep.subr.mxu0 0.0
      %1809 = vmatpush1.msra.mxu0 0.0
      %1810 = vmatprep.subr.mxu0 0.0
      %1811 = vmatpush1.msra.mxu0 0.0
      %1812 = vmatprep.subr.mxu0 0.0
      %1813 = vmatpush1.msra.mxu0 0.0
      %1814 = vmatprep.subr.mxu0 0.0
      %1815 = vmatpush1.msra.mxu0 0.0
      %1816 = vmatprep.subr.mxu0 0.0
      %1817 = vmatpush1.msra.mxu0 0.0
      %1818 = vmatprep.subr.mxu0 0.0
      %1819 = vmatpush1.msra.mxu0 0.0
      %1820 = vmatprep.subr.mxu0 0.0
      %1821 = vmatpush1.msra.mxu0 0.0
      %1822 = vmatprep.subr.mxu0 0.0
      %1823 = vmatpush1.msra.mxu0 0.0
      %1824 = vmatprep.subr.mxu0 0.0
      %1825 = vmatpush1.msra.mxu0 0.0
      %1826 = vmatprep.subr.mxu0 0.0
      %1827 = vmatpush1.msra.mxu0 0.0
      %1828 = vmatprep.subr.mxu0 0.0
      %1829 = vmatpush1.msra.mxu0 0.0
      %1830 = vmatprep.subr.mxu0 0.0
      %1831 = vmatpush1.msra.mxu0 0.0
      %1832 = vmatprep.subr.mxu0 0.0
      %1833 = vmatpush1.msra.mxu0 0.0
      %1834 = vmatprep.subr.mxu0 0.0
      %1835 = vmatpush1.msra.mxu0 0.0
      %1836 = vmatprep.subr.mxu0 0.0
      %1837 = vmatpush1.msra.mxu0 0.0
      %1838 = vmatprep.mubr.f32.mxu0 0.0
      %1839 = vmatmul.mubr.f32.gmra.mrb[0].mxu0 %v1772
      %v1840 = vpop.f32.mrb[0].mxu0
      %v1841 = vadd.f32 %v1748, %v1840
      %v1842 = vpop.f32.mrb[0].mxu0
      %1843 = vdwg.mxu0
      %v1844 = vld [vmem:[%s14] sm:$0xff]
      %v1845 = vld [vmem:[%s14 + $0x8] sm:$0xff]
      %v1846 = vld [vmem:[%s14 + $0x10] sm:$0xff]
      %v1847 = vld [vmem:[%s14 + $0x18] sm:$0xff]
      %v1848 = vld [vmem:[%s15] sm:$0x1]
      %v1850 = vlaneseq
      %v1851 = vshrl.u32 %v1850, 7
      %v1852 = vsub.s32 0, %v1851
      %v1853 = vrot.slane %v1848, %v1852
      %1855 = vmatprep.subr.mxu0 0.0
      %1856 = vmatpush1.msra.mxu0 %v1844
      %1857 = vmatprep.subr.mxu0 0.0
      %1858 = vmatpush1.msra.mxu0 %v1845
      %1859 = vmatprep.subr.mxu0 0.0
      %1860 = vmatpush1.msra.mxu0 %v1846
      %1861 = vmatprep.subr.mxu0 0.0
      %1862 = vmatpush1.msra.mxu0 %v1847
      %1863 = vmatprep.subr.mxu0 0.0
      %1864 = vmatpush1.msra.mxu0 0.0
      %1865 = vmatprep.subr.mxu0 0.0
      %1866 = vmatpush1.msra.mxu0 0.0
      %1867 = vmatprep.subr.mxu0 0.0
      %1868 = vmatpush1.msra.mxu0 0.0
      %1869 = vmatprep.subr.mxu0 0.0
      %1870 = vmatpush1.msra.mxu0 0.0
      %1871 = vmatprep.subr.mxu0 0.0
      %1872 = vmatpush1.msra.mxu0 0.0
      %1873 = vmatprep.subr.mxu0 0.0
      %1874 = vmatpush1.msra.mxu0 0.0
      %1875 = vmatprep.subr.mxu0 0.0
      %1876 = vmatpush1.msra.mxu0 0.0
      %1877 = vmatprep.subr.mxu0 0.0
      %1878 = vmatpush1.msra.mxu0 0.0
      %1879 = vmatprep.subr.mxu0 0.0
      %1880 = vmatpush1.msra.mxu0 0.0
      %1881 = vmatprep.subr.mxu0 0.0
      %1882 = vmatpush1.msra.mxu0 0.0
      %1883 = vmatprep.subr.mxu0 0.0
      %1884 = vmatpush1.msra.mxu0 0.0
      %1885 = vmatprep.subr.mxu0 0.0
      %1886 = vmatpush1.msra.mxu0 0.0
      %1887 = vmatprep.subr.mxu0 0.0
      %1888 = vmatpush1.msra.mxu0 0.0
      %1889 = vmatprep.subr.mxu0 0.0
      %1890 = vmatpush1.msra.mxu0 0.0
      %1891 = vmatprep.subr.mxu0 0.0
      %1892 = vmatpush1.msra.mxu0 0.0
      %1893 = vmatprep.subr.mxu0 0.0
      %1894 = vmatpush1.msra.mxu0 0.0
      %1895 = vmatprep.subr.mxu0 0.0
      %1896 = vmatpush1.msra.mxu0 0.0
      %1897 = vmatprep.subr.mxu0 0.0
      %1898 = vmatpush1.msra.mxu0 0.0
      %1899 = vmatprep.subr.mxu0 0.0
      %1900 = vmatpush1.msra.mxu0 0.0
      %1901 = vmatprep.subr.mxu0 0.0
      %1902 = vmatpush1.msra.mxu0 0.0
      %1903 = vmatprep.subr.mxu0 0.0
      %1904 = vmatpush1.msra.mxu0 0.0
      %1905 = vmatprep.subr.mxu0 0.0
      %1906 = vmatpush1.msra.mxu0 0.0
      %1907 = vmatprep.subr.mxu0 0.0
      %1908 = vmatpush1.msra.mxu0 0.0
      %1909 = vmatprep.subr.mxu0 0.0
      %1910 = vmatpush1.msra.mxu0 0.0
      %1911 = vmatprep.subr.mxu0 0.0
      %1912 = vmatpush1.msra.mxu0 0.0
      %1913 = vmatprep.subr.mxu0 0.0
      %1914 = vmatpush1.msra.mxu0 0.0
      %1915 = vmatprep.subr.mxu0 0.0
      %1916 = vmatpush1.msra.mxu0 0.0
      %1917 = vmatprep.subr.mxu0 0.0
      %1918 = vmatpush1.msra.mxu0 0.0
      %1919 = vmatprep.mubr.f32.mxu0 0.0
      %1920 = vmatmul.mubr.f32.gmra.mrb[0].mxu0 %v1772
      %v1921 = vpop.f32.mrb[0].mxu0
      %v1922 = vadd.f32 %v1853, %v1921
      %v1923 = vpop.f32.mrb[0].mxu0
      %1924 = vdwg.mxu0
      %1925 = vst.msk [vmem:[#allocation2] sm:$0xff] %vm217, %v1841
      %1926 = vst.msk [vmem:[#allocation3] sm:$0xff] %vm217, %v1922
      %1927 = vst.msk [vmem:[#allocation4] sm:$0xff] %vm217, %v1841
      %1928 = vst.msk [vmem:[#allocation5] sm:$0xff] %vm217, %v1922
      %s1929 = scalar_lea.vmem [#allocation4], 8
      %1930 = vst.msk [vmem:[%s1929] sm:$0xff] %vm217, %v1841
      %s1931 = scalar_lea.vmem [#allocation5], 8
      %1932 = vst.msk [vmem:[%s1931] sm:$0xff] %vm217, %v1922
      %s1933 = scalar_lea.vmem [#allocation4], 16
      %1934 = vst.msk [vmem:[%s1933] sm:$0xff] %vm217, %v1841
      %s1935 = scalar_lea.vmem [#allocation5], 16
      %1936 = vst.msk [vmem:[%s1935] sm:$0xff] %vm217, %v1922
    $region89: #{tpu_custom_call.1} parent=1 // pred_fallthru
      _
    %v1937 = vld [vmem:[%s0] sm:$0xff]
    %v1938 = vld [vmem:[%s3] sm:$0x1]
    %v1940 = vlaneseq
    %v1941 = vshrl.u32 %v1940, 7
    %v1942 = vsub.s32 0, %v1941
    %v1943 = vrot.slane %v1938, %v1942
    %v1945 = vlaneseq
    %v1946 = vand.u32 %v1945, 127
    %vm1947 = vcmp.lt.s32.totalorder %v1946, 64
    loop: start=0, step=1, limit=8
    $region90: #{tpu_custom_call.1} parent=1 // loop_pre_header
      _
    $region91: #{tpu_custom_call.1} parent=1 // loop_header
      %s1949 = sphi 0, %s1953
      %p1950 = scmp.ge.s32.totalorder %s1949, 8
    $region92: #{tpu_custom_call.1} parent=1 // loop_header_branch
      %1952 = sbr.rel (%p1950) target = $region96
    $region93: #{tpu_custom_call.1} parent=1 // loop_body
      %s1954 = smul.u32 0, 8
      %s1955 = sadd.s32 %s1954, %s1949
      %v1956 = vstv %s1955
      %vm1957 = vcmp.gt.s32.totalorder %v1937, %v1956
      %v1958 = vld [vmem:[#allocation2] sm:$0xff]
      %v1959 = vld [vmem:[%s1] sm:$0xff]
      %v1960 = vld [vmem:[%s1 + $0x8] sm:$0xff]
      %v1961 = vld [vmem:[%s1 + $0x10] sm:$0xff]
      %v1962 = vld [vmem:[%s1 + $0x18] sm:$0xff]
      %v1963 = vld [vmem:[%s1 + $0x20] sm:$0xff]
      %v1964 = vld [vmem:[%s1 + $0x28] sm:$0xff]
      %v1965 = vld [vmem:[%s1 + $0x30] sm:$0xff]
      %v1966 = vld [vmem:[%s1 + $0x38] sm:$0xff]
      %v1967 = vld [vmem:[%s1 + $0x40] sm:$0xff]
      %v1968 = vld [vmem:[%s1 + $0x48] sm:$0xff]
      %v1969 = vld [vmem:[%s1 + $0x50] sm:$0xff]
      %v1970 = vld [vmem:[%s1 + $0x58] sm:$0xff]
      %v1971 = vld [vmem:[%s1 + $0x60] sm:$0xff]
      %v1972 = vld [vmem:[%s1 + $0x68] sm:$0xff]
      %v1973 = vld [vmem:[%s1 + $0x70] sm:$0xff]
      %v1974 = vld [vmem:[%s1 + $0x78] sm:$0xff]
      %v1975 = vld [vmem:[%s1 + $0x80] sm:$0xff]
      %v1976 = vld [vmem:[%s1 + $0x88] sm:$0xff]
      %v1977 = vld [vmem:[%s1 + $0x90] sm:$0xff]
      %v1978 = vld [vmem:[%s1 + $0x98] sm:$0xff]
      %v1979 = vld [vmem:[%s1 + $0xa0] sm:$0xff]
      %v1980 = vld [vmem:[%s1 + $0xa8] sm:$0xff]
      %v1981 = vld [vmem:[%s1 + $0xb0] sm:$0xff]
      %v1982 = vld [vmem:[%s1 + $0xb8] sm:$0xff]
      %v1983 = vld [vmem:[%s1 + $0xc0] sm:$0xff]
      %v1984 = vld [vmem:[%s1 + $0xc8] sm:$0xff]
      %v1985 = vld [vmem:[%s1 + $0xd0] sm:$0xff]
      %v1986 = vld [vmem:[%s1 + $0xd8] sm:$0xff]
      %v1987 = vld [vmem:[%s1 + $0xe0] sm:$0xff]
      %v1988 = vld [vmem:[%s1 + $0xe8] sm:$0xff]
      %v1989 = vld [vmem:[%s1 + $0xf0] sm:$0xff]
      %v1990 = vld [vmem:[%s1 + $0xf8] sm:$0xff]
      %v1991 = vld [vmem:[%s1 + $0x100] sm:$0xff]
      %v1992 = vld [vmem:[%s1 + $0x108] sm:$0xff]
      %v1993 = vld [vmem:[%s1 + $0x110] sm:$0xff]
      %v1994 = vld [vmem:[%s1 + $0x118] sm:$0xff]
      %v1995 = vld [vmem:[%s1 + $0x120] sm:$0xff]
      %v1996 = vld [vmem:[%s1 + $0x128] sm:$0xff]
      %v1997 = vld [vmem:[%s1 + $0x130] sm:$0xff]
      %v1998 = vld [vmem:[%s1 + $0x138] sm:$0xff]
      %v1999 = vld [vmem:[%s1 + $0x140] sm:$0xff]
      %v2000 = vld [vmem:[%s1 + $0x148] sm:$0xff]
      %v2001 = vld [vmem:[%s1 + $0x150] sm:$0xff]
      %v2002 = vld [vmem:[%s1 + $0x158] sm:$0xff]
      %v2003 = vld [vmem:[%s1 + $0x160] sm:$0xff]
      %v2004 = vld [vmem:[%s1 + $0x168] sm:$0xff]
      %v2005 = vld [vmem:[%s1 + $0x170] sm:$0xff]
      %v2006 = vld [vmem:[%s1 + $0x178] sm:$0xff]
      %v2007 = vld [vmem:[%s1 + $0x180] sm:$0xff]
      %v2008 = vld [vmem:[%s1 + $0x188] sm:$0xff]
      %v2009 = vld [vmem:[%s1 + $0x190] sm:$0xff]
      %v2010 = vld [vmem:[%s1 + $0x198] sm:$0xff]
      %v2011 = vld [vmem:[%s1 + $0x1a0] sm:$0xff]
      %v2012 = vld [vmem:[%s1 + $0x1a8] sm:$0xff]
      %v2013 = vld [vmem:[%s1 + $0x1b0] sm:$0xff]
      %v2014 = vld [vmem:[%s1 + $0x1b8] sm:$0xff]
      %v2015 = vld [vmem:[%s1 + $0x1c0] sm:$0xff]
      %v2016 = vld [vmem:[%s1 + $0x1c8] sm:$0xff]
      %v2017 = vld [vmem:[%s1 + $0x1d0] sm:$0xff]
      %v2018 = vld [vmem:[%s1 + $0x1d8] sm:$0xff]
      %v2019 = vld [vmem:[%s1 + $0x1e0] sm:$0xff]
      %v2020 = vld [vmem:[%s1 + $0x1e8] sm:$0xff]
      %v2021 = vld [vmem:[%s1 + $0x1f0] sm:$0xff]
      %v2022 = vld [vmem:[%s1 + $0x1f8] sm:$0xff]
      %v2023 = vld [vmem:[%s1 + $0x200] sm:$0xff]
      %v2024 = vld [vmem:[%s1 + $0x208] sm:$0xff]
      %v2025 = vld [vmem:[%s1 + $0x210] sm:$0xff]
      %v2026 = vld [vmem:[%s1 + $0x218] sm:$0xff]
      %v2027 = vld [vmem:[%s1 + $0x220] sm:$0xff]
      %v2028 = vld [vmem:[%s1 + $0x228] sm:$0xff]
      %v2029 = vld [vmem:[%s1 + $0x230] sm:$0xff]
      %v2030 = vld [vmem:[%s1 + $0x238] sm:$0xff]
      %v2031 = vld [vmem:[%s1 + $0x240] sm:$0xff]
      %v2032 = vld [vmem:[%s1 + $0x248] sm:$0xff]
      %v2033 = vld [vmem:[%s1 + $0x250] sm:$0xff]
      %v2034 = vld [vmem:[%s1 + $0x258] sm:$0xff]
      %v2035 = vld [vmem:[%s1 + $0x260] sm:$0xff]
      %v2036 = vld [vmem:[%s1 + $0x268] sm:$0xff]
      %v2037 = vld [vmem:[%s1 + $0x270] sm:$0xff]
      %v2038 = vld [vmem:[%s1 + $0x278] sm:$0xff]
      %v2039 = vld [vmem:[%s1 + $0x280] sm:$0xff]
      %v2040 = vld [vmem:[%s1 + $0x288] sm:$0xff]
      %v2041 = vld [vmem:[%s1 + $0x290] sm:$0xff]
      %v2042 = vld [vmem:[%s1 + $0x298] sm:$0xff]
      %v2043 = vld [vmem:[%s1 + $0x2a0] sm:$0xff]
      %v2044 = vld [vmem:[%s1 + $0x2a8] sm:$0xff]
      %v2045 = vld [vmem:[%s1 + $0x2b0] sm:$0xff]
      %v2046 = vld [vmem:[%s1 + $0x2b8] sm:$0xff]
      %v2047 = vld [vmem:[%s1 + $0x2c0] sm:$0xff]
      %v2048 = vld [vmem:[%s1 + $0x2c8] sm:$0xff]
      %v2049 = vld [vmem:[%s1 + $0x2d0] sm:$0xff]
      %v2050 = vld [vmem:[%s1 + $0x2d8] sm:$0xff]
      %v2051 = vld [vmem:[%s1 + $0x2e0] sm:$0xff]
      %v2052 = vld [vmem:[%s1 + $0x2e8] sm:$0xff]
      %v2053 = vld [vmem:[%s1 + $0x2f0] sm:$0xff]
      %v2054 = vld [vmem:[%s1 + $0x2f8] sm:$0xff]
      %v2055 = vld [vmem:[%s1 + $0x300] sm:$0xff]
      %v2056 = vld [vmem:[%s1 + $0x308] sm:$0xff]
      %v2057 = vld [vmem:[%s1 + $0x310] sm:$0xff]
      %v2058 = vld [vmem:[%s1 + $0x318] sm:$0xff]
      %v2059 = vld [vmem:[%s1 + $0x320] sm:$0xff]
      %v2060 = vld [vmem:[%s1 + $0x328] sm:$0xff]
      %v2061 = vld [vmem:[%s1 + $0x330] sm:$0xff]
      %v2062 = vld [vmem:[%s1 + $0x338] sm:$0xff]
      %v2063 = vld [vmem:[%s1 + $0x340] sm:$0xff]
      %v2064 = vld [vmem:[%s1 + $0x348] sm:$0xff]
      %v2065 = vld [vmem:[%s1 + $0x350] sm:$0xff]
      %v2066 = vld [vmem:[%s1 + $0x358] sm:$0xff]
      %v2067 = vld [vmem:[%s1 + $0x360] sm:$0xff]
      %v2068 = vld [vmem:[%s1 + $0x368] sm:$0xff]
      %v2069 = vld [vmem:[%s1 + $0x370] sm:$0xff]
      %v2070 = vld [vmem:[%s1 + $0x378] sm:$0xff]
      %v2071 = vld [vmem:[%s1 + $0x380] sm:$0xff]
      %v2072 = vld [vmem:[%s1 + $0x388] sm:$0xff]
      %v2073 = vld [vmem:[%s1 + $0x390] sm:$0xff]
      %v2074 = vld [vmem:[%s1 + $0x398] sm:$0xff]
      %v2075 = vld [vmem:[%s1 + $0x3a0] sm:$0xff]
      %v2076 = vld [vmem:[%s1 + $0x3a8] sm:$0xff]
      %v2077 = vld [vmem:[%s1 + $0x3b0] sm:$0xff]
      %v2078 = vld [vmem:[%s1 + $0x3b8] sm:$0xff]
      %v2079 = vld [vmem:[%s1 + $0x3c0] sm:$0xff]
      %v2080 = vld [vmem:[%s1 + $0x3c8] sm:$0xff]
      %v2081 = vld [vmem:[%s1 + $0x3d0] sm:$0xff]
      %v2082 = vld [vmem:[%s1 + $0x3d8] sm:$0xff]
      %v2083 = vld [vmem:[%s1 + $0x3e0] sm:$0xff]
      %v2084 = vld [vmem:[%s1 + $0x3e8] sm:$0xff]
      %v2085 = vld [vmem:[%s1 + $0x3f0] sm:$0xff]
      %v2086 = vld [vmem:[%s1 + $0x3f8] sm:$0xff]
      %v2087 = vld [vmem:[%s6] sm:$0xff]
      %v2088 = vld [vmem:[%s6 + $0x8] sm:$0xff]
      %v2089 = vld [vmem:[%s6 + $0x10] sm:$0xff]
      %v2090 = vld [vmem:[%s6 + $0x18] sm:$0xff]
      %v2091 = vld [vmem:[%s7] sm:$0x1]
      %v2093 = vlaneseq
      %v2094 = vshrl.u32 %v2093, 7
      %v2095 = vsub.s32 0, %v2094
      %v2096 = vrot.slane %v2091, %v2095
      %vm2098 = vcmask 261120
      %v2100 = vsel %vm2098, %v1958, 0
      %2102 = vmatprep.subr.mxu0 0.0
      %2103 = vmatpush1.msra.mxu0 %v2087
      %2104 = vmatprep.subr.mxu0 0.0
      %2105 = vmatpush1.msra.mxu0 %v2088
      %2106 = vmatprep.subr.mxu0 0.0
      %2107 = vmatpush1.msra.mxu0 %v2089
      %2108 = vmatprep.subr.mxu0 0.0
      %2109 = vmatpush1.msra.mxu0 %v2090
      %2110 = vmatprep.subr.mxu0 0.0
      %2111 = vmatpush1.msra.mxu0 0.0
      %2112 = vmatprep.subr.mxu0 0.0
      %2113 = vmatpush1.msra.mxu0 0.0
      %2114 = vmatprep.subr.mxu0 0.0
      %2115 = vmatpush1.msra.mxu0 0.0
      %2116 = vmatprep.subr.mxu0 0.0
      %2117 = vmatpush1.msra.mxu0 0.0
      %2118 = vmatprep.subr.mxu0 0.0
      %2119 = vmatpush1.msra.mxu0 0.0
      %2120 = vmatprep.subr.mxu0 0.0
      %2121 = vmatpush1.msra.mxu0 0.0
      %2122 = vmatprep.subr.mxu0 0.0
      %2123 = vmatpush1.msra.mxu0 0.0
      %2124 = vmatprep.subr.mxu0 0.0
      %2125 = vmatpush1.msra.mxu0 0.0
      %2126 = vmatprep.subr.mxu0 0.0
      %2127 = vmatpush1.msra.mxu0 0.0
      %2128 = vmatprep.subr.mxu0 0.0
      %2129 = vmatpush1.msra.mxu0 0.0
      %2130 = vmatprep.subr.mxu0 0.0
      %2131 = vmatpush1.msra.mxu0 0.0
      %2132 = vmatprep.subr.mxu0 0.0
      %2133 = vmatpush1.msra.mxu0 0.0
      %2134 = vmatprep.subr.mxu0 0.0
      %2135 = vmatpush1.msra.mxu0 0.0
      %2136 = vmatprep.subr.mxu0 0.0
      %2137 = vmatpush1.msra.mxu0 0.0
      %2138 = vmatprep.subr.mxu0 0.0
      %2139 = vmatpush1.msra.mxu0 0.0
      %2140 = vmatprep.subr.mxu0 0.0
      %2141 = vmatpush1.msra.mxu0 0.0
      %2142 = vmatprep.subr.mxu0 0.0
      %2143 = vmatpush1.msra.mxu0 0.0
      %2144 = vmatprep.subr.mxu0 0.0
      %2145 = vmatpush1.msra.mxu0 0.0
      %2146 = vmatprep.subr.mxu0 0.0
      %2147 = vmatpush1.msra.mxu0 0.0
      %2148 = vmatprep.subr.mxu0 0.0
      %2149 = vmatpush1.msra.mxu0 0.0
      %2150 = vmatprep.subr.mxu0 0.0
      %2151 = vmatpush1.msra.mxu0 0.0
      %2152 = vmatprep.subr.mxu0 0.0
      %2153 = vmatpush1.msra.mxu0 0.0
      %2154 = vmatprep.subr.mxu0 0.0
      %2155 = vmatpush1.msra.mxu0 0.0
      %2156 = vmatprep.subr.mxu0 0.0
      %2157 = vmatpush1.msra.mxu0 0.0
      %2158 = vmatprep.subr.mxu0 0.0
      %2159 = vmatpush1.msra.mxu0 0.0
      %2160 = vmatprep.subr.mxu0 0.0
      %2161 = vmatpush1.msra.mxu0 0.0
      %2162 = vmatprep.subr.mxu0 0.0
      %2163 = vmatpush1.msra.mxu0 0.0
      %2164 = vmatprep.subr.mxu0 0.0
      %2165 = vmatpush1.msra.mxu0 0.0
      %2166 = vmatprep.mubr.f32.mxu0 0.0
      %2167 = vmatmul.mubr.f32.gmra.mrb[0].mxu0 %v2100
      %v2168 = vpop.f32.mrb[0].mxu0
      %v2169 = vadd.f32 %v2096, %v2168
      %v2170 = vpop.f32.mrb[0].mxu0
      %2171 = vdwg.mxu0
      %v2172 = vld [vmem:[#allocation6] sm:$0xff]
      %v2173 = vld [vmem:[#allocation6 + $0x8] sm:$0xff]
      %v2174 = vld [vmem:[#allocation6 + $0x10] sm:$0xff]
      %v2175 = vld [vmem:[#allocation6 + $0x18] sm:$0xff]
      %v2176 = vld [vmem:[#allocation6 + $0x20] sm:$0xff]
      %v2177 = vld [vmem:[#allocation6 + $0x28] sm:$0xff]
      %v2178 = vld [vmem:[#allocation6 + $0x30] sm:$0xff]
      %v2179 = vld [vmem:[#allocation6 + $0x38] sm:$0xff]
      %v2180 = vld [vmem:[#allocation6 + $0x40] sm:$0xff]
      %v2181 = vld [vmem:[#allocation6 + $0x48] sm:$0xff]
      %v2182 = vld [vmem:[#allocation6 + $0x50] sm:$0xff]
      %v2183 = vld [vmem:[#allocation6 + $0x58] sm:$0xff]
      %v2184 = vld [vmem:[#allocation6 + $0x60] sm:$0xff]
      %v2185 = vld [vmem:[#allocation6 + $0x68] sm:$0xff]
      %v2186 = vld [vmem:[#allocation6 + $0x70] sm:$0xff]
      %v2187 = vld [vmem:[#allocation6 + $0x78] sm:$0xff]
      %v2188 = vld [vmem:[#allocation6 + $0x80] sm:$0xff]
      %v2189 = vld [vmem:[#allocation6 + $0x88] sm:$0xff]
      %v2190 = vld [vmem:[#allocation6 + $0x90] sm:$0xff]
      %v2191 = vld [vmem:[#allocation6 + $0x98] sm:$0xff]
      %v2192 = vld [vmem:[#allocation6 + $0xa0] sm:$0xff]
      %v2193 = vld [vmem:[#allocation6 + $0xa8] sm:$0xff]
      %v2194 = vld [vmem:[#allocation6 + $0xb0] sm:$0xff]
      %v2195 = vld [vmem:[#allocation6 + $0xb8] sm:$0xff]
      %v2196 = vld [vmem:[#allocation6 + $0xc0] sm:$0xff]
      %v2197 = vld [vmem:[#allocation6 + $0xc8] sm:$0xff]
      %v2198 = vld [vmem:[#allocation6 + $0xd0] sm:$0xff]
      %v2199 = vld [vmem:[#allocation6 + $0xd8] sm:$0xff]
      %v2200 = vld [vmem:[#allocation6 + $0xe0] sm:$0xff]
      %v2201 = vld [vmem:[#allocation6 + $0xe8] sm:$0xff]
      %v2202 = vld [vmem:[#allocation6 + $0xf0] sm:$0xff]
      %v2203 = vld [vmem:[#allocation6 + $0xf8] sm:$0xff]
      %v2204 = vld [vmem:[#allocation6 + $0x100] sm:$0xff]
      %v2205 = vld [vmem:[#allocation6 + $0x108] sm:$0xff]
      %v2206 = vld [vmem:[#allocation6 + $0x110] sm:$0xff]
      %v2207 = vld [vmem:[#allocation6 + $0x118] sm:$0xff]
      %v2208 = vld [vmem:[#allocation6 + $0x120] sm:$0xff]
      %v2209 = vld [vmem:[#allocation6 + $0x128] sm:$0xff]
      %v2210 = vld [vmem:[#allocation6 + $0x130] sm:$0xff]
      %v2211 = vld [vmem:[#allocation6 + $0x138] sm:$0xff]
      %v2212 = vld [vmem:[#allocation6 + $0x140] sm:$0xff]
      %v2213 = vld [vmem:[#allocation6 + $0x148] sm:$0xff]
      %v2214 = vld [vmem:[#allocation6 + $0x150] sm:$0xff]
      %v2215 = vld [vmem:[#allocation6 + $0x158] sm:$0xff]
      %v2216 = vld [vmem:[#allocation6 + $0x160] sm:$0xff]
      %v2217 = vld [vmem:[#allocation6 + $0x168] sm:$0xff]
      %v2218 = vld [vmem:[#allocation6 + $0x170] sm:$0xff]
      %v2219 = vld [vmem:[#allocation6 + $0x178] sm:$0xff]
      %v2220 = vld [vmem:[#allocation6 + $0x180] sm:$0xff]
      %v2221 = vld [vmem:[#allocation6 + $0x188] sm:$0xff]
      %v2222 = vld [vmem:[#allocation6 + $0x190] sm:$0xff]
      %v2223 = vld [vmem:[#allocation6 + $0x198] sm:$0xff]
      %v2224 = vld [vmem:[#allocation6 + $0x1a0] sm:$0xff]
      %v2225 = vld [vmem:[#allocation6 + $0x1a8] sm:$0xff]
      %v2226 = vld [vmem:[#allocation6 + $0x1b0] sm:$0xff]
      %v2227 = vld [vmem:[#allocation6 + $0x1b8] sm:$0xff]
      %v2228 = vld [vmem:[#allocation6 + $0x1c0] sm:$0xff]
      %v2229 = vld [vmem:[#allocation6 + $0x1c8] sm:$0xff]
      %v2230 = vld [vmem:[#allocation6 + $0x1d0] sm:$0xff]
      %v2231 = vld [vmem:[#allocation6 + $0x1d8] sm:$0xff]
      %v2232 = vld [vmem:[#allocation6 + $0x1e0] sm:$0xff]
      %v2233 = vld [vmem:[#allocation6 + $0x1e8] sm:$0xff]
      %v2234 = vld [vmem:[#allocation6 + $0x1f0] sm:$0xff]
      %v2235 = vld [vmem:[#allocation6 + $0x1f8] sm:$0xff]
      %v2236 = vld [vmem:[#allocation6 + $0x200] sm:$0xff]
      %v2237 = vld [vmem:[#allocation6 + $0x208] sm:$0xff]
      %v2238 = vld [vmem:[#allocation6 + $0x210] sm:$0xff]
      %v2239 = vld [vmem:[#allocation6 + $0x218] sm:$0xff]
      %v2240 = vld [vmem:[#allocation6 + $0x220] sm:$0xff]
      %v2241 = vld [vmem:[#allocation6 + $0x228] sm:$0xff]
      %v2242 = vld [vmem:[#allocation6 + $0x230] sm:$0xff]
      %v2243 = vld [vmem:[#allocation6 + $0x238] sm:$0xff]
      %v2244 = vld [vmem:[#allocation6 + $0x240] sm:$0xff]
      %v2245 = vld [vmem:[#allocation6 + $0x248] sm:$0xff]
      %v2246 = vld [vmem:[#allocation6 + $0x250] sm:$0xff]
      %v2247 = vld [vmem:[#allocation6 + $0x258] sm:$0xff]
      %v2248 = vld [vmem:[#allocation6 + $0x260] sm:$0xff]
      %v2249 = vld [vmem:[#allocation6 + $0x268] sm:$0xff]
      %v2250 = vld [vmem:[#allocation6 + $0x270] sm:$0xff]
      %v2251 = vld [vmem:[#allocation6 + $0x278] sm:$0xff]
      %v2252 = vld [vmem:[#allocation6 + $0x280] sm:$0xff]
      %v2253 = vld [vmem:[#allocation6 + $0x288] sm:$0xff]
      %v2254 = vld [vmem:[#allocation6 + $0x290] sm:$0xff]
      %v2255 = vld [vmem:[#allocation6 + $0x298] sm:$0xff]
      %v2256 = vld [vmem:[#allocation6 + $0x2a0] sm:$0xff]
      %v2257 = vld [vmem:[#allocation6 + $0x2a8] sm:$0xff]
      %v2258 = vld [vmem:[#allocation6 + $0x2b0] sm:$0xff]
      %v2259 = vld [vmem:[#allocation6 + $0x2b8] sm:$0xff]
      %v2260 = vld [vmem:[#allocation6 + $0x2c0] sm:$0xff]
      %v2261 = vld [vmem:[#allocation6 + $0x2c8] sm:$0xff]
      %v2262 = vld [vmem:[#allocation6 + $0x2d0] sm:$0xff]
      %v2263 = vld [vmem:[#allocation6 + $0x2d8] sm:$0xff]
      %v2264 = vld [vmem:[#allocation6 + $0x2e0] sm:$0xff]
      %v2265 = vld [vmem:[#allocation6 + $0x2e8] sm:$0xff]
      %v2266 = vld [vmem:[#allocation6 + $0x2f0] sm:$0xff]
      %v2267 = vld [vmem:[#allocation6 + $0x2f8] sm:$0xff]
      %v2268 = vld [vmem:[#allocation6 + $0x300] sm:$0xff]
      %v2269 = vld [vmem:[#allocation6 + $0x308] sm:$0xff]
      %v2270 = vld [vmem:[#allocation6 + $0x310] sm:$0xff]
      %v2271 = vld [vmem:[#allocation6 + $0x318] sm:$0xff]
      %v2272 = vld [vmem:[#allocation6 + $0x320] sm:$0xff]
      %v2273 = vld [vmem:[#allocation6 + $0x328] sm:$0xff]
      %v2274 = vld [vmem:[#allocation6 + $0x330] sm:$0xff]
      %v2275 = vld [vmem:[#allocation6 + $0x338] sm:$0xff]
      %v2276 = vld [vmem:[#allocation6 + $0x340] sm:$0xff]
      %v2277 = vld [vmem:[#allocation6 + $0x348] sm:$0xff]
      %v2278 = vld [vmem:[#allocation6 + $0x350] sm:$0xff]
      %v2279 = vld [vmem:[#allocation6 + $0x358] sm:$0xff]
      %v2280 = vld [vmem:[#allocation6 + $0x360] sm:$0xff]
      %v2281 = vld [vmem:[#allocation6 + $0x368] sm:$0xff]
      %v2282 = vld [vmem:[#allocation6 + $0x370] sm:$0xff]
      %v2283 = vld [vmem:[#allocation6 + $0x378] sm:$0xff]
      %v2284 = vld [vmem:[#allocation6 + $0x380] sm:$0xff]
      %v2285 = vld [vmem:[#allocation6 + $0x388] sm:$0xff]
      %v2286 = vld [vmem:[#allocation6 + $0x390] sm:$0xff]
      %v2287 = vld [vmem:[#allocation6 + $0x398] sm:$0xff]
      %v2288 = vld [vmem:[#allocation6 + $0x3a0] sm:$0xff]
      %v2289 = vld [vmem:[#allocation6 + $0x3a8] sm:$0xff]
      %v2290 = vld [vmem:[#allocation6 + $0x3b0] sm:$0xff]
      %v2291 = vld [vmem:[#allocation6 + $0x3b8] sm:$0xff]
      %v2292 = vld [vmem:[#allocation6 + $0x3c0] sm:$0xff]
      %v2293 = vld [vmem:[#allocation6 + $0x3c8] sm:$0xff]
      %v2294 = vld [vmem:[#allocation6 + $0x3d0] sm:$0xff]
      %v2295 = vld [vmem:[#allocation6 + $0x3d8] sm:$0xff]
      %v2296 = vld [vmem:[#allocation6 + $0x3e0] sm:$0xff]
      %v2297 = vld [vmem:[#allocation6 + $0x3e8] sm:$0xff]
      %v2298 = vld [vmem:[#allocation6 + $0x3f0] sm:$0xff]
      %v2299 = vld [vmem:[#allocation6 + $0x3f8] sm:$0xff]
      %v2301 = vcombine.high %v2169, %v2169
      %v2303 = vunpack.c.l.s4 1966171168
      %v2304 = vunpack.c.0.s8 %v2303
      %v2305 = vlaneseq
      %v2306 = vshrl.u32 %v2305, 7
      %v2307 = vsub.s32 %v2304, %v2306
      %v2308 = vrot.slane %v2169, %v2307
      %v2310 = vunpack.c.l.s4 1966171168
      %v2311 = vunpack.c.0.s8 %v2310
      %v2312 = vlaneseq
      %v2313 = vshrl.u32 %v2312, 7
      %v2314 = vsub.s32 %v2311, %v2313
      %v2315 = vrot.slane %v2301, %v2314
      %v2316 = vcombine.high %v2308, %v2308
      %v2317 = vcombine.high %v2315, %v2315
      %v2319 = vunpack.c.l.s4 1966171168
      %v2320 = vunpack.c.0.s8 %v2319
      %v2321 = vlaneseq
      %v2322 = vshrl.u32 %v2321, 7
      %v2323 = vsub.s32 %v2320, %v2322
      %v2324 = vrot.slane %v2308, %v2323
      %v2326 = vunpack.c.l.s4 1966171168
      %v2327 = vunpack.c.0.s8 %v2326
      %v2328 = vlaneseq
      %v2329 = vshrl.u32 %v2328, 7
      %v2330 = vsub.s32 %v2327, %v2329
      %v2331 = vrot.slane %v2315, %v2330
      %v2333 = vunpack.c.l.s4 1966171168
      %v2334 = vunpack.c.0.s8 %v2333
      %v2335 = vlaneseq
      %v2336 = vshrl.u32 %v2335, 7
      %v2337 = vsub.s32 %v2334, %v2336
      %v2338 = vrot.slane %v2316, %v2337
      %v2340 = vunpack.c.l.s4 1966171168
      %v2341 = vunpack.c.0.s8 %v2340
      %v2342 = vlaneseq
      %v2343 = vshrl.u32 %v2342, 7
      %v2344 = vsub.s32 %v2341, %v2343
      %v2345 = vrot.slane %v2317, %v2344
      %v2346 = vcombine.high %v2324, %v2324
      %v2347 = vcombine.high %v2331, %v2331
      %v2348 = vcombine.high %v2338, %v2338
      %v2349 = vcombine.high %v2345, %v2345
      %v2350 = vlaneseq
      %v2351 = vshrl.u32 %v2350, 7
      %v2352 = vsub.s32 0, %v2351
      %v2353 = vrot.slane %v2324, %v2352
      %v2354 = vlaneseq
      %v2355 = vshrl.u32 %v2354, 7
      %v2356 = vsub.s32 0, %v2355
      %v2357 = vrot.slane %v2338, %v2356
      %v2358 = vlaneseq
      %v2359 = vshrl.u32 %v2358, 7
      %v2360 = vsub.s32 0, %v2359
      %v2361 = vrot.slane %v2346, %v2360
      %v2362 = vlaneseq
      %v2363 = vshrl.u32 %v2362, 7
      %v2364 = vsub.s32 0, %v2363
      %v2365 = vrot.slane %v2348, %v2364
      %v2366 = vlaneseq
      %v2367 = vshrl.u32 %v2366, 7
      %v2368 = vsub.s32 0, %v2367
      %v2369 = vrot.slane %v2331, %v2368
      %v2370 = vlaneseq
      %v2371 = vshrl.u32 %v2370, 7
      %v2372 = vsub.s32 0, %v2371
      %v2373 = vrot.slane %v2345, %v2372
      %v2374 = vlaneseq
      %v2375 = vshrl.u32 %v2374, 7
      %v2376 = vsub.s32 0, %v2375
      %v2377 = vrot.slane %v2347, %v2376
      %v2378 = vlaneseq
      %v2379 = vshrl.u32 %v2378, 7
      %v2380 = vsub.s32 0, %v2379
      %v2381 = vrot.slane %v2349, %v2380
      %v2390 = vadd.f32 %v2172, %v2353
      %v2391 = vadd.f32 %v2173, %v2353
      %v2392 = vadd.f32 %v2174, %v2353
      %v2393 = vadd.f32 %v2175, %v2353
      %v2394 = vadd.f32 %v2176, %v2353
      %v2395 = vadd.f32 %v2177, %v2353
      %v2396 = vadd.f32 %v2178, %v2353
      %v2397 = vadd.f32 %v2179, %v2353
      %v2398 = vadd.f32 %v2180, %v2353
      %v2399 = vadd.f32 %v2181, %v2353
      %v2400 = vadd.f32 %v2182, %v2353
      %v2401 = vadd.f32 %v2183, %v2353
      %v2402 = vadd.f32 %v2184, %v2353
      %v2403 = vadd.f32 %v2185, %v2353
      %v2404 = vadd.f32 %v2186, %v2353
      %v2405 = vadd.f32 %v2187, %v2353
      %v2406 = vadd.f32 %v2188, %v2357
      %v2407 = vadd.f32 %v2189, %v2357
      %v2408 = vadd.f32 %v2190, %v2357
      %v2409 = vadd.f32 %v2191, %v2357
      %v2410 = vadd.f32 %v2192, %v2357
      %v2411 = vadd.f32 %v2193, %v2357
      %v2412 = vadd.f32 %v2194, %v2357
      %v2413 = vadd.f32 %v2195, %v2357
      %v2414 = vadd.f32 %v2196, %v2357
      %v2415 = vadd.f32 %v2197, %v2357
      %v2416 = vadd.f32 %v2198, %v2357
      %v2417 = vadd.f32 %v2199, %v2357
      %v2418 = vadd.f32 %v2200, %v2357
      %v2419 = vadd.f32 %v2201, %v2357
      %v2420 = vadd.f32 %v2202, %v2357
      %v2421 = vadd.f32 %v2203, %v2357
      %v2422 = vadd.f32 %v2204, %v2361
      %v2423 = vadd.f32 %v2205, %v2361
      %v2424 = vadd.f32 %v2206, %v2361
      %v2425 = vadd.f32 %v2207, %v2361
      %v2426 = vadd.f32 %v2208, %v2361
      %v2427 = vadd.f32 %v2209, %v2361
      %v2428 = vadd.f32 %v2210, %v2361
      %v2429 = vadd.f32 %v2211, %v2361
      %v2430 = vadd.f32 %v2212, %v2361
      %v2431 = vadd.f32 %v2213, %v2361
      %v2432 = vadd.f32 %v2214, %v2361
      %v2433 = vadd.f32 %v2215, %v2361
      %v2434 = vadd.f32 %v2216, %v2361
      %v2435 = vadd.f32 %v2217, %v2361
      %v2436 = vadd.f32 %v2218, %v2361
      %v2437 = vadd.f32 %v2219, %v2361
      %v2438 = vadd.f32 %v2220, %v2365
      %v2439 = vadd.f32 %v2221, %v2365
      %v2440 = vadd.f32 %v2222, %v2365
      %v2441 = vadd.f32 %v2223, %v2365
      %v2442 = vadd.f32 %v2224, %v2365
      %v2443 = vadd.f32 %v2225, %v2365
      %v2444 = vadd.f32 %v2226, %v2365
      %v2445 = vadd.f32 %v2227, %v2365
      %v2446 = vadd.f32 %v2228, %v2365
      %v2447 = vadd.f32 %v2229, %v2365
      %v2448 = vadd.f32 %v2230, %v2365
      %v2449 = vadd.f32 %v2231, %v2365
      %v2450 = vadd.f32 %v2232, %v2365
      %v2451 = vadd.f32 %v2233, %v2365
      %v2452 = vadd.f32 %v2234, %v2365
      %v2453 = vadd.f32 %v2235, %v2365
      %v2454 = vadd.f32 %v2236, %v2369
      %v2455 = vadd.f32 %v2237, %v2369
      %v2456 = vadd.f32 %v2238, %v2369
      %v2457 = vadd.f32 %v2239, %v2369
      %v2458 = vadd.f32 %v2240, %v2369
      %v2459 = vadd.f32 %v2241, %v2369
      %v2460 = vadd.f32 %v2242, %v2369
      %v2461 = vadd.f32 %v2243, %v2369
      %v2462 = vadd.f32 %v2244, %v2369
      %v2463 = vadd.f32 %v2245, %v2369
      %v2464 = vadd.f32 %v2246, %v2369
      %v2465 = vadd.f32 %v2247, %v2369
      %v2466 = vadd.f32 %v2248, %v2369
      %v2467 = vadd.f32 %v2249, %v2369
      %v2468 = vadd.f32 %v2250, %v2369
      %v2469 = vadd.f32 %v2251, %v2369
      %v2470 = vadd.f32 %v2252, %v2373
      %v2471 = vadd.f32 %v2253, %v2373
      %v2472 = vadd.f32 %v2254, %v2373
      %v2473 = vadd.f32 %v2255, %v2373
      %v2474 = vadd.f32 %v2256, %v2373
      %v2475 = vadd.f32 %v2257, %v2373
      %v2476 = vadd.f32 %v2258, %v2373
      %v2477 = vadd.f32 %v2259, %v2373
      %v2478 = vadd.f32 %v2260, %v2373
      %v2479 = vadd.f32 %v2261, %v2373
      %v2480 = vadd.f32 %v2262, %v2373
      %v2481 = vadd.f32 %v2263, %v2373
      %v2482 = vadd.f32 %v2264, %v2373
      %v2483 = vadd.f32 %v2265, %v2373
      %v2484 = vadd.f32 %v2266, %v2373
      %v2485 = vadd.f32 %v2267, %v2373
      %v2486 = vadd.f32 %v2268, %v2377
      %v2487 = vadd.f32 %v2269, %v2377
      %v2488 = vadd.f32 %v2270, %v2377
      %v2489 = vadd.f32 %v2271, %v2377
      %v2490 = vadd.f32 %v2272, %v2377
      %v2491 = vadd.f32 %v2273, %v2377
      %v2492 = vadd.f32 %v2274, %v2377
      %v2493 = vadd.f32 %v2275, %v2377
      %v2494 = vadd.f32 %v2276, %v2377
      %v2495 = vadd.f32 %v2277, %v2377
      %v2496 = vadd.f32 %v2278, %v2377
      %v2497 = vadd.f32 %v2279, %v2377
      %v2498 = vadd.f32 %v2280, %v2377
      %v2499 = vadd.f32 %v2281, %v2377
      %v2500 = vadd.f32 %v2282, %v2377
      %v2501 = vadd.f32 %v2283, %v2377
      %v2502 = vadd.f32 %v2284, %v2381
      %v2503 = vadd.f32 %v2285, %v2381
      %v2504 = vadd.f32 %v2286, %v2381
      %v2505 = vadd.f32 %v2287, %v2381
      %v2506 = vadd.f32 %v2288, %v2381
      %v2507 = vadd.f32 %v2289, %v2381
      %v2508 = vadd.f32 %v2290, %v2381
      %v2509 = vadd.f32 %v2291, %v2381
      %v2510 = vadd.f32 %v2292, %v2381
      %v2511 = vadd.f32 %v2293, %v2381
      %v2512 = vadd.f32 %v2294, %v2381
      %v2513 = vadd.f32 %v2295, %v2381
      %v2514 = vadd.f32 %v2296, %v2381
      %v2515 = vadd.f32 %v2297, %v2381
      %v2516 = vadd.f32 %v2298, %v2381
      %v2517 = vadd.f32 %v2299, %v2381
      %v2518 = vmax.f32 %v2390, 0.0
      %v2519 = vmax.f32 %v2391, 0.0
      %v2520 = vmax.f32 %v2392, 0.0
      %v2521 = vmax.f32 %v2393, 0.0
      %v2522 = vmax.f32 %v2394, 0.0
      %v2523 = vmax.f32 %v2395, 0.0
      %v2524 = vmax.f32 %v2396, 0.0
      %v2525 = vmax.f32 %v2397, 0.0
      %v2526 = vmax.f32 %v2398, 0.0
      %v2527 = vmax.f32 %v2399, 0.0
      %v2528 = vmax.f32 %v2400, 0.0
      %v2529 = vmax.f32 %v2401, 0.0
      %v2530 = vmax.f32 %v2402, 0.0
      %v2531 = vmax.f32 %v2403, 0.0
      %v2532 = vmax.f32 %v2404, 0.0
      %v2533 = vmax.f32 %v2405, 0.0
      %v2534 = vmax.f32 %v2406, 0.0
      %v2535 = vmax.f32 %v2407, 0.0
      %v2536 = vmax.f32 %v2408, 0.0
      %v2537 = vmax.f32 %v2409, 0.0
      %v2538 = vmax.f32 %v2410, 0.0
      %v2539 = vmax.f32 %v2411, 0.0
      %v2540 = vmax.f32 %v2412, 0.0
      %v2541 = vmax.f32 %v2413, 0.0
      %v2542 = vmax.f32 %v2414, 0.0
      %v2543 = vmax.f32 %v2415, 0.0
      %v2544 = vmax.f32 %v2416, 0.0
      %v2545 = vmax.f32 %v2417, 0.0
      %v2546 = vmax.f32 %v2418, 0.0
      %v2547 = vmax.f32 %v2419, 0.0
      %v2548 = vmax.f32 %v2420, 0.0
      %v2549 = vmax.f32 %v2421, 0.0
      %v2550 = vmax.f32 %v2422, 0.0
      %v2551 = vmax.f32 %v2423, 0.0
      %v2552 = vmax.f32 %v2424, 0.0
      %v2553 = vmax.f32 %v2425, 0.0
      %v2554 = vmax.f32 %v2426, 0.0
      %v2555 = vmax.f32 %v2427, 0.0
      %v2556 = vmax.f32 %v2428, 0.0
      %v2557 = vmax.f32 %v2429, 0.0
      %v2558 = vmax.f32 %v2430, 0.0
      %v2559 = vmax.f32 %v2431, 0.0
      %v2560 = vmax.f32 %v2432, 0.0
      %v2561 = vmax.f32 %v2433, 0.0
      %v2562 = vmax.f32 %v2434, 0.0
      %v2563 = vmax.f32 %v2435, 0.0
      %v2564 = vmax.f32 %v2436, 0.0
      %v2565 = vmax.f32 %v2437, 0.0
      %v2566 = vmax.f32 %v2438, 0.0
      %v2567 = vmax.f32 %v2439, 0.0
      %v2568 = vmax.f32 %v2440, 0.0
      %v2569 = vmax.f32 %v2441, 0.0
      %v2570 = vmax.f32 %v2442, 0.0
      %v2571 = vmax.f32 %v2443, 0.0
      %v2572 = vmax.f32 %v2444, 0.0
      %v2573 = vmax.f32 %v2445, 0.0
      %v2574 = vmax.f32 %v2446, 0.0
      %v2575 = vmax.f32 %v2447, 0.0
      %v2576 = vmax.f32 %v2448, 0.0
      %v2577 = vmax.f32 %v2449, 0.0
      %v2578 = vmax.f32 %v2450, 0.0
      %v2579 = vmax.f32 %v2451, 0.0
      %v2580 = vmax.f32 %v2452, 0.0
      %v2581 = vmax.f32 %v2453, 0.0
      %v2582 = vmax.f32 %v2454, 0.0
      %v2583 = vmax.f32 %v2455, 0.0
      %v2584 = vmax.f32 %v2456, 0.0
      %v2585 = vmax.f32 %v2457, 0.0
      %v2586 = vmax.f32 %v2458, 0.0
      %v2587 = vmax.f32 %v2459, 0.0
      %v2588 = vmax.f32 %v2460, 0.0
      %v2589 = vmax.f32 %v2461, 0.0
      %v2590 = vmax.f32 %v2462, 0.0
      %v2591 = vmax.f32 %v2463, 0.0
      %v2592 = vmax.f32 %v2464, 0.0
      %v2593 = vmax.f32 %v2465, 0.0
      %v2594 = vmax.f32 %v2466, 0.0
      %v2595 = vmax.f32 %v2467, 0.0
      %v2596 = vmax.f32 %v2468, 0.0
      %v2597 = vmax.f32 %v2469, 0.0
      %v2598 = vmax.f32 %v2470, 0.0
      %v2599 = vmax.f32 %v2471, 0.0
      %v2600 = vmax.f32 %v2472, 0.0
      %v2601 = vmax.f32 %v2473, 0.0
      %v2602 = vmax.f32 %v2474, 0.0
      %v2603 = vmax.f32 %v2475, 0.0
      %v2604 = vmax.f32 %v2476, 0.0
      %v2605 = vmax.f32 %v2477, 0.0
      %v2606 = vmax.f32 %v2478, 0.0
      %v2607 = vmax.f32 %v2479, 0.0
      %v2608 = vmax.f32 %v2480, 0.0
      %v2609 = vmax.f32 %v2481, 0.0
      %v2610 = vmax.f32 %v2482, 0.0
      %v2611 = vmax.f32 %v2483, 0.0
      %v2612 = vmax.f32 %v2484, 0.0
      %v2613 = vmax.f32 %v2485, 0.0
      %v2614 = vmax.f32 %v2486, 0.0
      %v2615 = vmax.f32 %v2487, 0.0
      %v2616 = vmax.f32 %v2488, 0.0
      %v2617 = vmax.f32 %v2489, 0.0
      %v2618 = vmax.f32 %v2490, 0.0
      %v2619 = vmax.f32 %v2491, 0.0
      %v2620 = vmax.f32 %v2492, 0.0
      %v2621 = vmax.f32 %v2493, 0.0
      %v2622 = vmax.f32 %v2494, 0.0
      %v2623 = vmax.f32 %v2495, 0.0
      %v2624 = vmax.f32 %v2496, 0.0
      %v2625 = vmax.f32 %v2497, 0.0
      %v2626 = vmax.f32 %v2498, 0.0
      %v2627 = vmax.f32 %v2499, 0.0
      %v2628 = vmax.f32 %v2500, 0.0
      %v2629 = vmax.f32 %v2501, 0.0
      %v2630 = vmax.f32 %v2502, 0.0
      %v2631 = vmax.f32 %v2503, 0.0
      %v2632 = vmax.f32 %v2504, 0.0
      %v2633 = vmax.f32 %v2505, 0.0
      %v2634 = vmax.f32 %v2506, 0.0
      %v2635 = vmax.f32 %v2507, 0.0
      %v2636 = vmax.f32 %v2508, 0.0
      %v2637 = vmax.f32 %v2509, 0.0
      %v2638 = vmax.f32 %v2510, 0.0
      %v2639 = vmax.f32 %v2511, 0.0
      %v2640 = vmax.f32 %v2512, 0.0
      %v2641 = vmax.f32 %v2513, 0.0
      %v2642 = vmax.f32 %v2514, 0.0
      %v2643 = vmax.f32 %v2515, 0.0
      %v2644 = vmax.f32 %v2516, 0.0
      %v2645 = vmax.f32 %v2517, 0.0
      %v2646 = vld [vmem:[%s8] sm:$0x1]
      %v2648 = vlaneseq
      %v2649 = vshrl.u32 %v2648, 7
      %v2650 = vsub.s32 0, %v2649
      %v2651 = vrot.slane %v2646, %v2650
      %v2653 = vmul.f32 %v2518, %v2651
      %v2654 = vmul.f32 %v2519, %v2651
      %v2655 = vmul.f32 %v2520, %v2651
      %v2656 = vmul.f32 %v2521, %v2651
      %v2657 = vmul.f32 %v2522, %v2651
      %v2658 = vmul.f32 %v2523, %v2651
      %v2659 = vmul.f32 %v2524, %v2651
      %v2660 = vmul.f32 %v2525, %v2651
      %v2661 = vmul.f32 %v2526, %v2651
      %v2662 = vmul.f32 %v2527, %v2651
      %v2663 = vmul.f32 %v2528, %v2651
      %v2664 = vmul.f32 %v2529, %v2651
      %v2665 = vmul.f32 %v2530, %v2651
      %v2666 = vmul.f32 %v2531, %v2651
      %v2667 = vmul.f32 %v2532, %v2651
      %v2668 = vmul.f32 %v2533, %v2651
      %v2669 = vmul.f32 %v2534, %v2651
      %v2670 = vmul.f32 %v2535, %v2651
      %v2671 = vmul.f32 %v2536, %v2651
      %v2672 = vmul.f32 %v2537, %v2651
      %v2673 = vmul.f32 %v2538, %v2651
      %v2674 = vmul.f32 %v2539, %v2651
      %v2675 = vmul.f32 %v2540, %v2651
      %v2676 = vmul.f32 %v2541, %v2651
      %v2677 = vmul.f32 %v2542, %v2651
      %v2678 = vmul.f32 %v2543, %v2651
      %v2679 = vmul.f32 %v2544, %v2651
      %v2680 = vmul.f32 %v2545, %v2651
      %v2681 = vmul.f32 %v2546, %v2651
      %v2682 = vmul.f32 %v2547, %v2651
      %v2683 = vmul.f32 %v2548, %v2651
      %v2684 = vmul.f32 %v2549, %v2651
      %v2685 = vmul.f32 %v2550, %v2651
      %v2686 = vmul.f32 %v2551, %v2651
      %v2687 = vmul.f32 %v2552, %v2651
      %v2688 = vmul.f32 %v2553, %v2651
      %v2689 = vmul.f32 %v2554, %v2651
      %v2690 = vmul.f32 %v2555, %v2651
      %v2691 = vmul.f32 %v2556, %v2651
      %v2692 = vmul.f32 %v2557, %v2651
      %v2693 = vmul.f32 %v2558, %v2651
      %v2694 = vmul.f32 %v2559, %v2651
      %v2695 = vmul.f32 %v2560, %v2651
      %v2696 = vmul.f32 %v2561, %v2651
      %v2697 = vmul.f32 %v2562, %v2651
      %v2698 = vmul.f32 %v2563, %v2651
      %v2699 = vmul.f32 %v2564, %v2651
      %v2700 = vmul.f32 %v2565, %v2651
      %v2701 = vmul.f32 %v2566, %v2651
      %v2702 = vmul.f32 %v2567, %v2651
      %v2703 = vmul.f32 %v2568, %v2651
      %v2704 = vmul.f32 %v2569, %v2651
      %v2705 = vmul.f32 %v2570, %v2651
      %v2706 = vmul.f32 %v2571, %v2651
      %v2707 = vmul.f32 %v2572, %v2651
      %v2708 = vmul.f32 %v2573, %v2651
      %v2709 = vmul.f32 %v2574, %v2651
      %v2710 = vmul.f32 %v2575, %v2651
      %v2711 = vmul.f32 %v2576, %v2651
      %v2712 = vmul.f32 %v2577, %v2651
      %v2713 = vmul.f32 %v2578, %v2651
      %v2714 = vmul.f32 %v2579, %v2651
      %v2715 = vmul.f32 %v2580, %v2651
      %v2716 = vmul.f32 %v2581, %v2651
      %v2717 = vmul.f32 %v2582, %v2651
      %v2718 = vmul.f32 %v2583, %v2651
      %v2719 = vmul.f32 %v2584, %v2651
      %v2720 = vmul.f32 %v2585, %v2651
      %v2721 = vmul.f32 %v2586, %v2651
      %v2722 = vmul.f32 %v2587, %v2651
      %v2723 = vmul.f32 %v2588, %v2651
      %v2724 = vmul.f32 %v2589, %v2651
      %v2725 = vmul.f32 %v2590, %v2651
      %v2726 = vmul.f32 %v2591, %v2651
      %v2727 = vmul.f32 %v2592, %v2651
      %v2728 = vmul.f32 %v2593, %v2651
      %v2729 = vmul.f32 %v2594, %v2651
      %v2730 = vmul.f32 %v2595, %v2651
      %v2731 = vmul.f32 %v2596, %v2651
      %v2732 = vmul.f32 %v2597, %v2651
      %v2733 = vmul.f32 %v2598, %v2651
      %v2734 = vmul.f32 %v2599, %v2651
      %v2735 = vmul.f32 %v2600, %v2651
      %v2736 = vmul.f32 %v2601, %v2651
      %v2737 = vmul.f32 %v2602, %v2651
      %v2738 = vmul.f32 %v2603, %v2651
      %v2739 = vmul.f32 %v2604, %v2651
      %v2740 = vmul.f32 %v2605, %v2651
      %v2741 = vmul.f32 %v2606, %v2651
      %v2742 = vmul.f32 %v2607, %v2651
      %v2743 = vmul.f32 %v2608, %v2651
      %v2744 = vmul.f32 %v2609, %v2651
      %v2745 = vmul.f32 %v2610, %v2651
      %v2746 = vmul.f32 %v2611, %v2651
      %v2747 = vmul.f32 %v2612, %v2651
      %v2748 = vmul.f32 %v2613, %v2651
      %v2749 = vmul.f32 %v2614, %v2651
      %v2750 = vmul.f32 %v2615, %v2651
      %v2751 = vmul.f32 %v2616, %v2651
      %v2752 = vmul.f32 %v2617, %v2651
      %v2753 = vmul.f32 %v2618, %v2651
      %v2754 = vmul.f32 %v2619, %v2651
      %v2755 = vmul.f32 %v2620, %v2651
      %v2756 = vmul.f32 %v2621, %v2651
      %v2757 = vmul.f32 %v2622, %v2651
      %v2758 = vmul.f32 %v2623, %v2651
      %v2759 = vmul.f32 %v2624, %v2651
      %v2760 = vmul.f32 %v2625, %v2651
      %v2761 = vmul.f32 %v2626, %v2651
      %v2762 = vmul.f32 %v2627, %v2651
      %v2763 = vmul.f32 %v2628, %v2651
      %v2764 = vmul.f32 %v2629, %v2651
      %v2765 = vmul.f32 %v2630, %v2651
      %v2766 = vmul.f32 %v2631, %v2651
      %v2767 = vmul.f32 %v2632, %v2651
      %v2768 = vmul.f32 %v2633, %v2651
      %v2769 = vmul.f32 %v2634, %v2651
      %v2770 = vmul.f32 %v2635, %v2651
      %v2771 = vmul.f32 %v2636, %v2651
      %v2772 = vmul.f32 %v2637, %v2651
      %v2773 = vmul.f32 %v2638, %v2651
      %v2774 = vmul.f32 %v2639, %v2651
      %v2775 = vmul.f32 %v2640, %v2651
      %v2776 = vmul.f32 %v2641, %v2651
      %v2777 = vmul.f32 %v2642, %v2651
      %v2778 = vmul.f32 %v2643, %v2651
      %v2779 = vmul.f32 %v2644, %v2651
      %v2780 = vmul.f32 %v2645, %v2651
      %v2781 = vsel %vm2098, %v2653, 0.0
      %2782 = vadd.xlane.f32.xlu0 %v2781
      %v2783 = vpop.xlane.xlu0 %2782
      %v2784 = vsel %vm2098, %v2654, 0.0
      %2785 = vadd.xlane.f32.xlu0 %v2784
      %v2786 = vpop.xlane.xlu0 %2785
      %v2787 = vsel %vm2098, %v2655, 0.0
      %2788 = vadd.xlane.f32.xlu0 %v2787
      %v2789 = vpop.xlane.xlu0 %2788
      %v2790 = vsel %vm2098, %v2656, 0.0
      %2791 = vadd.xlane.f32.xlu0 %v2790
      %v2792 = vpop.xlane.xlu0 %2791
      %v2793 = vsel %vm2098, %v2657, 0.0
      %2794 = vadd.xlane.f32.xlu0 %v2793
      %v2795 = vpop.xlane.xlu0 %2794
      %v2796 = vsel %vm2098, %v2658, 0.0
      %2797 = vadd.xlane.f32.xlu0 %v2796
      %v2798 = vpop.xlane.xlu0 %2797
      %v2799 = vsel %vm2098, %v2659, 0.0
      %2800 = vadd.xlane.f32.xlu0 %v2799
      %v2801 = vpop.xlane.xlu0 %2800
      %v2802 = vsel %vm2098, %v2660, 0.0
      %2803 = vadd.xlane.f32.xlu0 %v2802
      %v2804 = vpop.xlane.xlu0 %2803
      %v2805 = vsel %vm2098, %v2661, 0.0
      %2806 = vadd.xlane.f32.xlu0 %v2805
      %v2807 = vpop.xlane.xlu0 %2806
      %v2808 = vsel %vm2098, %v2662, 0.0
      %2809 = vadd.xlane.f32.xlu0 %v2808
      %v2810 = vpop.xlane.xlu0 %2809
      %v2811 = vsel %vm2098, %v2663, 0.0
      %2812 = vadd.xlane.f32.xlu0 %v2811
      %v2813 = vpop.xlane.xlu0 %2812
      %v2814 = vsel %vm2098, %v2664, 0.0
      %2815 = vadd.xlane.f32.xlu0 %v2814
      %v2816 = vpop.xlane.xlu0 %2815
      %v2817 = vsel %vm2098, %v2665, 0.0
      %2818 = vadd.xlane.f32.xlu0 %v2817
      %v2819 = vpop.xlane.xlu0 %2818
      %v2820 = vsel %vm2098, %v2666, 0.0
      %2821 = vadd.xlane.f32.xlu0 %v2820
      %v2822 = vpop.xlane.xlu0 %2821
      %v2823 = vsel %vm2098, %v2667, 0.0
      %2824 = vadd.xlane.f32.xlu0 %v2823
      %v2825 = vpop.xlane.xlu0 %2824
      %v2826 = vsel %vm2098, %v2668, 0.0
      %2827 = vadd.xlane.f32.xlu0 %v2826
      %v2828 = vpop.xlane.xlu0 %2827
      %v2829 = vsel %vm2098, %v2669, 0.0
      %2830 = vadd.xlane.f32.xlu0 %v2829
      %v2831 = vpop.xlane.xlu0 %2830
      %v2832 = vsel %vm2098, %v2670, 0.0
      %2833 = vadd.xlane.f32.xlu0 %v2832
      %v2834 = vpop.xlane.xlu0 %2833
      %v2835 = vsel %vm2098, %v2671, 0.0
      %2836 = vadd.xlane.f32.xlu0 %v2835
      %v2837 = vpop.xlane.xlu0 %2836
      %v2838 = vsel %vm2098, %v2672, 0.0
      %2839 = vadd.xlane.f32.xlu0 %v2838
      %v2840 = vpop.xlane.xlu0 %2839
      %v2841 = vsel %vm2098, %v2673, 0.0
      %2842 = vadd.xlane.f32.xlu0 %v2841
      %v2843 = vpop.xlane.xlu0 %2842
      %v2844 = vsel %vm2098, %v2674, 0.0
      %2845 = vadd.xlane.f32.xlu0 %v2844
      %v2846 = vpop.xlane.xlu0 %2845
      %v2847 = vsel %vm2098, %v2675, 0.0
      %2848 = vadd.xlane.f32.xlu0 %v2847
      %v2849 = vpop.xlane.xlu0 %2848
      %v2850 = vsel %vm2098, %v2676, 0.0
      %2851 = vadd.xlane.f32.xlu0 %v2850
      %v2852 = vpop.xlane.xlu0 %2851
      %v2853 = vsel %vm2098, %v2677, 0.0
      %2854 = vadd.xlane.f32.xlu0 %v2853
      %v2855 = vpop.xlane.xlu0 %2854
      %v2856 = vsel %vm2098, %v2678, 0.0
      %2857 = vadd.xlane.f32.xlu0 %v2856
      %v2858 = vpop.xlane.xlu0 %2857
      %v2859 = vsel %vm2098, %v2679, 0.0
      %2860 = vadd.xlane.f32.xlu0 %v2859
      %v2861 = vpop.xlane.xlu0 %2860
      %v2862 = vsel %vm2098, %v2680, 0.0
      %2863 = vadd.xlane.f32.xlu0 %v2862
      %v2864 = vpop.xlane.xlu0 %2863
      %v2865 = vsel %vm2098, %v2681, 0.0
      %2866 = vadd.xlane.f32.xlu0 %v2865
      %v2867 = vpop.xlane.xlu0 %2866
      %v2868 = vsel %vm2098, %v2682, 0.0
      %2869 = vadd.xlane.f32.xlu0 %v2868
      %v2870 = vpop.xlane.xlu0 %2869
      %v2871 = vsel %vm2098, %v2683, 0.0
      %2872 = vadd.xlane.f32.xlu0 %v2871
      %v2873 = vpop.xlane.xlu0 %2872
      %v2874 = vsel %vm2098, %v2684, 0.0
      %2875 = vadd.xlane.f32.xlu0 %v2874
      %v2876 = vpop.xlane.xlu0 %2875
      %v2877 = vsel %vm2098, %v2685, 0.0
      %2878 = vadd.xlane.f32.xlu0 %v2877
      %v2879 = vpop.xlane.xlu0 %2878
      %v2880 = vsel %vm2098, %v2686, 0.0
      %2881 = vadd.xlane.f32.xlu0 %v2880
      %v2882 = vpop.xlane.xlu0 %2881
      %v2883 = vsel %vm2098, %v2687, 0.0
      %2884 = vadd.xlane.f32.xlu0 %v2883
      %v2885 = vpop.xlane.xlu0 %2884
      %v2886 = vsel %vm2098, %v2688, 0.0
      %2887 = vadd.xlane.f32.xlu0 %v2886
      %v2888 = vpop.xlane.xlu0 %2887
      %v2889 = vsel %vm2098, %v2689, 0.0
      %2890 = vadd.xlane.f32.xlu0 %v2889
      %v2891 = vpop.xlane.xlu0 %2890
      %v2892 = vsel %vm2098, %v2690, 0.0
      %2893 = vadd.xlane.f32.xlu0 %v2892
      %v2894 = vpop.xlane.xlu0 %2893
      %v2895 = vsel %vm2098, %v2691, 0.0
      %2896 = vadd.xlane.f32.xlu0 %v2895
      %v2897 = vpop.xlane.xlu0 %2896
      %v2898 = vsel %vm2098, %v2692, 0.0
      %2899 = vadd.xlane.f32.xlu0 %v2898
      %v2900 = vpop.xlane.xlu0 %2899
      %v2901 = vsel %vm2098, %v2693, 0.0
      %2902 = vadd.xlane.f32.xlu0 %v2901
      %v2903 = vpop.xlane.xlu0 %2902
      %v2904 = vsel %vm2098, %v2694, 0.0
      %2905 = vadd.xlane.f32.xlu0 %v2904
      %v2906 = vpop.xlane.xlu0 %2905
      %v2907 = vsel %vm2098, %v2695, 0.0
      %2908 = vadd.xlane.f32.xlu0 %v2907
      %v2909 = vpop.xlane.xlu0 %2908
      %v2910 = vsel %vm2098, %v2696, 0.0
      %2911 = vadd.xlane.f32.xlu0 %v2910
      %v2912 = vpop.xlane.xlu0 %2911
      %v2913 = vsel %vm2098, %v2697, 0.0
      %2914 = vadd.xlane.f32.xlu0 %v2913
      %v2915 = vpop.xlane.xlu0 %2914
      %v2916 = vsel %vm2098, %v2698, 0.0
      %2917 = vadd.xlane.f32.xlu0 %v2916
      %v2918 = vpop.xlane.xlu0 %2917
      %v2919 = vsel %vm2098, %v2699, 0.0
      %2920 = vadd.xlane.f32.xlu0 %v2919
      %v2921 = vpop.xlane.xlu0 %2920
      %v2922 = vsel %vm2098, %v2700, 0.0
      %2923 = vadd.xlane.f32.xlu0 %v2922
      %v2924 = vpop.xlane.xlu0 %2923
      %v2925 = vsel %vm2098, %v2701, 0.0
      %2926 = vadd.xlane.f32.xlu0 %v2925
      %v2927 = vpop.xlane.xlu0 %2926
      %v2928 = vsel %vm2098, %v2702, 0.0
      %2929 = vadd.xlane.f32.xlu0 %v2928
      %v2930 = vpop.xlane.xlu0 %2929
      %v2931 = vsel %vm2098, %v2703, 0.0
      %2932 = vadd.xlane.f32.xlu0 %v2931
      %v2933 = vpop.xlane.xlu0 %2932
      %v2934 = vsel %vm2098, %v2704, 0.0
      %2935 = vadd.xlane.f32.xlu0 %v2934
      %v2936 = vpop.xlane.xlu0 %2935
      %v2937 = vsel %vm2098, %v2705, 0.0
      %2938 = vadd.xlane.f32.xlu0 %v2937
      %v2939 = vpop.xlane.xlu0 %2938
      %v2940 = vsel %vm2098, %v2706, 0.0
      %2941 = vadd.xlane.f32.xlu0 %v2940
      %v2942 = vpop.xlane.xlu0 %2941
      %v2943 = vsel %vm2098, %v2707, 0.0
      %2944 = vadd.xlane.f32.xlu0 %v2943
      %v2945 = vpop.xlane.xlu0 %2944
      %v2946 = vsel %vm2098, %v2708, 0.0
      %2947 = vadd.xlane.f32.xlu0 %v2946
      %v2948 = vpop.xlane.xlu0 %2947
      %v2949 = vsel %vm2098, %v2709, 0.0
      %2950 = vadd.xlane.f32.xlu0 %v2949
      %v2951 = vpop.xlane.xlu0 %2950
      %v2952 = vsel %vm2098, %v2710, 0.0
      %2953 = vadd.xlane.f32.xlu0 %v2952
      %v2954 = vpop.xlane.xlu0 %2953
      %v2955 = vsel %vm2098, %v2711, 0.0
      %2956 = vadd.xlane.f32.xlu0 %v2955
      %v2957 = vpop.xlane.xlu0 %2956
      %v2958 = vsel %vm2098, %v2712, 0.0
      %2959 = vadd.xlane.f32.xlu0 %v2958
      %v2960 = vpop.xlane.xlu0 %2959
      %v2961 = vsel %vm2098, %v2713, 0.0
      %2962 = vadd.xlane.f32.xlu0 %v2961
      %v2963 = vpop.xlane.xlu0 %2962
      %v2964 = vsel %vm2098, %v2714, 0.0
      %2965 = vadd.xlane.f32.xlu0 %v2964
      %v2966 = vpop.xlane.xlu0 %2965
      %v2967 = vsel %vm2098, %v2715, 0.0
      %2968 = vadd.xlane.f32.xlu0 %v2967
      %v2969 = vpop.xlane.xlu0 %2968
      %v2970 = vsel %vm2098, %v2716, 0.0
      %2971 = vadd.xlane.f32.xlu0 %v2970
      %v2972 = vpop.xlane.xlu0 %2971
      %v2973 = vsel %vm2098, %v2717, 0.0
      %2974 = vadd.xlane.f32.xlu0 %v2973
      %v2975 = vpop.xlane.xlu0 %2974
      %v2976 = vsel %vm2098, %v2718, 0.0
      %2977 = vadd.xlane.f32.xlu0 %v2976
      %v2978 = vpop.xlane.xlu0 %2977
      %v2979 = vsel %vm2098, %v2719, 0.0
      %2980 = vadd.xlane.f32.xlu0 %v2979
      %v2981 = vpop.xlane.xlu0 %2980
      %v2982 = vsel %vm2098, %v2720, 0.0
      %2983 = vadd.xlane.f32.xlu0 %v2982
      %v2984 = vpop.xlane.xlu0 %2983
      %v2985 = vsel %vm2098, %v2721, 0.0
      %2986 = vadd.xlane.f32.xlu0 %v2985
      %v2987 = vpop.xlane.xlu0 %2986
      %v2988 = vsel %vm2098, %v2722, 0.0
      %2989 = vadd.xlane.f32.xlu0 %v2988
      %v2990 = vpop.xlane.xlu0 %2989
      %v2991 = vsel %vm2098, %v2723, 0.0
      %2992 = vadd.xlane.f32.xlu0 %v2991
      %v2993 = vpop.xlane.xlu0 %2992
      %v2994 = vsel %vm2098, %v2724, 0.0
      %2995 = vadd.xlane.f32.xlu0 %v2994
      %v2996 = vpop.xlane.xlu0 %2995
      %v2997 = vsel %vm2098, %v2725, 0.0
      %2998 = vadd.xlane.f32.xlu0 %v2997
      %v2999 = vpop.xlane.xlu0 %2998
      %v3000 = vsel %vm2098, %v2726, 0.0
      %3001 = vadd.xlane.f32.xlu0 %v3000
      %v3002 = vpop.xlane.xlu0 %3001
      %v3003 = vsel %vm2098, %v2727, 0.0
      %3004 = vadd.xlane.f32.xlu0 %v3003
      %v3005 = vpop.xlane.xlu0 %3004
      %v3006 = vsel %vm2098, %v2728, 0.0
      %3007 = vadd.xlane.f32.xlu0 %v3006
      %v3008 = vpop.xlane.xlu0 %3007
      %v3009 = vsel %vm2098, %v2729, 0.0
      %3010 = vadd.xlane.f32.xlu0 %v3009
      %v3011 = vpop.xlane.xlu0 %3010
      %v3012 = vsel %vm2098, %v2730, 0.0
      %3013 = vadd.xlane.f32.xlu0 %v3012
      %v3014 = vpop.xlane.xlu0 %3013
      %v3015 = vsel %vm2098, %v2731, 0.0
      %3016 = vadd.xlane.f32.xlu0 %v3015
      %v3017 = vpop.xlane.xlu0 %3016
      %v3018 = vsel %vm2098, %v2732, 0.0
      %3019 = vadd.xlane.f32.xlu0 %v3018
      %v3020 = vpop.xlane.xlu0 %3019
      %v3021 = vsel %vm2098, %v2733, 0.0
      %3022 = vadd.xlane.f32.xlu0 %v3021
      %v3023 = vpop.xlane.xlu0 %3022
      %v3024 = vsel %vm2098, %v2734, 0.0
      %3025 = vadd.xlane.f32.xlu0 %v3024
      %v3026 = vpop.xlane.xlu0 %3025
      %v3027 = vsel %vm2098, %v2735, 0.0
      %3028 = vadd.xlane.f32.xlu0 %v3027
      %v3029 = vpop.xlane.xlu0 %3028
      %v3030 = vsel %vm2098, %v2736, 0.0
      %3031 = vadd.xlane.f32.xlu0 %v3030
      %v3032 = vpop.xlane.xlu0 %3031
      %v3033 = vsel %vm2098, %v2737, 0.0
      %3034 = vadd.xlane.f32.xlu0 %v3033
      %v3035 = vpop.xlane.xlu0 %3034
      %v3036 = vsel %vm2098, %v2738, 0.0
      %3037 = vadd.xlane.f32.xlu0 %v3036
      %v3038 = vpop.xlane.xlu0 %3037
      %v3039 = vsel %vm2098, %v2739, 0.0
      %3040 = vadd.xlane.f32.xlu0 %v3039
      %v3041 = vpop.xlane.xlu0 %3040
      %v3042 = vsel %vm2098, %v2740, 0.0
      %3043 = vadd.xlane.f32.xlu0 %v3042
      %v3044 = vpop.xlane.xlu0 %3043
      %v3045 = vsel %vm2098, %v2741, 0.0
      %3046 = vadd.xlane.f32.xlu0 %v3045
      %v3047 = vpop.xlane.xlu0 %3046
      %v3048 = vsel %vm2098, %v2742, 0.0
      %3049 = vadd.xlane.f32.xlu0 %v3048
      %v3050 = vpop.xlane.xlu0 %3049
      %v3051 = vsel %vm2098, %v2743, 0.0
      %3052 = vadd.xlane.f32.xlu0 %v3051
      %v3053 = vpop.xlane.xlu0 %3052
      %v3054 = vsel %vm2098, %v2744, 0.0
      %3055 = vadd.xlane.f32.xlu0 %v3054
      %v3056 = vpop.xlane.xlu0 %3055
      %v3057 = vsel %vm2098, %v2745, 0.0
      %3058 = vadd.xlane.f32.xlu0 %v3057
      %v3059 = vpop.xlane.xlu0 %3058
      %v3060 = vsel %vm2098, %v2746, 0.0
      %3061 = vadd.xlane.f32.xlu0 %v3060
      %v3062 = vpop.xlane.xlu0 %3061
      %v3063 = vsel %vm2098, %v2747, 0.0
      %3064 = vadd.xlane.f32.xlu0 %v3063
      %v3065 = vpop.xlane.xlu0 %3064
      %v3066 = vsel %vm2098, %v2748, 0.0
      %3067 = vadd.xlane.f32.xlu0 %v3066
      %v3068 = vpop.xlane.xlu0 %3067
      %v3069 = vsel %vm2098, %v2749, 0.0
      %3070 = vadd.xlane.f32.xlu0 %v3069
      %v3071 = vpop.xlane.xlu0 %3070
      %v3072 = vsel %vm2098, %v2750, 0.0
      %3073 = vadd.xlane.f32.xlu0 %v3072
      %v3074 = vpop.xlane.xlu0 %3073
      %v3075 = vsel %vm2098, %v2751, 0.0
      %3076 = vadd.xlane.f32.xlu0 %v3075
      %v3077 = vpop.xlane.xlu0 %3076
      %v3078 = vsel %vm2098, %v2752, 0.0
      %3079 = vadd.xlane.f32.xlu0 %v3078
      %v3080 = vpop.xlane.xlu0 %3079
      %v3081 = vsel %vm2098, %v2753, 0.0
      %3082 = vadd.xlane.f32.xlu0 %v3081
      %v3083 = vpop.xlane.xlu0 %3082
      %v3084 = vsel %vm2098, %v2754, 0.0
      %3085 = vadd.xlane.f32.xlu0 %v3084
      %v3086 = vpop.xlane.xlu0 %3085
      %v3087 = vsel %vm2098, %v2755, 0.0
      %3088 = vadd.xlane.f32.xlu0 %v3087
      %v3089 = vpop.xlane.xlu0 %3088
      %v3090 = vsel %vm2098, %v2756, 0.0
      %3091 = vadd.xlane.f32.xlu0 %v3090
      %v3092 = vpop.xlane.xlu0 %3091
      %v3093 = vsel %vm2098, %v2757, 0.0
      %3094 = vadd.xlane.f32.xlu0 %v3093
      %v3095 = vpop.xlane.xlu0 %3094
      %v3096 = vsel %vm2098, %v2758, 0.0
      %3097 = vadd.xlane.f32.xlu0 %v3096
      %v3098 = vpop.xlane.xlu0 %3097
      %v3099 = vsel %vm2098, %v2759, 0.0
      %3100 = vadd.xlane.f32.xlu0 %v3099
      %v3101 = vpop.xlane.xlu0 %3100
      %v3102 = vsel %vm2098, %v2760, 0.0
      %3103 = vadd.xlane.f32.xlu0 %v3102
      %v3104 = vpop.xlane.xlu0 %3103
      %v3105 = vsel %vm2098, %v2761, 0.0
      %3106 = vadd.xlane.f32.xlu0 %v3105
      %v3107 = vpop.xlane.xlu0 %3106
      %v3108 = vsel %vm2098, %v2762, 0.0
      %3109 = vadd.xlane.f32.xlu0 %v3108
      %v3110 = vpop.xlane.xlu0 %3109
      %v3111 = vsel %vm2098, %v2763, 0.0
      %3112 = vadd.xlane.f32.xlu0 %v3111
      %v3113 = vpop.xlane.xlu0 %3112
      %v3114 = vsel %vm2098, %v2764, 0.0
      %3115 = vadd.xlane.f32.xlu0 %v3114
      %v3116 = vpop.xlane.xlu0 %3115
      %v3117 = vsel %vm2098, %v2765, 0.0
      %3118 = vadd.xlane.f32.xlu0 %v3117
      %v3119 = vpop.xlane.xlu0 %3118
      %v3120 = vsel %vm2098, %v2766, 0.0
      %3121 = vadd.xlane.f32.xlu0 %v3120
      %v3122 = vpop.xlane.xlu0 %3121
      %v3123 = vsel %vm2098, %v2767, 0.0
      %3124 = vadd.xlane.f32.xlu0 %v3123
      %v3125 = vpop.xlane.xlu0 %3124
      %v3126 = vsel %vm2098, %v2768, 0.0
      %3127 = vadd.xlane.f32.xlu0 %v3126
      %v3128 = vpop.xlane.xlu0 %3127
      %v3129 = vsel %vm2098, %v2769, 0.0
      %3130 = vadd.xlane.f32.xlu0 %v3129
      %v3131 = vpop.xlane.xlu0 %3130
      %v3132 = vsel %vm2098, %v2770, 0.0
      %3133 = vadd.xlane.f32.xlu0 %v3132
      %v3134 = vpop.xlane.xlu0 %3133
      %v3135 = vsel %vm2098, %v2771, 0.0
      %3136 = vadd.xlane.f32.xlu0 %v3135
      %v3137 = vpop.xlane.xlu0 %3136
      %v3138 = vsel %vm2098, %v2772, 0.0
      %3139 = vadd.xlane.f32.xlu0 %v3138
      %v3140 = vpop.xlane.xlu0 %3139
      %v3141 = vsel %vm2098, %v2773, 0.0
      %3142 = vadd.xlane.f32.xlu0 %v3141
      %v3143 = vpop.xlane.xlu0 %3142
      %v3144 = vsel %vm2098, %v2774, 0.0
      %3145 = vadd.xlane.f32.xlu0 %v3144
      %v3146 = vpop.xlane.xlu0 %3145
      %v3147 = vsel %vm2098, %v2775, 0.0
      %3148 = vadd.xlane.f32.xlu0 %v3147
      %v3149 = vpop.xlane.xlu0 %3148
      %v3150 = vsel %vm2098, %v2776, 0.0
      %3151 = vadd.xlane.f32.xlu0 %v3150
      %v3152 = vpop.xlane.xlu0 %3151
      %v3153 = vsel %vm2098, %v2777, 0.0
      %3154 = vadd.xlane.f32.xlu0 %v3153
      %v3155 = vpop.xlane.xlu0 %3154
      %v3156 = vsel %vm2098, %v2778, 0.0
      %3157 = vadd.xlane.f32.xlu0 %v3156
      %v3158 = vpop.xlane.xlu0 %3157
      %v3159 = vsel %vm2098, %v2779, 0.0
      %3160 = vadd.xlane.f32.xlu0 %v3159
      %v3161 = vpop.xlane.xlu0 %3160
      %v3162 = vsel %vm2098, %v2780, 0.0
      %3163 = vadd.xlane.f32.xlu0 %v3162
      %v3164 = vpop.xlane.xlu0 %3163
      %v3165 = vld [vmem:[#allocation7] sm:$0x1]
      %v3167 = vlaneseq
      %v3168 = vshrl.u32 %v3167, 7
      %v3169 = vsub.s32 0, %v3168
      %v3170 = vrot.slane %v3165, %v3169
      %3171 = vset.pattern.permute.xlu0 0
      %3172 = vperm.xlu0 %3171, %v3170
      %v3173 = vpop.permute.xlu0 %3172
      %v3175 = vadd.f32 %v2783, %v3173
      %v3176 = vadd.f32 %v2786, %v3173
      %v3177 = vadd.f32 %v2789, %v3173
      %v3178 = vadd.f32 %v2792, %v3173
      %v3179 = vadd.f32 %v2795, %v3173
      %v3180 = vadd.f32 %v2798, %v3173
      %v3181 = vadd.f32 %v2801, %v3173
      %v3182 = vadd.f32 %v2804, %v3173
      %v3183 = vadd.f32 %v2807, %v3173
      %v3184 = vadd.f32 %v2810, %v3173
      %v3185 = vadd.f32 %v2813, %v3173
      %v3186 = vadd.f32 %v2816, %v3173
      %v3187 = vadd.f32 %v2819, %v3173
      %v3188 = vadd.f32 %v2822, %v3173
      %v3189 = vadd.f32 %v2825, %v3173
      %v3190 = vadd.f32 %v2828, %v3173
      %v3191 = vadd.f32 %v2831, %v3173
      %v3192 = vadd.f32 %v2834, %v3173
      %v3193 = vadd.f32 %v2837, %v3173
      %v3194 = vadd.f32 %v2840, %v3173
      %v3195 = vadd.f32 %v2843, %v3173
      %v3196 = vadd.f32 %v2846, %v3173
      %v3197 = vadd.f32 %v2849, %v3173
      %v3198 = vadd.f32 %v2852, %v3173
      %v3199 = vadd.f32 %v2855, %v3173
      %v3200 = vadd.f32 %v2858, %v3173
      %v3201 = vadd.f32 %v2861, %v3173
      %v3202 = vadd.f32 %v2864, %v3173
      %v3203 = vadd.f32 %v2867, %v3173
      %v3204 = vadd.f32 %v2870, %v3173
      %v3205 = vadd.f32 %v2873, %v3173
      %v3206 = vadd.f32 %v2876, %v3173
      %v3207 = vadd.f32 %v2879, %v3173
      %v3208 = vadd.f32 %v2882, %v3173
      %v3209 = vadd.f32 %v2885, %v3173
      %v3210 = vadd.f32 %v2888, %v3173
      %v3211 = vadd.f32 %v2891, %v3173
      %v3212 = vadd.f32 %v2894, %v3173
      %v3213 = vadd.f32 %v2897, %v3173
      %v3214 = vadd.f32 %v2900, %v3173
      %v3215 = vadd.f32 %v2903, %v3173
      %v3216 = vadd.f32 %v2906, %v3173
      %v3217 = vadd.f32 %v2909, %v3173
      %v3218 = vadd.f32 %v2912, %v3173
      %v3219 = vadd.f32 %v2915, %v3173
      %v3220 = vadd.f32 %v2918, %v3173
      %v3221 = vadd.f32 %v2921, %v3173
      %v3222 = vadd.f32 %v2924, %v3173
      %v3223 = vadd.f32 %v2927, %v3173
      %v3224 = vadd.f32 %v2930, %v3173
      %v3225 = vadd.f32 %v2933, %v3173
      %v3226 = vadd.f32 %v2936, %v3173
      %v3227 = vadd.f32 %v2939, %v3173
      %v3228 = vadd.f32 %v2942, %v3173
      %v3229 = vadd.f32 %v2945, %v3173
      %v3230 = vadd.f32 %v2948, %v3173
      %v3231 = vadd.f32 %v2951, %v3173
      %v3232 = vadd.f32 %v2954, %v3173
      %v3233 = vadd.f32 %v2957, %v3173
      %v3234 = vadd.f32 %v2960, %v3173
      %v3235 = vadd.f32 %v2963, %v3173
      %v3236 = vadd.f32 %v2966, %v3173
      %v3237 = vadd.f32 %v2969, %v3173
      %v3238 = vadd.f32 %v2972, %v3173
      %v3239 = vadd.f32 %v2975, %v3173
      %v3240 = vadd.f32 %v2978, %v3173
      %v3241 = vadd.f32 %v2981, %v3173
      %v3242 = vadd.f32 %v2984, %v3173
      %v3243 = vadd.f32 %v2987, %v3173
      %v3244 = vadd.f32 %v2990, %v3173
      %v3245 = vadd.f32 %v2993, %v3173
      %v3246 = vadd.f32 %v2996, %v3173
      %v3247 = vadd.f32 %v2999, %v3173
      %v3248 = vadd.f32 %v3002, %v3173
      %v3249 = vadd.f32 %v3005, %v3173
      %v3250 = vadd.f32 %v3008, %v3173
      %v3251 = vadd.f32 %v3011, %v3173
      %v3252 = vadd.f32 %v3014, %v3173
      %v3253 = vadd.f32 %v3017, %v3173
      %v3254 = vadd.f32 %v3020, %v3173
      %v3255 = vadd.f32 %v3023, %v3173
      %v3256 = vadd.f32 %v3026, %v3173
      %v3257 = vadd.f32 %v3029, %v3173
      %v3258 = vadd.f32 %v3032, %v3173
      %v3259 = vadd.f32 %v3035, %v3173
      %v3260 = vadd.f32 %v3038, %v3173
      %v3261 = vadd.f32 %v3041, %v3173
      %v3262 = vadd.f32 %v3044, %v3173
      %v3263 = vadd.f32 %v3047, %v3173
      %v3264 = vadd.f32 %v3050, %v3173
      %v3265 = vadd.f32 %v3053, %v3173
      %v3266 = vadd.f32 %v3056, %v3173
      %v3267 = vadd.f32 %v3059, %v3173
      %v3268 = vadd.f32 %v3062, %v3173
      %v3269 = vadd.f32 %v3065, %v3173
      %v3270 = vadd.f32 %v3068, %v3173
      %v3271 = vadd.f32 %v3071, %v3173
      %v3272 = vadd.f32 %v3074, %v3173
      %v3273 = vadd.f32 %v3077, %v3173
      %v3274 = vadd.f32 %v3080, %v3173
      %v3275 = vadd.f32 %v3083, %v3173
      %v3276 = vadd.f32 %v3086, %v3173
      %v3277 = vadd.f32 %v3089, %v3173
      %v3278 = vadd.f32 %v3092, %v3173
      %v3279 = vadd.f32 %v3095, %v3173
      %v3280 = vadd.f32 %v3098, %v3173
      %v3281 = vadd.f32 %v3101, %v3173
      %v3282 = vadd.f32 %v3104, %v3173
      %v3283 = vadd.f32 %v3107, %v3173
      %v3284 = vadd.f32 %v3110, %v3173
      %v3285 = vadd.f32 %v3113, %v3173
      %v3286 = vadd.f32 %v3116, %v3173
      %v3287 = vadd.f32 %v3119, %v3173
      %v3288 = vadd.f32 %v3122, %v3173
      %v3289 = vadd.f32 %v3125, %v3173
      %v3290 = vadd.f32 %v3128, %v3173
      %v3291 = vadd.f32 %v3131, %v3173
      %v3292 = vadd.f32 %v3134, %v3173
      %v3293 = vadd.f32 %v3137, %v3173
      %v3294 = vadd.f32 %v3140, %v3173
      %v3295 = vadd.f32 %v3143, %v3173
      %v3296 = vadd.f32 %v3146, %v3173
      %v3297 = vadd.f32 %v3149, %v3173
      %v3298 = vadd.f32 %v3152, %v3173
      %v3299 = vadd.f32 %v3155, %v3173
      %v3300 = vadd.f32 %v3158, %v3173
      %v3301 = vadd.f32 %v3161, %v3173
      %v3302 = vadd.f32 %v3164, %v3173
      %v3303 = vsel %vm1947, 1, 0
      %vm3304 = vcmp.eq.s32.totalorder %v3303, 1
      %v3433 = vlaneseq
      %v3434 = vshrl.u32 %v3433, 7
      %v3435 = vsub.s32 %v1946, %v3434
      %v3436 = vrot.slane %v3175, %v3435
      %v3437 = vadd.s32 %v1946, 4294967288
      %v3438 = vlaneseq
      %v3439 = vshrl.u32 %v3438, 7
      %v3440 = vsub.s32 %v3437, %v3439
      %v3441 = vrot.slane %v3176, %v3440
      %vm3442 = vcmask 130112
      %v3443 = vsel %vm3442, %v3441, %v3436
      %v3444 = vadd.s32 %v1946, 4294967280
      %v3445 = vlaneseq
      %v3446 = vshrl.u32 %v3445, 7
      %v3447 = vsub.s32 %v3444, %v3446
      %v3448 = vrot.slane %v3177, %v3447
      %vm3449 = vcmask 195712
      %v3450 = vsel %vm3449, %v3448, %v3443
      %v3451 = vadd.s32 %v1946, 4294967272
      %v3452 = vlaneseq
      %v3453 = vshrl.u32 %v3452, 7
      %v3454 = vsub.s32 %v3451, %v3453
      %v3455 = vrot.slane %v3178, %v3454
      %vm3456 = vcmask 261312
      %v3457 = vsel %vm3456, %v3455, %v3450
      %v3458 = vadd.s32 %v1946, 4294967264
      %v3459 = vlaneseq
      %v3460 = vshrl.u32 %v3459, 7
      %v3461 = vsub.s32 %v3458, %v3460
      %v3462 = vrot.slane %v3179, %v3461
      %vm3463 = vcmask 326912
      %v3464 = vsel %vm3463, %v3462, %v3457
      %v3465 = vadd.s32 %v1946, 4294967256
      %v3466 = vlaneseq
      %v3467 = vshrl.u32 %v3466, 7
      %v3468 = vsub.s32 %v3465, %v3467
      %v3469 = vrot.slane %v3180, %v3468
      %vm3470 = vcmask 392512
      %v3471 = vsel %vm3470, %v3469, %v3464
      %v3472 = vadd.s32 %v1946, 4294967248
      %v3473 = vlaneseq
      %v3474 = vshrl.u32 %v3473, 7
      %v3475 = vsub.s32 %v3472, %v3474
      %v3476 = vrot.slane %v3181, %v3475
      %vm3477 = vcmask 458112
      %v3478 = vsel %vm3477, %v3476, %v3471
      %v3479 = vadd.s32 %v1946, 4294967240
      %v3480 = vlaneseq
      %v3481 = vshrl.u32 %v3480, 7
      %v3482 = vsub.s32 %v3479, %v3481
      %v3483 = vrot.slane %v3182, %v3482
      %vm3484 = vcmask 523712
      %v3485 = vsel %vm3484, %v3483, %v3478
      %v3486 = vadd.s32 %v1946, 4294967232
      %v3487 = vlaneseq
      %v3488 = vshrl.u32 %v3487, 7
      %v3489 = vsub.s32 %v3486, %v3488
      %v3490 = vrot.slane %v3183, %v3489
      %vm3491 = vcmask 589312
      %v3492 = vsel %vm3491, %v3490, %v3485
      %v3493 = vadd.s32 %v1946, 4294967224
      %v3494 = vlaneseq
      %v3495 = vshrl.u32 %v3494, 7
      %v3496 = vsub.s32 %v3493, %v3495
      %v3497 = vrot.slane %v3184, %v3496
      %vm3498 = vcmask 654912
      %v3499 = vsel %vm3498, %v3497, %v3492
      %v3500 = vadd.s32 %v1946, 4294967216
      %v3501 = vlaneseq
      %v3502 = vshrl.u32 %v3501, 7
      %v3503 = vsub.s32 %v3500, %v3502
      %v3504 = vrot.slane %v3185, %v3503
      %vm3505 = vcmask 720512
      %v3506 = vsel %vm3505, %v3504, %v3499
      %v3507 = vadd.s32 %v1946, 4294967208
      %v3508 = vlaneseq
      %v3509 = vshrl.u32 %v3508, 7
      %v3510 = vsub.s32 %v3507, %v3509
      %v3511 = vrot.slane %v3186, %v3510
      %vm3512 = vcmask 786112
      %v3513 = vsel %vm3512, %v3511, %v3506
      %v3514 = vadd.s32 %v1946, 4294967200
      %v3515 = vlaneseq
      %v3516 = vshrl.u32 %v3515, 7
      %v3517 = vsub.s32 %v3514, %v3516
      %v3518 = vrot.slane %v3187, %v3517
      %vm3519 = vcmask 851712
      %v3520 = vsel %vm3519, %v3518, %v3513
      %v3521 = vadd.s32 %v1946, 4294967192
      %v3522 = vlaneseq
      %v3523 = vshrl.u32 %v3522, 7
      %v3524 = vsub.s32 %v3521, %v3523
      %v3525 = vrot.slane %v3188, %v3524
      %vm3526 = vcmask 917312
      %v3527 = vsel %vm3526, %v3525, %v3520
      %v3528 = vadd.s32 %v1946, 4294967184
      %v3529 = vlaneseq
      %v3530 = vshrl.u32 %v3529, 7
      %v3531 = vsub.s32 %v3528, %v3530
      %v3532 = vrot.slane %v3189, %v3531
      %vm3533 = vcmask 982912
      %v3534 = vsel %vm3533, %v3532, %v3527
      %v3535 = vadd.s32 %v1946, 4294967176
      %v3536 = vlaneseq
      %v3537 = vshrl.u32 %v3536, 7
      %v3538 = vsub.s32 %v3535, %v3537
      %v3539 = vrot.slane %v3190, %v3538
      %vm3540 = vcmask 1048512
      %v3541 = vsel %vm3540, %v3539, %v3534
      %v3542 = vlaneseq
      %v3543 = vshrl.u32 %v3542, 7
      %v3544 = vsub.s32 %v1946, %v3543
      %v3545 = vrot.slane %v3191, %v3544
      %v3546 = vlaneseq
      %v3547 = vshrl.u32 %v3546, 7
      %v3548 = vsub.s32 %v3437, %v3547
      %v3549 = vrot.slane %v3192, %v3548
      %v3550 = vsel %vm3442, %v3549, %v3545
      %v3551 = vlaneseq
      %v3552 = vshrl.u32 %v3551, 7
      %v3553 = vsub.s32 %v3444, %v3552
      %v3554 = vrot.slane %v3193, %v3553
      %v3555 = vsel %vm3449, %v3554, %v3550
      %v3556 = vlaneseq
      %v3557 = vshrl.u32 %v3556, 7
      %v3558 = vsub.s32 %v3451, %v3557
      %v3559 = vrot.slane %v3194, %v3558
      %v3560 = vsel %vm3456, %v3559, %v3555
      %v3561 = vlaneseq
      %v3562 = vshrl.u32 %v3561, 7
      %v3563 = vsub.s32 %v3458, %v3562
      %v3564 = vrot.slane %v3195, %v3563
      %v3565 = vsel %vm3463, %v3564, %v3560
      %v3566 = vlaneseq
      %v3567 = vshrl.u32 %v3566, 7
      %v3568 = vsub.s32 %v3465, %v3567
      %v3569 = vrot.slane %v3196, %v3568
      %v3570 = vsel %vm3470, %v3569, %v3565
      %v3571 = vlaneseq
      %v3572 = vshrl.u32 %v3571, 7
      %v3573 = vsub.s32 %v3472, %v3572
      %v3574 = vrot.slane %v3197, %v3573
      %v3575 = vsel %vm3477, %v3574, %v3570
      %v3576 = vlaneseq
      %v3577 = vshrl.u32 %v3576, 7
      %v3578 = vsub.s32 %v3479, %v3577
      %v3579 = vrot.slane %v3198, %v3578
      %v3580 = vsel %vm3484, %v3579, %v3575
      %v3581 = vlaneseq
      %v3582 = vshrl.u32 %v3581, 7
      %v3583 = vsub.s32 %v3486, %v3582
      %v3584 = vrot.slane %v3199, %v3583
      %v3585 = vsel %vm3491, %v3584, %v3580
      %v3586 = vlaneseq
      %v3587 = vshrl.u32 %v3586, 7
      %v3588 = vsub.s32 %v3493, %v3587
      %v3589 = vrot.slane %v3200, %v3588
      %v3590 = vsel %vm3498, %v3589, %v3585
      %v3591 = vlaneseq
      %v3592 = vshrl.u32 %v3591, 7
      %v3593 = vsub.s32 %v3500, %v3592
      %v3594 = vrot.slane %v3201, %v3593
      %v3595 = vsel %vm3505, %v3594, %v3590
      %v3596 = vlaneseq
      %v3597 = vshrl.u32 %v3596, 7
      %v3598 = vsub.s32 %v3507, %v3597
      %v3599 = vrot.slane %v3202, %v3598
      %v3600 = vsel %vm3512, %v3599, %v3595
      %v3601 = vlaneseq
      %v3602 = vshrl.u32 %v3601, 7
      %v3603 = vsub.s32 %v3514, %v3602
      %v3604 = vrot.slane %v3203, %v3603
      %v3605 = vsel %vm3519, %v3604, %v3600
      %v3606 = vlaneseq
      %v3607 = vshrl.u32 %v3606, 7
      %v3608 = vsub.s32 %v3521, %v3607
      %v3609 = vrot.slane %v3204, %v3608
      %v3610 = vsel %vm3526, %v3609, %v3605
      %v3611 = vlaneseq
      %v3612 = vshrl.u32 %v3611, 7
      %v3613 = vsub.s32 %v3528, %v3612
      %v3614 = vrot.slane %v3205, %v3613
      %v3615 = vsel %vm3533, %v3614, %v3610
      %v3616 = vlaneseq
      %v3617 = vshrl.u32 %v3616, 7
      %v3618 = vsub.s32 %v3535, %v3617
      %v3619 = vrot.slane %v3206, %v3618
      %v3620 = vsel %vm3540, %v3619, %v3615
      %v3621 = vlaneseq
      %v3622 = vshrl.u32 %v3621, 7
      %v3623 = vsub.s32 %v1946, %v3622
      %v3624 = vrot.slane %v3207, %v3623
      %v3625 = vlaneseq
      %v3626 = vshrl.u32 %v3625, 7
      %v3627 = vsub.s32 %v3437, %v3626
      %v3628 = vrot.slane %v3208, %v3627
      %v3629 = vsel %vm3442, %v3628, %v3624
      %v3630 = vlaneseq
      %v3631 = vshrl.u32 %v3630, 7
      %v3632 = vsub.s32 %v3444, %v3631
      %v3633 = vrot.slane %v3209, %v3632
      %v3634 = vsel %vm3449, %v3633, %v3629
      %v3635 = vlaneseq
      %v3636 = vshrl.u32 %v3635, 7
      %v3637 = vsub.s32 %v3451, %v3636
      %v3638 = vrot.slane %v3210, %v3637
      %v3639 = vsel %vm3456, %v3638, %v3634
      %v3640 = vlaneseq
      %v3641 = vshrl.u32 %v3640, 7
      %v3642 = vsub.s32 %v3458, %v3641
      %v3643 = vrot.slane %v3211, %v3642
      %v3644 = vsel %vm3463, %v3643, %v3639
      %v3645 = vlaneseq
      %v3646 = vshrl.u32 %v3645, 7
      %v3647 = vsub.s32 %v3465, %v3646
      %v3648 = vrot.slane %v3212, %v3647
      %v3649 = vsel %vm3470, %v3648, %v3644
      %v3650 = vlaneseq
      %v3651 = vshrl.u32 %v3650, 7
      %v3652 = vsub.s32 %v3472, %v3651
      %v3653 = vrot.slane %v3213, %v3652
      %v3654 = vsel %vm3477, %v3653, %v3649
      %v3655 = vlaneseq
      %v3656 = vshrl.u32 %v3655, 7
      %v3657 = vsub.s32 %v3479, %v3656
      %v3658 = vrot.slane %v3214, %v3657
      %v3659 = vsel %vm3484, %v3658, %v3654
      %v3660 = vlaneseq
      %v3661 = vshrl.u32 %v3660, 7
      %v3662 = vsub.s32 %v3486, %v3661
      %v3663 = vrot.slane %v3215, %v3662
      %v3664 = vsel %vm3491, %v3663, %v3659
      %v3665 = vlaneseq
      %v3666 = vshrl.u32 %v3665, 7
      %v3667 = vsub.s32 %v3493, %v3666
      %v3668 = vrot.slane %v3216, %v3667
      %v3669 = vsel %vm3498, %v3668, %v3664
      %v3670 = vlaneseq
      %v3671 = vshrl.u32 %v3670, 7
      %v3672 = vsub.s32 %v3500, %v3671
      %v3673 = vrot.slane %v3217, %v3672
      %v3674 = vsel %vm3505, %v3673, %v3669
      %v3675 = vlaneseq
      %v3676 = vshrl.u32 %v3675, 7
      %v3677 = vsub.s32 %v3507, %v3676
      %v3678 = vrot.slane %v3218, %v3677
      %v3679 = vsel %vm3512, %v3678, %v3674
      %v3680 = vlaneseq
      %v3681 = vshrl.u32 %v3680, 7
      %v3682 = vsub.s32 %v3514, %v3681
      %v3683 = vrot.slane %v3219, %v3682
      %v3684 = vsel %vm3519, %v3683, %v3679
      %v3685 = vlaneseq
      %v3686 = vshrl.u32 %v3685, 7
      %v3687 = vsub.s32 %v3521, %v3686
      %v3688 = vrot.slane %v3220, %v3687
      %v3689 = vsel %vm3526, %v3688, %v3684
      %v3690 = vlaneseq
      %v3691 = vshrl.u32 %v3690, 7
      %v3692 = vsub.s32 %v3528, %v3691
      %v3693 = vrot.slane %v3221, %v3692
      %v3694 = vsel %vm3533, %v3693, %v3689
      %v3695 = vlaneseq
      %v3696 = vshrl.u32 %v3695, 7
      %v3697 = vsub.s32 %v3535, %v3696
      %v3698 = vrot.slane %v3222, %v3697
      %v3699 = vsel %vm3540, %v3698, %v3694
      %v3700 = vlaneseq
      %v3701 = vshrl.u32 %v3700, 7
      %v3702 = vsub.s32 %v1946, %v3701
      %v3703 = vrot.slane %v3223, %v3702
      %v3704 = vlaneseq
      %v3705 = vshrl.u32 %v3704, 7
      %v3706 = vsub.s32 %v3437, %v3705
      %v3707 = vrot.slane %v3224, %v3706
      %v3708 = vsel %vm3442, %v3707, %v3703
      %v3709 = vlaneseq
      %v3710 = vshrl.u32 %v3709, 7
      %v3711 = vsub.s32 %v3444, %v3710
      %v3712 = vrot.slane %v3225, %v3711
      %v3713 = vsel %vm3449, %v3712, %v3708
      %v3714 = vlaneseq
      %v3715 = vshrl.u32 %v3714, 7
      %v3716 = vsub.s32 %v3451, %v3715
      %v3717 = vrot.slane %v3226, %v3716
      %v3718 = vsel %vm3456, %v3717, %v3713
      %v3719 = vlaneseq
      %v3720 = vshrl.u32 %v3719, 7
      %v3721 = vsub.s32 %v3458, %v3720
      %v3722 = vrot.slane %v3227, %v3721
      %v3723 = vsel %vm3463, %v3722, %v3718
      %v3724 = vlaneseq
      %v3725 = vshrl.u32 %v3724, 7
      %v3726 = vsub.s32 %v3465, %v3725
      %v3727 = vrot.slane %v3228, %v3726
      %v3728 = vsel %vm3470, %v3727, %v3723
      %v3729 = vlaneseq
      %v3730 = vshrl.u32 %v3729, 7
      %v3731 = vsub.s32 %v3472, %v3730
      %v3732 = vrot.slane %v3229, %v3731
      %v3733 = vsel %vm3477, %v3732, %v3728
      %v3734 = vlaneseq
      %v3735 = vshrl.u32 %v3734, 7
      %v3736 = vsub.s32 %v3479, %v3735
      %v3737 = vrot.slane %v3230, %v3736
      %v3738 = vsel %vm3484, %v3737, %v3733
      %v3739 = vlaneseq
      %v3740 = vshrl.u32 %v3739, 7
      %v3741 = vsub.s32 %v3486, %v3740
      %v3742 = vrot.slane %v3231, %v3741
      %v3743 = vsel %vm3491, %v3742, %v3738
      %v3744 = vlaneseq
      %v3745 = vshrl.u32 %v3744, 7
      %v3746 = vsub.s32 %v3493, %v3745
      %v3747 = vrot.slane %v3232, %v3746
      %v3748 = vsel %vm3498, %v3747, %v3743
      %v3749 = vlaneseq
      %v3750 = vshrl.u32 %v3749, 7
      %v3751 = vsub.s32 %v3500, %v3750
      %v3752 = vrot.slane %v3233, %v3751
      %v3753 = vsel %vm3505, %v3752, %v3748
      %v3754 = vlaneseq
      %v3755 = vshrl.u32 %v3754, 7
      %v3756 = vsub.s32 %v3507, %v3755
      %v3757 = vrot.slane %v3234, %v3756
      %v3758 = vsel %vm3512, %v3757, %v3753
      %v3759 = vlaneseq
      %v3760 = vshrl.u32 %v3759, 7
      %v3761 = vsub.s32 %v3514, %v3760
      %v3762 = vrot.slane %v3235, %v3761
      %v3763 = vsel %vm3519, %v3762, %v3758
      %v3764 = vlaneseq
      %v3765 = vshrl.u32 %v3764, 7
      %v3766 = vsub.s32 %v3521, %v3765
      %v3767 = vrot.slane %v3236, %v3766
      %v3768 = vsel %vm3526, %v3767, %v3763
      %v3769 = vlaneseq
      %v3770 = vshrl.u32 %v3769, 7
      %v3771 = vsub.s32 %v3528, %v3770
      %v3772 = vrot.slane %v3237, %v3771
      %v3773 = vsel %vm3533, %v3772, %v3768
      %v3774 = vlaneseq
      %v3775 = vshrl.u32 %v3774, 7
      %v3776 = vsub.s32 %v3535, %v3775
      %v3777 = vrot.slane %v3238, %v3776
      %v3778 = vsel %vm3540, %v3777, %v3773
      %v3779 = vlaneseq
      %v3780 = vshrl.u32 %v3779, 7
      %v3781 = vsub.s32 %v1946, %v3780
      %v3782 = vrot.slane %v3239, %v3781
      %v3783 = vlaneseq
      %v3784 = vshrl.u32 %v3783, 7
      %v3785 = vsub.s32 %v3437, %v3784
      %v3786 = vrot.slane %v3240, %v3785
      %v3787 = vsel %vm3442, %v3786, %v3782
      %v3788 = vlaneseq
      %v3789 = vshrl.u32 %v3788, 7
      %v3790 = vsub.s32 %v3444, %v3789
      %v3791 = vrot.slane %v3241, %v3790
      %v3792 = vsel %vm3449, %v3791, %v3787
      %v3793 = vlaneseq
      %v3794 = vshrl.u32 %v3793, 7
      %v3795 = vsub.s32 %v3451, %v3794
      %v3796 = vrot.slane %v3242, %v3795
      %v3797 = vsel %vm3456, %v3796, %v3792
      %v3798 = vlaneseq
      %v3799 = vshrl.u32 %v3798, 7
      %v3800 = vsub.s32 %v3458, %v3799
      %v3801 = vrot.slane %v3243, %v3800
      %v3802 = vsel %vm3463, %v3801, %v3797
      %v3803 = vlaneseq
      %v3804 = vshrl.u32 %v3803, 7
      %v3805 = vsub.s32 %v3465, %v3804
      %v3806 = vrot.slane %v3244, %v3805
      %v3807 = vsel %vm3470, %v3806, %v3802
      %v3808 = vlaneseq
      %v3809 = vshrl.u32 %v3808, 7
      %v3810 = vsub.s32 %v3472, %v3809
      %v3811 = vrot.slane %v3245, %v3810
      %v3812 = vsel %vm3477, %v3811, %v3807
      %v3813 = vlaneseq
      %v3814 = vshrl.u32 %v3813, 7
      %v3815 = vsub.s32 %v3479, %v3814
      %v3816 = vrot.slane %v3246, %v3815
      %v3817 = vsel %vm3484, %v3816, %v3812
      %v3818 = vlaneseq
      %v3819 = vshrl.u32 %v3818, 7
      %v3820 = vsub.s32 %v3486, %v3819
      %v3821 = vrot.slane %v3247, %v3820
      %v3822 = vsel %vm3491, %v3821, %v3817
      %v3823 = vlaneseq
      %v3824 = vshrl.u32 %v3823, 7
      %v3825 = vsub.s32 %v3493, %v3824
      %v3826 = vrot.slane %v3248, %v3825
      %v3827 = vsel %vm3498, %v3826, %v3822
      %v3828 = vlaneseq
      %v3829 = vshrl.u32 %v3828, 7
      %v3830 = vsub.s32 %v3500, %v3829
      %v3831 = vrot.slane %v3249, %v3830
      %v3832 = vsel %vm3505, %v3831, %v3827
      %v3833 = vlaneseq
      %v3834 = vshrl.u32 %v3833, 7
      %v3835 = vsub.s32 %v3507, %v3834
      %v3836 = vrot.slane %v3250, %v3835
      %v3837 = vsel %vm3512, %v3836, %v3832
      %v3838 = vlaneseq
      %v3839 = vshrl.u32 %v3838, 7
      %v3840 = vsub.s32 %v3514, %v3839
      %v3841 = vrot.slane %v3251, %v3840
      %v3842 = vsel %vm3519, %v3841, %v3837
      %v3843 = vlaneseq
      %v3844 = vshrl.u32 %v3843, 7
      %v3845 = vsub.s32 %v3521, %v3844
      %v3846 = vrot.slane %v3252, %v3845
      %v3847 = vsel %vm3526, %v3846, %v3842
      %v3848 = vlaneseq
      %v3849 = vshrl.u32 %v3848, 7
      %v3850 = vsub.s32 %v3528, %v3849
      %v3851 = vrot.slane %v3253, %v3850
      %v3852 = vsel %vm3533, %v3851, %v3847
      %v3853 = vlaneseq
      %v3854 = vshrl.u32 %v3853, 7
      %v3855 = vsub.s32 %v3535, %v3854
      %v3856 = vrot.slane %v3254, %v3855
      %v3857 = vsel %vm3540, %v3856, %v3852
      %v3858 = vlaneseq
      %v3859 = vshrl.u32 %v3858, 7
      %v3860 = vsub.s32 %v1946, %v3859
      %v3861 = vrot.slane %v3255, %v3860
      %v3862 = vlaneseq
      %v3863 = vshrl.u32 %v3862, 7
      %v3864 = vsub.s32 %v3437, %v3863
      %v3865 = vrot.slane %v3256, %v3864
      %v3866 = vsel %vm3442, %v3865, %v3861
      %v3867 = vlaneseq
      %v3868 = vshrl.u32 %v3867, 7
      %v3869 = vsub.s32 %v3444, %v3868
      %v3870 = vrot.slane %v3257, %v3869
      %v3871 = vsel %vm3449, %v3870, %v3866
      %v3872 = vlaneseq
      %v3873 = vshrl.u32 %v3872, 7
      %v3874 = vsub.s32 %v3451, %v3873
      %v3875 = vrot.slane %v3258, %v3874
      %v3876 = vsel %vm3456, %v3875, %v3871
      %v3877 = vlaneseq
      %v3878 = vshrl.u32 %v3877, 7
      %v3879 = vsub.s32 %v3458, %v3878
      %v3880 = vrot.slane %v3259, %v3879
      %v3881 = vsel %vm3463, %v3880, %v3876
      %v3882 = vlaneseq
      %v3883 = vshrl.u32 %v3882, 7
      %v3884 = vsub.s32 %v3465, %v3883
      %v3885 = vrot.slane %v3260, %v3884
      %v3886 = vsel %vm3470, %v3885, %v3881
      %v3887 = vlaneseq
      %v3888 = vshrl.u32 %v3887, 7
      %v3889 = vsub.s32 %v3472, %v3888
      %v3890 = vrot.slane %v3261, %v3889
      %v3891 = vsel %vm3477, %v3890, %v3886
      %v3892 = vlaneseq
      %v3893 = vshrl.u32 %v3892, 7
      %v3894 = vsub.s32 %v3479, %v3893
      %v3895 = vrot.slane %v3262, %v3894
      %v3896 = vsel %vm3484, %v3895, %v3891
      %v3897 = vlaneseq
      %v3898 = vshrl.u32 %v3897, 7
      %v3899 = vsub.s32 %v3486, %v3898
      %v3900 = vrot.slane %v3263, %v3899
      %v3901 = vsel %vm3491, %v3900, %v3896
      %v3902 = vlaneseq
      %v3903 = vshrl.u32 %v3902, 7
      %v3904 = vsub.s32 %v3493, %v3903
      %v3905 = vrot.slane %v3264, %v3904
      %v3906 = vsel %vm3498, %v3905, %v3901
      %v3907 = vlaneseq
      %v3908 = vshrl.u32 %v3907, 7
      %v3909 = vsub.s32 %v3500, %v3908
      %v3910 = vrot.slane %v3265, %v3909
      %v3911 = vsel %vm3505, %v3910, %v3906
      %v3912 = vlaneseq
      %v3913 = vshrl.u32 %v3912, 7
      %v3914 = vsub.s32 %v3507, %v3913
      %v3915 = vrot.slane %v3266, %v3914
      %v3916 = vsel %vm3512, %v3915, %v3911
      %v3917 = vlaneseq
      %v3918 = vshrl.u32 %v3917, 7
      %v3919 = vsub.s32 %v3514, %v3918
      %v3920 = vrot.slane %v3267, %v3919
      %v3921 = vsel %vm3519, %v3920, %v3916
      %v3922 = vlaneseq
      %v3923 = vshrl.u32 %v3922, 7
      %v3924 = vsub.s32 %v3521, %v3923
      %v3925 = vrot.slane %v3268, %v3924
      %v3926 = vsel %vm3526, %v3925, %v3921
      %v3927 = vlaneseq
      %v3928 = vshrl.u32 %v3927, 7
      %v3929 = vsub.s32 %v3528, %v3928
      %v3930 = vrot.slane %v3269, %v3929
      %v3931 = vsel %vm3533, %v3930, %v3926
      %v3932 = vlaneseq
      %v3933 = vshrl.u32 %v3932, 7
      %v3934 = vsub.s32 %v3535, %v3933
      %v3935 = vrot.slane %v3270, %v3934
      %v3936 = vsel %vm3540, %v3935, %v3931
      %v3937 = vlaneseq
      %v3938 = vshrl.u32 %v3937, 7
      %v3939 = vsub.s32 %v1946, %v3938
      %v3940 = vrot.slane %v3271, %v3939
      %v3941 = vlaneseq
      %v3942 = vshrl.u32 %v3941, 7
      %v3943 = vsub.s32 %v3437, %v3942
      %v3944 = vrot.slane %v3272, %v3943
      %v3945 = vsel %vm3442, %v3944, %v3940
      %v3946 = vlaneseq
      %v3947 = vshrl.u32 %v3946, 7
      %v3948 = vsub.s32 %v3444, %v3947
      %v3949 = vrot.slane %v3273, %v3948
      %v3950 = vsel %vm3449, %v3949, %v3945
      %v3951 = vlaneseq
      %v3952 = vshrl.u32 %v3951, 7
      %v3953 = vsub.s32 %v3451, %v3952
      %v3954 = vrot.slane %v3274, %v3953
      %v3955 = vsel %vm3456, %v3954, %v3950
      %v3956 = vlaneseq
      %v3957 = vshrl.u32 %v3956, 7
      %v3958 = vsub.s32 %v3458, %v3957
      %v3959 = vrot.slane %v3275, %v3958
      %v3960 = vsel %vm3463, %v3959, %v3955
      %v3961 = vlaneseq
      %v3962 = vshrl.u32 %v3961, 7
      %v3963 = vsub.s32 %v3465, %v3962
      %v3964 = vrot.slane %v3276, %v3963
      %v3965 = vsel %vm3470, %v3964, %v3960
      %v3966 = vlaneseq
      %v3967 = vshrl.u32 %v3966, 7
      %v3968 = vsub.s32 %v3472, %v3967
      %v3969 = vrot.slane %v3277, %v3968
      %v3970 = vsel %vm3477, %v3969, %v3965
      %v3971 = vlaneseq
      %v3972 = vshrl.u32 %v3971, 7
      %v3973 = vsub.s32 %v3479, %v3972
      %v3974 = vrot.slane %v3278, %v3973
      %v3975 = vsel %vm3484, %v3974, %v3970
      %v3976 = vlaneseq
      %v3977 = vshrl.u32 %v3976, 7
      %v3978 = vsub.s32 %v3486, %v3977
      %v3979 = vrot.slane %v3279, %v3978
      %v3980 = vsel %vm3491, %v3979, %v3975
      %v3981 = vlaneseq
      %v3982 = vshrl.u32 %v3981, 7
      %v3983 = vsub.s32 %v3493, %v3982
      %v3984 = vrot.slane %v3280, %v3983
      %v3985 = vsel %vm3498, %v3984, %v3980
      %v3986 = vlaneseq
      %v3987 = vshrl.u32 %v3986, 7
      %v3988 = vsub.s32 %v3500, %v3987
      %v3989 = vrot.slane %v3281, %v3988
      %v3990 = vsel %vm3505, %v3989, %v3985
      %v3991 = vlaneseq
      %v3992 = vshrl.u32 %v3991, 7
      %v3993 = vsub.s32 %v3507, %v3992
      %v3994 = vrot.slane %v3282, %v3993
      %v3995 = vsel %vm3512, %v3994, %v3990
      %v3996 = vlaneseq
      %v3997 = vshrl.u32 %v3996, 7
      %v3998 = vsub.s32 %v3514, %v3997
      %v3999 = vrot.slane %v3283, %v3998
      %v4000 = vsel %vm3519, %v3999, %v3995
      %v4001 = vlaneseq
      %v4002 = vshrl.u32 %v4001, 7
      %v4003 = vsub.s32 %v3521, %v4002
      %v4004 = vrot.slane %v3284, %v4003
      %v4005 = vsel %vm3526, %v4004, %v4000
      %v4006 = vlaneseq
      %v4007 = vshrl.u32 %v4006, 7
      %v4008 = vsub.s32 %v3528, %v4007
      %v4009 = vrot.slane %v3285, %v4008
      %v4010 = vsel %vm3533, %v4009, %v4005
      %v4011 = vlaneseq
      %v4012 = vshrl.u32 %v4011, 7
      %v4013 = vsub.s32 %v3535, %v4012
      %v4014 = vrot.slane %v3286, %v4013
      %v4015 = vsel %vm3540, %v4014, %v4010
      %v4016 = vlaneseq
      %v4017 = vshrl.u32 %v4016, 7
      %v4018 = vsub.s32 %v1946, %v4017
      %v4019 = vrot.slane %v3287, %v4018
      %v4020 = vlaneseq
      %v4021 = vshrl.u32 %v4020, 7
      %v4022 = vsub.s32 %v3437, %v4021
      %v4023 = vrot.slane %v3288, %v4022
      %v4024 = vsel %vm3442, %v4023, %v4019
      %v4025 = vlaneseq
      %v4026 = vshrl.u32 %v4025, 7
      %v4027 = vsub.s32 %v3444, %v4026
      %v4028 = vrot.slane %v3289, %v4027
      %v4029 = vsel %vm3449, %v4028, %v4024
      %v4030 = vlaneseq
      %v4031 = vshrl.u32 %v4030, 7
      %v4032 = vsub.s32 %v3451, %v4031
      %v4033 = vrot.slane %v3290, %v4032
      %v4034 = vsel %vm3456, %v4033, %v4029
      %v4035 = vlaneseq
      %v4036 = vshrl.u32 %v4035, 7
      %v4037 = vsub.s32 %v3458, %v4036
      %v4038 = vrot.slane %v3291, %v4037
      %v4039 = vsel %vm3463, %v4038, %v4034
      %v4040 = vlaneseq
      %v4041 = vshrl.u32 %v4040, 7
      %v4042 = vsub.s32 %v3465, %v4041
      %v4043 = vrot.slane %v3292, %v4042
      %v4044 = vsel %vm3470, %v4043, %v4039
      %v4045 = vlaneseq
      %v4046 = vshrl.u32 %v4045, 7
      %v4047 = vsub.s32 %v3472, %v4046
      %v4048 = vrot.slane %v3293, %v4047
      %v4049 = vsel %vm3477, %v4048, %v4044
      %v4050 = vlaneseq
      %v4051 = vshrl.u32 %v4050, 7
      %v4052 = vsub.s32 %v3479, %v4051
      %v4053 = vrot.slane %v3294, %v4052
      %v4054 = vsel %vm3484, %v4053, %v4049
      %v4055 = vlaneseq
      %v4056 = vshrl.u32 %v4055, 7
      %v4057 = vsub.s32 %v3486, %v4056
      %v4058 = vrot.slane %v3295, %v4057
      %v4059 = vsel %vm3491, %v4058, %v4054
      %v4060 = vlaneseq
      %v4061 = vshrl.u32 %v4060, 7
      %v4062 = vsub.s32 %v3493, %v4061
      %v4063 = vrot.slane %v3296, %v4062
      %v4064 = vsel %vm3498, %v4063, %v4059
      %v4065 = vlaneseq
      %v4066 = vshrl.u32 %v4065, 7
      %v4067 = vsub.s32 %v3500, %v4066
      %v4068 = vrot.slane %v3297, %v4067
      %v4069 = vsel %vm3505, %v4068, %v4064
      %v4070 = vlaneseq
      %v4071 = vshrl.u32 %v4070, 7
      %v4072 = vsub.s32 %v3507, %v4071
      %v4073 = vrot.slane %v3298, %v4072
      %v4074 = vsel %vm3512, %v4073, %v4069
      %v4075 = vlaneseq
      %v4076 = vshrl.u32 %v4075, 7
      %v4077 = vsub.s32 %v3514, %v4076
      %v4078 = vrot.slane %v3299, %v4077
      %v4079 = vsel %vm3519, %v4078, %v4074
      %v4080 = vlaneseq
      %v4081 = vshrl.u32 %v4080, 7
      %v4082 = vsub.s32 %v3521, %v4081
      %v4083 = vrot.slane %v3300, %v4082
      %v4084 = vsel %vm3526, %v4083, %v4079
      %v4085 = vlaneseq
      %v4086 = vshrl.u32 %v4085, 7
      %v4087 = vsub.s32 %v3528, %v4086
      %v4088 = vrot.slane %v3301, %v4087
      %v4089 = vsel %vm3533, %v4088, %v4084
      %v4090 = vlaneseq
      %v4091 = vshrl.u32 %v4090, 7
      %v4092 = vsub.s32 %v3535, %v4091
      %v4093 = vrot.slane %v3302, %v4092
      %v4094 = vsel %vm3540, %v4093, %v4089
      %vm4095 = vcmask 1041409
      %v4096 = vsel %vm4095, %v3620, %v3541
      %vm4097 = vcmask 1042434
      %v4098 = vsel %vm4097, %v3699, %v4096
      %vm4099 = vcmask 1043459
      %v4100 = vsel %vm4099, %v3778, %v4098
      %vm4101 = vcmask 1044484
      %v4102 = vsel %vm4101, %v3857, %v4100
      %vm4103 = vcmask 1045509
      %v4104 = vsel %vm4103, %v3936, %v4102
      %vm4105 = vcmask 1046534
      %v4106 = vsel %vm4105, %v4015, %v4104
      %vm4107 = vcmask 1047559
      %v4108 = vsel %vm4107, %v4094, %v4106
      %v4110 = vsel %vm3304, %v4108, -1e+30
      %4111 = vmax.xlane.f32.xlu0 %v4110
      %v4112 = vpop.xlane.xlu0 %4111
      %v4113 = vsub.f32 %v4110, %v4112
      %v4114 = vmul.f32 %v4113, 1.442695
      %v4115 = vpow.pop %v4114
      %4116 = vadd.xlane.f32.xlu0 %v4115
      %v4117 = vpop.xlane.xlu0 %4116
      %v4118 = vrcp.pop %v4117
      %v4119 = vmul.f32 %v4115, %v4118
      %v4121 = vcombine.high %v4119, %v4119
      %v4123 = vunpack.c.l.s4 1966171168
      %v4124 = vunpack.c.0.s8 %v4123
      %v4125 = vlaneseq
      %v4126 = vshrl.u32 %v4125, 7
      %v4127 = vsub.s32 %v4124, %v4126
      %v4128 = vrot.slane %v4119, %v4127
      %v4130 = vunpack.c.l.s4 1966171168
      %v4131 = vunpack.c.0.s8 %v4130
      %v4132 = vlaneseq
      %v4133 = vshrl.u32 %v4132, 7
      %v4134 = vsub.s32 %v4131, %v4133
      %v4135 = vrot.slane %v4121, %v4134
      %v4136 = vcombine.high %v4128, %v4128
      %v4137 = vcombine.high %v4135, %v4135
      %v4139 = vunpack.c.l.s4 1966171168
      %v4140 = vunpack.c.0.s8 %v4139
      %v4141 = vlaneseq
      %v4142 = vshrl.u32 %v4141, 7
      %v4143 = vsub.s32 %v4140, %v4142
      %v4144 = vrot.slane %v4128, %v4143
      %v4146 = vunpack.c.l.s4 1966171168
      %v4147 = vunpack.c.0.s8 %v4146
      %v4148 = vlaneseq
      %v4149 = vshrl.u32 %v4148, 7
      %v4150 = vsub.s32 %v4147, %v4149
      %v4151 = vrot.slane %v4135, %v4150
      %v4153 = vunpack.c.l.s4 1966171168
      %v4154 = vunpack.c.0.s8 %v4153
      %v4155 = vlaneseq
      %v4156 = vshrl.u32 %v4155, 7
      %v4157 = vsub.s32 %v4154, %v4156
      %v4158 = vrot.slane %v4136, %v4157
      %v4160 = vunpack.c.l.s4 1966171168
      %v4161 = vunpack.c.0.s8 %v4160
      %v4162 = vlaneseq
      %v4163 = vshrl.u32 %v4162, 7
      %v4164 = vsub.s32 %v4161, %v4163
      %v4165 = vrot.slane %v4137, %v4164
      %v4166 = vcombine.high %v4144, %v4144
      %v4167 = vcombine.high %v4151, %v4151
      %v4168 = vcombine.high %v4158, %v4158
      %v4169 = vcombine.high %v4165, %v4165
      %4178 = vmatprep.subr.mxu0 0.0
      %4179 = vmatpush1.msra.mxu0 %v1959
      %4180 = vmatprep.subr.mxu0 0.0
      %4181 = vmatpush1.msra.mxu0 %v1960
      %4182 = vmatprep.subr.mxu0 0.0
      %4183 = vmatpush1.msra.mxu0 %v1961
      %4184 = vmatprep.subr.mxu0 0.0
      %4185 = vmatpush1.msra.mxu0 %v1962
      %4186 = vmatprep.subr.mxu0 0.0
      %4187 = vmatpush1.msra.mxu0 %v1963
      %4188 = vmatprep.subr.mxu0 0.0
      %4189 = vmatpush1.msra.mxu0 %v1964
      %4190 = vmatprep.subr.mxu0 0.0
      %4191 = vmatpush1.msra.mxu0 %v1965
      %4192 = vmatprep.subr.mxu0 0.0
      %4193 = vmatpush1.msra.mxu0 %v1966
      %4194 = vmatprep.subr.mxu0 0.0
      %4195 = vmatpush1.msra.mxu0 %v1967
      %4196 = vmatprep.subr.mxu0 0.0
      %4197 = vmatpush1.msra.mxu0 %v1968
      %4198 = vmatprep.subr.mxu0 0.0
      %4199 = vmatpush1.msra.mxu0 %v1969
      %4200 = vmatprep.subr.mxu0 0.0
      %4201 = vmatpush1.msra.mxu0 %v1970
      %4202 = vmatprep.subr.mxu0 0.0
      %4203 = vmatpush1.msra.mxu0 %v1971
      %4204 = vmatprep.subr.mxu0 0.0
      %4205 = vmatpush1.msra.mxu0 %v1972
      %4206 = vmatprep.subr.mxu0 0.0
      %4207 = vmatpush1.msra.mxu0 %v1973
      %4208 = vmatprep.subr.mxu0 0.0
      %4209 = vmatpush1.msra.mxu0 %v1974
      %4210 = vmatprep.subr.mxu0 0.0
      %4211 = vmatpush1.msra.mxu0 0.0
      %4212 = vmatprep.subr.mxu0 0.0
      %4213 = vmatpush1.msra.mxu0 0.0
      %4214 = vmatprep.subr.mxu0 0.0
      %4215 = vmatpush1.msra.mxu0 0.0
      %4216 = vmatprep.subr.mxu0 0.0
      %4217 = vmatpush1.msra.mxu0 0.0
      %4218 = vmatprep.subr.mxu0 0.0
      %4219 = vmatpush1.msra.mxu0 0.0
      %4220 = vmatprep.subr.mxu0 0.0
      %4221 = vmatpush1.msra.mxu0 0.0
      %4222 = vmatprep.subr.mxu0 0.0
      %4223 = vmatpush1.msra.mxu0 0.0
      %4224 = vmatprep.subr.mxu0 0.0
      %4225 = vmatpush1.msra.mxu0 0.0
      %4226 = vmatprep.subr.mxu0 0.0
      %4227 = vmatpush1.msra.mxu0 0.0
      %4228 = vmatprep.subr.mxu0 0.0
      %4229 = vmatpush1.msra.mxu0 0.0
      %4230 = vmatprep.subr.mxu0 0.0
      %4231 = vmatpush1.msra.mxu0 0.0
      %4232 = vmatprep.subr.mxu0 0.0
      %4233 = vmatpush1.msra.mxu0 0.0
      %4234 = vmatprep.subr.mxu0 0.0
      %4235 = vmatpush1.msra.mxu0 0.0
      %4236 = vmatprep.subr.mxu0 0.0
      %4237 = vmatpush1.msra.mxu0 0.0
      %4238 = vmatprep.subr.mxu0 0.0
      %4239 = vmatpush1.msra.mxu0 0.0
      %4240 = vmatprep.subr.mxu0 0.0
      %4241 = vmatpush1.msra.mxu0 0.0
      %4242 = vmatprep.mubr.f32.mxu0 0.0
      %4243 = vmatmul.mubr.f32.gmra.mrb[0].mxu0 %v4144
      %v4244 = vpop.f32.mrb[0].mxu0
      %v4245 = vadd.f32 0.0, %v4244
      %v4246 = vpop.f32.mrb[0].mxu0
      %4247 = vdwg.mxu0
      %4248 = vmatprep.subr.mxu0 0.0
      %4249 = vmatpush1.msra.mxu0 %v1975
      %4250 = vmatprep.subr.mxu0 0.0
      %4251 = vmatpush1.msra.mxu0 %v1976
      %4252 = vmatprep.subr.mxu0 0.0
      %4253 = vmatpush1.msra.mxu0 %v1977
      %4254 = vmatprep.subr.mxu0 0.0
      %4255 = vmatpush1.msra.mxu0 %v1978
      %4256 = vmatprep.subr.mxu0 0.0
      %4257 = vmatpush1.msra.mxu0 %v1979
      %4258 = vmatprep.subr.mxu0 0.0
      %4259 = vmatpush1.msra.mxu0 %v1980
      %4260 = vmatprep.subr.mxu0 0.0
      %4261 = vmatpush1.msra.mxu0 %v1981
      %4262 = vmatprep.subr.mxu0 0.0
      %4263 = vmatpush1.msra.mxu0 %v1982
      %4264 = vmatprep.subr.mxu0 0.0
      %4265 = vmatpush1.msra.mxu0 %v1983
      %4266 = vmatprep.subr.mxu0 0.0
      %4267 = vmatpush1.msra.mxu0 %v1984
      %4268 = vmatprep.subr.mxu0 0.0
      %4269 = vmatpush1.msra.mxu0 %v1985
      %4270 = vmatprep.subr.mxu0 0.0
      %4271 = vmatpush1.msra.mxu0 %v1986
      %4272 = vmatprep.subr.mxu0 0.0
      %4273 = vmatpush1.msra.mxu0 %v1987
      %4274 = vmatprep.subr.mxu0 0.0
      %4275 = vmatpush1.msra.mxu0 %v1988
      %4276 = vmatprep.subr.mxu0 0.0
      %4277 = vmatpush1.msra.mxu0 %v1989
      %4278 = vmatprep.subr.mxu0 0.0
      %4279 = vmatpush1.msra.mxu0 %v1990
      %4280 = vmatprep.subr.mxu0 0.0
      %4281 = vmatpush1.msra.mxu0 0.0
      %4282 = vmatprep.subr.mxu0 0.0
      %4283 = vmatpush1.msra.mxu0 0.0
      %4284 = vmatprep.subr.mxu0 0.0
      %4285 = vmatpush1.msra.mxu0 0.0
      %4286 = vmatprep.subr.mxu0 0.0
      %4287 = vmatpush1.msra.mxu0 0.0
      %4288 = vmatprep.subr.mxu0 0.0
      %4289 = vmatpush1.msra.mxu0 0.0
      %4290 = vmatprep.subr.mxu0 0.0
      %4291 = vmatpush1.msra.mxu0 0.0
      %4292 = vmatprep.subr.mxu0 0.0
      %4293 = vmatpush1.msra.mxu0 0.0
      %4294 = vmatprep.subr.mxu0 0.0
      %4295 = vmatpush1.msra.mxu0 0.0
      %4296 = vmatprep.subr.mxu0 0.0
      %4297 = vmatpush1.msra.mxu0 0.0
      %4298 = vmatprep.subr.mxu0 0.0
      %4299 = vmatpush1.msra.mxu0 0.0
      %4300 = vmatprep.subr.mxu0 0.0
      %4301 = vmatpush1.msra.mxu0 0.0
      %4302 = vmatprep.subr.mxu0 0.0
      %4303 = vmatpush1.msra.mxu0 0.0
      %4304 = vmatprep.subr.mxu0 0.0
      %4305 = vmatpush1.msra.mxu0 0.0
      %4306 = vmatprep.subr.mxu0 0.0
      %4307 = vmatpush1.msra.mxu0 0.0
      %4308 = vmatprep.subr.mxu0 0.0
      %4309 = vmatpush1.msra.mxu0 0.0
      %4310 = vmatprep.subr.mxu0 0.0
      %4311 = vmatpush1.msra.mxu0 0.0
      %4312 = vmatprep.mubr.f32.mxu0 0.0
      %4313 = vmatmul.mubr.f32.gmra.mrb[0].mxu0 %v4158
      %v4314 = vpop.f32.mrb[0].mxu0
      %v4315 = vadd.f32 0.0, %v4314
      %v4316 = vpop.f32.mrb[0].mxu0
      %4317 = vdwg.mxu0
      %4318 = vmatprep.subr.mxu0 0.0
      %4319 = vmatpush1.msra.mxu0 %v1991
      %4320 = vmatprep.subr.mxu0 0.0
      %4321 = vmatpush1.msra.mxu0 %v1992
      %4322 = vmatprep.subr.mxu0 0.0
      %4323 = vmatpush1.msra.mxu0 %v1993
      %4324 = vmatprep.subr.mxu0 0.0
      %4325 = vmatpush1.msra.mxu0 %v1994
      %4326 = vmatprep.subr.mxu0 0.0
      %4327 = vmatpush1.msra.mxu0 %v1995
      %4328 = vmatprep.subr.mxu0 0.0
      %4329 = vmatpush1.msra.mxu0 %v1996
      %4330 = vmatprep.subr.mxu0 0.0
      %4331 = vmatpush1.msra.mxu0 %v1997
      %4332 = vmatprep.subr.mxu0 0.0
      %4333 = vmatpush1.msra.mxu0 %v1998
      %4334 = vmatprep.subr.mxu0 0.0
      %4335 = vmatpush1.msra.mxu0 %v1999
      %4336 = vmatprep.subr.mxu0 0.0
      %4337 = vmatpush1.msra.mxu0 %v2000
      %4338 = vmatprep.subr.mxu0 0.0
      %4339 = vmatpush1.msra.mxu0 %v2001
      %4340 = vmatprep.subr.mxu0 0.0
      %4341 = vmatpush1.msra.mxu0 %v2002
      %4342 = vmatprep.subr.mxu0 0.0
      %4343 = vmatpush1.msra.mxu0 %v2003
      %4344 = vmatprep.subr.mxu0 0.0
      %4345 = vmatpush1.msra.mxu0 %v2004
      %4346 = vmatprep.subr.mxu0 0.0
      %4347 = vmatpush1.msra.mxu0 %v2005
      %4348 = vmatprep.subr.mxu0 0.0
      %4349 = vmatpush1.msra.mxu0 %v2006
      %4350 = vmatprep.subr.mxu0 0.0
      %4351 = vmatpush1.msra.mxu0 0.0
      %4352 = vmatprep.subr.mxu0 0.0
      %4353 = vmatpush1.msra.mxu0 0.0
      %4354 = vmatprep.subr.mxu0 0.0
      %4355 = vmatpush1.msra.mxu0 0.0
      %4356 = vmatprep.subr.mxu0 0.0
      %4357 = vmatpush1.msra.mxu0 0.0
      %4358 = vmatprep.subr.mxu0 0.0
      %4359 = vmatpush1.msra.mxu0 0.0
      %4360 = vmatprep.subr.mxu0 0.0
      %4361 = vmatpush1.msra.mxu0 0.0
      %4362 = vmatprep.subr.mxu0 0.0
      %4363 = vmatpush1.msra.mxu0 0.0
      %4364 = vmatprep.subr.mxu0 0.0
      %4365 = vmatpush1.msra.mxu0 0.0
      %4366 = vmatprep.subr.mxu0 0.0
      %4367 = vmatpush1.msra.mxu0 0.0
      %4368 = vmatprep.subr.mxu0 0.0
      %4369 = vmatpush1.msra.mxu0 0.0
      %4370 = vmatprep.subr.mxu0 0.0
      %4371 = vmatpush1.msra.mxu0 0.0
      %4372 = vmatprep.subr.mxu0 0.0
      %4373 = vmatpush1.msra.mxu0 0.0
      %4374 = vmatprep.subr.mxu0 0.0
      %4375 = vmatpush1.msra.mxu0 0.0
      %4376 = vmatprep.subr.mxu0 0.0
      %4377 = vmatpush1.msra.mxu0 0.0
      %4378 = vmatprep.subr.mxu0 0.0
      %4379 = vmatpush1.msra.mxu0 0.0
      %4380 = vmatprep.subr.mxu0 0.0
      %4381 = vmatpush1.msra.mxu0 0.0
      %4382 = vmatprep.mubr.f32.mxu0 0.0
      %4383 = vmatmul.mubr.f32.gmra.mrb[0].mxu0 %v4166
      %v4384 = vpop.f32.mrb[0].mxu0
      %v4385 = vadd.f32 0.0, %v4384
      %v4386 = vpop.f32.mrb[0].mxu0
      %4387 = vdwg.mxu0
      %4388 = vmatprep.subr.mxu0 0.0
      %4389 = vmatpush1.msra.mxu0 %v2007
      %4390 = vmatprep.subr.mxu0 0.0
      %4391 = vmatpush1.msra.mxu0 %v2008
      %4392 = vmatprep.subr.mxu0 0.0
      %4393 = vmatpush1.msra.mxu0 %v2009
      %4394 = vmatprep.subr.mxu0 0.0
      %4395 = vmatpush1.msra.mxu0 %v2010
      %4396 = vmatprep.subr.mxu0 0.0
      %4397 = vmatpush1.msra.mxu0 %v2011
      %4398 = vmatprep.subr.mxu0 0.0
      %4399 = vmatpush1.msra.mxu0 %v2012
      %4400 = vmatprep.subr.mxu0 0.0
      %4401 = vmatpush1.msra.mxu0 %v2013
      %4402 = vmatprep.subr.mxu0 0.0
      %4403 = vmatpush1.msra.mxu0 %v2014
      %4404 = vmatprep.subr.mxu0 0.0
      %4405 = vmatpush1.msra.mxu0 %v2015
      %4406 = vmatprep.subr.mxu0 0.0
      %4407 = vmatpush1.msra.mxu0 %v2016
      %4408 = vmatprep.subr.mxu0 0.0
      %4409 = vmatpush1.msra.mxu0 %v2017
      %4410 = vmatprep.subr.mxu0 0.0
      %4411 = vmatpush1.msra.mxu0 %v2018
      %4412 = vmatprep.subr.mxu0 0.0
      %4413 = vmatpush1.msra.mxu0 %v2019
      %4414 = vmatprep.subr.mxu0 0.0
      %4415 = vmatpush1.msra.mxu0 %v2020
      %4416 = vmatprep.subr.mxu0 0.0
      %4417 = vmatpush1.msra.mxu0 %v2021
      %4418 = vmatprep.subr.mxu0 0.0
      %4419 = vmatpush1.msra.mxu0 %v2022
      %4420 = vmatprep.subr.mxu0 0.0
      %4421 = vmatpush1.msra.mxu0 0.0
      %4422 = vmatprep.subr.mxu0 0.0
      %4423 = vmatpush1.msra.mxu0 0.0
      %4424 = vmatprep.subr.mxu0 0.0
      %4425 = vmatpush1.msra.mxu0 0.0
      %4426 = vmatprep.subr.mxu0 0.0
      %4427 = vmatpush1.msra.mxu0 0.0
      %4428 = vmatprep.subr.mxu0 0.0
      %4429 = vmatpush1.msra.mxu0 0.0
      %4430 = vmatprep.subr.mxu0 0.0
      %4431 = vmatpush1.msra.mxu0 0.0
      %4432 = vmatprep.subr.mxu0 0.0
      %4433 = vmatpush1.msra.mxu0 0.0
      %4434 = vmatprep.subr.mxu0 0.0
      %4435 = vmatpush1.msra.mxu0 0.0
      %4436 = vmatprep.subr.mxu0 0.0
      %4437 = vmatpush1.msra.mxu0 0.0
      %4438 = vmatprep.subr.mxu0 0.0
      %4439 = vmatpush1.msra.mxu0 0.0
      %4440 = vmatprep.subr.mxu0 0.0
      %4441 = vmatpush1.msra.mxu0 0.0
      %4442 = vmatprep.subr.mxu0 0.0
      %4443 = vmatpush1.msra.mxu0 0.0
      %4444 = vmatprep.subr.mxu0 0.0
      %4445 = vmatpush1.msra.mxu0 0.0
      %4446 = vmatprep.subr.mxu0 0.0
      %4447 = vmatpush1.msra.mxu0 0.0
      %4448 = vmatprep.subr.mxu0 0.0
      %4449 = vmatpush1.msra.mxu0 0.0
      %4450 = vmatprep.subr.mxu0 0.0
      %4451 = vmatpush1.msra.mxu0 0.0
      %4452 = vmatprep.mubr.f32.mxu0 0.0
      %4453 = vmatmul.mubr.f32.gmra.mrb[0].mxu0 %v4168
      %v4454 = vpop.f32.mrb[0].mxu0
      %v4455 = vadd.f32 0.0, %v4454
      %v4456 = vpop.f32.mrb[0].mxu0
      %4457 = vdwg.mxu0
      %4458 = vmatprep.subr.mxu0 0.0
      %4459 = vmatpush1.msra.mxu0 %v2023
      %4460 = vmatprep.subr.mxu0 0.0
      %4461 = vmatpush1.msra.mxu0 %v2024
      %4462 = vmatprep.subr.mxu0 0.0
      %4463 = vmatpush1.msra.mxu0 %v2025
      %4464 = vmatprep.subr.mxu0 0.0
      %4465 = vmatpush1.msra.mxu0 %v2026
      %4466 = vmatprep.subr.mxu0 0.0
      %4467 = vmatpush1.msra.mxu0 %v2027
      %4468 = vmatprep.subr.mxu0 0.0
      %4469 = vmatpush1.msra.mxu0 %v2028
      %4470 = vmatprep.subr.mxu0 0.0
      %4471 = vmatpush1.msra.mxu0 %v2029
      %4472 = vmatprep.subr.mxu0 0.0
      %4473 = vmatpush1.msra.mxu0 %v2030
      %4474 = vmatprep.subr.mxu0 0.0
      %4475 = vmatpush1.msra.mxu0 %v2031
      %4476 = vmatprep.subr.mxu0 0.0
      %4477 = vmatpush1.msra.mxu0 %v2032
      %4478 = vmatprep.subr.mxu0 0.0
      %4479 = vmatpush1.msra.mxu0 %v2033
      %4480 = vmatprep.subr.mxu0 0.0
      %4481 = vmatpush1.msra.mxu0 %v2034
      %4482 = vmatprep.subr.mxu0 0.0
      %4483 = vmatpush1.msra.mxu0 %v2035
      %4484 = vmatprep.subr.mxu0 0.0
      %4485 = vmatpush1.msra.mxu0 %v2036
      %4486 = vmatprep.subr.mxu0 0.0
      %4487 = vmatpush1.msra.mxu0 %v2037
      %4488 = vmatprep.subr.mxu0 0.0
      %4489 = vmatpush1.msra.mxu0 %v2038
      %4490 = vmatprep.subr.mxu0 0.0
      %4491 = vmatpush1.msra.mxu0 0.0
      %4492 = vmatprep.subr.mxu0 0.0
      %4493 = vmatpush1.msra.mxu0 0.0
      %4494 = vmatprep.subr.mxu0 0.0
      %4495 = vmatpush1.msra.mxu0 0.0
      %4496 = vmatprep.subr.mxu0 0.0
      %4497 = vmatpush1.msra.mxu0 0.0
      %4498 = vmatprep.subr.mxu0 0.0
      %4499 = vmatpush1.msra.mxu0 0.0
      %4500 = vmatprep.subr.mxu0 0.0
      %4501 = vmatpush1.msra.mxu0 0.0
      %4502 = vmatprep.subr.mxu0 0.0
      %4503 = vmatpush1.msra.mxu0 0.0
      %4504 = vmatprep.subr.mxu0 0.0
      %4505 = vmatpush1.msra.mxu0 0.0
      %4506 = vmatprep.subr.mxu0 0.0
      %4507 = vmatpush1.msra.mxu0 0.0
      %4508 = vmatprep.subr.mxu0 0.0
      %4509 = vmatpush1.msra.mxu0 0.0
      %4510 = vmatprep.subr.mxu0 0.0
      %4511 = vmatpush1.msra.mxu0 0.0
      %4512 = vmatprep.subr.mxu0 0.0
      %4513 = vmatpush1.msra.mxu0 0.0
      %4514 = vmatprep.subr.mxu0 0.0
      %4515 = vmatpush1.msra.mxu0 0.0
      %4516 = vmatprep.subr.mxu0 0.0
      %4517 = vmatpush1.msra.mxu0 0.0
      %4518 = vmatprep.subr.mxu0 0.0
      %4519 = vmatpush1.msra.mxu0 0.0
      %4520 = vmatprep.subr.mxu0 0.0
      %4521 = vmatpush1.msra.mxu0 0.0
      %4522 = vmatprep.mubr.f32.mxu0 0.0
      %4523 = vmatmul.mubr.f32.gmra.mrb[0].mxu0 %v4151
      %v4524 = vpop.f32.mrb[0].mxu0
      %v4525 = vadd.f32 0.0, %v4524
      %v4526 = vpop.f32.mrb[0].mxu0
      %4527 = vdwg.mxu0
      %4528 = vmatprep.subr.mxu0 0.0
      %4529 = vmatpush1.msra.mxu0 %v2039
      %4530 = vmatprep.subr.mxu0 0.0
      %4531 = vmatpush1.msra.mxu0 %v2040
      %4532 = vmatprep.subr.mxu0 0.0
      %4533 = vmatpush1.msra.mxu0 %v2041
      %4534 = vmatprep.subr.mxu0 0.0
      %4535 = vmatpush1.msra.mxu0 %v2042
      %4536 = vmatprep.subr.mxu0 0.0
      %4537 = vmatpush1.msra.mxu0 %v2043
      %4538 = vmatprep.subr.mxu0 0.0
      %4539 = vmatpush1.msra.mxu0 %v2044
      %4540 = vmatprep.subr.mxu0 0.0
      %4541 = vmatpush1.msra.mxu0 %v2045
      %4542 = vmatprep.subr.mxu0 0.0
      %4543 = vmatpush1.msra.mxu0 %v2046
      %4544 = vmatprep.subr.mxu0 0.0
      %4545 = vmatpush1.msra.mxu0 %v2047
      %4546 = vmatprep.subr.mxu0 0.0
      %4547 = vmatpush1.msra.mxu0 %v2048
      %4548 = vmatprep.subr.mxu0 0.0
      %4549 = vmatpush1.msra.mxu0 %v2049
      %4550 = vmatprep.subr.mxu0 0.0
      %4551 = vmatpush1.msra.mxu0 %v2050
      %4552 = vmatprep.subr.mxu0 0.0
      %4553 = vmatpush1.msra.mxu0 %v2051
      %4554 = vmatprep.subr.mxu0 0.0
      %4555 = vmatpush1.msra.mxu0 %v2052
      %4556 = vmatprep.subr.mxu0 0.0
      %4557 = vmatpush1.msra.mxu0 %v2053
      %4558 = vmatprep.subr.mxu0 0.0
      %4559 = vmatpush1.msra.mxu0 %v2054
      %4560 = vmatprep.subr.mxu0 0.0
      %4561 = vmatpush1.msra.mxu0 0.0
      %4562 = vmatprep.subr.mxu0 0.0
      %4563 = vmatpush1.msra.mxu0 0.0
      %4564 = vmatprep.subr.mxu0 0.0
      %4565 = vmatpush1.msra.mxu0 0.0
      %4566 = vmatprep.subr.mxu0 0.0
      %4567 = vmatpush1.msra.mxu0 0.0
      %4568 = vmatprep.subr.mxu0 0.0
      %4569 = vmatpush1.msra.mxu0 0.0
      %4570 = vmatprep.subr.mxu0 0.0
      %4571 = vmatpush1.msra.mxu0 0.0
      %4572 = vmatprep.subr.mxu0 0.0
      %4573 = vmatpush1.msra.mxu0 0.0
      %4574 = vmatprep.subr.mxu0 0.0
      %4575 = vmatpush1.msra.mxu0 0.0
      %4576 = vmatprep.subr.mxu0 0.0
      %4577 = vmatpush1.msra.mxu0 0.0
      %4578 = vmatprep.subr.mxu0 0.0
      %4579 = vmatpush1.msra.mxu0 0.0
      %4580 = vmatprep.subr.mxu0 0.0
      %4581 = vmatpush1.msra.mxu0 0.0
      %4582 = vmatprep.subr.mxu0 0.0
      %4583 = vmatpush1.msra.mxu0 0.0
      %4584 = vmatprep.subr.mxu0 0.0
      %4585 = vmatpush1.msra.mxu0 0.0
      %4586 = vmatprep.subr.mxu0 0.0
      %4587 = vmatpush1.msra.mxu0 0.0
      %4588 = vmatprep.subr.mxu0 0.0
      %4589 = vmatpush1.msra.mxu0 0.0
      %4590 = vmatprep.subr.mxu0 0.0
      %4591 = vmatpush1.msra.mxu0 0.0
      %4592 = vmatprep.mubr.f32.mxu0 0.0
      %4593 = vmatmul.mubr.f32.gmra.mrb[0].mxu0 %v4165
      %v4594 = vpop.f32.mrb[0].mxu0
      %v4595 = vadd.f32 0.0, %v4594
      %v4596 = vpop.f32.mrb[0].mxu0
      %4597 = vdwg.mxu0
      %4598 = vmatprep.subr.mxu0 0.0
      %4599 = vmatpush1.msra.mxu0 %v2055
      %4600 = vmatprep.subr.mxu0 0.0
      %4601 = vmatpush1.msra.mxu0 %v2056
      %4602 = vmatprep.subr.mxu0 0.0
      %4603 = vmatpush1.msra.mxu0 %v2057
      %4604 = vmatprep.subr.mxu0 0.0
      %4605 = vmatpush1.msra.mxu0 %v2058
      %4606 = vmatprep.subr.mxu0 0.0
      %4607 = vmatpush1.msra.mxu0 %v2059
      %4608 = vmatprep.subr.mxu0 0.0
      %4609 = vmatpush1.msra.mxu0 %v2060
      %4610 = vmatprep.subr.mxu0 0.0
      %4611 = vmatpush1.msra.mxu0 %v2061
      %4612 = vmatprep.subr.mxu0 0.0
      %4613 = vmatpush1.msra.mxu0 %v2062
      %4614 = vmatprep.subr.mxu0 0.0
      %4615 = vmatpush1.msra.mxu0 %v2063
      %4616 = vmatprep.subr.mxu0 0.0
      %4617 = vmatpush1.msra.mxu0 %v2064
      %4618 = vmatprep.subr.mxu0 0.0
      %4619 = vmatpush1.msra.mxu0 %v2065
      %4620 = vmatprep.subr.mxu0 0.0
      %4621 = vmatpush1.msra.mxu0 %v2066
      %4622 = vmatprep.subr.mxu0 0.0
      %4623 = vmatpush1.msra.mxu0 %v2067
      %4624 = vmatprep.subr.mxu0 0.0
      %4625 = vmatpush1.msra.mxu0 %v2068
      %4626 = vmatprep.subr.mxu0 0.0
      %4627 = vmatpush1.msra.mxu0 %v2069
      %4628 = vmatprep.subr.mxu0 0.0
      %4629 = vmatpush1.msra.mxu0 %v2070
      %4630 = vmatprep.subr.mxu0 0.0
      %4631 = vmatpush1.msra.mxu0 0.0
      %4632 = vmatprep.subr.mxu0 0.0
      %4633 = vmatpush1.msra.mxu0 0.0
      %4634 = vmatprep.subr.mxu0 0.0
      %4635 = vmatpush1.msra.mxu0 0.0
      %4636 = vmatprep.subr.mxu0 0.0
      %4637 = vmatpush1.msra.mxu0 0.0
      %4638 = vmatprep.subr.mxu0 0.0
      %4639 = vmatpush1.msra.mxu0 0.0
      %4640 = vmatprep.subr.mxu0 0.0
      %4641 = vmatpush1.msra.mxu0 0.0
      %4642 = vmatprep.subr.mxu0 0.0
      %4643 = vmatpush1.msra.mxu0 0.0
      %4644 = vmatprep.subr.mxu0 0.0
      %4645 = vmatpush1.msra.mxu0 0.0
      %4646 = vmatprep.subr.mxu0 0.0
      %4647 = vmatpush1.msra.mxu0 0.0
      %4648 = vmatprep.subr.mxu0 0.0
      %4649 = vmatpush1.msra.mxu0 0.0
      %4650 = vmatprep.subr.mxu0 0.0
      %4651 = vmatpush1.msra.mxu0 0.0
      %4652 = vmatprep.subr.mxu0 0.0
      %4653 = vmatpush1.msra.mxu0 0.0
      %4654 = vmatprep.subr.mxu0 0.0
      %4655 = vmatpush1.msra.mxu0 0.0
      %4656 = vmatprep.subr.mxu0 0.0
      %4657 = vmatpush1.msra.mxu0 0.0
      %4658 = vmatprep.subr.mxu0 0.0
      %4659 = vmatpush1.msra.mxu0 0.0
      %4660 = vmatprep.subr.mxu0 0.0
      %4661 = vmatpush1.msra.mxu0 0.0
      %4662 = vmatprep.mubr.f32.mxu0 0.0
      %4663 = vmatmul.mubr.f32.gmra.mrb[0].mxu0 %v4167
      %v4664 = vpop.f32.mrb[0].mxu0
      %v4665 = vadd.f32 0.0, %v4664
      %v4666 = vpop.f32.mrb[0].mxu0
      %4667 = vdwg.mxu0
      %4668 = vmatprep.subr.mxu0 0.0
      %4669 = vmatpush1.msra.mxu0 %v2071
      %4670 = vmatprep.subr.mxu0 0.0
      %4671 = vmatpush1.msra.mxu0 %v2072
      %4672 = vmatprep.subr.mxu0 0.0
      %4673 = vmatpush1.msra.mxu0 %v2073
      %4674 = vmatprep.subr.mxu0 0.0
      %4675 = vmatpush1.msra.mxu0 %v2074
      %4676 = vmatprep.subr.mxu0 0.0
      %4677 = vmatpush1.msra.mxu0 %v2075
      %4678 = vmatprep.subr.mxu0 0.0
      %4679 = vmatpush1.msra.mxu0 %v2076
      %4680 = vmatprep.subr.mxu0 0.0
      %4681 = vmatpush1.msra.mxu0 %v2077
      %4682 = vmatprep.subr.mxu0 0.0
      %4683 = vmatpush1.msra.mxu0 %v2078
      %4684 = vmatprep.subr.mxu0 0.0
      %4685 = vmatpush1.msra.mxu0 %v2079
      %4686 = vmatprep.subr.mxu0 0.0
      %4687 = vmatpush1.msra.mxu0 %v2080
      %4688 = vmatprep.subr.mxu0 0.0
      %4689 = vmatpush1.msra.mxu0 %v2081
      %4690 = vmatprep.subr.mxu0 0.0
      %4691 = vmatpush1.msra.mxu0 %v2082
      %4692 = vmatprep.subr.mxu0 0.0
      %4693 = vmatpush1.msra.mxu0 %v2083
      %4694 = vmatprep.subr.mxu0 0.0
      %4695 = vmatpush1.msra.mxu0 %v2084
      %4696 = vmatprep.subr.mxu0 0.0
      %4697 = vmatpush1.msra.mxu0 %v2085
      %4698 = vmatprep.subr.mxu0 0.0
      %4699 = vmatpush1.msra.mxu0 %v2086
      %4700 = vmatprep.subr.mxu0 0.0
      %4701 = vmatpush1.msra.mxu0 0.0
      %4702 = vmatprep.subr.mxu0 0.0
      %4703 = vmatpush1.msra.mxu0 0.0
      %4704 = vmatprep.subr.mxu0 0.0
      %4705 = vmatpush1.msra.mxu0 0.0
      %4706 = vmatprep.subr.mxu0 0.0
      %4707 = vmatpush1.msra.mxu0 0.0
      %4708 = vmatprep.subr.mxu0 0.0
      %4709 = vmatpush1.msra.mxu0 0.0
      %4710 = vmatprep.subr.mxu0 0.0
      %4711 = vmatpush1.msra.mxu0 0.0
      %4712 = vmatprep.subr.mxu0 0.0
      %4713 = vmatpush1.msra.mxu0 0.0
      %4714 = vmatprep.subr.mxu0 0.0
      %4715 = vmatpush1.msra.mxu0 0.0
      %4716 = vmatprep.subr.mxu0 0.0
      %4717 = vmatpush1.msra.mxu0 0.0
      %4718 = vmatprep.subr.mxu0 0.0
      %4719 = vmatpush1.msra.mxu0 0.0
      %4720 = vmatprep.subr.mxu0 0.0
      %4721 = vmatpush1.msra.mxu0 0.0
      %4722 = vmatprep.subr.mxu0 0.0
      %4723 = vmatpush1.msra.mxu0 0.0
      %4724 = vmatprep.subr.mxu0 0.0
      %4725 = vmatpush1.msra.mxu0 0.0
      %4726 = vmatprep.subr.mxu0 0.0
      %4727 = vmatpush1.msra.mxu0 0.0
      %4728 = vmatprep.subr.mxu0 0.0
      %4729 = vmatpush1.msra.mxu0 0.0
      %4730 = vmatprep.subr.mxu0 0.0
      %4731 = vmatpush1.msra.mxu0 0.0
      %4732 = vmatprep.mubr.f32.mxu0 0.0
      %4733 = vmatmul.mubr.f32.gmra.mrb[0].mxu0 %v4169
      %v4734 = vpop.f32.mrb[0].mxu0
      %v4735 = vadd.f32 0.0, %v4734
      %v4736 = vpop.f32.mrb[0].mxu0
      %4737 = vdwg.mxu0
      %v4738 = vld [vmem:[%s10] sm:$0xff]
      %v4739 = vld [vmem:[%s10 + $0x8] sm:$0xff]
      %v4740 = vld [vmem:[%s10 + $0x10] sm:$0xff]
      %v4741 = vld [vmem:[%s10 + $0x18] sm:$0xff]
      %v4742 = vld [vmem:[%s11] sm:$0x1]
      %v4744 = vlaneseq
      %v4745 = vshrl.u32 %v4744, 7
      %v4746 = vsub.s32 0, %v4745
      %v4747 = vrot.slane %v4742, %v4746
      %4749 = vmatprep.subr.mxu0 0.0
      %4750 = vmatpush1.msra.mxu0 %v4738
      %4751 = vmatprep.subr.mxu0 0.0
      %4752 = vmatpush1.msra.mxu0 %v4739
      %4753 = vmatprep.subr.mxu0 0.0
      %4754 = vmatpush1.msra.mxu0 %v4740
      %4755 = vmatprep.subr.mxu0 0.0
      %4756 = vmatpush1.msra.mxu0 %v4741
      %4757 = vmatprep.subr.mxu0 0.0
      %4758 = vmatpush1.msra.mxu0 0.0
      %4759 = vmatprep.subr.mxu0 0.0
      %4760 = vmatpush1.msra.mxu0 0.0
      %4761 = vmatprep.subr.mxu0 0.0
      %4762 = vmatpush1.msra.mxu0 0.0
      %4763 = vmatprep.subr.mxu0 0.0
      %4764 = vmatpush1.msra.mxu0 0.0
      %4765 = vmatprep.subr.mxu0 0.0
      %4766 = vmatpush1.msra.mxu0 0.0
      %4767 = vmatprep.subr.mxu0 0.0
      %4768 = vmatpush1.msra.mxu0 0.0
      %4769 = vmatprep.subr.mxu0 0.0
      %4770 = vmatpush1.msra.mxu0 0.0
      %4771 = vmatprep.subr.mxu0 0.0
      %4772 = vmatpush1.msra.mxu0 0.0
      %4773 = vmatprep.subr.mxu0 0.0
      %4774 = vmatpush1.msra.mxu0 0.0
      %4775 = vmatprep.subr.mxu0 0.0
      %4776 = vmatpush1.msra.mxu0 0.0
      %4777 = vmatprep.subr.mxu0 0.0
      %4778 = vmatpush1.msra.mxu0 0.0
      %4779 = vmatprep.subr.mxu0 0.0
      %4780 = vmatpush1.msra.mxu0 0.0
      %4781 = vmatprep.subr.mxu0 0.0
      %4782 = vmatpush1.msra.mxu0 0.0
      %4783 = vmatprep.subr.mxu0 0.0
      %4784 = vmatpush1.msra.mxu0 0.0
      %4785 = vmatprep.subr.mxu0 0.0
      %4786 = vmatpush1.msra.mxu0 0.0
      %4787 = vmatprep.subr.mxu0 0.0
      %4788 = vmatpush1.msra.mxu0 0.0
      %4789 = vmatprep.subr.mxu0 0.0
      %4790 = vmatpush1.msra.mxu0 0.0
      %4791 = vmatprep.subr.mxu0 0.0
      %4792 = vmatpush1.msra.mxu0 0.0
      %4793 = vmatprep.subr.mxu0 0.0
      %4794 = vmatpush1.msra.mxu0 0.0
      %4795 = vmatprep.subr.mxu0 0.0
      %4796 = vmatpush1.msra.mxu0 0.0
      %4797 = vmatprep.subr.mxu0 0.0
      %4798 = vmatpush1.msra.mxu0 0.0
      %4799 = vmatprep.subr.mxu0 0.0
      %4800 = vmatpush1.msra.mxu0 0.0
      %4801 = vmatprep.subr.mxu0 0.0
      %4802 = vmatpush1.msra.mxu0 0.0
      %4803 = vmatprep.subr.mxu0 0.0
      %4804 = vmatpush1.msra.mxu0 0.0
      %4805 = vmatprep.subr.mxu0 0.0
      %4806 = vmatpush1.msra.mxu0 0.0
      %4807 = vmatprep.subr.mxu0 0.0
      %4808 = vmatpush1.msra.mxu0 0.0
      %4809 = vmatprep.subr.mxu0 0.0
      %4810 = vmatpush1.msra.mxu0 0.0
      %4811 = vmatprep.subr.mxu0 0.0
      %4812 = vmatpush1.msra.mxu0 0.0
      %4813 = vmatprep.mubr.f32.mxu0 0.0
      %4814 = vmatmul.mubr.f32.gmra.mrb[0].mxu0 %v2100
      %v4815 = vpop.f32.mrb[0].mxu0
      %v4816 = vadd.f32 %v4747, %v4815
      %v4817 = vpop.f32.mrb[0].mxu0
      %4818 = vdwg.mxu0
      %v4819 = vxor.u32 %v4816, 2147483648
      %v4820 = vmul.f32 %v4819, 1.442695
      %v4821 = vpow.pop %v4820
      %v4822 = vadd.f32 %v4821, 1.0
      %v4823 = vrcp.pop %v4822
      %v4824 = vmul.f32 1.0, %v4823
      %v4833 = vrot.slane %v4315, 7
      %v4834 = vsel %vm4095, %v4833, %v4245
      %v4835 = vrot.slane %v4385, 6
      %v4836 = vsel %vm4097, %v4835, %v4834
      %v4837 = vrot.slane %v4455, 5
      %v4838 = vsel %vm4099, %v4837, %v4836
      %v4839 = vrot.slane %v4525, 4
      %v4840 = vsel %vm4101, %v4839, %v4838
      %v4841 = vrot.slane %v4595, 3
      %v4842 = vsel %vm4103, %v4841, %v4840
      %v4843 = vrot.slane %v4665, 2
      %v4844 = vsel %vm4105, %v4843, %v4842
      %v4845 = vrot.slane %v4735, 1
      %v4846 = vsel %vm4107, %v4845, %v4844
      %v4848 = vmul.f32 %v4824, %v4846
      %p4849 = scmp.eq.s32.totalorder %s1955, 0
      %v4850 = vld [vmem:[%s2] sm:$0xff]
      %s4851 = scalar_select %p4849, 1, 0
      %v4852 = vstv %s4851
      %vm4853 = vcmp.eq.s32.totalorder %v4852, 1
      %v4854 = vsel %vm4853, %v4850, %v1943
      %4856 = vrot.lane.b32.xlu0 %v4848, 32
      %v4857 = vpop.permute.xlu0 %4856
      %v4859 = vsel %vm2098, %v4854, %v4857
      %v4860 = vld [vmem:[%s16] sm:$0xff]
      %v4861 = vld [vmem:[%s16 + $0x8] sm:$0xff]
      %v4862 = vld [vmem:[%s16 + $0x10] sm:$0xff]
      %v4863 = vld [vmem:[%s16 + $0x18] sm:$0xff]
      %v4864 = vld [vmem:[%s16 + $0x20] sm:$0xff]
      %v4865 = vld [vmem:[%s16 + $0x28] sm:$0xff]
      %v4866 = vld [vmem:[%s16 + $0x30] sm:$0xff]
      %v4867 = vld [vmem:[%s16 + $0x38] sm:$0xff]
      %v4868 = vld [vmem:[%s16 + $0x40] sm:$0xff]
      %v4869 = vld [vmem:[%s16 + $0x48] sm:$0xff]
      %v4870 = vld [vmem:[%s16 + $0x50] sm:$0xff]
      %v4871 = vld [vmem:[%s16 + $0x58] sm:$0xff]
      %v4872 = vld [vmem:[%s16 + $0x60] sm:$0xff]
      %v4873 = vld [vmem:[%s16 + $0x68] sm:$0xff]
      %v4874 = vld [vmem:[%s16 + $0x70] sm:$0xff]
      %v4875 = vld [vmem:[%s16 + $0x78] sm:$0xff]
      %v4876 = vld [vmem:[%s16 + $0x80] sm:$0xff]
      %v4877 = vld [vmem:[%s16 + $0x88] sm:$0xff]
      %v4878 = vld [vmem:[%s16 + $0x90] sm:$0xff]
      %v4879 = vld [vmem:[%s16 + $0x98] sm:$0xff]
      %v4880 = vld [vmem:[%s16 + $0xa0] sm:$0xff]
      %v4881 = vld [vmem:[%s16 + $0xa8] sm:$0xff]
      %v4882 = vld [vmem:[%s16 + $0xb0] sm:$0xff]
      %v4883 = vld [vmem:[%s16 + $0xb8] sm:$0xff]
      %v4884 = vld [vmem:[%s16 + $0xc0] sm:$0xff]
      %v4885 = vld [vmem:[%s16 + $0xc8] sm:$0xff]
      %v4886 = vld [vmem:[%s16 + $0xd0] sm:$0xff]
      %v4887 = vld [vmem:[%s16 + $0xd8] sm:$0xff]
      %v4888 = vld [vmem:[%s16 + $0xe0] sm:$0xff]
      %v4889 = vld [vmem:[%s16 + $0xe8] sm:$0xff]
      %v4890 = vld [vmem:[%s16 + $0xf0] sm:$0xff]
      %v4891 = vld [vmem:[%s16 + $0xf8] sm:$0xff]
      %v4892 = vld [vmem:[%s16 + $0x100] sm:$0xff]
      %v4893 = vld [vmem:[%s16 + $0x108] sm:$0xff]
      %v4894 = vld [vmem:[%s16 + $0x110] sm:$0xff]
      %v4895 = vld [vmem:[%s16 + $0x118] sm:$0xff]
      %v4896 = vld [vmem:[%s16 + $0x120] sm:$0xff]
      %v4897 = vld [vmem:[%s16 + $0x128] sm:$0xff]
      %v4898 = vld [vmem:[%s16 + $0x130] sm:$0xff]
      %v4899 = vld [vmem:[%s16 + $0x138] sm:$0xff]
      %v4900 = vld [vmem:[%s16 + $0x140] sm:$0xff]
      %v4901 = vld [vmem:[%s16 + $0x148] sm:$0xff]
      %v4902 = vld [vmem:[%s16 + $0x150] sm:$0xff]
      %v4903 = vld [vmem:[%s16 + $0x158] sm:$0xff]
      %v4904 = vld [vmem:[%s16 + $0x160] sm:$0xff]
      %v4905 = vld [vmem:[%s16 + $0x168] sm:$0xff]
      %v4906 = vld [vmem:[%s16 + $0x170] sm:$0xff]
      %v4907 = vld [vmem:[%s16 + $0x178] sm:$0xff]
      %v4908 = vld [vmem:[%s17] sm:$0x3f]
      %v4910 = vlaneseq
      %v4911 = vshrl.u32 %v4910, 7
      %v4912 = vsub.s32 0, %v4911
      %v4913 = vrot.slane %v4908, %v4912
      %v4914 = vlaneseq
      %v4915 = vshrl.u32 %v4914, 7
      %v4916 = vsub.s32 1, %v4915
      %v4917 = vrot.slane %v4908, %v4916
      %v4918 = vlaneseq
      %v4919 = vshrl.u32 %v4918, 7
      %v4920 = vsub.s32 2, %v4919
      %v4921 = vrot.slane %v4908, %v4920
      %v4922 = vlaneseq
      %v4923 = vshrl.u32 %v4922, 7
      %v4924 = vsub.s32 3, %v4923
      %v4925 = vrot.slane %v4908, %v4924
      %v4926 = vlaneseq
      %v4927 = vshrl.u32 %v4926, 7
      %v4928 = vsub.s32 4, %v4927
      %v4929 = vrot.slane %v4908, %v4928
      %v4930 = vlaneseq
      %v4931 = vshrl.u32 %v4930, 7
      %v4932 = vsub.s32 5, %v4931
      %v4933 = vrot.slane %v4908, %v4932
      %vm4940 = vcmask 523264
      %v4942 = vsel %vm4940, %v4859, 0
      %4944 = vmatprep.subr.mxu0 %v4861
      %4945 = vmatpush1.msra.mxu0 %v4860
      %4946 = vmatprep.subr.mxu0 %v4867
      %4947 = vmatpush1.msra.mxu0 %v4866
      %4948 = vmatprep.subr.mxu0 %v4873
      %4949 = vmatpush1.msra.mxu0 %v4872
      %4950 = vmatprep.subr.mxu0 %v4879
      %4951 = vmatpush1.msra.mxu0 %v4878
      %4952 = vmatprep.subr.mxu0 %v4885
      %4953 = vmatpush1.msra.mxu0 %v4884
      %4954 = vmatprep.subr.mxu0 %v4891
      %4955 = vmatpush1.msra.mxu0 %v4890
      %4956 = vmatprep.subr.mxu0 %v4897
      %4957 = vmatpush1.msra.mxu0 %v4896
      %4958 = vmatprep.subr.mxu0 %v4903
      %4959 = vmatpush1.msra.mxu0 %v4902
      %4960 = vmatprep.subr.mxu0 0.0
      %4961 = vmatpush1.msra.mxu0 0.0
      %4962 = vmatprep.subr.mxu0 0.0
      %4963 = vmatpush1.msra.mxu0 0.0
      %4964 = vmatprep.subr.mxu0 0.0
      %4965 = vmatpush1.msra.mxu0 0.0
      %4966 = vmatprep.subr.mxu0 0.0
      %4967 = vmatpush1.msra.mxu0 0.0
      %4968 = vmatprep.subr.mxu0 0.0
      %4969 = vmatpush1.msra.mxu0 0.0
      %4970 = vmatprep.subr.mxu0 0.0
      %4971 = vmatpush1.msra.mxu0 0.0
      %4972 = vmatprep.subr.mxu0 0.0
      %4973 = vmatpush1.msra.mxu0 0.0
      %4974 = vmatprep.subr.mxu0 0.0
      %4975 = vmatpush1.msra.mxu0 0.0
      %4976 = vmatprep.subr.mxu0 0.0
      %4977 = vmatpush1.msra.mxu0 0.0
      %4978 = vmatprep.subr.mxu0 0.0
      %4979 = vmatpush1.msra.mxu0 0.0
      %4980 = vmatprep.subr.mxu0 0.0
      %4981 = vmatpush1.msra.mxu0 0.0
      %4982 = vmatprep.subr.mxu0 0.0
      %4983 = vmatpush1.msra.mxu0 0.0
      %4984 = vmatprep.subr.mxu0 0.0
      %4985 = vmatpush1.msra.mxu0 0.0
      %4986 = vmatprep.subr.mxu0 0.0
      %4987 = vmatpush1.msra.mxu0 0.0
      %4988 = vmatprep.subr.mxu0 0.0
      %4989 = vmatpush1.msra.mxu0 0.0
      %4990 = vmatprep.subr.mxu0 0.0
      %4991 = vmatpush1.msra.mxu0 0.0
      %4992 = vmatprep.subr.mxu0 0.0
      %4993 = vmatpush1.msra.mxu0 0.0
      %4994 = vmatprep.subr.mxu0 0.0
      %4995 = vmatpush1.msra.mxu0 0.0
      %4996 = vmatprep.subr.mxu0 0.0
      %4997 = vmatpush1.msra.mxu0 0.0
      %4998 = vmatprep.subr.mxu0 0.0
      %4999 = vmatpush1.msra.mxu0 0.0
      %5000 = vmatprep.subr.mxu0 0.0
      %5001 = vmatpush1.msra.mxu0 0.0
      %5002 = vmatprep.subr.mxu0 0.0
      %5003 = vmatpush1.msra.mxu0 0.0
      %5004 = vmatprep.subr.mxu0 0.0
      %5005 = vmatpush1.msra.mxu0 0.0
      %5006 = vmatprep.subr.mxu0 0.0
      %5007 = vmatpush1.msra.mxu0 0.0
      %5008 = vmatprep.mubr.f32.mxu0 0.0
      %5009 = vmatmul.mubr.f32.gmra.mrb[0].mxu0 %v4942
      %v5010 = vpop.f32.mrb[0].mxu0
      %v5011 = vadd.f32 %v4913, %v5010
      %v5012 = vpop.f32.mrb[0].mxu0
      %v5013 = vadd.f32 %v4917, %v5012
      %5014 = vdwg.mxu0
      %5015 = vmatprep.subr.mxu0 %v4863
      %5016 = vmatpush1.msra.mxu0 %v4862
      %5017 = vmatprep.subr.mxu0 %v4869
      %5018 = vmatpush1.msra.mxu0 %v4868
      %5019 = vmatprep.subr.mxu0 %v4875
      %5020 = vmatpush1.msra.mxu0 %v4874
      %5021 = vmatprep.subr.mxu0 %v4881
      %5022 = vmatpush1.msra.mxu0 %v4880
      %5023 = vmatprep.subr.mxu0 %v4887
      %5024 = vmatpush1.msra.mxu0 %v4886
      %5025 = vmatprep.subr.mxu0 %v4893
      %5026 = vmatpush1.msra.mxu0 %v4892
      %5027 = vmatprep.subr.mxu0 %v4899
      %5028 = vmatpush1.msra.mxu0 %v4898
      %5029 = vmatprep.subr.mxu0 %v4905
      %5030 = vmatpush1.msra.mxu0 %v4904
      %5031 = vmatprep.subr.mxu0 0.0
      %5032 = vmatpush1.msra.mxu0 0.0
      %5033 = vmatprep.subr.mxu0 0.0
      %5034 = vmatpush1.msra.mxu0 0.0
      %5035 = vmatprep.subr.mxu0 0.0
      %5036 = vmatpush1.msra.mxu0 0.0
      %5037 = vmatprep.subr.mxu0 0.0
      %5038 = vmatpush1.msra.mxu0 0.0
      %5039 = vmatprep.subr.mxu0 0.0
      %5040 = vmatpush1.msra.mxu0 0.0
      %5041 = vmatprep.subr.mxu0 0.0
      %5042 = vmatpush1.msra.mxu0 0.0
      %5043 = vmatprep.subr.mxu0 0.0
      %5044 = vmatpush1.msra.mxu0 0.0
      %5045 = vmatprep.subr.mxu0 0.0
      %5046 = vmatpush1.msra.mxu0 0.0
      %5047 = vmatprep.subr.mxu0 0.0
      %5048 = vmatpush1.msra.mxu0 0.0
      %5049 = vmatprep.subr.mxu0 0.0
      %5050 = vmatpush1.msra.mxu0 0.0
      %5051 = vmatprep.subr.mxu0 0.0
      %5052 = vmatpush1.msra.mxu0 0.0
      %5053 = vmatprep.subr.mxu0 0.0
      %5054 = vmatpush1.msra.mxu0 0.0
      %5055 = vmatprep.subr.mxu0 0.0
      %5056 = vmatpush1.msra.mxu0 0.0
      %5057 = vmatprep.subr.mxu0 0.0
      %5058 = vmatpush1.msra.mxu0 0.0
      %5059 = vmatprep.subr.mxu0 0.0
      %5060 = vmatpush1.msra.mxu0 0.0
      %5061 = vmatprep.subr.mxu0 0.0
      %5062 = vmatpush1.msra.mxu0 0.0
      %5063 = vmatprep.subr.mxu0 0.0
      %5064 = vmatpush1.msra.mxu0 0.0
      %5065 = vmatprep.subr.mxu0 0.0
      %5066 = vmatpush1.msra.mxu0 0.0
      %5067 = vmatprep.subr.mxu0 0.0
      %5068 = vmatpush1.msra.mxu0 0.0
      %5069 = vmatprep.subr.mxu0 0.0
      %5070 = vmatpush1.msra.mxu0 0.0
      %5071 = vmatprep.subr.mxu0 0.0
      %5072 = vmatpush1.msra.mxu0 0.0
      %5073 = vmatprep.subr.mxu0 0.0
      %5074 = vmatpush1.msra.mxu0 0.0
      %5075 = vmatprep.subr.mxu0 0.0
      %5076 = vmatpush1.msra.mxu0 0.0
      %5077 = vmatprep.subr.mxu0 0.0
      %5078 = vmatpush1.msra.mxu0 0.0
      %5079 = vmatprep.mubr.f32.mxu0 0.0
      %5080 = vmatmul.mubr.f32.gmra.mrb[0].mxu0 %v4942
      %v5081 = vpop.f32.mrb[0].mxu0
      %v5082 = vadd.f32 %v4921, %v5081
      %v5083 = vpop.f32.mrb[0].mxu0
      %v5084 = vadd.f32 %v4925, %v5083
      %5085 = vdwg.mxu0
      %5086 = vmatprep.subr.mxu0 %v4865
      %5087 = vmatpush1.msra.mxu0 %v4864
      %5088 = vmatprep.subr.mxu0 %v4871
      %5089 = vmatpush1.msra.mxu0 %v4870
      %5090 = vmatprep.subr.mxu0 %v4877
      %5091 = vmatpush1.msra.mxu0 %v4876
      %5092 = vmatprep.subr.mxu0 %v4883
      %5093 = vmatpush1.msra.mxu0 %v4882
      %5094 = vmatprep.subr.mxu0 %v4889
      %5095 = vmatpush1.msra.mxu0 %v4888
      %5096 = vmatprep.subr.mxu0 %v4895
      %5097 = vmatpush1.msra.mxu0 %v4894
      %5098 = vmatprep.subr.mxu0 %v4901
      %5099 = vmatpush1.msra.mxu0 %v4900
      %5100 = vmatprep.subr.mxu0 %v4907
      %5101 = vmatpush1.msra.mxu0 %v4906
      %5102 = vmatprep.subr.mxu0 0.0
      %5103 = vmatpush1.msra.mxu0 0.0
      %5104 = vmatprep.subr.mxu0 0.0
      %5105 = vmatpush1.msra.mxu0 0.0
      %5106 = vmatprep.subr.mxu0 0.0
      %5107 = vmatpush1.msra.mxu0 0.0
      %5108 = vmatprep.subr.mxu0 0.0
      %5109 = vmatpush1.msra.mxu0 0.0
      %5110 = vmatprep.subr.mxu0 0.0
      %5111 = vmatpush1.msra.mxu0 0.0
      %5112 = vmatprep.subr.mxu0 0.0
      %5113 = vmatpush1.msra.mxu0 0.0
      %5114 = vmatprep.subr.mxu0 0.0
      %5115 = vmatpush1.msra.mxu0 0.0
      %5116 = vmatprep.subr.mxu0 0.0
      %5117 = vmatpush1.msra.mxu0 0.0
      %5118 = vmatprep.subr.mxu0 0.0
      %5119 = vmatpush1.msra.mxu0 0.0
      %5120 = vmatprep.subr.mxu0 0.0
      %5121 = vmatpush1.msra.mxu0 0.0
      %5122 = vmatprep.subr.mxu0 0.0
      %5123 = vmatpush1.msra.mxu0 0.0
      %5124 = vmatprep.subr.mxu0 0.0
      %5125 = vmatpush1.msra.mxu0 0.0
      %5126 = vmatprep.subr.mxu0 0.0
      %5127 = vmatpush1.msra.mxu0 0.0
      %5128 = vmatprep.subr.mxu0 0.0
      %5129 = vmatpush1.msra.mxu0 0.0
      %5130 = vmatprep.subr.mxu0 0.0
      %5131 = vmatpush1.msra.mxu0 0.0
      %5132 = vmatprep.subr.mxu0 0.0
      %5133 = vmatpush1.msra.mxu0 0.0
      %5134 = vmatprep.subr.mxu0 0.0
      %5135 = vmatpush1.msra.mxu0 0.0
      %5136 = vmatprep.subr.mxu0 0.0
      %5137 = vmatpush1.msra.mxu0 0.0
      %5138 = vmatprep.subr.mxu0 0.0
      %5139 = vmatpush1.msra.mxu0 0.0
      %5140 = vmatprep.subr.mxu0 0.0
      %5141 = vmatpush1.msra.mxu0 0.0
      %5142 = vmatprep.subr.mxu0 0.0
      %5143 = vmatpush1.msra.mxu0 0.0
      %5144 = vmatprep.subr.mxu0 0.0
      %5145 = vmatpush1.msra.mxu0 0.0
      %5146 = vmatprep.subr.mxu0 0.0
      %5147 = vmatpush1.msra.mxu0 0.0
      %5148 = vmatprep.subr.mxu0 0.0
      %5149 = vmatpush1.msra.mxu0 0.0
      %5150 = vmatprep.mubr.f32.mxu0 0.0
      %5151 = vmatmul.mubr.f32.gmra.mrb[0].mxu0 %v4942
      %v5152 = vpop.f32.mrb[0].mxu0
      %v5153 = vadd.f32 %v4929, %v5152
      %v5154 = vpop.f32.mrb[0].mxu0
      %v5155 = vadd.f32 %v4933, %v5154
      %5156 = vdwg.mxu0
      %v5157 = vld [vmem:[#allocation3] sm:$0xff]
      %v5158 = vld [vmem:[#allocation4] sm:$0xff]
      %v5159 = vadd.f32 %v1958, %v5158
      %v5160 = vld [vmem:[%s18] sm:$0xff]
      %v5161 = vld [vmem:[%s18 + $0x8] sm:$0xff]
      %v5162 = vld [vmem:[%s18 + $0x10] sm:$0xff]
      %v5163 = vld [vmem:[%s18 + $0x18] sm:$0xff]
      %v5164 = vld [vmem:[%s18 + $0x20] sm:$0xff]
      %v5165 = vld [vmem:[%s18 + $0x28] sm:$0xff]
      %v5166 = vld [vmem:[%s18 + $0x30] sm:$0xff]
      %v5167 = vld [vmem:[%s18 + $0x38] sm:$0xff]
      %v5169 = vsel %vm2098, %v5159, 0
      %5171 = vmatprep.subr.mxu0 %v5161
      %5172 = vmatpush1.msra.mxu0 %v5160
      %5173 = vmatprep.subr.mxu0 %v5163
      %5174 = vmatpush1.msra.mxu0 %v5162
      %5175 = vmatprep.subr.mxu0 %v5165
      %5176 = vmatpush1.msra.mxu0 %v5164
      %5177 = vmatprep.subr.mxu0 %v5167
      %5178 = vmatpush1.msra.mxu0 %v5166
      %5179 = vmatprep.subr.mxu0 0.0
      %5180 = vmatpush1.msra.mxu0 0.0
      %5181 = vmatprep.subr.mxu0 0.0
      %5182 = vmatpush1.msra.mxu0 0.0
      %5183 = vmatprep.subr.mxu0 0.0
      %5184 = vmatpush1.msra.mxu0 0.0
      %5185 = vmatprep.subr.mxu0 0.0
      %5186 = vmatpush1.msra.mxu0 0.0
      %5187 = vmatprep.subr.mxu0 0.0
      %5188 = vmatpush1.msra.mxu0 0.0
      %5189 = vmatprep.subr.mxu0 0.0
      %5190 = vmatpush1.msra.mxu0 0.0
      %5191 = vmatprep.subr.mxu0 0.0
      %5192 = vmatpush1.msra.mxu0 0.0
      %5193 = vmatprep.subr.mxu0 0.0
      %5194 = vmatpush1.msra.mxu0 0.0
      %5195 = vmatprep.subr.mxu0 0.0
      %5196 = vmatpush1.msra.mxu0 0.0
      %5197 = vmatprep.subr.mxu0 0.0
      %5198 = vmatpush1.msra.mxu0 0.0
      %5199 = vmatprep.subr.mxu0 0.0
      %5200 = vmatpush1.msra.mxu0 0.0
      %5201 = vmatprep.subr.mxu0 0.0
      %5202 = vmatpush1.msra.mxu0 0.0
      %5203 = vmatprep.subr.mxu0 0.0
      %5204 = vmatpush1.msra.mxu0 0.0
      %5205 = vmatprep.subr.mxu0 0.0
      %5206 = vmatpush1.msra.mxu0 0.0
      %5207 = vmatprep.subr.mxu0 0.0
      %5208 = vmatpush1.msra.mxu0 0.0
      %5209 = vmatprep.subr.mxu0 0.0
      %5210 = vmatpush1.msra.mxu0 0.0
      %5211 = vmatprep.subr.mxu0 0.0
      %5212 = vmatpush1.msra.mxu0 0.0
      %5213 = vmatprep.subr.mxu0 0.0
      %5214 = vmatpush1.msra.mxu0 0.0
      %5215 = vmatprep.subr.mxu0 0.0
      %5216 = vmatpush1.msra.mxu0 0.0
      %5217 = vmatprep.subr.mxu0 0.0
      %5218 = vmatpush1.msra.mxu0 0.0
      %5219 = vmatprep.subr.mxu0 0.0
      %5220 = vmatpush1.msra.mxu0 0.0
      %5221 = vmatprep.subr.mxu0 0.0
      %5222 = vmatpush1.msra.mxu0 0.0
      %5223 = vmatprep.subr.mxu0 0.0
      %5224 = vmatpush1.msra.mxu0 0.0
      %5225 = vmatprep.subr.mxu0 0.0
      %5226 = vmatpush1.msra.mxu0 0.0
      %5227 = vmatprep.subr.mxu0 0.0
      %5228 = vmatpush1.msra.mxu0 0.0
      %5229 = vmatprep.subr.mxu0 0.0
      %5230 = vmatpush1.msra.mxu0 0.0
      %5231 = vmatprep.subr.mxu0 0.0
      %5232 = vmatpush1.msra.mxu0 0.0
      %5233 = vmatprep.subr.mxu0 0.0
      %5234 = vmatpush1.msra.mxu0 0.0
      %5235 = vmatprep.mubr.f32.mxu0 0.0
      %5236 = vmatmul.mubr.f32.gmra.mrb[0].mxu0 %v5169
      %v5237 = vpop.f32.mrb[0].mxu0
      %v5238 = vadd.f32 0.0, %v5237
      %v5239 = vpop.f32.mrb[0].mxu0
      %v5240 = vadd.f32 0.0, %v5239
      %5241 = vdwg.mxu0
      %v5242 = vadd.f32 %v5011, %v5238
      %v5243 = vadd.f32 %v5013, %v5240
      %v5244 = vxor.u32 %v5242, 2147483648
      %v5245 = vmul.f32 %v5244, 1.442695
      %v5246 = vpow.pop %v5245
      %v5247 = vadd.f32 %v5246, 1.0
      %v5248 = vrcp.pop %v5247
      %v5249 = vmul.f32 1.0, %v5248
      %v5250 = vtanh.pop %v5242
      %5252 = vrot.lane.b32.xlu0 %v5157, 32
      %v5253 = vpop.permute.xlu0 %5252
      %v5255 = vmul.f32 %v5249, %v5253
      %5257 = vrot.lane.b32.xlu0 %v5250, 64
      %v5258 = vpop.permute.xlu0 %5257
      %v5260 = vmul.f32 %v5249, %v5258
      %5262 = vrot.lane.b32.xlu0 %v5260, 32
      %v5263 = vpop.permute.xlu0 %5262
      %v5265 = vadd.f32 %v5255, %v5263
      %v5266 = vtanh.pop %v5265
      %5268 = vrot.lane.b32.xlu0 %v5266, 64
      %v5269 = vpop.permute.xlu0 %5268
      %v5271 = vmul.f32 %v5249, %v5269
      %v5272 = vld [vmem:[#allocation5] sm:$0xff]
      %v5273 = vxor.u32 %v5243, 2147483648
      %v5274 = vmul.f32 %v5273, 1.442695
      %v5275 = vpow.pop %v5274
      %v5276 = vadd.f32 %v5275, 1.0
      %v5277 = vrcp.pop %v5276
      %v5278 = vmul.f32 1.0, %v5277
      %v5279 = vtanh.pop %v5243
      %5281 = vrot.lane.b32.xlu0 %v5272, 32
      %v5282 = vpop.permute.xlu0 %5281
      %v5284 = vmul.f32 %v5278, %v5282
      %5286 = vrot.lane.b32.xlu0 %v5279, 64
      %v5287 = vpop.permute.xlu0 %5286
      %v5289 = vmul.f32 %v5278, %v5287
      %5291 = vrot.lane.b32.xlu0 %v5289, 32
      %v5292 = vpop.permute.xlu0 %5291
      %v5294 = vadd.f32 %v5284, %v5292
      %v5295 = vtanh.pop %v5294
      %5297 = vrot.lane.b32.xlu0 %v5295, 64
      %v5298 = vpop.permute.xlu0 %5297
      %v5300 = vmul.f32 %v5278, %v5298
      %s5301 = scalar_lea.vmem [#allocation4], 8
      %v5302 = vld [vmem:[%s5301] sm:$0xff]
      %5304 = vrot.lane.b32.xlu0 %v5302, 96
      %v5305 = vpop.permute.xlu0 %5304
      %v5307 = vadd.f32 %v5271, %v5305
      %s5308 = scalar_lea.vmem %s18, 64
      %v5309 = vld [vmem:[%s5308] sm:$0xff]
      %v5310 = vld [vmem:[%s5308 + $0x8] sm:$0xff]
      %v5311 = vld [vmem:[%s5308 + $0x10] sm:$0xff]
      %v5312 = vld [vmem:[%s5308 + $0x18] sm:$0xff]
      %v5313 = vld [vmem:[%s5308 + $0x20] sm:$0xff]
      %v5314 = vld [vmem:[%s5308 + $0x28] sm:$0xff]
      %v5315 = vld [vmem:[%s5308 + $0x30] sm:$0xff]
      %v5316 = vld [vmem:[%s5308 + $0x38] sm:$0xff]
      %5318 = vrot.lane.b32.xlu0 %v5307, 32
      %v5319 = vpop.permute.xlu0 %5318
      %v5320 = vsel %vm2098, %v5319, 0
      %5322 = vmatprep.subr.mxu0 %v5310
      %5323 = vmatpush1.msra.mxu0 %v5309
      %5324 = vmatprep.subr.mxu0 %v5312
      %5325 = vmatpush1.msra.mxu0 %v5311
      %5326 = vmatprep.subr.mxu0 %v5314
      %5327 = vmatpush1.msra.mxu0 %v5313
      %5328 = vmatprep.subr.mxu0 %v5316
      %5329 = vmatpush1.msra.mxu0 %v5315
      %5330 = vmatprep.subr.mxu0 0.0
      %5331 = vmatpush1.msra.mxu0 0.0
      %5332 = vmatprep.subr.mxu0 0.0
      %5333 = vmatpush1.msra.mxu0 0.0
      %5334 = vmatprep.subr.mxu0 0.0
      %5335 = vmatpush1.msra.mxu0 0.0
      %5336 = vmatprep.subr.mxu0 0.0
      %5337 = vmatpush1.msra.mxu0 0.0
      %5338 = vmatprep.subr.mxu0 0.0
      %5339 = vmatpush1.msra.mxu0 0.0
      %5340 = vmatprep.subr.mxu0 0.0
      %5341 = vmatpush1.msra.mxu0 0.0
      %5342 = vmatprep.subr.mxu0 0.0
      %5343 = vmatpush1.msra.mxu0 0.0
      %5344 = vmatprep.subr.mxu0 0.0
      %5345 = vmatpush1.msra.mxu0 0.0
      %5346 = vmatprep.subr.mxu0 0.0
      %5347 = vmatpush1.msra.mxu0 0.0
      %5348 = vmatprep.subr.mxu0 0.0
      %5349 = vmatpush1.msra.mxu0 0.0
      %5350 = vmatprep.subr.mxu0 0.0
      %5351 = vmatpush1.msra.mxu0 0.0
      %5352 = vmatprep.subr.mxu0 0.0
      %5353 = vmatpush1.msra.mxu0 0.0
      %5354 = vmatprep.subr.mxu0 0.0
      %5355 = vmatpush1.msra.mxu0 0.0
      %5356 = vmatprep.subr.mxu0 0.0
      %5357 = vmatpush1.msra.mxu0 0.0
      %5358 = vmatprep.subr.mxu0 0.0
      %5359 = vmatpush1.msra.mxu0 0.0
      %5360 = vmatprep.subr.mxu0 0.0
      %5361 = vmatpush1.msra.mxu0 0.0
      %5362 = vmatprep.subr.mxu0 0.0
      %5363 = vmatpush1.msra.mxu0 0.0
      %5364 = vmatprep.subr.mxu0 0.0
      %5365 = vmatpush1.msra.mxu0 0.0
      %5366 = vmatprep.subr.mxu0 0.0
      %5367 = vmatpush1.msra.mxu0 0.0
      %5368 = vmatprep.subr.mxu0 0.0
      %5369 = vmatpush1.msra.mxu0 0.0
      %5370 = vmatprep.subr.mxu0 0.0
      %5371 = vmatpush1.msra.mxu0 0.0
      %5372 = vmatprep.subr.mxu0 0.0
      %5373 = vmatpush1.msra.mxu0 0.0
      %5374 = vmatprep.subr.mxu0 0.0
      %5375 = vmatpush1.msra.mxu0 0.0
      %5376 = vmatprep.subr.mxu0 0.0
      %5377 = vmatpush1.msra.mxu0 0.0
      %5378 = vmatprep.subr.mxu0 0.0
      %5379 = vmatpush1.msra.mxu0 0.0
      %5380 = vmatprep.subr.mxu0 0.0
      %5381 = vmatpush1.msra.mxu0 0.0
      %5382 = vmatprep.subr.mxu0 0.0
      %5383 = vmatpush1.msra.mxu0 0.0
      %5384 = vmatprep.subr.mxu0 0.0
      %5385 = vmatpush1.msra.mxu0 0.0
      %5386 = vmatprep.mubr.f32.mxu0 0.0
      %5387 = vmatmul.mubr.f32.gmra.mrb[0].mxu0 %v5320
      %v5388 = vpop.f32.mrb[0].mxu0
      %v5389 = vadd.f32 0.0, %v5388
      %v5390 = vpop.f32.mrb[0].mxu0
      %v5391 = vadd.f32 0.0, %v5390
      %5392 = vdwg.mxu0
      %v5393 = vadd.f32 %v5082, %v5389
      %v5394 = vadd.f32 %v5084, %v5391
      %v5395 = vxor.u32 %v5393, 2147483648
      %v5396 = vmul.f32 %v5395, 1.442695
      %v5397 = vpow.pop %v5396
      %v5398 = vadd.f32 %v5397, 1.0
      %v5399 = vrcp.pop %v5398
      %v5400 = vmul.f32 1.0, %v5399
      %v5401 = vtanh.pop %v5393
      %v5402 = vmul.f32 %v5400, %v5265
      %5404 = vrot.lane.b32.xlu0 %v5401, 64
      %v5405 = vpop.permute.xlu0 %5404
      %v5407 = vmul.f32 %v5400, %v5405
      %5409 = vrot.lane.b32.xlu0 %v5407, 32
      %v5410 = vpop.permute.xlu0 %5409
      %v5412 = vadd.f32 %v5402, %v5410
      %v5413 = vtanh.pop %v5412
      %5415 = vrot.lane.b32.xlu0 %v5413, 64
      %v5416 = vpop.permute.xlu0 %5415
      %v5418 = vmul.f32 %v5400, %v5416
      %s5419 = scalar_lea.vmem [#allocation5], 8
      %v5420 = vld [vmem:[%s5419] sm:$0xff]
      %v5421 = vxor.u32 %v5394, 2147483648
      %v5422 = vmul.f32 %v5421, 1.442695
      %v5423 = vpow.pop %v5422
      %v5424 = vadd.f32 %v5423, 1.0
      %v5425 = vrcp.pop %v5424
      %v5426 = vmul.f32 1.0, %v5425
      %v5427 = vtanh.pop %v5394
      %5429 = vrot.lane.b32.xlu0 %v5420, 32
      %v5430 = vpop.permute.xlu0 %5429
      %v5432 = vmul.f32 %v5426, %v5430
      %5434 = vrot.lane.b32.xlu0 %v5427, 64
      %v5435 = vpop.permute.xlu0 %5434
      %v5437 = vmul.f32 %v5426, %v5435
      %5439 = vrot.lane.b32.xlu0 %v5437, 32
      %v5440 = vpop.permute.xlu0 %5439
      %v5442 = vadd.f32 %v5432, %v5440
      %v5443 = vtanh.pop %v5442
      %5445 = vrot.lane.b32.xlu0 %v5443, 64
      %v5446 = vpop.permute.xlu0 %5445
      %v5448 = vmul.f32 %v5426, %v5446
      %s5449 = scalar_lea.vmem [#allocation4], 16
      %v5450 = vld [vmem:[%s5449] sm:$0xff]
      %5452 = vrot.lane.b32.xlu0 %v5450, 96
      %v5453 = vpop.permute.xlu0 %5452
      %v5455 = vadd.f32 %v5418, %v5453
      %s5456 = scalar_lea.vmem %s18, 128
      %v5457 = vld [vmem:[%s5456] sm:$0xff]
      %v5458 = vld [vmem:[%s5456 + $0x8] sm:$0xff]
      %v5459 = vld [vmem:[%s5456 + $0x10] sm:$0xff]
      %v5460 = vld [vmem:[%s5456 + $0x18] sm:$0xff]
      %v5461 = vld [vmem:[%s5456 + $0x20] sm:$0xff]
      %v5462 = vld [vmem:[%s5456 + $0x28] sm:$0xff]
      %v5463 = vld [vmem:[%s5456 + $0x30] sm:$0xff]
      %v5464 = vld [vmem:[%s5456 + $0x38] sm:$0xff]
      %5466 = vrot.lane.b32.xlu0 %v5455, 32
      %v5467 = vpop.permute.xlu0 %5466
      %v5468 = vsel %vm2098, %v5467, 0
      %5470 = vmatprep.subr.mxu0 %v5458
      %5471 = vmatpush1.msra.mxu0 %v5457
      %5472 = vmatprep.subr.mxu0 %v5460
      %5473 = vmatpush1.msra.mxu0 %v5459
      %5474 = vmatprep.subr.mxu0 %v5462
      %5475 = vmatpush1.msra.mxu0 %v5461
      %5476 = vmatprep.subr.mxu0 %v5464
      %5477 = vmatpush1.msra.mxu0 %v5463
      %5478 = vmatprep.subr.mxu0 0.0
      %5479 = vmatpush1.msra.mxu0 0.0
      %5480 = vmatprep.subr.mxu0 0.0
      %5481 = vmatpush1.msra.mxu0 0.0
      %5482 = vmatprep.subr.mxu0 0.0
      %5483 = vmatpush1.msra.mxu0 0.0
      %5484 = vmatprep.subr.mxu0 0.0
      %5485 = vmatpush1.msra.mxu0 0.0
      %5486 = vmatprep.subr.mxu0 0.0
      %5487 = vmatpush1.msra.mxu0 0.0
      %5488 = vmatprep.subr.mxu0 0.0
      %5489 = vmatpush1.msra.mxu0 0.0
      %5490 = vmatprep.subr.mxu0 0.0
      %5491 = vmatpush1.msra.mxu0 0.0
      %5492 = vmatprep.subr.mxu0 0.0
      %5493 = vmatpush1.msra.mxu0 0.0
      %5494 = vmatprep.subr.mxu0 0.0
      %5495 = vmatpush1.msra.mxu0 0.0
      %5496 = vmatprep.subr.mxu0 0.0
      %5497 = vmatpush1.msra.mxu0 0.0
      %5498 = vmatprep.subr.mxu0 0.0
      %5499 = vmatpush1.msra.mxu0 0.0
      %5500 = vmatprep.subr.mxu0 0.0
      %5501 = vmatpush1.msra.mxu0 0.0
      %5502 = vmatprep.subr.mxu0 0.0
      %5503 = vmatpush1.msra.mxu0 0.0
      %5504 = vmatprep.subr.mxu0 0.0
      %5505 = vmatpush1.msra.mxu0 0.0
      %5506 = vmatprep.subr.mxu0 0.0
      %5507 = vmatpush1.msra.mxu0 0.0
      %5508 = vmatprep.subr.mxu0 0.0
      %5509 = vmatpush1.msra.mxu0 0.0
      %5510 = vmatprep.subr.mxu0 0.0
      %5511 = vmatpush1.msra.mxu0 0.0
      %5512 = vmatprep.subr.mxu0 0.0
      %5513 = vmatpush1.msra.mxu0 0.0
      %5514 = vmatprep.subr.mxu0 0.0
      %5515 = vmatpush1.msra.mxu0 0.0
      %5516 = vmatprep.subr.mxu0 0.0
      %5517 = vmatpush1.msra.mxu0 0.0
      %5518 = vmatprep.subr.mxu0 0.0
      %5519 = vmatpush1.msra.mxu0 0.0
      %5520 = vmatprep.subr.mxu0 0.0
      %5521 = vmatpush1.msra.mxu0 0.0
      %5522 = vmatprep.subr.mxu0 0.0
      %5523 = vmatpush1.msra.mxu0 0.0
      %5524 = vmatprep.subr.mxu0 0.0
      %5525 = vmatpush1.msra.mxu0 0.0
      %5526 = vmatprep.subr.mxu0 0.0
      %5527 = vmatpush1.msra.mxu0 0.0
      %5528 = vmatprep.subr.mxu0 0.0
      %5529 = vmatpush1.msra.mxu0 0.0
      %5530 = vmatprep.subr.mxu0 0.0
      %5531 = vmatpush1.msra.mxu0 0.0
      %5532 = vmatprep.subr.mxu0 0.0
      %5533 = vmatpush1.msra.mxu0 0.0
      %5534 = vmatprep.mubr.f32.mxu0 0.0
      %5535 = vmatmul.mubr.f32.gmra.mrb[0].mxu0 %v5468
      %v5536 = vpop.f32.mrb[0].mxu0
      %v5537 = vadd.f32 0.0, %v5536
      %v5538 = vpop.f32.mrb[0].mxu0
      %v5539 = vadd.f32 0.0, %v5538
      %5540 = vdwg.mxu0
      %v5541 = vadd.f32 %v5153, %v5537
      %v5542 = vadd.f32 %v5155, %v5539
      %v5543 = vxor.u32 %v5541, 2147483648
      %v5544 = vmul.f32 %v5543, 1.442695
      %v5545 = vpow.pop %v5544
      %v5546 = vadd.f32 %v5545, 1.0
      %v5547 = vrcp.pop %v5546
      %v5548 = vmul.f32 1.0, %v5547
      %v5549 = vtanh.pop %v5541
      %v5550 = vmul.f32 %v5548, %v5412
      %5552 = vrot.lane.b32.xlu0 %v5549, 64
      %v5553 = vpop.permute.xlu0 %5552
      %v5555 = vmul.f32 %v5548, %v5553
      %5557 = vrot.lane.b32.xlu0 %v5555, 32
      %v5558 = vpop.permute.xlu0 %5557
      %v5560 = vadd.f32 %v5550, %v5558
      %v5561 = vtanh.pop %v5560
      %5563 = vrot.lane.b32.xlu0 %v5561, 64
      %v5564 = vpop.permute.xlu0 %5563
      %v5566 = vmul.f32 %v5548, %v5564
      %s5567 = scalar_lea.vmem [#allocation5], 16
      %v5568 = vld [vmem:[%s5567] sm:$0xff]
      %v5569 = vxor.u32 %v5542, 2147483648
      %v5570 = vmul.f32 %v5569, 1.442695
      %v5571 = vpow.pop %v5570
      %v5572 = vadd.f32 %v5571, 1.0
      %v5573 = vrcp.pop %v5572
      %v5574 = vmul.f32 1.0, %v5573
      %v5575 = vtanh.pop %v5542
      %5577 = vrot.lane.b32.xlu0 %v5568, 32
      %v5578 = vpop.permute.xlu0 %5577
      %v5580 = vmul.f32 %v5574, %v5578
      %5582 = vrot.lane.b32.xlu0 %v5575, 64
      %v5583 = vpop.permute.xlu0 %5582
      %v5585 = vmul.f32 %v5574, %v5583
      %5587 = vrot.lane.b32.xlu0 %v5585, 32
      %v5588 = vpop.permute.xlu0 %5587
      %v5590 = vadd.f32 %v5580, %v5588
      %v5591 = vtanh.pop %v5590
      %5593 = vrot.lane.b32.xlu0 %v5591, 64
      %v5594 = vpop.permute.xlu0 %5593
      %v5596 = vmul.f32 %v5574, %v5594
      %v5597 = vld [vmem:[#allocation2] sm:$0xff]
      %v5598 = vsel %vm1957, 1, 0
      %5599 = vset.pattern.permute.xlu0 0
      %5600 = vperm.xlu0 %5599, %v5598
      %v5601 = vpop.permute.xlu0 %5600
      %vm5602 = vcmp.eq.s32.totalorder %v5601, 1
      %5604 = vrot.lane.b32.xlu0 %v5597, 96
      %v5605 = vpop.permute.xlu0 %5604
      %v5607 = vsel %vm5602, %v5566, %v5605
      %5609 = vrot.lane.b32.xlu0 %v5607, 32
      %v5610 = vpop.permute.xlu0 %5609
      %5612 = vst.msk [vmem:[#allocation2] sm:$0xff] %vm2098, %v5610
      %v5613 = vld [vmem:[#allocation3] sm:$0xff]
      %5615 = vrot.lane.b32.xlu0 %v5613, 32
      %v5616 = vpop.permute.xlu0 %5615
      %v5618 = vsel %vm5602, %v5560, %v5616
      %5620 = vrot.lane.b32.xlu0 %v5618, 96
      %v5621 = vpop.permute.xlu0 %5620
      %5623 = vst.msk [vmem:[#allocation3] sm:$0xff] %vm2098, %v5621
      %v5624 = vld [vmem:[#allocation4] sm:$0xff]
      %5626 = vrot.lane.b32.xlu0 %v5624, 96
      %v5627 = vpop.permute.xlu0 %5626
      %v5629 = vsel %vm5602, %v5300, %v5627
      %5631 = vrot.lane.b32.xlu0 %v5629, 32
      %v5632 = vpop.permute.xlu0 %5631
      %5634 = vst.msk [vmem:[#allocation4] sm:$0xff] %vm2098, %v5632
      %v5635 = vld [vmem:[#allocation5] sm:$0xff]
      %5637 = vrot.lane.b32.xlu0 %v5635, 32
      %v5638 = vpop.permute.xlu0 %5637
      %v5640 = vsel %vm5602, %v5294, %v5638
      %5642 = vrot.lane.b32.xlu0 %v5640, 96
      %v5643 = vpop.permute.xlu0 %5642
      %5645 = vst.msk [vmem:[#allocation5] sm:$0xff] %vm2098, %v5643
      %v5646 = vld [vmem:[%s5301] sm:$0xff]
      %5648 = vrot.lane.b32.xlu0 %v5646, 96
      %v5649 = vpop.permute.xlu0 %5648
      %v5651 = vsel %vm5602, %v5448, %v5649
      %5653 = vrot.lane.b32.xlu0 %v5651, 32
      %v5654 = vpop.permute.xlu0 %5653
      %5656 = vst.msk [vmem:[%s5301] sm:$0xff] %vm2098, %v5654
      %v5657 = vld [vmem:[%s5419] sm:$0xff]
      %5659 = vrot.lane.b32.xlu0 %v5657, 32
      %v5660 = vpop.permute.xlu0 %5659
      %v5662 = vsel %vm5602, %v5442, %v5660
      %5664 = vrot.lane.b32.xlu0 %v5662, 96
      %v5665 = vpop.permute.xlu0 %5664
      %5667 = vst.msk [vmem:[%s5419] sm:$0xff] %vm2098, %v5665
      %v5668 = vld [vmem:[%s5449] sm:$0xff]
      %5670 = vrot.lane.b32.xlu0 %v5668, 96
      %v5671 = vpop.permute.xlu0 %5670
      %v5673 = vsel %vm5602, %v5596, %v5671
      %5675 = vrot.lane.b32.xlu0 %v5673, 32
      %v5676 = vpop.permute.xlu0 %5675
      %5678 = vst.msk [vmem:[%s5449] sm:$0xff] %vm2098, %v5676
      %v5679 = vld [vmem:[%s5567] sm:$0xff]
      %5681 = vrot.lane.b32.xlu0 %v5679, 32
      %v5682 = vpop.permute.xlu0 %5681
      %v5684 = vsel %vm5602, %v5590, %v5682
      %5686 = vrot.lane.b32.xlu0 %v5684, 96
      %v5687 = vpop.permute.xlu0 %5686
      %5689 = vst.msk [vmem:[%s5567] sm:$0xff] %vm2098, %v5687
      %v5690 = vld [vmem:[%s19] sm:$0xff]
      %v5691 = vld [vmem:[%s19 + $0x8] sm:$0xff]
      %v5692 = vld [vmem:[%s19 + $0x10] sm:$0xff]
      %v5693 = vld [vmem:[%s19 + $0x18] sm:$0xff]
      %v5694 = vld [vmem:[%s20] sm:$0x1]
      %v5696 = vlaneseq
      %v5697 = vshrl.u32 %v5696, 7
      %v5698 = vsub.s32 0, %v5697
      %v5699 = vrot.slane %v5694, %v5698
      %5702 = vrot.lane.b32.xlu0 %v5566, 32
      %v5703 = vpop.permute.xlu0 %5702
      %v5704 = vsel %vm2098, %v5703, 0
      %5706 = vmatprep.subr.mxu0 0.0
      %5707 = vmatpush1.msra.mxu0 %v5690
      %5708 = vmatprep.subr.mxu0 0.0
      %5709 = vmatpush1.msra.mxu0 %v5691
      %5710 = vmatprep.subr.mxu0 0.0
      %5711 = vmatpush1.msra.mxu0 %v5692
      %5712 = vmatprep.subr.mxu0 0.0
      %5713 = vmatpush1.msra.mxu0 %v5693
      %5714 = vmatprep.subr.mxu0 0.0
      %5715 = vmatpush1.msra.mxu0 0.0
      %5716 = vmatprep.subr.mxu0 0.0
      %5717 = vmatpush1.msra.mxu0 0.0
      %5718 = vmatprep.subr.mxu0 0.0
      %5719 = vmatpush1.msra.mxu0 0.0
      %5720 = vmatprep.subr.mxu0 0.0
      %5721 = vmatpush1.msra.mxu0 0.0
      %5722 = vmatprep.subr.mxu0 0.0
      %5723 = vmatpush1.msra.mxu0 0.0
      %5724 = vmatprep.subr.mxu0 0.0
      %5725 = vmatpush1.msra.mxu0 0.0
      %5726 = vmatprep.subr.mxu0 0.0
      %5727 = vmatpush1.msra.mxu0 0.0
      %5728 = vmatprep.subr.mxu0 0.0
      %5729 = vmatpush1.msra.mxu0 0.0
      %5730 = vmatprep.subr.mxu0 0.0
      %5731 = vmatpush1.msra.mxu0 0.0
      %5732 = vmatprep.subr.mxu0 0.0
      %5733 = vmatpush1.msra.mxu0 0.0
      %5734 = vmatprep.subr.mxu0 0.0
      %5735 = vmatpush1.msra.mxu0 0.0
      %5736 = vmatprep.subr.mxu0 0.0
      %5737 = vmatpush1.msra.mxu0 0.0
      %5738 = vmatprep.subr.mxu0 0.0
      %5739 = vmatpush1.msra.mxu0 0.0
      %5740 = vmatprep.subr.mxu0 0.0
      %5741 = vmatpush1.msra.mxu0 0.0
      %5742 = vmatprep.subr.mxu0 0.0
      %5743 = vmatpush1.msra.mxu0 0.0
      %5744 = vmatprep.subr.mxu0 0.0
      %5745 = vmatpush1.msra.mxu0 0.0
      %5746 = vmatprep.subr.mxu0 0.0
      %5747 = vmatpush1.msra.mxu0 0.0
      %5748 = vmatprep.subr.mxu0 0.0
      %5749 = vmatpush1.msra.mxu0 0.0
      %5750 = vmatprep.subr.mxu0 0.0
      %5751 = vmatpush1.msra.mxu0 0.0
      %5752 = vmatprep.subr.mxu0 0.0
      %5753 = vmatpush1.msra.mxu0 0.0
      %5754 = vmatprep.subr.mxu0 0.0
      %5755 = vmatpush1.msra.mxu0 0.0
      %5756 = vmatprep.subr.mxu0 0.0
      %5757 = vmatpush1.msra.mxu0 0.0
      %5758 = vmatprep.subr.mxu0 0.0
      %5759 = vmatpush1.msra.mxu0 0.0
      %5760 = vmatprep.subr.mxu0 0.0
      %5761 = vmatpush1.msra.mxu0 0.0
      %5762 = vmatprep.subr.mxu0 0.0
      %5763 = vmatpush1.msra.mxu0 0.0
      %5764 = vmatprep.subr.mxu0 0.0
      %5765 = vmatpush1.msra.mxu0 0.0
      %5766 = vmatprep.subr.mxu0 0.0
      %5767 = vmatpush1.msra.mxu0 0.0
      %5768 = vmatprep.subr.mxu0 0.0
      %5769 = vmatpush1.msra.mxu0 0.0
      %5770 = vmatprep.mubr.f32.mxu0 0.0
      %5771 = vmatmul.mubr.f32.gmra.mrb[0].mxu0 %v5704
      %v5772 = vpop.f32.mrb[0].mxu0
      %v5773 = vadd.f32 %v5699, %v5772
      %v5774 = vpop.f32.mrb[0].mxu0
      %5775 = vdwg.mxu0
      %v5776 = vsel %vm5602, %v5773, 0.0
      %s5777 = smul.u32 %s1949, 8
      %s5778 = scalar_lea.vmem [#allocation8], %s5777
      %5779 = vst [vmem:[%s5778] sm:$0xff] %v5776
      %v5780 = vsel %vm5602, %v4119, 0.0
      %s5781 = scalar_lea.vmem [#allocation10], %s5777
      %5782 = vst [vmem:[%s5781] sm:$0xff] %v5780
    $region94: #{tpu_custom_call.1} parent=1 // loop_footer
      %s1953 = sadd.s32 1, %s1949
    $region95: #{tpu_custom_call.1} parent=1 // loop_footer_branch
      %1948 = sbr.rel target = $region91
    $region96: #{tpu_custom_call.1} parent=1 // loop_exit
      _
    // Predicated region
    $region97: #{tpu_custom_call.1} parent=1 // pred_check
      _
    $region98: #{tpu_custom_call.1} parent=1 // pred_check_branch
      %5784 = sbr.rel (0) target = $region100
    $region99: #{tpu_custom_call.1} parent=1 // pred_region
      %s5786 = ssub.s32 1024, 1024
      %5787 = vsyncadd [#allocation9], %s5786
      %s5788 = sshll.u32 [#allocation8], 4
      %s5789 = int_to_ptr.vmem [resolvable:$true] %s5788
      %5794 = dma.vmem_to_hbm [thread:$0]  %s5789, 1024, %s21, [#allocation9], 128, 128, 8
    $region100: #{tpu_custom_call.1} parent=1 // pred_fallthru
      _
    // Predicated region
    $region101: #{tpu_custom_call.1} parent=1 // pred_check
      _
    $region102: #{tpu_custom_call.1} parent=1 // pred_check_branch
      %5796 = sbr.rel (0) target = $region104
    $region103: #{tpu_custom_call.1} parent=1 // pred_region
      %s5798 = ssub.s32 1024, 1024
      %5799 = vsyncadd [#allocation11], %s5798
      %s5800 = sshll.u32 [#allocation10], 4
      %s5801 = int_to_ptr.vmem [resolvable:$true] %s5800
      %5806 = dma.vmem_to_hbm [thread:$0]  %s5801, 1024, %s22, [#allocation11], 128, 128, 8
    $region104: #{tpu_custom_call.1} parent=1 // pred_fallthru
      _
    // Predicated region
    $region105: #{tpu_custom_call.1} parent=1 // pred_check
      _
    $region106: #{tpu_custom_call.1} parent=1 // pred_check_branch
      %5808 = sbr.rel (0) target = $region108
    $region107: #{tpu_custom_call.1} parent=1 // pred_region
      %5809 = dma.done [#allocation9], 1024
    $region108: #{tpu_custom_call.1} parent=1 // pred_fallthru
      _
    // Predicated region
    $region109: #{tpu_custom_call.1} parent=1 // pred_check
      _
    $region110: #{tpu_custom_call.1} parent=1 // pred_check_branch
      %5811 = sbr.rel (0) target = $region112
    $region111: #{tpu_custom_call.1} parent=1 // pred_region
      %5812 = dma.done [#allocation11], 1024
    $region112: #{tpu_custom_call.1} parent=1 // pred_fallthru
      _
    %5813 = vsyncpa [#allocation9], 1
    %5814 = vsyncpa [#allocation11], 1

</llo_original>
